<compile_context>
chip_gen: v5e
topology: v5e:2x2
jax: 0.10.0
libtpu: 0.0.40
codegen_flags: <defaults>
</compile_context>

<pallas_src>
import functools

import jax
import jax.numpy as jnp
import numpy as np
from jax.experimental import pallas as pl
from jax.experimental.pallas import tpu as pltpu

BN_EPS = 1e-5


def _elu(x):
    # ELU with alpha=1 (F.elu default). exp(x)-1 (not expm1): |diff| ~1e-7.
    return jnp.where(x > 0, x, jnp.exp(x) - 1.0)


# --------------------------- pass 1: convs + BN statistics -------------------

def _conv_stats_kernel(tapsT_ref, wbdT_ref, bcat_ref, w13T_ref, b13_ref,
                       gamma_ref, beta_ref,
                       z_ref, scale_ref, shift_ref,
                       sz_ref, szz_ref):
    # tapsT : (KP, TM) bf16  im2col taps for this M tile (54*C rows, zero-padded)
    # wbdT  : (2C, KP) bf16  block-diagonal [w11 | 0 ; 0 | w12]
    # bcat  : (2C, 1)  f32   [b11 ; b12]
    # w13T  : (C, 2C)  f32   1x1x1 conv weight (transposed)
    # b13/gamma/beta : (C, 1) f32
    # z     : (C, TM)  f32   conv13 output tile (HBM intermediate)
    # scale/shift : (C, 1)   folded BN affine, written at the last grid step
    # sz/szz: (C, 1)   f32   running per-channel sum(z) / sum(z*z)  (scratch)
    i = pl.program_id(0)

    @pl.when(i == 0)
    def _init():
        sz_ref[...] = jnp.zeros_like(sz_ref)
        szz_ref[...] = jnp.zeros_like(szz_ref)

    # Both dilated 3x3x3 convs in a single bf16 MXU dot -> [y1; y2] = (2C, TM).
    y12 = jnp.dot(wbdT_ref[...], tapsT_ref[...],
                  preferred_element_type=jnp.float32) + bcat_ref[...]
    y12 = _elu(y12)                                           # lane-dense ELU

    # 1x1x1 conv over the channel-concatenated block (single dot, f32 acc).
    z = jnp.dot(w13T_ref[...], y12,
                preferred_element_type=jnp.float32) + b13_ref[...]   # (C, TM)
    z_ref[...] = z

    # BN partial sums, accumulated across the "arbitrary" M axis.
    # TODO(synk): for very large M switch to centered two-pass variance
    # (E[z^2]-E[z]^2 cancellation); fine at these sizes with f32 partial sums.
    sz_ref[...] += jnp.sum(z, axis=1, keepdims=True)
    szz_ref[...] += jnp.sum(z * z, axis=1, keepdims=True)

    @pl.when(i == pl.num_programs(0) - 1)
    def _finalize():
        m_total = z_ref.shape[1] * pl.num_programs(0)
        inv_m = 1.0 / m_total
        mu = sz_ref[...] * inv_m
        var = szz_ref[...] * inv_m - mu * mu
        scale = jax.lax.rsqrt(var + BN_EPS) * gamma_ref[...]
        scale_ref[...] = scale
        shift_ref[...] = beta_ref[...] - mu * scale


# --------------------------- pass 2: BN apply + residual + ELU ---------------

def _bn_apply_kernel(scale_ref, shift_ref, z_ref, x0_ref, o_ref):
    # scale/shift : (C, 1) f32 ; z : (C, TM2) f32
    # x0 / o      : (1, C, TM2) f32 -- native NCDHW layout, flattened spatial.
    # Note: with C=4 the f32 vregs here are half-populated on sublanes; this
    # pass is HBM-bound (3 small f32 streams), so the lost VPU/vst width is not
    # the bottleneck and the simple layout is kept.
    bn = z_ref[...] * scale_ref[...] + shift_ref[...]
    o_ref[...] = _elu(x0_ref[...] + bn[None])


# --------------------------- wrapper ------------------------------------------

def _largest_tile(total, cap):
    """Largest multiple of 128 that divides `total` and is <= cap (0 if none)."""
    best = 0
    t = 128
    while t <= total and t <= cap:
        if total % t == 0:
            best = t
        t += 128
    return best


@functools.partial(jax.jit, static_argnames=("max_tm", "max_tm2"))
def atr_res_13_forward(x_ncdhw, params, max_tm=None, max_tm2=None):
    """x_ncdhw: (N, C, D, H, W) float32  ->  (N, C, D, H, W) float32."""
    w11, b11, w12, b12, w13, b13, gamma, beta = params
    N, C, D, H, W = x_ncdhw.shape
    DHW = D * H * W
    M = N * DHW
    if DHW % 128 != 0:
        raise ValueError(f"D*H*W must be a multiple of 128 for lane tiling, got {DHW}")

    # ---- layout plumbing (XLA side) -----------------------------------------
    # One channels-major bf16 padded copy of x, used only for the taps build.
    x_cm = jnp.transpose(x_ncdhw, (1, 0, 2, 3, 4))                 # (C,N,D,H,W)
    xp = jnp.pad(x_cm.astype(jnp.bfloat16),
                 ((0, 0), (0, 0), (2, 2), (2, 2), (2, 2)))

    # im2col taps built DIRECTLY in (54*C, M) layout (no HBM transpose pass).
    # 27 taps for conv11 (pad=1, dil=1 -> offsets k+1) then 27 taps for conv12
    # (pad=2, dil=2 -> offsets 2k); both read the same pad-2 array.
    taps = []
    for start in (lambda k: k + 1, lambda k: 2 * k):
        for kd in range(3):
            for kh in range(3):
                for kw in range(3):
                    od, oh, ow = start(kd), start(kh), start(kw)
                    taps.append(
                        xp[:, :, od:od + D, oh:oh + H, ow:ow + W].reshape(C, M))
    K1 = 27 * C
    K2 = 2 * K1
    KP = ((K2 + 127) // 128) * 128            # pad contraction dim for the MXU
    tapsT = jnp.concatenate(taps, axis=0)               # (54C, M), row = tap*C + c
    tapsT = jnp.pad(tapsT, ((0, KP - K2), (0, 0)))      # (KP, M) bf16

    # Block-diagonal conv weights (2C, KP): rows 0..C-1 produce y1 from the
    # first 27*C taps, rows C..2C-1 produce y2 from the next 27*C.
    w11r = jnp.transpose(w11.reshape(27, C, C), (2, 0, 1)).reshape(C, K1)
    w12r = jnp.transpose(w12.reshape(27, C, C), (2, 0, 1)).reshape(C, K1)
    wbdT = jnp.zeros((2 * C, KP), jnp.float32)
    wbdT = wbdT.at[:C, :K1].set(w11r).at[C:, K1:K2].set(w12r)
    wbdT = wbdT.astype(jnp.bfloat16)

    bcat = jnp.concatenate([b11, b12]).reshape(2 * C, 1)           # (2C, 1) f32
    w13T = w13.T                                                   # (C, 2C) f32
    b13c = b13.reshape(C, 1)
    gam = gamma.reshape(C, 1)
    bet = beta.reshape(C, 1)

    # Residual input stays in its native NCDHW layout (no transpose, no copy).
    x0 = x_ncdhw.reshape(N, C, DHW)

    # ---- pass 1: fused convs + BN statistics (pipelined grid over M) --------
    # Double-buffered per-step footprint kept ~12 MiB: safe on v5e (16 MiB
    # scoped default), v6e (128 MiB) and v7x (64 MiB physical VMEM).
    per_col = 2 * (KP * 2) + 2 * (C * 4)          # taps bf16 + z f32, x2 buffers
    cap = min(16384, max(128, (12 << 20) // per_col))
    if max_tm is not None:
        cap = min(cap, max_tm)
    tm = _largest_tile(M, cap) or M
    nt = M // tm

    cost1 = pl.CostEstimate(
        flops=2 * (2 * C) * KP * M + 2 * C * (2 * C) * M,
        transcendentals=2 * C * M,
        bytes_accessed=KP * M * 2 + C * M * 4 + 2 * C * KP * 2)

    z, scale, shift = pl.pallas_call(
        _conv_stats_kernel,
        grid=(nt,),
        in_specs=[
            pl.BlockSpec((KP, tm), lambda i: (0, i)),              # taps tile
            pl.BlockSpec((2 * C, KP), lambda i: (0, 0)),           # wbdT
            pl.BlockSpec((2 * C, 1), lambda i: (0, 0)),            # bcat
            pl.BlockSpec((C, 2 * C), lambda i: (0, 0)),            # w13T
            pl.BlockSpec((C, 1), lambda i: (0, 0)),                # b13
            pl.BlockSpec((C, 1), lambda i: (0, 0)),                # gamma
            pl.BlockSpec((C, 1), lambda i: (0, 0)),                # beta
        ],
        out_specs=(
            pl.BlockSpec((C, tm), lambda i: (0, i)),               # z
            pl.BlockSpec((C, 1), lambda i: (0, 0)),                # scale
            pl.BlockSpec((C, 1), lambda i: (0, 0)),                # shift
        ),
        out_shape=(
            jax.ShapeDtypeStruct((C, M), jnp.float32),
            jax.ShapeDtypeStruct((C, 1), jnp.float32),
            jax.ShapeDtypeStruct((C, 1), jnp.float32),
        ),
        scratch_shapes=[pltpu.VMEM((C, 1), jnp.float32),
                        pltpu.VMEM((C, 1), jnp.float32)],
        compiler_params=pltpu.CompilerParams(
            dimension_semantics=("arbitrary",),     # BN stats accumulate over M
            vmem_limit_bytes=32 * 1024 * 1024),
        cost_estimate=cost1,
    )(tapsT, wbdT, bcat, w13T, b13c, gam, bet)

    # ---- pass 2: BN apply + residual + ELU, NCDHW output, fully parallel ----
    cap2 = min(8192, DHW)
    if max_tm2 is not None:
        cap2 = min(cap2, max_tm2)
    tm2 = _largest_tile(DHW, cap2) or DHW
    jt = DHW // tm2

    cost2 = pl.CostEstimate(
        flops=6 * C * M, transcendentals=C * M, bytes_accessed=3 * C * M * 4)

    out = pl.pallas_call(
        _bn_apply_kernel,
        grid=(N, jt),
        in_specs=[
            pl.BlockSpec((C, 1), lambda n, j: (0, 0)),                   # scale
            pl.BlockSpec((C, 1), lambda n, j: (0, 0)),                   # shift
            pl.BlockSpec((C, tm2), lambda n, j: (0, n * jt + j)),        # z
            pl.BlockSpec((1, C, tm2), lambda n, j: (n, 0, j)),           # x0
        ],
        out_specs=pl.BlockSpec((1, C, tm2), lambda n, j: (n, 0, j)),
        out_shape=jax.ShapeDtypeStruct((N, C, DHW), jnp.float32),
        compiler_params=pltpu.CompilerParams(
            dimension_semantics=("parallel", "parallel"),   # v7x: both TCs
            vmem_limit_bytes=32 * 1024 * 1024),
        cost_estimate=cost2,
    )(scale, shift, z, x0)

    return out.reshape(N, C, D, H, W)


# --------------------------- init + pure-JAX reference -----------------------

def init_params(ch, key):
    """Deterministic parameter init. 3x3x3 weights stored as (kD,kH,kW,Cin,Cout)."""
    k = jax.random.split(key, 6)
    w11 = 0.1 * jax.random.normal(k[0], (3, 3, 3, ch, ch), jnp.float32)
    b11 = 0.1 * jax.random.normal(k[1], (ch,), jnp.float32)
    w12 = 0.1 * jax.random.normal(k[2], (3, 3, 3, ch, ch), jnp.float32)
    b12 = 0.1 * jax.random.normal(k[3], (ch,), jnp.float32)
    w13 = 0.1 * jax.random.normal(k[4], (2 * ch, ch), jnp.float32)
    b13 = 0.1 * jax.random.normal(k[5], (ch,), jnp.float32)
    gamma = jnp.ones((ch,), jnp.float32)                 # BatchNorm3d defaults
    beta = jnp.zeros((ch,), jnp.float32)
    return (w11, b11, w12, b12, w13, b13, gamma, beta)


def reference_forward(x_ncdhw, params):
    """Pure-JAX (XLA) reference mirroring the PyTorch forward.  The 3x3x3 conv
    operands are bfloat16 with f32 accumulation (same precision choice as the
    kernel's MXU path); everything else is f32."""
    w11, b11, w12, b12, w13, b13, gamma, beta = params
    x = jnp.transpose(x_ncdhw, (0, 2, 3, 4, 1))
    xb = x.astype(jnp.bfloat16)

    def conv(w, b, dil, pad):
        y = jax.lax.conv_general_dilated(
            xb, w.astype(jnp.bfloat16), window_strides=(1, 1, 1),
            padding=[(pad, pad)] * 3, rhs_dilation=(dil, dil, dil),
            dimension_numbers=('NDHWC', 'DHWIO', 'NDHWC'),
            preferred_element_type=jnp.float32)
        return y + b

    y1 = _elu(conv(w11, b11, 1, 1))
    y2 = _elu(conv(w12, b12, 2, 2))
    cat = jnp.concatenate([y1, y2], axis=-1)
    z = jnp.einsum('ndhwc,co->ndhwo', cat, w13,
                   precision=jax.lax.Precision.HIGHEST) + b13
    mu = z.mean(axis=(0, 1, 2, 3))
    var = ((z - mu) ** 2).mean(axis=(0, 1, 2, 3))
    bn = (z - mu) * jax.lax.rsqrt(var + BN_EPS) * gamma + beta
    out = _elu(x + bn)
    return jnp.transpose(out, (0, 4, 1, 2, 3))


if __name__ == "__main__":
    key = jax.random.PRNGKey(0)
    kx, kp = jax.random.split(key)

    N, CH, D, H, W = 2, 4, 16, 16, 16                 # M = 8192, DHW = 4096
    x = jax.random.normal(kx, (N, CH, D, H, W), jnp.float32)   # NCDHW like PyTorch
    params = init_params(CH, kp)

    ref = jax.block_until_ready(reference_forward(x, params))

    # Auto tiling (VMEM-budget-driven tile sizes).
    out = jax.block_until_ready(atr_res_13_forward(x, params))
    np.testing.assert_allclose(np.asarray(out), np.asarray(ref),
                               rtol=2e-3, atol=2e-3)

    # Explicit small tiles: exercises the multi-step pipelined grid and the
    # cross-tile BatchNorm-statistics accumulation / finalize path.
    out_t = jax.block_until_ready(
        atr_res_13_forward(x, params, max_tm=512, max_tm2=512))
    np.testing.assert_allclose(np.asarray(out_t), np.asarray(ref),
                               rtol=2e-3, atol=2e-3)

    print("KERNEL_OK")
</pallas_src>

<mosaic_0001>
module attributes {stable_mosaic.version = 11 : i64} {
  func.func @_conv_stats_kernel(%arg0: i32, %arg1: memref<256x8192xbf16, #tpu.memory_space<vmem>>, %arg2: memref<8x256xbf16, #tpu.memory_space<vmem>>, %arg3: memref<8x1xf32, #tpu.memory_space<vmem>>, %arg4: memref<4x8xf32, #tpu.memory_space<vmem>>, %arg5: memref<4x1xf32, #tpu.memory_space<vmem>>, %arg6: memref<4x1xf32, #tpu.memory_space<vmem>>, %arg7: memref<4x1xf32, #tpu.memory_space<vmem>>, %arg8: memref<4x8192xf32, #tpu.memory_space<vmem>>, %arg9: memref<4x1xf32, #tpu.memory_space<vmem>>, %arg10: memref<4x1xf32, #tpu.memory_space<vmem>>, %arg11: memref<4x1xf32, #tpu.memory_space<vmem>>, %arg12: memref<4x1xf32, #tpu.memory_space<vmem>>) attributes {dimension_semantics = [#tpu.dimension_semantics<arbitrary>], iteration_bounds = array<i64: 1>, scalar_prefetch = 0 : i64, scratch_operands = 2 : i64, tpu.core_type = #tpu.core_type<tc>, window_params = [{transform_indices = @transform_0, window_bounds = array<i64: 256, 8192>}, {pipeline_mode = #tpu.pipeline_mode<synchronous>, transform_indices = @transform_1, window_bounds = array<i64: 8, 256>}, {pipeline_mode = #tpu.pipeline_mode<synchronous>, transform_indices = @transform_2, window_bounds = array<i64: 8, 1>}, {pipeline_mode = #tpu.pipeline_mode<synchronous>, transform_indices = @transform_3, window_bounds = array<i64: 4, 8>}, {pipeline_mode = #tpu.pipeline_mode<synchronous>, transform_indices = @transform_4, window_bounds = array<i64: 4, 1>}, {pipeline_mode = #tpu.pipeline_mode<synchronous>, transform_indices = @transform_5, window_bounds = array<i64: 4, 1>}, {pipeline_mode = #tpu.pipeline_mode<synchronous>, transform_indices = @transform_6, window_bounds = array<i64: 4, 1>}, {transform_indices = @transform_7, window_bounds = array<i64: 4, 8192>}, {pipeline_mode = #tpu.pipeline_mode<synchronous>, transform_indices = @transform_8, window_bounds = array<i64: 4, 1>}, {pipeline_mode = #tpu.pipeline_mode<synchronous>, transform_indices = @transform_9, window_bounds = array<i64: 4, 1>}]} {
    %c0_i32 = arith.constant 0 : i32
    %0 = arith.cmpi eq, %arg0, %c0_i32 : i32
    %1 = arith.extui %0 : i1 to i32
    %c0_i32_0 = arith.constant 0 : i32
    %2 = arith.cmpi ne, %1, %c0_i32_0 : i32
    scf.if %2 {
      %cst_27 = arith.constant 0.000000e+00 : f32
      %35 = vector.broadcast %cst_27 : f32 to vector<4x1xf32>
      %c0_28 = arith.constant 0 : index
      %c0_29 = arith.constant 0 : index
      %36 = vector.load %arg11[%c0_28, %c0_29] : memref<4x1xf32, #tpu.memory_space<vmem>>, vector<4x1xf32>
      tpu.vector_store %arg11[%c0_28, %c0_29], %35 {strides = array<i32>} : memref<4x1xf32, #tpu.memory_space<vmem>>, vector<4x1xf32>,
      %cst_30 = arith.constant 0.000000e+00 : f32
      %37 = vector.broadcast %cst_30 : f32 to vector<4x1xf32>
      %c0_31 = arith.constant 0 : index
      %c0_32 = arith.constant 0 : index
      %38 = vector.load %arg12[%c0_31, %c0_32] : memref<4x1xf32, #tpu.memory_space<vmem>>, vector<4x1xf32>
      tpu.vector_store %arg12[%c0_31, %c0_32], %37 {strides = array<i32>} : memref<4x1xf32, #tpu.memory_space<vmem>>, vector<4x1xf32>,
    } else {
    }
    %c0 = arith.constant 0 : index
    %c0_1 = arith.constant 0 : index
    %3 = vector.load %arg2[%c0, %c0_1] : memref<8x256xbf16, #tpu.memory_space<vmem>>, vector<8x256xbf16>
    %c0_2 = arith.constant 0 : index
    %c0_3 = arith.constant 0 : index
    %4 = vector.load %arg1[%c0_2, %c0_3] : memref<256x8192xbf16, #tpu.memory_space<vmem>>, vector<256x8192xbf16>
    %cst = arith.constant dense<0.000000e+00> : vector<8x8192xf32>
    %5 = tpu.matmul %3, %4, %cst {dimension_numbers = #tpu.dot_dimension_numbers<[1], [0], [0], [1], [0, 0, 1, 1], [], []>} : vector<8x256xbf16>, vector<256x8192xbf16>, vector<8x8192xf32> -> vector<8x8192xf32>
    %c0_4 = arith.constant 0 : index
    %c0_5 = arith.constant 0 : index
    %6 = vector.load %arg3[%c0_4, %c0_5] : memref<8x1xf32, #tpu.memory_space<vmem>>, vector<8x1xf32>
    %7 = vector.broadcast %6 : vector<8x1xf32> to vector<8x8192xf32>
    %8 = arith.addf %5, %7 : vector<8x8192xf32>
    %cst_6 = arith.constant 0.000000e+00 : f32
    %9 = vector.broadcast %cst_6 : f32 to vector<8x8192xf32>
    %10 = arith.cmpf ogt, %8, %9 : vector<8x8192xf32>
    %11 = math.exp %8 : vector<8x8192xf32>
    %cst_7 = arith.constant 1.000000e+00 : f32
    %12 = vector.broadcast %cst_7 : f32 to vector<8x8192xf32>
    %13 = arith.subf %11, %12 : vector<8x8192xf32>
    %14 = arith.select %10, %8, %13 : vector<8x8192xi1>, vector<8x8192xf32>
    %c0_8 = arith.constant 0 : index
    %c0_9 = arith.constant 0 : index
    %15 = vector.load %arg4[%c0_8, %c0_9] : memref<4x8xf32, #tpu.memory_space<vmem>>, vector<4x8xf32>
    %cst_10 = arith.constant dense<0.000000e+00> : vector<4x8192xf32>
    %16 = tpu.matmul %15, %14, %cst_10 {dimension_numbers = #tpu.dot_dimension_numbers<[1], [0], [0], [1], [0, 0, 1, 1], [], []>} : vector<4x8xf32>, vector<8x8192xf32>, vector<4x8192xf32> -> vector<4x8192xf32>
    %c0_11 = arith.constant 0 : index
    %c0_12 = arith.constant 0 : index
    %17 = vector.load %arg5[%c0_11, %c0_12] : memref<4x1xf32, #tpu.memory_space<vmem>>, vector<4x1xf32>
    %18 = vector.broadcast %17 : vector<4x1xf32> to vector<4x8192xf32>
    %19 = arith.addf %16, %18 : vector<4x8192xf32>
    %c0_13 = arith.constant 0 : index
    %c0_14 = arith.constant 0 : index
    %20 = vector.load %arg8[%c0_13, %c0_14] : memref<4x8192xf32, #tpu.memory_space<vmem>>, vector<4x8192xf32>
    tpu.vector_store %arg8[%c0_13, %c0_14], %19 {strides = array<i32>} : memref<4x8192xf32, #tpu.memory_space<vmem>>, vector<4x8192xf32>,
    %c0_15 = arith.constant 0 : index
    %c0_16 = arith.constant 0 : index
    %21 = vector.load %arg11[%c0_15, %c0_16] : memref<4x1xf32, #tpu.memory_space<vmem>>, vector<4x1xf32>
    %cst_17 = arith.constant dense<0.000000e+00> : vector<4xf32>
    %22 = vector.multi_reduction <add>, %19, %cst_17 [1] : vector<4x8192xf32> to vector<4xf32>
    %23 = vector.shape_cast %22 : vector<4xf32> to vector<4x1xf32>
    %24 = arith.addf %21, %23 : vector<4x1xf32>
    %c0_18 = arith.constant 0 : index
    %c0_19 = arith.constant 0 : index
    %25 = vector.load %arg11[%c0_18, %c0_19] : memref<4x1xf32, #tpu.memory_space<vmem>>, vector<4x1xf32>
    tpu.vector_store %arg11[%c0_18, %c0_19], %24 {strides = array<i32>} : memref<4x1xf32, #tpu.memory_space<vmem>>, vector<4x1xf32>,
    %c0_20 = arith.constant 0 : index
    %c0_21 = arith.constant 0 : index
    %26 = vector.load %arg12[%c0_20, %c0_21] : memref<4x1xf32, #tpu.memory_space<vmem>>, vector<4x1xf32>
    %27 = arith.mulf %19, %19 : vector<4x8192xf32>
    %cst_22 = arith.constant dense<0.000000e+00> : vector<4xf32>
    %28 = vector.multi_reduction <add>, %27, %cst_22 [1] : vector<4x8192xf32> to vector<4xf32>
    %29 = vector.shape_cast %28 : vector<4xf32> to vector<4x1xf32>
    %30 = arith.addf %26, %29 : vector<4x1xf32>
    %c0_23 = arith.constant 0 : index
    %c0_24 = arith.constant 0 : index
    %31 = vector.load %arg12[%c0_23, %c0_24] : memref<4x1xf32, #tpu.memory_space<vmem>>, vector<4x1xf32>
    tpu.vector_store %arg12[%c0_23, %c0_24], %30 {strides = array<i32>} : memref<4x1xf32, #tpu.memory_space<vmem>>, vector<4x1xf32>,
    %c0_i32_25 = arith.constant 0 : i32
    %32 = arith.cmpi eq, %arg0, %c0_i32_25 : i32
    %33 = arith.extui %32 : i1 to i32
    %c0_i32_26 = arith.constant 0 : i32
    %34 = arith.cmpi ne, %33, %c0_i32_26 : i32
    scf.if %34 {
      %c0_27 = arith.constant 0 : index
      %c0_28 = arith.constant 0 : index
      %35 = vector.load %arg11[%c0_27, %c0_28] : memref<4x1xf32, #tpu.memory_space<vmem>>, vector<4x1xf32>
      %cst_29 = arith.constant 1.22070313E-4 : f32
      %36 = vector.broadcast %cst_29 : f32 to vector<4x1xf32>
      %37 = arith.mulf %35, %36 : vector<4x1xf32>
      %c0_30 = arith.constant 0 : index
      %c0_31 = arith.constant 0 : index
      %38 = vector.load %arg12[%c0_30, %c0_31] : memref<4x1xf32, #tpu.memory_space<vmem>>, vector<4x1xf32>
      %cst_32 = arith.constant 1.22070313E-4 : f32
      %39 = vector.broadcast %cst_32 : f32 to vector<4x1xf32>
      %40 = arith.mulf %38, %39 : vector<4x1xf32>
      %41 = arith.mulf %37, %37 : vector<4x1xf32>
      %42 = arith.subf %40, %41 : vector<4x1xf32>
      %cst_33 = arith.constant 9.99999974E-6 : f32
      %43 = vector.broadcast %cst_33 : f32 to vector<4x1xf32>
      %44 = arith.addf %42, %43 : vector<4x1xf32>
      %45 = math.rsqrt %44 : vector<4x1xf32>
      %c0_34 = arith.constant 0 : index
      %c0_35 = arith.constant 0 : index
      %46 = vector.load %arg6[%c0_34, %c0_35] : memref<4x1xf32, #tpu.memory_space<vmem>>, vector<4x1xf32>
      %47 = arith.mulf %45, %46 : vector<4x1xf32>
      %c0_36 = arith.constant 0 : index
      %c0_37 = arith.constant 0 : index
      %48 = vector.load %arg9[%c0_36, %c0_37] : memref<4x1xf32, #tpu.memory_space<vmem>>, vector<4x1xf32>
      tpu.vector_store %arg9[%c0_36, %c0_37], %47 {strides = array<i32>} : memref<4x1xf32, #tpu.memory_space<vmem>>, vector<4x1xf32>,
      %c0_38 = arith.constant 0 : index
      %c0_39 = arith.constant 0 : index
      %49 = vector.load %arg7[%c0_38, %c0_39] : memref<4x1xf32, #tpu.memory_space<vmem>>, vector<4x1xf32>
      %50 = arith.mulf %37, %47 : vector<4x1xf32>
      %51 = arith.subf %49, %50 : vector<4x1xf32>
      %c0_40 = arith.constant 0 : index
      %c0_41 = arith.constant 0 : index
      %52 = vector.load %arg10[%c0_40, %c0_41] : memref<4x1xf32, #tpu.memory_space<vmem>>, vector<4x1xf32>
      tpu.vector_store %arg10[%c0_40, %c0_41], %51 {strides = array<i32>} : memref<4x1xf32, #tpu.memory_space<vmem>>, vector<4x1xf32>,
    } else {
    }
    return
  }
  func.func @transform_0(%arg0: i32) -> (i32, i32) {
    %c0_i32 = arith.constant 0 : i32
    %c0_i32_0 = arith.constant 0 : i32
    return %c0_i32, %arg0 : i32, i32
  }
  func.func @transform_1(%arg0: i32) -> (i32, i32) {
    %c0_i32 = arith.constant 0 : i32
    %c0_i32_0 = arith.constant 0 : i32
    %c0_i32_1 = arith.constant 0 : i32
    return %c0_i32, %c0_i32_0 : i32, i32
  }
  func.func @transform_2(%arg0: i32) -> (i32, i32) {
    %c0_i32 = arith.constant 0 : i32
    %c0_i32_0 = arith.constant 0 : i32
    %c0_i32_1 = arith.constant 0 : i32
    return %c0_i32, %c0_i32_0 : i32, i32
  }
  func.func @transform_3(%arg0: i32) -> (i32, i32) {
    %c0_i32 = arith.constant 0 : i32
    %c0_i32_0 = arith.constant 0 : i32
    %c0_i32_1 = arith.constant 0 : i32
    return %c0_i32, %c0_i32_0 : i32, i32
  }
  func.func @transform_4(%arg0: i32) -> (i32, i32) {
    %c0_i32 = arith.constant 0 : i32
    %c0_i32_0 = arith.constant 0 : i32
    %c0_i32_1 = arith.constant 0 : i32
    return %c0_i32, %c0_i32_0 : i32, i32
  }
  func.func @transform_5(%arg0: i32) -> (i32, i32) {
    %c0_i32 = arith.constant 0 : i32
    %c0_i32_0 = arith.constant 0 : i32
    %c0_i32_1 = arith.constant 0 : i32
    return %c0_i32, %c0_i32_0 : i32, i32
  }
  func.func @transform_6(%arg0: i32) -> (i32, i32) {
    %c0_i32 = arith.constant 0 : i32
    %c0_i32_0 = arith.constant 0 : i32
    %c0_i32_1 = arith.constant 0 : i32
    return %c0_i32, %c0_i32_0 : i32, i32
  }
  func.func @transform_7(%arg0: i32) -> (i32, i32) {
    %c0_i32 = arith.constant 0 : i32
    %c0_i32_0 = arith.constant 0 : i32
    return %c0_i32, %arg0 : i32, i32
  }
  func.func @transform_8(%arg0: i32) -> (i32, i32) {
    %c0_i32 = arith.constant 0 : i32
    %c0_i32_0 = arith.constant 0 : i32
    %c0_i32_1 = arith.constant 0 : i32
    return %c0_i32, %c0_i32_0 : i32, i32
  }
  func.func @transform_9(%arg0: i32) -> (i32, i32) {
    %c0_i32 = arith.constant 0 : i32
    %c0_i32_0 = arith.constant 0 : i32
    %c0_i32_1 = arith.constant 0 : i32
    return %c0_i32, %c0_i32_0 : i32, i32
  }
}

module attributes {stable_mosaic.version = 11 : i64} {
  func.func @_bn_apply_kernel(%arg0: i32, %arg1: i32, %arg2: memref<4x1xf32, #tpu.memory_space<vmem>>, %arg3: memref<4x1xf32, #tpu.memory_space<vmem>>, %arg4: memref<4x4096xf32, #tpu.memory_space<vmem>>, %arg5: memref<1x4x4096xf32, #tpu.memory_space<vmem>>, %arg6: memref<1x4x4096xf32, #tpu.memory_space<vmem>>) attributes {dimension_semantics = [#tpu.dimension_semantics<parallel>, #tpu.dimension_semantics<parallel>], iteration_bounds = array<i64: 2, 1>, scalar_prefetch = 0 : i64, scratch_operands = 0 : i64, tpu.core_type = #tpu.core_type<tc>, window_params = [{pipeline_mode = #tpu.pipeline_mode<synchronous>, transform_indices = @transform_0, window_bounds = array<i64: 4, 1>}, {pipeline_mode = #tpu.pipeline_mode<synchronous>, transform_indices = @transform_1, window_bounds = array<i64: 4, 1>}, {transform_indices = @transform_2, window_bounds = array<i64: 4, 4096>}, {transform_indices = @transform_3, window_bounds = array<i64: 1, 4, 4096>}, {transform_indices = @transform_4, window_bounds = array<i64: 1, 4, 4096>}]} {
    %c0 = arith.constant 0 : index
    %c0_0 = arith.constant 0 : index
    %0 = vector.load %arg4[%c0, %c0_0] : memref<4x4096xf32, #tpu.memory_space<vmem>>, vector<4x4096xf32>
    %c0_1 = arith.constant 0 : index
    %c0_2 = arith.constant 0 : index
    %1 = vector.load %arg2[%c0_1, %c0_2] : memref<4x1xf32, #tpu.memory_space<vmem>>, vector<4x1xf32>
    %2 = vector.broadcast %1 : vector<4x1xf32> to vector<4x4096xf32>
    %3 = arith.mulf %0, %2 : vector<4x4096xf32>
    %c0_3 = arith.constant 0 : index
    %c0_4 = arith.constant 0 : index
    %4 = vector.load %arg3[%c0_3, %c0_4] : memref<4x1xf32, #tpu.memory_space<vmem>>, vector<4x1xf32>
    %5 = vector.broadcast %4 : vector<4x1xf32> to vector<4x4096xf32>
    %6 = arith.addf %3, %5 : vector<4x4096xf32>
    %c0_5 = arith.constant 0 : index
    %c0_6 = arith.constant 0 : index
    %c0_7 = arith.constant 0 : index
    %7 = vector.load %arg5[%c0_5, %c0_6, %c0_7] : memref<1x4x4096xf32, #tpu.memory_space<vmem>>, vector<1x4x4096xf32>
    %8 = vector.shape_cast %6 : vector<4x4096xf32> to vector<1x4x4096xf32>
    %9 = arith.addf %7, %8 : vector<1x4x4096xf32>
    %cst = arith.constant 0.000000e+00 : f32
    %10 = vector.broadcast %cst : f32 to vector<1x4x4096xf32>
    %11 = arith.cmpf ogt, %9, %10 : vector<1x4x4096xf32>
    %12 = math.exp %9 : vector<1x4x4096xf32>
    %cst_8 = arith.constant 1.000000e+00 : f32
    %13 = vector.broadcast %cst_8 : f32 to vector<1x4x4096xf32>
    %14 = arith.subf %12, %13 : vector<1x4x4096xf32>
    %15 = arith.select %11, %9, %14 : vector<1x4x4096xi1>, vector<1x4x4096xf32>
    %c0_9 = arith.constant 0 : index
    %c0_10 = arith.constant 0 : index
    %c0_11 = arith.constant 0 : index
    %16 = vector.load %arg6[%c0_9, %c0_10, %c0_11] : memref<1x4x4096xf32, #tpu.memory_space<vmem>>, vector<1x4x4096xf32>
    tpu.vector_store %arg6[%c0_9, %c0_10, %c0_11], %15 {strides = array<i32>} : memref<1x4x4096xf32, #tpu.memory_space<vmem>>, vector<1x4x4096xf32>,
    return
  }
  func.func @transform_0(%arg0: i32, %arg1: i32) -> (i32, i32) {
    %c0_i32 = arith.constant 0 : i32
    %c0_i32_0 = arith.constant 0 : i32
    %c0_i32_1 = arith.constant 0 : i32
    return %c0_i32, %c0_i32_0 : i32, i32
  }
  func.func @transform_1(%arg0: i32, %arg1: i32) -> (i32, i32) {
    %c0_i32 = arith.constant 0 : i32
    %c0_i32_0 = arith.constant 0 : i32
    %c0_i32_1 = arith.constant 0 : i32
    return %c0_i32, %c0_i32_0 : i32, i32
  }
  func.func @transform_2(%arg0: i32, %arg1: i32) -> (i32, i32) {
    %c1_i32 = arith.constant 1 : i32
    %0 = arith.muli %arg0, %c1_i32 : i32
    %1 = arith.addi %0, %arg1 : i32
    %c0_i32 = arith.constant 0 : i32
    %c0_i32_0 = arith.constant 0 : i32
    return %c0_i32, %1 : i32, i32
  }
  func.func @transform_3(%arg0: i32, %arg1: i32) -> (i32, i32, i32) {
    %c0_i32 = arith.constant 0 : i32
    %c0_i32_0 = arith.constant 0 : i32
    return %arg0, %c0_i32, %arg1 : i32, i32, i32
  }
  func.func @transform_4(%arg0: i32, %arg1: i32) -> (i32, i32, i32) {
    %c0_i32 = arith.constant 0 : i32
    %c0_i32_0 = arith.constant 0 : i32
    return %arg0, %c0_i32, %arg1 : i32, i32, i32
  }
}

</mosaic_0001>

<llo_original>
// kernel: atr_res_13_forward.2
$region0: #{atr_res_13_forward.2}
  #allocation0 [shape = 'u32[]', space=smem, size = 0x4, offset = 0x4, fixed_abs, tag = 'smem constant byte address 0x4 - core index']
  #allocation1 [shape = 'u32[72,128]{1,0:T(1,128)}', space=vmem, size = 0x9000, scoped, tag = 'internal scratch']
  #allocation2 [shape = 'f32[4,1]{1,0:T(4,128)}', space=vmem, size = 0x800, scoped, tag = 'scratch operand']
  #allocation3 [shape = 'f32[4,1]{1,0:T(4,128)}', space=vmem, size = 0x800, scoped, tag = 'scratch operand']
  %s0 = inlined_call_operand.vmem [shape: bf16[256,8192], index: 0, kind: input, shape index: {}]
  %s1 = inlined_call_operand.vmem [shape: bf16[8,256], index: 1, kind: input, shape index: {}]
  %s2 = inlined_call_operand.vmem [shape: f32[8,1], index: 2, kind: input, shape index: {}]
  %s3 = inlined_call_operand.vmem [shape: f32[4,8], index: 3, kind: input, shape index: {}]
  %s4 = inlined_call_operand.vmem [shape: f32[4,1], index: 4, kind: input, shape index: {}]
  %s5 = inlined_call_operand.vmem [shape: f32[4,1], index: 5, kind: input, shape index: {}]
  %s6 = inlined_call_operand.vmem [shape: f32[4,1], index: 6, kind: input, shape index: {}]
  %s7 = inlined_call_operand.vmem [shape: f32[4,8192], index: 7, kind: output, shape index: {0}]
  %s8 = inlined_call_operand.vmem [shape: f32[4,1], index: 8, kind: output, shape index: {1}]
  %s9 = inlined_call_operand.vmem [shape: f32[4,1], index: 9, kind: output, shape index: {2}]
  %10 = xla_tuple %s7, %s8, %s9
  %s11 = sld [smem:[#allocation0]]
  $region62: #{atr_res_13_forward.2} parent=0
    _
  %s13 = ssub.s32 1, %s11
  %s14 = scalar_select 0, %s13, %s11
  // Predicated region
  $region2: #{atr_res_13_forward.2} parent=0 // pred_check
    _
  $region3: #{atr_res_13_forward.2} parent=0 // pred_check_branch
    %16 = sbr.rel (0) target = $region5
  $region4: #{atr_res_13_forward.2} parent=0 // pred_region
    _
  $region5: #{atr_res_13_forward.2} parent=0 // pred_fallthru
    _
  // Predicated region
  $region6: #{atr_res_13_forward.2} parent=0 // pred_check
    _
  $region7: #{atr_res_13_forward.2} parent=0 // pred_check_branch
    %18 = sbr.rel (0) target = $region9
  $region8: #{atr_res_13_forward.2} parent=0 // pred_region
    _
  $region9: #{atr_res_13_forward.2} parent=0 // pred_fallthru
    _
  // Predicated region
  $region10: #{atr_res_13_forward.2} parent=0 // pred_check
    _
  $region11: #{atr_res_13_forward.2} parent=0 // pred_check_branch
    %20 = sbr.rel (0) target = $region13
  $region12: #{atr_res_13_forward.2} parent=0 // pred_region
    _
  $region13: #{atr_res_13_forward.2} parent=0 // pred_fallthru
    _
  // Predicated region
  $region14: #{atr_res_13_forward.2} parent=0 // pred_check
    _
  $region15: #{atr_res_13_forward.2} parent=0 // pred_check_branch
    %22 = sbr.rel (0) target = $region17
  $region16: #{atr_res_13_forward.2} parent=0 // pred_region
    _
  $region17: #{atr_res_13_forward.2} parent=0 // pred_fallthru
    _
  // Predicated region
  $region18: #{atr_res_13_forward.2} parent=0 // pred_check
    _
  $region19: #{atr_res_13_forward.2} parent=0 // pred_check_branch
    %24 = sbr.rel (0) target = $region21
  $region20: #{atr_res_13_forward.2} parent=0 // pred_region
    _
  $region21: #{atr_res_13_forward.2} parent=0 // pred_fallthru
    _
  // Predicated region
  $region22: #{atr_res_13_forward.2} parent=0 // pred_check
    _
  $region23: #{atr_res_13_forward.2} parent=0 // pred_check_branch
    %26 = sbr.rel (0) target = $region25
  $region24: #{atr_res_13_forward.2} parent=0 // pred_region
    _
  $region25: #{atr_res_13_forward.2} parent=0 // pred_fallthru
    _
  // Predicated region
  $region26: #{atr_res_13_forward.2} parent=0 // pred_check
    _
  $region27: #{atr_res_13_forward.2} parent=0 // pred_check_branch
    %28 = sbr.rel (0) target = $region29
  $region28: #{atr_res_13_forward.2} parent=0 // pred_region
    _
  $region29: #{atr_res_13_forward.2} parent=0 // pred_fallthru
    _
  %p29 = scmp.eq.s32.totalorder 0, 0
  // Predicated region
  $region30: #{atr_res_13_forward.2} parent=0 // pred_check
    %p30 = pneg %p29
  $region31: #{atr_res_13_forward.2} parent=0 // pred_check_branch
    %32 = sbr.rel (%p30) target = $region33
  $region32: #{atr_res_13_forward.2} parent=0 // pred_region
    %vm33 = vcmask 3072
    %34 = vst.msk [vmem:[#allocation2] sm:$0xf] %vm33, 0.0
    %35 = vst.msk [vmem:[#allocation3] sm:$0xf] %vm33, 0.0
  $region33: #{atr_res_13_forward.2} parent=0 // pred_fallthru
    _
  %v36 = vld [vmem:[%s1] sm:$0xff]
  %v37 = vld [vmem:[%s0] sm:$0xff]
  %v38 = vld [vmem:[%s0 + $0x8] sm:$0xff]
  %v39 = vld [vmem:[%s0 + $0x10] sm:$0xff]
  %v40 = vld [vmem:[%s0 + $0x18] sm:$0xff]
  %v41 = vld [vmem:[%s0 + $0x20] sm:$0xff]
  %v42 = vld [vmem:[%s0 + $0x28] sm:$0xff]
  %v43 = vld [vmem:[%s0 + $0x30] sm:$0xff]
  %v44 = vld [vmem:[%s0 + $0x38] sm:$0xff]
  %v45 = vld [vmem:[%s0 + $0x40] sm:$0xff]
  %v46 = vld [vmem:[%s0 + $0x48] sm:$0xff]
  %v47 = vld [vmem:[%s0 + $0x50] sm:$0xff]
  %v48 = vld [vmem:[%s0 + $0x58] sm:$0xff]
  %v49 = vld [vmem:[%s0 + $0x60] sm:$0xff]
  %v50 = vld [vmem:[%s0 + $0x68] sm:$0xff]
  %v51 = vld [vmem:[%s0 + $0x70] sm:$0xff]
  %v52 = vld [vmem:[%s0 + $0x78] sm:$0xff]
  %v53 = vld [vmem:[%s0 + $0x80] sm:$0xff]
  %v54 = vld [vmem:[%s0 + $0x88] sm:$0xff]
  %v55 = vld [vmem:[%s0 + $0x90] sm:$0xff]
  %v56 = vld [vmem:[%s0 + $0x98] sm:$0xff]
  %v57 = vld [vmem:[%s0 + $0xa0] sm:$0xff]
  %v58 = vld [vmem:[%s0 + $0xa8] sm:$0xff]
  %v59 = vld [vmem:[%s0 + $0xb0] sm:$0xff]
  %v60 = vld [vmem:[%s0 + $0xb8] sm:$0xff]
  %v61 = vld [vmem:[%s0 + $0xc0] sm:$0xff]
  %v62 = vld [vmem:[%s0 + $0xc8] sm:$0xff]
  %v63 = vld [vmem:[%s0 + $0xd0] sm:$0xff]
  %v64 = vld [vmem:[%s0 + $0xd8] sm:$0xff]
  %v65 = vld [vmem:[%s0 + $0xe0] sm:$0xff]
  %v66 = vld [vmem:[%s0 + $0xe8] sm:$0xff]
  %v67 = vld [vmem:[%s0 + $0xf0] sm:$0xff]
  %v68 = vld [vmem:[%s0 + $0xf8] sm:$0xff]
  %v69 = vld [vmem:[%s0 + $0x100] sm:$0xff]
  %v70 = vld [vmem:[%s0 + $0x108] sm:$0xff]
  %v71 = vld [vmem:[%s0 + $0x110] sm:$0xff]
  %v72 = vld [vmem:[%s0 + $0x118] sm:$0xff]
  %v73 = vld [vmem:[%s0 + $0x120] sm:$0xff]
  %v74 = vld [vmem:[%s0 + $0x128] sm:$0xff]
  %v75 = vld [vmem:[%s0 + $0x130] sm:$0xff]
  %v76 = vld [vmem:[%s0 + $0x138] sm:$0xff]
  %v77 = vld [vmem:[%s0 + $0x140] sm:$0xff]
  %v78 = vld [vmem:[%s0 + $0x148] sm:$0xff]
  %v79 = vld [vmem:[%s0 + $0x150] sm:$0xff]
  %v80 = vld [vmem:[%s0 + $0x158] sm:$0xff]
  %v81 = vld [vmem:[%s0 + $0x160] sm:$0xff]
  %v82 = vld [vmem:[%s0 + $0x168] sm:$0xff]
  %v83 = vld [vmem:[%s0 + $0x170] sm:$0xff]
  %v84 = vld [vmem:[%s0 + $0x178] sm:$0xff]
  %v85 = vld [vmem:[%s0 + $0x180] sm:$0xff]
  %v86 = vld [vmem:[%s0 + $0x188] sm:$0xff]
  %v87 = vld [vmem:[%s0 + $0x190] sm:$0xff]
  %v88 = vld [vmem:[%s0 + $0x198] sm:$0xff]
  %v89 = vld [vmem:[%s0 + $0x1a0] sm:$0xff]
  %v90 = vld [vmem:[%s0 + $0x1a8] sm:$0xff]
  %v91 = vld [vmem:[%s0 + $0x1b0] sm:$0xff]
  %v92 = vld [vmem:[%s0 + $0x1b8] sm:$0xff]
  %v93 = vld [vmem:[%s0 + $0x1c0] sm:$0xff]
  %v94 = vld [vmem:[%s0 + $0x1c8] sm:$0xff]
  %v95 = vld [vmem:[%s0 + $0x1d0] sm:$0xff]
  %v96 = vld [vmem:[%s0 + $0x1d8] sm:$0xff]
  %v97 = vld [vmem:[%s0 + $0x1e0] sm:$0xff]
  %v98 = vld [vmem:[%s0 + $0x1e8] sm:$0xff]
  %v99 = vld [vmem:[%s0 + $0x1f0] sm:$0xff]
  %v100 = vld [vmem:[%s0 + $0x1f8] sm:$0xff]
  %v101 = vld [vmem:[%s0 + $0x200] sm:$0xff]
  %v102 = vld [vmem:[%s0 + $0x208] sm:$0xff]
  %v103 = vld [vmem:[%s0 + $0x210] sm:$0xff]
  %v104 = vld [vmem:[%s0 + $0x218] sm:$0xff]
  %v105 = vld [vmem:[%s0 + $0x220] sm:$0xff]
  %v106 = vld [vmem:[%s0 + $0x228] sm:$0xff]
  %v107 = vld [vmem:[%s0 + $0x230] sm:$0xff]
  %v108 = vld [vmem:[%s0 + $0x238] sm:$0xff]
  %v109 = vld [vmem:[%s0 + $0x240] sm:$0xff]
  %v110 = vld [vmem:[%s0 + $0x248] sm:$0xff]
  %v111 = vld [vmem:[%s0 + $0x250] sm:$0xff]
  %v112 = vld [vmem:[%s0 + $0x258] sm:$0xff]
  %v113 = vld [vmem:[%s0 + $0x260] sm:$0xff]
  %v114 = vld [vmem:[%s0 + $0x268] sm:$0xff]
  %v115 = vld [vmem:[%s0 + $0x270] sm:$0xff]
  %v116 = vld [vmem:[%s0 + $0x278] sm:$0xff]
  %v117 = vld [vmem:[%s0 + $0x280] sm:$0xff]
  %v118 = vld [vmem:[%s0 + $0x288] sm:$0xff]
  %v119 = vld [vmem:[%s0 + $0x290] sm:$0xff]
  %v120 = vld [vmem:[%s0 + $0x298] sm:$0xff]
  %v121 = vld [vmem:[%s0 + $0x2a0] sm:$0xff]
  %v122 = vld [vmem:[%s0 + $0x2a8] sm:$0xff]
  %v123 = vld [vmem:[%s0 + $0x2b0] sm:$0xff]
  %v124 = vld [vmem:[%s0 + $0x2b8] sm:$0xff]
  %v125 = vld [vmem:[%s0 + $0x2c0] sm:$0xff]
  %v126 = vld [vmem:[%s0 + $0x2c8] sm:$0xff]
  %v127 = vld [vmem:[%s0 + $0x2d0] sm:$0xff]
  %v128 = vld [vmem:[%s0 + $0x2d8] sm:$0xff]
  %v129 = vld [vmem:[%s0 + $0x2e0] sm:$0xff]
  %v130 = vld [vmem:[%s0 + $0x2e8] sm:$0xff]
  %v131 = vld [vmem:[%s0 + $0x2f0] sm:$0xff]
  %v132 = vld [vmem:[%s0 + $0x2f8] sm:$0xff]
  %v133 = vld [vmem:[%s0 + $0x300] sm:$0xff]
  %v134 = vld [vmem:[%s0 + $0x308] sm:$0xff]
  %v135 = vld [vmem:[%s0 + $0x310] sm:$0xff]
  %v136 = vld [vmem:[%s0 + $0x318] sm:$0xff]
  %v137 = vld [vmem:[%s0 + $0x320] sm:$0xff]
  %v138 = vld [vmem:[%s0 + $0x328] sm:$0xff]
  %v139 = vld [vmem:[%s0 + $0x330] sm:$0xff]
  %v140 = vld [vmem:[%s0 + $0x338] sm:$0xff]
  %v141 = vld [vmem:[%s0 + $0x340] sm:$0xff]
  %v142 = vld [vmem:[%s0 + $0x348] sm:$0xff]
  %v143 = vld [vmem:[%s0 + $0x350] sm:$0xff]
  %v144 = vld [vmem:[%s0 + $0x358] sm:$0xff]
  %v145 = vld [vmem:[%s0 + $0x360] sm:$0xff]
  %v146 = vld [vmem:[%s0 + $0x368] sm:$0xff]
  %v147 = vld [vmem:[%s0 + $0x370] sm:$0xff]
  %v148 = vld [vmem:[%s0 + $0x378] sm:$0xff]
  %v149 = vld [vmem:[%s0 + $0x380] sm:$0xff]
  %v150 = vld [vmem:[%s0 + $0x388] sm:$0xff]
  %v151 = vld [vmem:[%s0 + $0x390] sm:$0xff]
  %v152 = vld [vmem:[%s0 + $0x398] sm:$0xff]
  %v153 = vld [vmem:[%s0 + $0x3a0] sm:$0xff]
  %v154 = vld [vmem:[%s0 + $0x3a8] sm:$0xff]
  %v155 = vld [vmem:[%s0 + $0x3b0] sm:$0xff]
  %v156 = vld [vmem:[%s0 + $0x3b8] sm:$0xff]
  %v157 = vld [vmem:[%s0 + $0x3c0] sm:$0xff]
  %v158 = vld [vmem:[%s0 + $0x3c8] sm:$0xff]
  %v159 = vld [vmem:[%s0 + $0x3d0] sm:$0xff]
  %v160 = vld [vmem:[%s0 + $0x3d8] sm:$0xff]
  %v161 = vld [vmem:[%s0 + $0x3e0] sm:$0xff]
  %v162 = vld [vmem:[%s0 + $0x3e8] sm:$0xff]
  %v163 = vld [vmem:[%s0 + $0x3f0] sm:$0xff]
  %v164 = vld [vmem:[%s0 + $0x3f8] sm:$0xff]
  %v165 = vld [vmem:[%s0 + $0x400] sm:$0xff]
  %v166 = vld [vmem:[%s0 + $0x408] sm:$0xff]
  %v167 = vld [vmem:[%s0 + $0x410] sm:$0xff]
  %v168 = vld [vmem:[%s0 + $0x418] sm:$0xff]
  %v169 = vld [vmem:[%s0 + $0x420] sm:$0xff]
  %v170 = vld [vmem:[%s0 + $0x428] sm:$0xff]
  %v171 = vld [vmem:[%s0 + $0x430] sm:$0xff]
  %v172 = vld [vmem:[%s0 + $0x438] sm:$0xff]
  %v173 = vld [vmem:[%s0 + $0x440] sm:$0xff]
  %v174 = vld [vmem:[%s0 + $0x448] sm:$0xff]
  %v175 = vld [vmem:[%s0 + $0x450] sm:$0xff]
  %v176 = vld [vmem:[%s0 + $0x458] sm:$0xff]
  %v177 = vld [vmem:[%s0 + $0x460] sm:$0xff]
  %v178 = vld [vmem:[%s0 + $0x468] sm:$0xff]
  %v179 = vld [vmem:[%s0 + $0x470] sm:$0xff]
  %v180 = vld [vmem:[%s0 + $0x478] sm:$0xff]
  %v181 = vld [vmem:[%s0 + $0x480] sm:$0xff]
  %v182 = vld [vmem:[%s0 + $0x488] sm:$0xff]
  %v183 = vld [vmem:[%s0 + $0x490] sm:$0xff]
  %v184 = vld [vmem:[%s0 + $0x498] sm:$0xff]
  %v185 = vld [vmem:[%s0 + $0x4a0] sm:$0xff]
  %v186 = vld [vmem:[%s0 + $0x4a8] sm:$0xff]
  %v187 = vld [vmem:[%s0 + $0x4b0] sm:$0xff]
  %v188 = vld [vmem:[%s0 + $0x4b8] sm:$0xff]
  %v189 = vld [vmem:[%s0 + $0x4c0] sm:$0xff]
  %v190 = vld [vmem:[%s0 + $0x4c8] sm:$0xff]
  %v191 = vld [vmem:[%s0 + $0x4d0] sm:$0xff]
  %v192 = vld [vmem:[%s0 + $0x4d8] sm:$0xff]
  %v193 = vld [vmem:[%s0 + $0x4e0] sm:$0xff]
  %v194 = vld [vmem:[%s0 + $0x4e8] sm:$0xff]
  %v195 = vld [vmem:[%s0 + $0x4f0] sm:$0xff]
  %v196 = vld [vmem:[%s0 + $0x4f8] sm:$0xff]
  %v197 = vld [vmem:[%s0 + $0x500] sm:$0xff]
  %v198 = vld [vmem:[%s0 + $0x508] sm:$0xff]
  %v199 = vld [vmem:[%s0 + $0x510] sm:$0xff]
  %v200 = vld [vmem:[%s0 + $0x518] sm:$0xff]
  %v201 = vld [vmem:[%s0 + $0x520] sm:$0xff]
  %v202 = vld [vmem:[%s0 + $0x528] sm:$0xff]
  %v203 = vld [vmem:[%s0 + $0x530] sm:$0xff]
  %v204 = vld [vmem:[%s0 + $0x538] sm:$0xff]
  %v205 = vld [vmem:[%s0 + $0x540] sm:$0xff]
  %v206 = vld [vmem:[%s0 + $0x548] sm:$0xff]
  %v207 = vld [vmem:[%s0 + $0x550] sm:$0xff]
  %v208 = vld [vmem:[%s0 + $0x558] sm:$0xff]
  %v209 = vld [vmem:[%s0 + $0x560] sm:$0xff]
  %v210 = vld [vmem:[%s0 + $0x568] sm:$0xff]
  %v211 = vld [vmem:[%s0 + $0x570] sm:$0xff]
  %v212 = vld [vmem:[%s0 + $0x578] sm:$0xff]
  %v213 = vld [vmem:[%s0 + $0x580] sm:$0xff]
  %v214 = vld [vmem:[%s0 + $0x588] sm:$0xff]
  %v215 = vld [vmem:[%s0 + $0x590] sm:$0xff]
  %v216 = vld [vmem:[%s0 + $0x598] sm:$0xff]
  %v217 = vld [vmem:[%s0 + $0x5a0] sm:$0xff]
  %v218 = vld [vmem:[%s0 + $0x5a8] sm:$0xff]
  %v219 = vld [vmem:[%s0 + $0x5b0] sm:$0xff]
  %v220 = vld [vmem:[%s0 + $0x5b8] sm:$0xff]
  %v221 = vld [vmem:[%s0 + $0x5c0] sm:$0xff]
  %v222 = vld [vmem:[%s0 + $0x5c8] sm:$0xff]
  %v223 = vld [vmem:[%s0 + $0x5d0] sm:$0xff]
  %v224 = vld [vmem:[%s0 + $0x5d8] sm:$0xff]
  %v225 = vld [vmem:[%s0 + $0x5e0] sm:$0xff]
  %v226 = vld [vmem:[%s0 + $0x5e8] sm:$0xff]
  %v227 = vld [vmem:[%s0 + $0x5f0] sm:$0xff]
  %v228 = vld [vmem:[%s0 + $0x5f8] sm:$0xff]
  %v229 = vld [vmem:[%s0 + $0x600] sm:$0xff]
  %v230 = vld [vmem:[%s0 + $0x608] sm:$0xff]
  %v231 = vld [vmem:[%s0 + $0x610] sm:$0xff]
  %v232 = vld [vmem:[%s0 + $0x618] sm:$0xff]
  %v233 = vld [vmem:[%s0 + $0x620] sm:$0xff]
  %v234 = vld [vmem:[%s0 + $0x628] sm:$0xff]
  %v235 = vld [vmem:[%s0 + $0x630] sm:$0xff]
  %v236 = vld [vmem:[%s0 + $0x638] sm:$0xff]
  %v237 = vld [vmem:[%s0 + $0x640] sm:$0xff]
  %v238 = vld [vmem:[%s0 + $0x648] sm:$0xff]
  %v239 = vld [vmem:[%s0 + $0x650] sm:$0xff]
  %v240 = vld [vmem:[%s0 + $0x658] sm:$0xff]
  %v241 = vld [vmem:[%s0 + $0x660] sm:$0xff]
  %v242 = vld [vmem:[%s0 + $0x668] sm:$0xff]
  %v243 = vld [vmem:[%s0 + $0x670] sm:$0xff]
  %v244 = vld [vmem:[%s0 + $0x678] sm:$0xff]
  %v245 = vld [vmem:[%s0 + $0x680] sm:$0xff]
  %v246 = vld [vmem:[%s0 + $0x688] sm:$0xff]
  %v247 = vld [vmem:[%s0 + $0x690] sm:$0xff]
  %v248 = vld [vmem:[%s0 + $0x698] sm:$0xff]
  %v249 = vld [vmem:[%s0 + $0x6a0] sm:$0xff]
  %v250 = vld [vmem:[%s0 + $0x6a8] sm:$0xff]
  %v251 = vld [vmem:[%s0 + $0x6b0] sm:$0xff]
  %v252 = vld [vmem:[%s0 + $0x6b8] sm:$0xff]
  %v253 = vld [vmem:[%s0 + $0x6c0] sm:$0xff]
  %v254 = vld [vmem:[%s0 + $0x6c8] sm:$0xff]
  %v255 = vld [vmem:[%s0 + $0x6d0] sm:$0xff]
  %v256 = vld [vmem:[%s0 + $0x6d8] sm:$0xff]
  %v257 = vld [vmem:[%s0 + $0x6e0] sm:$0xff]
  %v258 = vld [vmem:[%s0 + $0x6e8] sm:$0xff]
  %v259 = vld [vmem:[%s0 + $0x6f0] sm:$0xff]
  %v260 = vld [vmem:[%s0 + $0x6f8] sm:$0xff]
  %v261 = vld [vmem:[%s0 + $0x700] sm:$0xff]
  %v262 = vld [vmem:[%s0 + $0x708] sm:$0xff]
  %v263 = vld [vmem:[%s0 + $0x710] sm:$0xff]
  %v264 = vld [vmem:[%s0 + $0x718] sm:$0xff]
  %v265 = vld [vmem:[%s0 + $0x720] sm:$0xff]
  %v266 = vld [vmem:[%s0 + $0x728] sm:$0xff]
  %v267 = vld [vmem:[%s0 + $0x730] sm:$0xff]
  %v268 = vld [vmem:[%s0 + $0x738] sm:$0xff]
  %v269 = vld [vmem:[%s0 + $0x740] sm:$0xff]
  %v270 = vld [vmem:[%s0 + $0x748] sm:$0xff]
  %v271 = vld [vmem:[%s0 + $0x750] sm:$0xff]
  %v272 = vld [vmem:[%s0 + $0x758] sm:$0xff]
  %v273 = vld [vmem:[%s0 + $0x760] sm:$0xff]
  %v274 = vld [vmem:[%s0 + $0x768] sm:$0xff]
  %v275 = vld [vmem:[%s0 + $0x770] sm:$0xff]
  %v276 = vld [vmem:[%s0 + $0x778] sm:$0xff]
  %v277 = vld [vmem:[%s0 + $0x780] sm:$0xff]
  %v278 = vld [vmem:[%s0 + $0x788] sm:$0xff]
  %v279 = vld [vmem:[%s0 + $0x790] sm:$0xff]
  %v280 = vld [vmem:[%s0 + $0x798] sm:$0xff]
  %v281 = vld [vmem:[%s0 + $0x7a0] sm:$0xff]
  %v282 = vld [vmem:[%s0 + $0x7a8] sm:$0xff]
  %v283 = vld [vmem:[%s0 + $0x7b0] sm:$0xff]
  %v284 = vld [vmem:[%s0 + $0x7b8] sm:$0xff]
  %v285 = vld [vmem:[%s0 + $0x7c0] sm:$0xff]
  %v286 = vld [vmem:[%s0 + $0x7c8] sm:$0xff]
  %v287 = vld [vmem:[%s0 + $0x7d0] sm:$0xff]
  %v288 = vld [vmem:[%s0 + $0x7d8] sm:$0xff]
  %v289 = vld [vmem:[%s0 + $0x7e0] sm:$0xff]
  %v290 = vld [vmem:[%s0 + $0x7e8] sm:$0xff]
  %v291 = vld [vmem:[%s0 + $0x7f0] sm:$0xff]
  %v292 = vld [vmem:[%s0 + $0x7f8] sm:$0xff]
  %v293 = vld [vmem:[%s0 + $0x800] sm:$0xff]
  %v294 = vld [vmem:[%s0 + $0x808] sm:$0xff]
  %v295 = vld [vmem:[%s0 + $0x810] sm:$0xff]
  %v296 = vld [vmem:[%s0 + $0x818] sm:$0xff]
  %v297 = vld [vmem:[%s0 + $0x820] sm:$0xff]
  %v298 = vld [vmem:[%s0 + $0x828] sm:$0xff]
  %v299 = vld [vmem:[%s0 + $0x830] sm:$0xff]
  %v300 = vld [vmem:[%s0 + $0x838] sm:$0xff]
  %v301 = vld [vmem:[%s0 + $0x840] sm:$0xff]
  %v302 = vld [vmem:[%s0 + $0x848] sm:$0xff]
  %v303 = vld [vmem:[%s0 + $0x850] sm:$0xff]
  %v304 = vld [vmem:[%s0 + $0x858] sm:$0xff]
  %v305 = vld [vmem:[%s0 + $0x860] sm:$0xff]
  %v306 = vld [vmem:[%s0 + $0x868] sm:$0xff]
  %v307 = vld [vmem:[%s0 + $0x870] sm:$0xff]
  %v308 = vld [vmem:[%s0 + $0x878] sm:$0xff]
  %v309 = vld [vmem:[%s0 + $0x880] sm:$0xff]
  %v310 = vld [vmem:[%s0 + $0x888] sm:$0xff]
  %v311 = vld [vmem:[%s0 + $0x890] sm:$0xff]
  %v312 = vld [vmem:[%s0 + $0x898] sm:$0xff]
  %v313 = vld [vmem:[%s0 + $0x8a0] sm:$0xff]
  %v314 = vld [vmem:[%s0 + $0x8a8] sm:$0xff]
  %v315 = vld [vmem:[%s0 + $0x8b0] sm:$0xff]
  %v316 = vld [vmem:[%s0 + $0x8b8] sm:$0xff]
  %v317 = vld [vmem:[%s0 + $0x8c0] sm:$0xff]
  %v318 = vld [vmem:[%s0 + $0x8c8] sm:$0xff]
  %v319 = vld [vmem:[%s0 + $0x8d0] sm:$0xff]
  %v320 = vld [vmem:[%s0 + $0x8d8] sm:$0xff]
  %v321 = vld [vmem:[%s0 + $0x8e0] sm:$0xff]
  %v322 = vld [vmem:[%s0 + $0x8e8] sm:$0xff]
  %v323 = vld [vmem:[%s0 + $0x8f0] sm:$0xff]
  %v324 = vld [vmem:[%s0 + $0x8f8] sm:$0xff]
  %v325 = vld [vmem:[%s0 + $0x900] sm:$0xff]
  %v326 = vld [vmem:[%s0 + $0x908] sm:$0xff]
  %v327 = vld [vmem:[%s0 + $0x910] sm:$0xff]
  %v328 = vld [vmem:[%s0 + $0x918] sm:$0xff]
  %v329 = vld [vmem:[%s0 + $0x920] sm:$0xff]
  %v330 = vld [vmem:[%s0 + $0x928] sm:$0xff]
  %v331 = vld [vmem:[%s0 + $0x930] sm:$0xff]
  %v332 = vld [vmem:[%s0 + $0x938] sm:$0xff]
  %v333 = vld [vmem:[%s0 + $0x940] sm:$0xff]
  %v334 = vld [vmem:[%s0 + $0x948] sm:$0xff]
  %v335 = vld [vmem:[%s0 + $0x950] sm:$0xff]
  %v336 = vld [vmem:[%s0 + $0x958] sm:$0xff]
  %v337 = vld [vmem:[%s0 + $0x960] sm:$0xff]
  %v338 = vld [vmem:[%s0 + $0x968] sm:$0xff]
  %v339 = vld [vmem:[%s0 + $0x970] sm:$0xff]
  %v340 = vld [vmem:[%s0 + $0x978] sm:$0xff]
  %v341 = vld [vmem:[%s0 + $0x980] sm:$0xff]
  %v342 = vld [vmem:[%s0 + $0x988] sm:$0xff]
  %v343 = vld [vmem:[%s0 + $0x990] sm:$0xff]
  %v344 = vld [vmem:[%s0 + $0x998] sm:$0xff]
  %v345 = vld [vmem:[%s0 + $0x9a0] sm:$0xff]
  %v346 = vld [vmem:[%s0 + $0x9a8] sm:$0xff]
  %v347 = vld [vmem:[%s0 + $0x9b0] sm:$0xff]
  %v348 = vld [vmem:[%s0 + $0x9b8] sm:$0xff]
  %v349 = vld [vmem:[%s0 + $0x9c0] sm:$0xff]
  %v350 = vld [vmem:[%s0 + $0x9c8] sm:$0xff]
  %v351 = vld [vmem:[%s0 + $0x9d0] sm:$0xff]
  %v352 = vld [vmem:[%s0 + $0x9d8] sm:$0xff]
  %v353 = vld [vmem:[%s0 + $0x9e0] sm:$0xff]
  %v354 = vld [vmem:[%s0 + $0x9e8] sm:$0xff]
  %v355 = vld [vmem:[%s0 + $0x9f0] sm:$0xff]
  %v356 = vld [vmem:[%s0 + $0x9f8] sm:$0xff]
  %v357 = vld [vmem:[%s0 + $0xa00] sm:$0xff]
  %v358 = vld [vmem:[%s0 + $0xa08] sm:$0xff]
  %v359 = vld [vmem:[%s0 + $0xa10] sm:$0xff]
  %v360 = vld [vmem:[%s0 + $0xa18] sm:$0xff]
  %v361 = vld [vmem:[%s0 + $0xa20] sm:$0xff]
  %v362 = vld [vmem:[%s0 + $0xa28] sm:$0xff]
  %v363 = vld [vmem:[%s0 + $0xa30] sm:$0xff]
  %v364 = vld [vmem:[%s0 + $0xa38] sm:$0xff]
  %v365 = vld [vmem:[%s0 + $0xa40] sm:$0xff]
  %v366 = vld [vmem:[%s0 + $0xa48] sm:$0xff]
  %v367 = vld [vmem:[%s0 + $0xa50] sm:$0xff]
  %v368 = vld [vmem:[%s0 + $0xa58] sm:$0xff]
  %v369 = vld [vmem:[%s0 + $0xa60] sm:$0xff]
  %v370 = vld [vmem:[%s0 + $0xa68] sm:$0xff]
  %v371 = vld [vmem:[%s0 + $0xa70] sm:$0xff]
  %v372 = vld [vmem:[%s0 + $0xa78] sm:$0xff]
  %v373 = vld [vmem:[%s0 + $0xa80] sm:$0xff]
  %v374 = vld [vmem:[%s0 + $0xa88] sm:$0xff]
  %v375 = vld [vmem:[%s0 + $0xa90] sm:$0xff]
  %v376 = vld [vmem:[%s0 + $0xa98] sm:$0xff]
  %v377 = vld [vmem:[%s0 + $0xaa0] sm:$0xff]
  %v378 = vld [vmem:[%s0 + $0xaa8] sm:$0xff]
  %v379 = vld [vmem:[%s0 + $0xab0] sm:$0xff]
  %v380 = vld [vmem:[%s0 + $0xab8] sm:$0xff]
  %v381 = vld [vmem:[%s0 + $0xac0] sm:$0xff]
  %v382 = vld [vmem:[%s0 + $0xac8] sm:$0xff]
  %v383 = vld [vmem:[%s0 + $0xad0] sm:$0xff]
  %v384 = vld [vmem:[%s0 + $0xad8] sm:$0xff]
  %v385 = vld [vmem:[%s0 + $0xae0] sm:$0xff]
  %v386 = vld [vmem:[%s0 + $0xae8] sm:$0xff]
  %v387 = vld [vmem:[%s0 + $0xaf0] sm:$0xff]
  %v388 = vld [vmem:[%s0 + $0xaf8] sm:$0xff]
  %v389 = vld [vmem:[%s0 + $0xb00] sm:$0xff]
  %v390 = vld [vmem:[%s0 + $0xb08] sm:$0xff]
  %v391 = vld [vmem:[%s0 + $0xb10] sm:$0xff]
  %v392 = vld [vmem:[%s0 + $0xb18] sm:$0xff]
  %v393 = vld [vmem:[%s0 + $0xb20] sm:$0xff]
  %v394 = vld [vmem:[%s0 + $0xb28] sm:$0xff]
  %v395 = vld [vmem:[%s0 + $0xb30] sm:$0xff]
  %v396 = vld [vmem:[%s0 + $0xb38] sm:$0xff]
  %v397 = vld [vmem:[%s0 + $0xb40] sm:$0xff]
  %v398 = vld [vmem:[%s0 + $0xb48] sm:$0xff]
  %v399 = vld [vmem:[%s0 + $0xb50] sm:$0xff]
  %v400 = vld [vmem:[%s0 + $0xb58] sm:$0xff]
  %v401 = vld [vmem:[%s0 + $0xb60] sm:$0xff]
  %v402 = vld [vmem:[%s0 + $0xb68] sm:$0xff]
  %v403 = vld [vmem:[%s0 + $0xb70] sm:$0xff]
  %v404 = vld [vmem:[%s0 + $0xb78] sm:$0xff]
  %v405 = vld [vmem:[%s0 + $0xb80] sm:$0xff]
  %v406 = vld [vmem:[%s0 + $0xb88] sm:$0xff]
  %v407 = vld [vmem:[%s0 + $0xb90] sm:$0xff]
  %v408 = vld [vmem:[%s0 + $0xb98] sm:$0xff]
  %v409 = vld [vmem:[%s0 + $0xba0] sm:$0xff]
  %v410 = vld [vmem:[%s0 + $0xba8] sm:$0xff]
  %v411 = vld [vmem:[%s0 + $0xbb0] sm:$0xff]
  %v412 = vld [vmem:[%s0 + $0xbb8] sm:$0xff]
  %v413 = vld [vmem:[%s0 + $0xbc0] sm:$0xff]
  %v414 = vld [vmem:[%s0 + $0xbc8] sm:$0xff]
  %v415 = vld [vmem:[%s0 + $0xbd0] sm:$0xff]
  %v416 = vld [vmem:[%s0 + $0xbd8] sm:$0xff]
  %v417 = vld [vmem:[%s0 + $0xbe0] sm:$0xff]
  %v418 = vld [vmem:[%s0 + $0xbe8] sm:$0xff]
  %v419 = vld [vmem:[%s0 + $0xbf0] sm:$0xff]
  %v420 = vld [vmem:[%s0 + $0xbf8] sm:$0xff]
  %v421 = vld [vmem:[%s0 + $0xc00] sm:$0xff]
  %v422 = vld [vmem:[%s0 + $0xc08] sm:$0xff]
  %v423 = vld [vmem:[%s0 + $0xc10] sm:$0xff]
  %v424 = vld [vmem:[%s0 + $0xc18] sm:$0xff]
  %v425 = vld [vmem:[%s0 + $0xc20] sm:$0xff]
  %v426 = vld [vmem:[%s0 + $0xc28] sm:$0xff]
  %v427 = vld [vmem:[%s0 + $0xc30] sm:$0xff]
  %v428 = vld [vmem:[%s0 + $0xc38] sm:$0xff]
  %v429 = vld [vmem:[%s0 + $0xc40] sm:$0xff]
  %v430 = vld [vmem:[%s0 + $0xc48] sm:$0xff]
  %v431 = vld [vmem:[%s0 + $0xc50] sm:$0xff]
  %v432 = vld [vmem:[%s0 + $0xc58] sm:$0xff]
  %v433 = vld [vmem:[%s0 + $0xc60] sm:$0xff]
  %v434 = vld [vmem:[%s0 + $0xc68] sm:$0xff]
  %v435 = vld [vmem:[%s0 + $0xc70] sm:$0xff]
  %v436 = vld [vmem:[%s0 + $0xc78] sm:$0xff]
  %v437 = vld [vmem:[%s0 + $0xc80] sm:$0xff]
  %v438 = vld [vmem:[%s0 + $0xc88] sm:$0xff]
  %v439 = vld [vmem:[%s0 + $0xc90] sm:$0xff]
  %v440 = vld [vmem:[%s0 + $0xc98] sm:$0xff]
  %v441 = vld [vmem:[%s0 + $0xca0] sm:$0xff]
  %v442 = vld [vmem:[%s0 + $0xca8] sm:$0xff]
  %v443 = vld [vmem:[%s0 + $0xcb0] sm:$0xff]
  %v444 = vld [vmem:[%s0 + $0xcb8] sm:$0xff]
  %v445 = vld [vmem:[%s0 + $0xcc0] sm:$0xff]
  %v446 = vld [vmem:[%s0 + $0xcc8] sm:$0xff]
  %v447 = vld [vmem:[%s0 + $0xcd0] sm:$0xff]
  %v448 = vld [vmem:[%s0 + $0xcd8] sm:$0xff]
  %v449 = vld [vmem:[%s0 + $0xce0] sm:$0xff]
  %v450 = vld [vmem:[%s0 + $0xce8] sm:$0xff]
  %v451 = vld [vmem:[%s0 + $0xcf0] sm:$0xff]
  %v452 = vld [vmem:[%s0 + $0xcf8] sm:$0xff]
  %v453 = vld [vmem:[%s0 + $0xd00] sm:$0xff]
  %v454 = vld [vmem:[%s0 + $0xd08] sm:$0xff]
  %v455 = vld [vmem:[%s0 + $0xd10] sm:$0xff]
  %v456 = vld [vmem:[%s0 + $0xd18] sm:$0xff]
  %v457 = vld [vmem:[%s0 + $0xd20] sm:$0xff]
  %v458 = vld [vmem:[%s0 + $0xd28] sm:$0xff]
  %v459 = vld [vmem:[%s0 + $0xd30] sm:$0xff]
  %v460 = vld [vmem:[%s0 + $0xd38] sm:$0xff]
  %v461 = vld [vmem:[%s0 + $0xd40] sm:$0xff]
  %v462 = vld [vmem:[%s0 + $0xd48] sm:$0xff]
  %v463 = vld [vmem:[%s0 + $0xd50] sm:$0xff]
  %v464 = vld [vmem:[%s0 + $0xd58] sm:$0xff]
  %v465 = vld [vmem:[%s0 + $0xd60] sm:$0xff]
  %v466 = vld [vmem:[%s0 + $0xd68] sm:$0xff]
  %v467 = vld [vmem:[%s0 + $0xd70] sm:$0xff]
  %v468 = vld [vmem:[%s0 + $0xd78] sm:$0xff]
  %v469 = vld [vmem:[%s0 + $0xd80] sm:$0xff]
  %v470 = vld [vmem:[%s0 + $0xd88] sm:$0xff]
  %v471 = vld [vmem:[%s0 + $0xd90] sm:$0xff]
  %v472 = vld [vmem:[%s0 + $0xd98] sm:$0xff]
  %v473 = vld [vmem:[%s0 + $0xda0] sm:$0xff]
  %v474 = vld [vmem:[%s0 + $0xda8] sm:$0xff]
  %v475 = vld [vmem:[%s0 + $0xdb0] sm:$0xff]
  %v476 = vld [vmem:[%s0 + $0xdb8] sm:$0xff]
  %v477 = vld [vmem:[%s0 + $0xdc0] sm:$0xff]
  %v478 = vld [vmem:[%s0 + $0xdc8] sm:$0xff]
  %v479 = vld [vmem:[%s0 + $0xdd0] sm:$0xff]
  %v480 = vld [vmem:[%s0 + $0xdd8] sm:$0xff]
  %v481 = vld [vmem:[%s0 + $0xde0] sm:$0xff]
  %v482 = vld [vmem:[%s0 + $0xde8] sm:$0xff]
  %v483 = vld [vmem:[%s0 + $0xdf0] sm:$0xff]
  %v484 = vld [vmem:[%s0 + $0xdf8] sm:$0xff]
  %v485 = vld [vmem:[%s0 + $0xe00] sm:$0xff]
  %v486 = vld [vmem:[%s0 + $0xe08] sm:$0xff]
  %v487 = vld [vmem:[%s0 + $0xe10] sm:$0xff]
  %v488 = vld [vmem:[%s0 + $0xe18] sm:$0xff]
  %v489 = vld [vmem:[%s0 + $0xe20] sm:$0xff]
  %v490 = vld [vmem:[%s0 + $0xe28] sm:$0xff]
  %v491 = vld [vmem:[%s0 + $0xe30] sm:$0xff]
  %v492 = vld [vmem:[%s0 + $0xe38] sm:$0xff]
  %v493 = vld [vmem:[%s0 + $0xe40] sm:$0xff]
  %v494 = vld [vmem:[%s0 + $0xe48] sm:$0xff]
  %v495 = vld [vmem:[%s0 + $0xe50] sm:$0xff]
  %v496 = vld [vmem:[%s0 + $0xe58] sm:$0xff]
  %v497 = vld [vmem:[%s0 + $0xe60] sm:$0xff]
  %v498 = vld [vmem:[%s0 + $0xe68] sm:$0xff]
  %v499 = vld [vmem:[%s0 + $0xe70] sm:$0xff]
  %v500 = vld [vmem:[%s0 + $0xe78] sm:$0xff]
  %v501 = vld [vmem:[%s0 + $0xe80] sm:$0xff]
  %v502 = vld [vmem:[%s0 + $0xe88] sm:$0xff]
  %v503 = vld [vmem:[%s0 + $0xe90] sm:$0xff]
  %v504 = vld [vmem:[%s0 + $0xe98] sm:$0xff]
  %v505 = vld [vmem:[%s0 + $0xea0] sm:$0xff]
  %v506 = vld [vmem:[%s0 + $0xea8] sm:$0xff]
  %v507 = vld [vmem:[%s0 + $0xeb0] sm:$0xff]
  %v508 = vld [vmem:[%s0 + $0xeb8] sm:$0xff]
  %v509 = vld [vmem:[%s0 + $0xec0] sm:$0xff]
  %v510 = vld [vmem:[%s0 + $0xec8] sm:$0xff]
  %v511 = vld [vmem:[%s0 + $0xed0] sm:$0xff]
  %v512 = vld [vmem:[%s0 + $0xed8] sm:$0xff]
  %v513 = vld [vmem:[%s0 + $0xee0] sm:$0xff]
  %v514 = vld [vmem:[%s0 + $0xee8] sm:$0xff]
  %v515 = vld [vmem:[%s0 + $0xef0] sm:$0xff]
  %v516 = vld [vmem:[%s0 + $0xef8] sm:$0xff]
  %v517 = vld [vmem:[%s0 + $0xf00] sm:$0xff]
  %v518 = vld [vmem:[%s0 + $0xf08] sm:$0xff]
  %v519 = vld [vmem:[%s0 + $0xf10] sm:$0xff]
  %v520 = vld [vmem:[%s0 + $0xf18] sm:$0xff]
  %v521 = vld [vmem:[%s0 + $0xf20] sm:$0xff]
  %v522 = vld [vmem:[%s0 + $0xf28] sm:$0xff]
  %v523 = vld [vmem:[%s0 + $0xf30] sm:$0xff]
  %v524 = vld [vmem:[%s0 + $0xf38] sm:$0xff]
  %v525 = vld [vmem:[%s0 + $0xf40] sm:$0xff]
  %v526 = vld [vmem:[%s0 + $0xf48] sm:$0xff]
  %v527 = vld [vmem:[%s0 + $0xf50] sm:$0xff]
  %v528 = vld [vmem:[%s0 + $0xf58] sm:$0xff]
  %v529 = vld [vmem:[%s0 + $0xf60] sm:$0xff]
  %v530 = vld [vmem:[%s0 + $0xf68] sm:$0xff]
  %v531 = vld [vmem:[%s0 + $0xf70] sm:$0xff]
  %v532 = vld [vmem:[%s0 + $0xf78] sm:$0xff]
  %v533 = vld [vmem:[%s0 + $0xf80] sm:$0xff]
  %v534 = vld [vmem:[%s0 + $0xf88] sm:$0xff]
  %v535 = vld [vmem:[%s0 + $0xf90] sm:$0xff]
  %v536 = vld [vmem:[%s0 + $0xf98] sm:$0xff]
  %v537 = vld [vmem:[%s0 + $0xfa0] sm:$0xff]
  %v538 = vld [vmem:[%s0 + $0xfa8] sm:$0xff]
  %v539 = vld [vmem:[%s0 + $0xfb0] sm:$0xff]
  %v540 = vld [vmem:[%s0 + $0xfb8] sm:$0xff]
  %v541 = vld [vmem:[%s0 + $0xfc0] sm:$0xff]
  %v542 = vld [vmem:[%s0 + $0xfc8] sm:$0xff]
  %v543 = vld [vmem:[%s0 + $0xfd0] sm:$0xff]
  %v544 = vld [vmem:[%s0 + $0xfd8] sm:$0xff]
  %v545 = vld [vmem:[%s0 + $0xfe0] sm:$0xff]
  %v546 = vld [vmem:[%s0 + $0xfe8] sm:$0xff]
  %v547 = vld [vmem:[%s0 + $0xff0] sm:$0xff]
  %v548 = vld [vmem:[%s0 + $0xff8] sm:$0xff]
  %v549 = vld [vmem:[%s0 + $0x1000] sm:$0xff]
  %v550 = vld [vmem:[%s0 + $0x1008] sm:$0xff]
  %v551 = vld [vmem:[%s0 + $0x1010] sm:$0xff]
  %v552 = vld [vmem:[%s0 + $0x1018] sm:$0xff]
  %v553 = vld [vmem:[%s0 + $0x1020] sm:$0xff]
  %v554 = vld [vmem:[%s0 + $0x1028] sm:$0xff]
  %v555 = vld [vmem:[%s0 + $0x1030] sm:$0xff]
  %v556 = vld [vmem:[%s0 + $0x1038] sm:$0xff]
  %v557 = vld [vmem:[%s0 + $0x1040] sm:$0xff]
  %v558 = vld [vmem:[%s0 + $0x1048] sm:$0xff]
  %v559 = vld [vmem:[%s0 + $0x1050] sm:$0xff]
  %v560 = vld [vmem:[%s0 + $0x1058] sm:$0xff]
  %v561 = vld [vmem:[%s0 + $0x1060] sm:$0xff]
  %v562 = vld [vmem:[%s0 + $0x1068] sm:$0xff]
  %v563 = vld [vmem:[%s0 + $0x1070] sm:$0xff]
  %v564 = vld [vmem:[%s0 + $0x1078] sm:$0xff]
  %v565 = vld [vmem:[%s0 + $0x1080] sm:$0xff]
  %v566 = vld [vmem:[%s0 + $0x1088] sm:$0xff]
  %v567 = vld [vmem:[%s0 + $0x1090] sm:$0xff]
  %v568 = vld [vmem:[%s0 + $0x1098] sm:$0xff]
  %v569 = vld [vmem:[%s0 + $0x10a0] sm:$0xff]
  %v570 = vld [vmem:[%s0 + $0x10a8] sm:$0xff]
  %v571 = vld [vmem:[%s0 + $0x10b0] sm:$0xff]
  %v572 = vld [vmem:[%s0 + $0x10b8] sm:$0xff]
  %v573 = vld [vmem:[%s0 + $0x10c0] sm:$0xff]
  %v574 = vld [vmem:[%s0 + $0x10c8] sm:$0xff]
  %v575 = vld [vmem:[%s0 + $0x10d0] sm:$0xff]
  %v576 = vld [vmem:[%s0 + $0x10d8] sm:$0xff]
  %v577 = vld [vmem:[%s0 + $0x10e0] sm:$0xff]
  %v578 = vld [vmem:[%s0 + $0x10e8] sm:$0xff]
  %v579 = vld [vmem:[%s0 + $0x10f0] sm:$0xff]
  %v580 = vld [vmem:[%s0 + $0x10f8] sm:$0xff]
  %v581 = vld [vmem:[%s0 + $0x1100] sm:$0xff]
  %v582 = vld [vmem:[%s0 + $0x1108] sm:$0xff]
  %v583 = vld [vmem:[%s0 + $0x1110] sm:$0xff]
  %v584 = vld [vmem:[%s0 + $0x1118] sm:$0xff]
  %v585 = vld [vmem:[%s0 + $0x1120] sm:$0xff]
  %v586 = vld [vmem:[%s0 + $0x1128] sm:$0xff]
  %v587 = vld [vmem:[%s0 + $0x1130] sm:$0xff]
  %v588 = vld [vmem:[%s0 + $0x1138] sm:$0xff]
  %v589 = vld [vmem:[%s0 + $0x1140] sm:$0xff]
  %v590 = vld [vmem:[%s0 + $0x1148] sm:$0xff]
  %v591 = vld [vmem:[%s0 + $0x1150] sm:$0xff]
  %v592 = vld [vmem:[%s0 + $0x1158] sm:$0xff]
  %v593 = vld [vmem:[%s0 + $0x1160] sm:$0xff]
  %v594 = vld [vmem:[%s0 + $0x1168] sm:$0xff]
  %v595 = vld [vmem:[%s0 + $0x1170] sm:$0xff]
  %v596 = vld [vmem:[%s0 + $0x1178] sm:$0xff]
  %v597 = vld [vmem:[%s0 + $0x1180] sm:$0xff]
  %v598 = vld [vmem:[%s0 + $0x1188] sm:$0xff]
  %v599 = vld [vmem:[%s0 + $0x1190] sm:$0xff]
  %v600 = vld [vmem:[%s0 + $0x1198] sm:$0xff]
  %v601 = vld [vmem:[%s0 + $0x11a0] sm:$0xff]
  %v602 = vld [vmem:[%s0 + $0x11a8] sm:$0xff]
  %v603 = vld [vmem:[%s0 + $0x11b0] sm:$0xff]
  %v604 = vld [vmem:[%s0 + $0x11b8] sm:$0xff]
  %v605 = vld [vmem:[%s0 + $0x11c0] sm:$0xff]
  %v606 = vld [vmem:[%s0 + $0x11c8] sm:$0xff]
  %v607 = vld [vmem:[%s0 + $0x11d0] sm:$0xff]
  %v608 = vld [vmem:[%s0 + $0x11d8] sm:$0xff]
  %v609 = vld [vmem:[%s0 + $0x11e0] sm:$0xff]
  %v610 = vld [vmem:[%s0 + $0x11e8] sm:$0xff]
  %v611 = vld [vmem:[%s0 + $0x11f0] sm:$0xff]
  %v612 = vld [vmem:[%s0 + $0x11f8] sm:$0xff]
  %v613 = vld [vmem:[%s0 + $0x1200] sm:$0xff]
  %v614 = vld [vmem:[%s0 + $0x1208] sm:$0xff]
  %v615 = vld [vmem:[%s0 + $0x1210] sm:$0xff]
  %v616 = vld [vmem:[%s0 + $0x1218] sm:$0xff]
  %v617 = vld [vmem:[%s0 + $0x1220] sm:$0xff]
  %v618 = vld [vmem:[%s0 + $0x1228] sm:$0xff]
  %v619 = vld [vmem:[%s0 + $0x1230] sm:$0xff]
  %v620 = vld [vmem:[%s0 + $0x1238] sm:$0xff]
  %v621 = vld [vmem:[%s0 + $0x1240] sm:$0xff]
  %v622 = vld [vmem:[%s0 + $0x1248] sm:$0xff]
  %v623 = vld [vmem:[%s0 + $0x1250] sm:$0xff]
  %v624 = vld [vmem:[%s0 + $0x1258] sm:$0xff]
  %v625 = vld [vmem:[%s0 + $0x1260] sm:$0xff]
  %v626 = vld [vmem:[%s0 + $0x1268] sm:$0xff]
  %v627 = vld [vmem:[%s0 + $0x1270] sm:$0xff]
  %v628 = vld [vmem:[%s0 + $0x1278] sm:$0xff]
  %v629 = vld [vmem:[%s0 + $0x1280] sm:$0xff]
  %v630 = vld [vmem:[%s0 + $0x1288] sm:$0xff]
  %v631 = vld [vmem:[%s0 + $0x1290] sm:$0xff]
  %v632 = vld [vmem:[%s0 + $0x1298] sm:$0xff]
  %v633 = vld [vmem:[%s0 + $0x12a0] sm:$0xff]
  %v634 = vld [vmem:[%s0 + $0x12a8] sm:$0xff]
  %v635 = vld [vmem:[%s0 + $0x12b0] sm:$0xff]
  %v636 = vld [vmem:[%s0 + $0x12b8] sm:$0xff]
  %v637 = vld [vmem:[%s0 + $0x12c0] sm:$0xff]
  %v638 = vld [vmem:[%s0 + $0x12c8] sm:$0xff]
  %v639 = vld [vmem:[%s0 + $0x12d0] sm:$0xff]
  %v640 = vld [vmem:[%s0 + $0x12d8] sm:$0xff]
  %v641 = vld [vmem:[%s0 + $0x12e0] sm:$0xff]
  %v642 = vld [vmem:[%s0 + $0x12e8] sm:$0xff]
  %v643 = vld [vmem:[%s0 + $0x12f0] sm:$0xff]
  %v644 = vld [vmem:[%s0 + $0x12f8] sm:$0xff]
  %v645 = vld [vmem:[%s0 + $0x1300] sm:$0xff]
  %v646 = vld [vmem:[%s0 + $0x1308] sm:$0xff]
  %v647 = vld [vmem:[%s0 + $0x1310] sm:$0xff]
  %v648 = vld [vmem:[%s0 + $0x1318] sm:$0xff]
  %v649 = vld [vmem:[%s0 + $0x1320] sm:$0xff]
  %v650 = vld [vmem:[%s0 + $0x1328] sm:$0xff]
  %v651 = vld [vmem:[%s0 + $0x1330] sm:$0xff]
  %v652 = vld [vmem:[%s0 + $0x1338] sm:$0xff]
  %v653 = vld [vmem:[%s0 + $0x1340] sm:$0xff]
  %v654 = vld [vmem:[%s0 + $0x1348] sm:$0xff]
  %v655 = vld [vmem:[%s0 + $0x1350] sm:$0xff]
  %v656 = vld [vmem:[%s0 + $0x1358] sm:$0xff]
  %v657 = vld [vmem:[%s0 + $0x1360] sm:$0xff]
  %v658 = vld [vmem:[%s0 + $0x1368] sm:$0xff]
  %v659 = vld [vmem:[%s0 + $0x1370] sm:$0xff]
  %v660 = vld [vmem:[%s0 + $0x1378] sm:$0xff]
  %v661 = vld [vmem:[%s0 + $0x1380] sm:$0xff]
  %v662 = vld [vmem:[%s0 + $0x1388] sm:$0xff]
  %v663 = vld [vmem:[%s0 + $0x1390] sm:$0xff]
  %v664 = vld [vmem:[%s0 + $0x1398] sm:$0xff]
  %v665 = vld [vmem:[%s0 + $0x13a0] sm:$0xff]
  %v666 = vld [vmem:[%s0 + $0x13a8] sm:$0xff]
  %v667 = vld [vmem:[%s0 + $0x13b0] sm:$0xff]
  %v668 = vld [vmem:[%s0 + $0x13b8] sm:$0xff]
  %v669 = vld [vmem:[%s0 + $0x13c0] sm:$0xff]
  %v670 = vld [vmem:[%s0 + $0x13c8] sm:$0xff]
  %v671 = vld [vmem:[%s0 + $0x13d0] sm:$0xff]
  %v672 = vld [vmem:[%s0 + $0x13d8] sm:$0xff]
  %v673 = vld [vmem:[%s0 + $0x13e0] sm:$0xff]
  %v674 = vld [vmem:[%s0 + $0x13e8] sm:$0xff]
  %v675 = vld [vmem:[%s0 + $0x13f0] sm:$0xff]
  %v676 = vld [vmem:[%s0 + $0x13f8] sm:$0xff]
  %v677 = vld [vmem:[%s0 + $0x1400] sm:$0xff]
  %v678 = vld [vmem:[%s0 + $0x1408] sm:$0xff]
  %v679 = vld [vmem:[%s0 + $0x1410] sm:$0xff]
  %v680 = vld [vmem:[%s0 + $0x1418] sm:$0xff]
  %v681 = vld [vmem:[%s0 + $0x1420] sm:$0xff]
  %v682 = vld [vmem:[%s0 + $0x1428] sm:$0xff]
  %v683 = vld [vmem:[%s0 + $0x1430] sm:$0xff]
  %v684 = vld [vmem:[%s0 + $0x1438] sm:$0xff]
  %v685 = vld [vmem:[%s0 + $0x1440] sm:$0xff]
  %v686 = vld [vmem:[%s0 + $0x1448] sm:$0xff]
  %v687 = vld [vmem:[%s0 + $0x1450] sm:$0xff]
  %v688 = vld [vmem:[%s0 + $0x1458] sm:$0xff]
  %v689 = vld [vmem:[%s0 + $0x1460] sm:$0xff]
  %v690 = vld [vmem:[%s0 + $0x1468] sm:$0xff]
  %v691 = vld [vmem:[%s0 + $0x1470] sm:$0xff]
  %v692 = vld [vmem:[%s0 + $0x1478] sm:$0xff]
  %v693 = vld [vmem:[%s0 + $0x1480] sm:$0xff]
  %v694 = vld [vmem:[%s0 + $0x1488] sm:$0xff]
  %v695 = vld [vmem:[%s0 + $0x1490] sm:$0xff]
  %v696 = vld [vmem:[%s0 + $0x1498] sm:$0xff]
  %v697 = vld [vmem:[%s0 + $0x14a0] sm:$0xff]
  %v698 = vld [vmem:[%s0 + $0x14a8] sm:$0xff]
  %v699 = vld [vmem:[%s0 + $0x14b0] sm:$0xff]
  %v700 = vld [vmem:[%s0 + $0x14b8] sm:$0xff]
  %v701 = vld [vmem:[%s0 + $0x14c0] sm:$0xff]
  %v702 = vld [vmem:[%s0 + $0x14c8] sm:$0xff]
  %v703 = vld [vmem:[%s0 + $0x14d0] sm:$0xff]
  %v704 = vld [vmem:[%s0 + $0x14d8] sm:$0xff]
  %v705 = vld [vmem:[%s0 + $0x14e0] sm:$0xff]
  %v706 = vld [vmem:[%s0 + $0x14e8] sm:$0xff]
  %v707 = vld [vmem:[%s0 + $0x14f0] sm:$0xff]
  %v708 = vld [vmem:[%s0 + $0x14f8] sm:$0xff]
  %v709 = vld [vmem:[%s0 + $0x1500] sm:$0xff]
  %v710 = vld [vmem:[%s0 + $0x1508] sm:$0xff]
  %v711 = vld [vmem:[%s0 + $0x1510] sm:$0xff]
  %v712 = vld [vmem:[%s0 + $0x1518] sm:$0xff]
  %v713 = vld [vmem:[%s0 + $0x1520] sm:$0xff]
  %v714 = vld [vmem:[%s0 + $0x1528] sm:$0xff]
  %v715 = vld [vmem:[%s0 + $0x1530] sm:$0xff]
  %v716 = vld [vmem:[%s0 + $0x1538] sm:$0xff]
  %v717 = vld [vmem:[%s0 + $0x1540] sm:$0xff]
  %v718 = vld [vmem:[%s0 + $0x1548] sm:$0xff]
  %v719 = vld [vmem:[%s0 + $0x1550] sm:$0xff]
  %v720 = vld [vmem:[%s0 + $0x1558] sm:$0xff]
  %v721 = vld [vmem:[%s0 + $0x1560] sm:$0xff]
  %v722 = vld [vmem:[%s0 + $0x1568] sm:$0xff]
  %v723 = vld [vmem:[%s0 + $0x1570] sm:$0xff]
  %v724 = vld [vmem:[%s0 + $0x1578] sm:$0xff]
  %v725 = vld [vmem:[%s0 + $0x1580] sm:$0xff]
  %v726 = vld [vmem:[%s0 + $0x1588] sm:$0xff]
  %v727 = vld [vmem:[%s0 + $0x1590] sm:$0xff]
  %v728 = vld [vmem:[%s0 + $0x1598] sm:$0xff]
  %v729 = vld [vmem:[%s0 + $0x15a0] sm:$0xff]
  %v730 = vld [vmem:[%s0 + $0x15a8] sm:$0xff]
  %v731 = vld [vmem:[%s0 + $0x15b0] sm:$0xff]
  %v732 = vld [vmem:[%s0 + $0x15b8] sm:$0xff]
  %v733 = vld [vmem:[%s0 + $0x15c0] sm:$0xff]
  %v734 = vld [vmem:[%s0 + $0x15c8] sm:$0xff]
  %v735 = vld [vmem:[%s0 + $0x15d0] sm:$0xff]
  %v736 = vld [vmem:[%s0 + $0x15d8] sm:$0xff]
  %v737 = vld [vmem:[%s0 + $0x15e0] sm:$0xff]
  %v738 = vld [vmem:[%s0 + $0x15e8] sm:$0xff]
  %v739 = vld [vmem:[%s0 + $0x15f0] sm:$0xff]
  %v740 = vld [vmem:[%s0 + $0x15f8] sm:$0xff]
  %v741 = vld [vmem:[%s0 + $0x1600] sm:$0xff]
  %v742 = vld [vmem:[%s0 + $0x1608] sm:$0xff]
  %v743 = vld [vmem:[%s0 + $0x1610] sm:$0xff]
  %v744 = vld [vmem:[%s0 + $0x1618] sm:$0xff]
  %v745 = vld [vmem:[%s0 + $0x1620] sm:$0xff]
  %v746 = vld [vmem:[%s0 + $0x1628] sm:$0xff]
  %v747 = vld [vmem:[%s0 + $0x1630] sm:$0xff]
  %v748 = vld [vmem:[%s0 + $0x1638] sm:$0xff]
  %v749 = vld [vmem:[%s0 + $0x1640] sm:$0xff]
  %v750 = vld [vmem:[%s0 + $0x1648] sm:$0xff]
  %v751 = vld [vmem:[%s0 + $0x1650] sm:$0xff]
  %v752 = vld [vmem:[%s0 + $0x1658] sm:$0xff]
  %v753 = vld [vmem:[%s0 + $0x1660] sm:$0xff]
  %v754 = vld [vmem:[%s0 + $0x1668] sm:$0xff]
  %v755 = vld [vmem:[%s0 + $0x1670] sm:$0xff]
  %v756 = vld [vmem:[%s0 + $0x1678] sm:$0xff]
  %v757 = vld [vmem:[%s0 + $0x1680] sm:$0xff]
  %v758 = vld [vmem:[%s0 + $0x1688] sm:$0xff]
  %v759 = vld [vmem:[%s0 + $0x1690] sm:$0xff]
  %v760 = vld [vmem:[%s0 + $0x1698] sm:$0xff]
  %v761 = vld [vmem:[%s0 + $0x16a0] sm:$0xff]
  %v762 = vld [vmem:[%s0 + $0x16a8] sm:$0xff]
  %v763 = vld [vmem:[%s0 + $0x16b0] sm:$0xff]
  %v764 = vld [vmem:[%s0 + $0x16b8] sm:$0xff]
  %v765 = vld [vmem:[%s0 + $0x16c0] sm:$0xff]
  %v766 = vld [vmem:[%s0 + $0x16c8] sm:$0xff]
  %v767 = vld [vmem:[%s0 + $0x16d0] sm:$0xff]
  %v768 = vld [vmem:[%s0 + $0x16d8] sm:$0xff]
  %v769 = vld [vmem:[%s0 + $0x16e0] sm:$0xff]
  %v770 = vld [vmem:[%s0 + $0x16e8] sm:$0xff]
  %v771 = vld [vmem:[%s0 + $0x16f0] sm:$0xff]
  %v772 = vld [vmem:[%s0 + $0x16f8] sm:$0xff]
  %v773 = vld [vmem:[%s0 + $0x1700] sm:$0xff]
  %v774 = vld [vmem:[%s0 + $0x1708] sm:$0xff]
  %v775 = vld [vmem:[%s0 + $0x1710] sm:$0xff]
  %v776 = vld [vmem:[%s0 + $0x1718] sm:$0xff]
  %v777 = vld [vmem:[%s0 + $0x1720] sm:$0xff]
  %v778 = vld [vmem:[%s0 + $0x1728] sm:$0xff]
  %v779 = vld [vmem:[%s0 + $0x1730] sm:$0xff]
  %v780 = vld [vmem:[%s0 + $0x1738] sm:$0xff]
  %v781 = vld [vmem:[%s0 + $0x1740] sm:$0xff]
  %v782 = vld [vmem:[%s0 + $0x1748] sm:$0xff]
  %v783 = vld [vmem:[%s0 + $0x1750] sm:$0xff]
  %v784 = vld [vmem:[%s0 + $0x1758] sm:$0xff]
  %v785 = vld [vmem:[%s0 + $0x1760] sm:$0xff]
  %v786 = vld [vmem:[%s0 + $0x1768] sm:$0xff]
  %v787 = vld [vmem:[%s0 + $0x1770] sm:$0xff]
  %v788 = vld [vmem:[%s0 + $0x1778] sm:$0xff]
  %v789 = vld [vmem:[%s0 + $0x1780] sm:$0xff]
  %v790 = vld [vmem:[%s0 + $0x1788] sm:$0xff]
  %v791 = vld [vmem:[%s0 + $0x1790] sm:$0xff]
  %v792 = vld [vmem:[%s0 + $0x1798] sm:$0xff]
  %v793 = vld [vmem:[%s0 + $0x17a0] sm:$0xff]
  %v794 = vld [vmem:[%s0 + $0x17a8] sm:$0xff]
  %v795 = vld [vmem:[%s0 + $0x17b0] sm:$0xff]
  %v796 = vld [vmem:[%s0 + $0x17b8] sm:$0xff]
  %v797 = vld [vmem:[%s0 + $0x17c0] sm:$0xff]
  %v798 = vld [vmem:[%s0 + $0x17c8] sm:$0xff]
  %v799 = vld [vmem:[%s0 + $0x17d0] sm:$0xff]
  %v800 = vld [vmem:[%s0 + $0x17d8] sm:$0xff]
  %v801 = vld [vmem:[%s0 + $0x17e0] sm:$0xff]
  %v802 = vld [vmem:[%s0 + $0x17e8] sm:$0xff]
  %v803 = vld [vmem:[%s0 + $0x17f0] sm:$0xff]
  %v804 = vld [vmem:[%s0 + $0x17f8] sm:$0xff]
  %v805 = vld [vmem:[%s0 + $0x1800] sm:$0xff]
  %v806 = vld [vmem:[%s0 + $0x1808] sm:$0xff]
  %v807 = vld [vmem:[%s0 + $0x1810] sm:$0xff]
  %v808 = vld [vmem:[%s0 + $0x1818] sm:$0xff]
  %v809 = vld [vmem:[%s0 + $0x1820] sm:$0xff]
  %v810 = vld [vmem:[%s0 + $0x1828] sm:$0xff]
  %v811 = vld [vmem:[%s0 + $0x1830] sm:$0xff]
  %v812 = vld [vmem:[%s0 + $0x1838] sm:$0xff]
  %v813 = vld [vmem:[%s0 + $0x1840] sm:$0xff]
  %v814 = vld [vmem:[%s0 + $0x1848] sm:$0xff]
  %v815 = vld [vmem:[%s0 + $0x1850] sm:$0xff]
  %v816 = vld [vmem:[%s0 + $0x1858] sm:$0xff]
  %v817 = vld [vmem:[%s0 + $0x1860] sm:$0xff]
  %v818 = vld [vmem:[%s0 + $0x1868] sm:$0xff]
  %v819 = vld [vmem:[%s0 + $0x1870] sm:$0xff]
  %v820 = vld [vmem:[%s0 + $0x1878] sm:$0xff]
  %v821 = vld [vmem:[%s0 + $0x1880] sm:$0xff]
  %v822 = vld [vmem:[%s0 + $0x1888] sm:$0xff]
  %v823 = vld [vmem:[%s0 + $0x1890] sm:$0xff]
  %v824 = vld [vmem:[%s0 + $0x1898] sm:$0xff]
  %v825 = vld [vmem:[%s0 + $0x18a0] sm:$0xff]
  %v826 = vld [vmem:[%s0 + $0x18a8] sm:$0xff]
  %v827 = vld [vmem:[%s0 + $0x18b0] sm:$0xff]
  %v828 = vld [vmem:[%s0 + $0x18b8] sm:$0xff]
  %v829 = vld [vmem:[%s0 + $0x18c0] sm:$0xff]
  %v830 = vld [vmem:[%s0 + $0x18c8] sm:$0xff]
  %v831 = vld [vmem:[%s0 + $0x18d0] sm:$0xff]
  %v832 = vld [vmem:[%s0 + $0x18d8] sm:$0xff]
  %v833 = vld [vmem:[%s0 + $0x18e0] sm:$0xff]
  %v834 = vld [vmem:[%s0 + $0x18e8] sm:$0xff]
  %v835 = vld [vmem:[%s0 + $0x18f0] sm:$0xff]
  %v836 = vld [vmem:[%s0 + $0x18f8] sm:$0xff]
  %v837 = vld [vmem:[%s0 + $0x1900] sm:$0xff]
  %v838 = vld [vmem:[%s0 + $0x1908] sm:$0xff]
  %v839 = vld [vmem:[%s0 + $0x1910] sm:$0xff]
  %v840 = vld [vmem:[%s0 + $0x1918] sm:$0xff]
  %v841 = vld [vmem:[%s0 + $0x1920] sm:$0xff]
  %v842 = vld [vmem:[%s0 + $0x1928] sm:$0xff]
  %v843 = vld [vmem:[%s0 + $0x1930] sm:$0xff]
  %v844 = vld [vmem:[%s0 + $0x1938] sm:$0xff]
  %v845 = vld [vmem:[%s0 + $0x1940] sm:$0xff]
  %v846 = vld [vmem:[%s0 + $0x1948] sm:$0xff]
  %v847 = vld [vmem:[%s0 + $0x1950] sm:$0xff]
  %v848 = vld [vmem:[%s0 + $0x1958] sm:$0xff]
  %v849 = vld [vmem:[%s0 + $0x1960] sm:$0xff]
  %v850 = vld [vmem:[%s0 + $0x1968] sm:$0xff]
  %v851 = vld [vmem:[%s0 + $0x1970] sm:$0xff]
  %v852 = vld [vmem:[%s0 + $0x1978] sm:$0xff]
  %v853 = vld [vmem:[%s0 + $0x1980] sm:$0xff]
  %v854 = vld [vmem:[%s0 + $0x1988] sm:$0xff]
  %v855 = vld [vmem:[%s0 + $0x1990] sm:$0xff]
  %v856 = vld [vmem:[%s0 + $0x1998] sm:$0xff]
  %v857 = vld [vmem:[%s0 + $0x19a0] sm:$0xff]
  %v858 = vld [vmem:[%s0 + $0x19a8] sm:$0xff]
  %v859 = vld [vmem:[%s0 + $0x19b0] sm:$0xff]
  %v860 = vld [vmem:[%s0 + $0x19b8] sm:$0xff]
  %v861 = vld [vmem:[%s0 + $0x19c0] sm:$0xff]
  %v862 = vld [vmem:[%s0 + $0x19c8] sm:$0xff]
  %v863 = vld [vmem:[%s0 + $0x19d0] sm:$0xff]
  %v864 = vld [vmem:[%s0 + $0x19d8] sm:$0xff]
  %v865 = vld [vmem:[%s0 + $0x19e0] sm:$0xff]
  %v866 = vld [vmem:[%s0 + $0x19e8] sm:$0xff]
  %v867 = vld [vmem:[%s0 + $0x19f0] sm:$0xff]
  %v868 = vld [vmem:[%s0 + $0x19f8] sm:$0xff]
  %v869 = vld [vmem:[%s0 + $0x1a00] sm:$0xff]
  %v870 = vld [vmem:[%s0 + $0x1a08] sm:$0xff]
  %v871 = vld [vmem:[%s0 + $0x1a10] sm:$0xff]
  %v872 = vld [vmem:[%s0 + $0x1a18] sm:$0xff]
  %v873 = vld [vmem:[%s0 + $0x1a20] sm:$0xff]
  %v874 = vld [vmem:[%s0 + $0x1a28] sm:$0xff]
  %v875 = vld [vmem:[%s0 + $0x1a30] sm:$0xff]
  %v876 = vld [vmem:[%s0 + $0x1a38] sm:$0xff]
  %v877 = vld [vmem:[%s0 + $0x1a40] sm:$0xff]
  %v878 = vld [vmem:[%s0 + $0x1a48] sm:$0xff]
  %v879 = vld [vmem:[%s0 + $0x1a50] sm:$0xff]
  %v880 = vld [vmem:[%s0 + $0x1a58] sm:$0xff]
  %v881 = vld [vmem:[%s0 + $0x1a60] sm:$0xff]
  %v882 = vld [vmem:[%s0 + $0x1a68] sm:$0xff]
  %v883 = vld [vmem:[%s0 + $0x1a70] sm:$0xff]
  %v884 = vld [vmem:[%s0 + $0x1a78] sm:$0xff]
  %v885 = vld [vmem:[%s0 + $0x1a80] sm:$0xff]
  %v886 = vld [vmem:[%s0 + $0x1a88] sm:$0xff]
  %v887 = vld [vmem:[%s0 + $0x1a90] sm:$0xff]
  %v888 = vld [vmem:[%s0 + $0x1a98] sm:$0xff]
  %v889 = vld [vmem:[%s0 + $0x1aa0] sm:$0xff]
  %v890 = vld [vmem:[%s0 + $0x1aa8] sm:$0xff]
  %v891 = vld [vmem:[%s0 + $0x1ab0] sm:$0xff]
  %v892 = vld [vmem:[%s0 + $0x1ab8] sm:$0xff]
  %v893 = vld [vmem:[%s0 + $0x1ac0] sm:$0xff]
  %v894 = vld [vmem:[%s0 + $0x1ac8] sm:$0xff]
  %v895 = vld [vmem:[%s0 + $0x1ad0] sm:$0xff]
  %v896 = vld [vmem:[%s0 + $0x1ad8] sm:$0xff]
  %v897 = vld [vmem:[%s0 + $0x1ae0] sm:$0xff]
  %v898 = vld [vmem:[%s0 + $0x1ae8] sm:$0xff]
  %v899 = vld [vmem:[%s0 + $0x1af0] sm:$0xff]
  %v900 = vld [vmem:[%s0 + $0x1af8] sm:$0xff]
  %v901 = vld [vmem:[%s0 + $0x1b00] sm:$0xff]
  %v902 = vld [vmem:[%s0 + $0x1b08] sm:$0xff]
  %v903 = vld [vmem:[%s0 + $0x1b10] sm:$0xff]
  %v904 = vld [vmem:[%s0 + $0x1b18] sm:$0xff]
  %v905 = vld [vmem:[%s0 + $0x1b20] sm:$0xff]
  %v906 = vld [vmem:[%s0 + $0x1b28] sm:$0xff]
  %v907 = vld [vmem:[%s0 + $0x1b30] sm:$0xff]
  %v908 = vld [vmem:[%s0 + $0x1b38] sm:$0xff]
  %v909 = vld [vmem:[%s0 + $0x1b40] sm:$0xff]
  %v910 = vld [vmem:[%s0 + $0x1b48] sm:$0xff]
  %v911 = vld [vmem:[%s0 + $0x1b50] sm:$0xff]
  %v912 = vld [vmem:[%s0 + $0x1b58] sm:$0xff]
  %v913 = vld [vmem:[%s0 + $0x1b60] sm:$0xff]
  %v914 = vld [vmem:[%s0 + $0x1b68] sm:$0xff]
  %v915 = vld [vmem:[%s0 + $0x1b70] sm:$0xff]
  %v916 = vld [vmem:[%s0 + $0x1b78] sm:$0xff]
  %v917 = vld [vmem:[%s0 + $0x1b80] sm:$0xff]
  %v918 = vld [vmem:[%s0 + $0x1b88] sm:$0xff]
  %v919 = vld [vmem:[%s0 + $0x1b90] sm:$0xff]
  %v920 = vld [vmem:[%s0 + $0x1b98] sm:$0xff]
  %v921 = vld [vmem:[%s0 + $0x1ba0] sm:$0xff]
  %v922 = vld [vmem:[%s0 + $0x1ba8] sm:$0xff]
  %v923 = vld [vmem:[%s0 + $0x1bb0] sm:$0xff]
  %v924 = vld [vmem:[%s0 + $0x1bb8] sm:$0xff]
  %v925 = vld [vmem:[%s0 + $0x1bc0] sm:$0xff]
  %v926 = vld [vmem:[%s0 + $0x1bc8] sm:$0xff]
  %v927 = vld [vmem:[%s0 + $0x1bd0] sm:$0xff]
  %v928 = vld [vmem:[%s0 + $0x1bd8] sm:$0xff]
  %v929 = vld [vmem:[%s0 + $0x1be0] sm:$0xff]
  %v930 = vld [vmem:[%s0 + $0x1be8] sm:$0xff]
  %v931 = vld [vmem:[%s0 + $0x1bf0] sm:$0xff]
  %v932 = vld [vmem:[%s0 + $0x1bf8] sm:$0xff]
  %v933 = vld [vmem:[%s0 + $0x1c00] sm:$0xff]
  %v934 = vld [vmem:[%s0 + $0x1c08] sm:$0xff]
  %v935 = vld [vmem:[%s0 + $0x1c10] sm:$0xff]
  %v936 = vld [vmem:[%s0 + $0x1c18] sm:$0xff]
  %v937 = vld [vmem:[%s0 + $0x1c20] sm:$0xff]
  %v938 = vld [vmem:[%s0 + $0x1c28] sm:$0xff]
  %v939 = vld [vmem:[%s0 + $0x1c30] sm:$0xff]
  %v940 = vld [vmem:[%s0 + $0x1c38] sm:$0xff]
  %v941 = vld [vmem:[%s0 + $0x1c40] sm:$0xff]
  %v942 = vld [vmem:[%s0 + $0x1c48] sm:$0xff]
  %v943 = vld [vmem:[%s0 + $0x1c50] sm:$0xff]
  %v944 = vld [vmem:[%s0 + $0x1c58] sm:$0xff]
  %v945 = vld [vmem:[%s0 + $0x1c60] sm:$0xff]
  %v946 = vld [vmem:[%s0 + $0x1c68] sm:$0xff]
  %v947 = vld [vmem:[%s0 + $0x1c70] sm:$0xff]
  %v948 = vld [vmem:[%s0 + $0x1c78] sm:$0xff]
  %v949 = vld [vmem:[%s0 + $0x1c80] sm:$0xff]
  %v950 = vld [vmem:[%s0 + $0x1c88] sm:$0xff]
  %v951 = vld [vmem:[%s0 + $0x1c90] sm:$0xff]
  %v952 = vld [vmem:[%s0 + $0x1c98] sm:$0xff]
  %v953 = vld [vmem:[%s0 + $0x1ca0] sm:$0xff]
  %v954 = vld [vmem:[%s0 + $0x1ca8] sm:$0xff]
  %v955 = vld [vmem:[%s0 + $0x1cb0] sm:$0xff]
  %v956 = vld [vmem:[%s0 + $0x1cb8] sm:$0xff]
  %v957 = vld [vmem:[%s0 + $0x1cc0] sm:$0xff]
  %v958 = vld [vmem:[%s0 + $0x1cc8] sm:$0xff]
  %v959 = vld [vmem:[%s0 + $0x1cd0] sm:$0xff]
  %v960 = vld [vmem:[%s0 + $0x1cd8] sm:$0xff]
  %v961 = vld [vmem:[%s0 + $0x1ce0] sm:$0xff]
  %v962 = vld [vmem:[%s0 + $0x1ce8] sm:$0xff]
  %v963 = vld [vmem:[%s0 + $0x1cf0] sm:$0xff]
  %v964 = vld [vmem:[%s0 + $0x1cf8] sm:$0xff]
  %v965 = vld [vmem:[%s0 + $0x1d00] sm:$0xff]
  %v966 = vld [vmem:[%s0 + $0x1d08] sm:$0xff]
  %v967 = vld [vmem:[%s0 + $0x1d10] sm:$0xff]
  %v968 = vld [vmem:[%s0 + $0x1d18] sm:$0xff]
  %v969 = vld [vmem:[%s0 + $0x1d20] sm:$0xff]
  %v970 = vld [vmem:[%s0 + $0x1d28] sm:$0xff]
  %v971 = vld [vmem:[%s0 + $0x1d30] sm:$0xff]
  %v972 = vld [vmem:[%s0 + $0x1d38] sm:$0xff]
  %v973 = vld [vmem:[%s0 + $0x1d40] sm:$0xff]
  %v974 = vld [vmem:[%s0 + $0x1d48] sm:$0xff]
  %v975 = vld [vmem:[%s0 + $0x1d50] sm:$0xff]
  %v976 = vld [vmem:[%s0 + $0x1d58] sm:$0xff]
  %v977 = vld [vmem:[%s0 + $0x1d60] sm:$0xff]
  %v978 = vld [vmem:[%s0 + $0x1d68] sm:$0xff]
  %v979 = vld [vmem:[%s0 + $0x1d70] sm:$0xff]
  %v980 = vld [vmem:[%s0 + $0x1d78] sm:$0xff]
  %v981 = vld [vmem:[%s0 + $0x1d80] sm:$0xff]
  %v982 = vld [vmem:[%s0 + $0x1d88] sm:$0xff]
  %v983 = vld [vmem:[%s0 + $0x1d90] sm:$0xff]
  %v984 = vld [vmem:[%s0 + $0x1d98] sm:$0xff]
  %v985 = vld [vmem:[%s0 + $0x1da0] sm:$0xff]
  %v986 = vld [vmem:[%s0 + $0x1da8] sm:$0xff]
  %v987 = vld [vmem:[%s0 + $0x1db0] sm:$0xff]
  %v988 = vld [vmem:[%s0 + $0x1db8] sm:$0xff]
  %v989 = vld [vmem:[%s0 + $0x1dc0] sm:$0xff]
  %v990 = vld [vmem:[%s0 + $0x1dc8] sm:$0xff]
  %v991 = vld [vmem:[%s0 + $0x1dd0] sm:$0xff]
  %v992 = vld [vmem:[%s0 + $0x1dd8] sm:$0xff]
  %v993 = vld [vmem:[%s0 + $0x1de0] sm:$0xff]
  %v994 = vld [vmem:[%s0 + $0x1de8] sm:$0xff]
  %v995 = vld [vmem:[%s0 + $0x1df0] sm:$0xff]
  %v996 = vld [vmem:[%s0 + $0x1df8] sm:$0xff]
  %v997 = vld [vmem:[%s0 + $0x1e00] sm:$0xff]
  %v998 = vld [vmem:[%s0 + $0x1e08] sm:$0xff]
  %v999 = vld [vmem:[%s0 + $0x1e10] sm:$0xff]
  %v1000 = vld [vmem:[%s0 + $0x1e18] sm:$0xff]
  %v1001 = vld [vmem:[%s0 + $0x1e20] sm:$0xff]
  %v1002 = vld [vmem:[%s0 + $0x1e28] sm:$0xff]
  %v1003 = vld [vmem:[%s0 + $0x1e30] sm:$0xff]
  %v1004 = vld [vmem:[%s0 + $0x1e38] sm:$0xff]
  %v1005 = vld [vmem:[%s0 + $0x1e40] sm:$0xff]
  %v1006 = vld [vmem:[%s0 + $0x1e48] sm:$0xff]
  %v1007 = vld [vmem:[%s0 + $0x1e50] sm:$0xff]
  %v1008 = vld [vmem:[%s0 + $0x1e58] sm:$0xff]
  %v1009 = vld [vmem:[%s0 + $0x1e60] sm:$0xff]
  %v1010 = vld [vmem:[%s0 + $0x1e68] sm:$0xff]
  %v1011 = vld [vmem:[%s0 + $0x1e70] sm:$0xff]
  %v1012 = vld [vmem:[%s0 + $0x1e78] sm:$0xff]
  %v1013 = vld [vmem:[%s0 + $0x1e80] sm:$0xff]
  %v1014 = vld [vmem:[%s0 + $0x1e88] sm:$0xff]
  %v1015 = vld [vmem:[%s0 + $0x1e90] sm:$0xff]
  %v1016 = vld [vmem:[%s0 + $0x1e98] sm:$0xff]
  %v1017 = vld [vmem:[%s0 + $0x1ea0] sm:$0xff]
  %v1018 = vld [vmem:[%s0 + $0x1ea8] sm:$0xff]
  %v1019 = vld [vmem:[%s0 + $0x1eb0] sm:$0xff]
  %v1020 = vld [vmem:[%s0 + $0x1eb8] sm:$0xff]
  %v1021 = vld [vmem:[%s0 + $0x1ec0] sm:$0xff]
  %v1022 = vld [vmem:[%s0 + $0x1ec8] sm:$0xff]
  %v1023 = vld [vmem:[%s0 + $0x1ed0] sm:$0xff]
  %v1024 = vld [vmem:[%s0 + $0x1ed8] sm:$0xff]
  %v1025 = vld [vmem:[%s0 + $0x1ee0] sm:$0xff]
  %v1026 = vld [vmem:[%s0 + $0x1ee8] sm:$0xff]
  %v1027 = vld [vmem:[%s0 + $0x1ef0] sm:$0xff]
  %v1028 = vld [vmem:[%s0 + $0x1ef8] sm:$0xff]
  %v1029 = vld [vmem:[%s0 + $0x1f00] sm:$0xff]
  %v1030 = vld [vmem:[%s0 + $0x1f08] sm:$0xff]
  %v1031 = vld [vmem:[%s0 + $0x1f10] sm:$0xff]
  %v1032 = vld [vmem:[%s0 + $0x1f18] sm:$0xff]
  %v1033 = vld [vmem:[%s0 + $0x1f20] sm:$0xff]
  %v1034 = vld [vmem:[%s0 + $0x1f28] sm:$0xff]
  %v1035 = vld [vmem:[%s0 + $0x1f30] sm:$0xff]
  %v1036 = vld [vmem:[%s0 + $0x1f38] sm:$0xff]
  %v1037 = vld [vmem:[%s0 + $0x1f40] sm:$0xff]
  %v1038 = vld [vmem:[%s0 + $0x1f48] sm:$0xff]
  %v1039 = vld [vmem:[%s0 + $0x1f50] sm:$0xff]
  %v1040 = vld [vmem:[%s0 + $0x1f58] sm:$0xff]
  %v1041 = vld [vmem:[%s0 + $0x1f60] sm:$0xff]
  %v1042 = vld [vmem:[%s0 + $0x1f68] sm:$0xff]
  %v1043 = vld [vmem:[%s0 + $0x1f70] sm:$0xff]
  %v1044 = vld [vmem:[%s0 + $0x1f78] sm:$0xff]
  %v1045 = vld [vmem:[%s0 + $0x1f80] sm:$0xff]
  %v1046 = vld [vmem:[%s0 + $0x1f88] sm:$0xff]
  %v1047 = vld [vmem:[%s0 + $0x1f90] sm:$0xff]
  %v1048 = vld [vmem:[%s0 + $0x1f98] sm:$0xff]
  %v1049 = vld [vmem:[%s0 + $0x1fa0] sm:$0xff]
  %v1050 = vld [vmem:[%s0 + $0x1fa8] sm:$0xff]
  %v1051 = vld [vmem:[%s0 + $0x1fb0] sm:$0xff]
  %v1052 = vld [vmem:[%s0 + $0x1fb8] sm:$0xff]
  %v1053 = vld [vmem:[%s0 + $0x1fc0] sm:$0xff]
  %v1054 = vld [vmem:[%s0 + $0x1fc8] sm:$0xff]
  %v1055 = vld [vmem:[%s0 + $0x1fd0] sm:$0xff]
  %v1056 = vld [vmem:[%s0 + $0x1fd8] sm:$0xff]
  %v1057 = vld [vmem:[%s0 + $0x1fe0] sm:$0xff]
  %v1058 = vld [vmem:[%s0 + $0x1fe8] sm:$0xff]
  %v1059 = vld [vmem:[%s0 + $0x1ff0] sm:$0xff]
  %v1060 = vld [vmem:[%s0 + $0x1ff8] sm:$0xff]
  %v1061 = vld [vmem:[%s2] sm:$0xff]
  %1063 = vset.pattern.permute.xlu0 0
  %1064 = vperm.xlu0 %1063, %v1061
  %v1065 = vpop.permute.xlu0 %1064
  %v1068 = vunpack.c.l.b16 %v36
  %v1069 = vunpack.c.h.b16 %v36
  %v1070 = vpack.c.b16 %v1068, %v1068
  %v1071 = vpack.c.b16 %v1069, %v1069
  %v2098 = vunpack.c.l.b16 %v37
  %v2099 = vunpack.c.h.b16 %v37
  %v2100 = vunpack.c.l.b16 %v38
  %v2101 = vunpack.c.h.b16 %v38
  %v2102 = vunpack.c.l.b16 %v39
  %v2103 = vunpack.c.h.b16 %v39
  %v2104 = vunpack.c.l.b16 %v40
  %v2105 = vunpack.c.h.b16 %v40
  %v2106 = vunpack.c.l.b16 %v41
  %v2107 = vunpack.c.h.b16 %v41
  %v2108 = vunpack.c.l.b16 %v42
  %v2109 = vunpack.c.h.b16 %v42
  %v2110 = vunpack.c.l.b16 %v43
  %v2111 = vunpack.c.h.b16 %v43
  %v2112 = vunpack.c.l.b16 %v44
  %v2113 = vunpack.c.h.b16 %v44
  %v2114 = vunpack.c.l.b16 %v45
  %v2115 = vunpack.c.h.b16 %v45
  %v2116 = vunpack.c.l.b16 %v46
  %v2117 = vunpack.c.h.b16 %v46
  %v2118 = vunpack.c.l.b16 %v47
  %v2119 = vunpack.c.h.b16 %v47
  %v2120 = vunpack.c.l.b16 %v48
  %v2121 = vunpack.c.h.b16 %v48
  %v2122 = vunpack.c.l.b16 %v49
  %v2123 = vunpack.c.h.b16 %v49
  %v2124 = vunpack.c.l.b16 %v50
  %v2125 = vunpack.c.h.b16 %v50
  %v2126 = vunpack.c.l.b16 %v51
  %v2127 = vunpack.c.h.b16 %v51
  %v2128 = vunpack.c.l.b16 %v52
  %v2129 = vunpack.c.h.b16 %v52
  %v2130 = vunpack.c.l.b16 %v53
  %v2131 = vunpack.c.h.b16 %v53
  %v2132 = vunpack.c.l.b16 %v54
  %v2133 = vunpack.c.h.b16 %v54
  %v2134 = vunpack.c.l.b16 %v55
  %v2135 = vunpack.c.h.b16 %v55
  %v2136 = vunpack.c.l.b16 %v56
  %v2137 = vunpack.c.h.b16 %v56
  %v2138 = vunpack.c.l.b16 %v57
  %v2139 = vunpack.c.h.b16 %v57
  %v2140 = vunpack.c.l.b16 %v58
  %v2141 = vunpack.c.h.b16 %v58
  %v2142 = vunpack.c.l.b16 %v59
  %v2143 = vunpack.c.h.b16 %v59
  %v2144 = vunpack.c.l.b16 %v60
  %v2145 = vunpack.c.h.b16 %v60
  %v2146 = vunpack.c.l.b16 %v61
  %v2147 = vunpack.c.h.b16 %v61
  %v2148 = vunpack.c.l.b16 %v62
  %v2149 = vunpack.c.h.b16 %v62
  %v2150 = vunpack.c.l.b16 %v63
  %v2151 = vunpack.c.h.b16 %v63
  %v2152 = vunpack.c.l.b16 %v64
  %v2153 = vunpack.c.h.b16 %v64
  %v2154 = vunpack.c.l.b16 %v65
  %v2155 = vunpack.c.h.b16 %v65
  %v2156 = vunpack.c.l.b16 %v66
  %v2157 = vunpack.c.h.b16 %v66
  %v2158 = vunpack.c.l.b16 %v67
  %v2159 = vunpack.c.h.b16 %v67
  %v2160 = vunpack.c.l.b16 %v68
  %v2161 = vunpack.c.h.b16 %v68
  %v2162 = vunpack.c.l.b16 %v69
  %v2163 = vunpack.c.h.b16 %v69
  %v2164 = vunpack.c.l.b16 %v70
  %v2165 = vunpack.c.h.b16 %v70
  %v2166 = vunpack.c.l.b16 %v71
  %v2167 = vunpack.c.h.b16 %v71
  %v2168 = vunpack.c.l.b16 %v72
  %v2169 = vunpack.c.h.b16 %v72
  %v2170 = vunpack.c.l.b16 %v73
  %v2171 = vunpack.c.h.b16 %v73
  %v2172 = vunpack.c.l.b16 %v74
  %v2173 = vunpack.c.h.b16 %v74
  %v2174 = vunpack.c.l.b16 %v75
  %v2175 = vunpack.c.h.b16 %v75
  %v2176 = vunpack.c.l.b16 %v76
  %v2177 = vunpack.c.h.b16 %v76
  %v2178 = vunpack.c.l.b16 %v77
  %v2179 = vunpack.c.h.b16 %v77
  %v2180 = vunpack.c.l.b16 %v78
  %v2181 = vunpack.c.h.b16 %v78
  %v2182 = vunpack.c.l.b16 %v79
  %v2183 = vunpack.c.h.b16 %v79
  %v2184 = vunpack.c.l.b16 %v80
  %v2185 = vunpack.c.h.b16 %v80
  %v2186 = vunpack.c.l.b16 %v81
  %v2187 = vunpack.c.h.b16 %v81
  %v2188 = vunpack.c.l.b16 %v82
  %v2189 = vunpack.c.h.b16 %v82
  %v2190 = vunpack.c.l.b16 %v83
  %v2191 = vunpack.c.h.b16 %v83
  %v2192 = vunpack.c.l.b16 %v84
  %v2193 = vunpack.c.h.b16 %v84
  %v2194 = vunpack.c.l.b16 %v85
  %v2195 = vunpack.c.h.b16 %v85
  %v2196 = vunpack.c.l.b16 %v86
  %v2197 = vunpack.c.h.b16 %v86
  %v2198 = vunpack.c.l.b16 %v87
  %v2199 = vunpack.c.h.b16 %v87
  %v2200 = vunpack.c.l.b16 %v88
  %v2201 = vunpack.c.h.b16 %v88
  %v2202 = vunpack.c.l.b16 %v89
  %v2203 = vunpack.c.h.b16 %v89
  %v2204 = vunpack.c.l.b16 %v90
  %v2205 = vunpack.c.h.b16 %v90
  %v2206 = vunpack.c.l.b16 %v91
  %v2207 = vunpack.c.h.b16 %v91
  %v2208 = vunpack.c.l.b16 %v92
  %v2209 = vunpack.c.h.b16 %v92
  %v2210 = vunpack.c.l.b16 %v93
  %v2211 = vunpack.c.h.b16 %v93
  %v2212 = vunpack.c.l.b16 %v94
  %v2213 = vunpack.c.h.b16 %v94
  %v2214 = vunpack.c.l.b16 %v95
  %v2215 = vunpack.c.h.b16 %v95
  %v2216 = vunpack.c.l.b16 %v96
  %v2217 = vunpack.c.h.b16 %v96
  %v2218 = vunpack.c.l.b16 %v97
  %v2219 = vunpack.c.h.b16 %v97
  %v2220 = vunpack.c.l.b16 %v98
  %v2221 = vunpack.c.h.b16 %v98
  %v2222 = vunpack.c.l.b16 %v99
  %v2223 = vunpack.c.h.b16 %v99
  %v2224 = vunpack.c.l.b16 %v100
  %v2225 = vunpack.c.h.b16 %v100
  %v2226 = vunpack.c.l.b16 %v101
  %v2227 = vunpack.c.h.b16 %v101
  %v2228 = vunpack.c.l.b16 %v102
  %v2229 = vunpack.c.h.b16 %v102
  %v2230 = vunpack.c.l.b16 %v103
  %v2231 = vunpack.c.h.b16 %v103
  %v2232 = vunpack.c.l.b16 %v104
  %v2233 = vunpack.c.h.b16 %v104
  %v2234 = vunpack.c.l.b16 %v105
  %v2235 = vunpack.c.h.b16 %v105
  %v2236 = vunpack.c.l.b16 %v106
  %v2237 = vunpack.c.h.b16 %v106
  %v2238 = vunpack.c.l.b16 %v107
  %v2239 = vunpack.c.h.b16 %v107
  %v2240 = vunpack.c.l.b16 %v108
  %v2241 = vunpack.c.h.b16 %v108
  %v2242 = vunpack.c.l.b16 %v109
  %v2243 = vunpack.c.h.b16 %v109
  %v2244 = vunpack.c.l.b16 %v110
  %v2245 = vunpack.c.h.b16 %v110
  %v2246 = vunpack.c.l.b16 %v111
  %v2247 = vunpack.c.h.b16 %v111
  %v2248 = vunpack.c.l.b16 %v112
  %v2249 = vunpack.c.h.b16 %v112
  %v2250 = vunpack.c.l.b16 %v113
  %v2251 = vunpack.c.h.b16 %v113
  %v2252 = vunpack.c.l.b16 %v114
  %v2253 = vunpack.c.h.b16 %v114
  %v2254 = vunpack.c.l.b16 %v115
  %v2255 = vunpack.c.h.b16 %v115
  %v2256 = vunpack.c.l.b16 %v116
  %v2257 = vunpack.c.h.b16 %v116
  %v2258 = vunpack.c.l.b16 %v117
  %v2259 = vunpack.c.h.b16 %v117
  %v2260 = vunpack.c.l.b16 %v118
  %v2261 = vunpack.c.h.b16 %v118
  %v2262 = vunpack.c.l.b16 %v119
  %v2263 = vunpack.c.h.b16 %v119
  %v2264 = vunpack.c.l.b16 %v120
  %v2265 = vunpack.c.h.b16 %v120
  %v2266 = vunpack.c.l.b16 %v121
  %v2267 = vunpack.c.h.b16 %v121
  %v2268 = vunpack.c.l.b16 %v122
  %v2269 = vunpack.c.h.b16 %v122
  %v2270 = vunpack.c.l.b16 %v123
  %v2271 = vunpack.c.h.b16 %v123
  %v2272 = vunpack.c.l.b16 %v124
  %v2273 = vunpack.c.h.b16 %v124
  %v2274 = vunpack.c.l.b16 %v125
  %v2275 = vunpack.c.h.b16 %v125
  %v2276 = vunpack.c.l.b16 %v126
  %v2277 = vunpack.c.h.b16 %v126
  %v2278 = vunpack.c.l.b16 %v127
  %v2279 = vunpack.c.h.b16 %v127
  %v2280 = vunpack.c.l.b16 %v128
  %v2281 = vunpack.c.h.b16 %v128
  %v2282 = vunpack.c.l.b16 %v129
  %v2283 = vunpack.c.h.b16 %v129
  %v2284 = vunpack.c.l.b16 %v130
  %v2285 = vunpack.c.h.b16 %v130
  %v2286 = vunpack.c.l.b16 %v131
  %v2287 = vunpack.c.h.b16 %v131
  %v2288 = vunpack.c.l.b16 %v132
  %v2289 = vunpack.c.h.b16 %v132
  %v2290 = vunpack.c.l.b16 %v133
  %v2291 = vunpack.c.h.b16 %v133
  %v2292 = vunpack.c.l.b16 %v134
  %v2293 = vunpack.c.h.b16 %v134
  %v2294 = vunpack.c.l.b16 %v135
  %v2295 = vunpack.c.h.b16 %v135
  %v2296 = vunpack.c.l.b16 %v136
  %v2297 = vunpack.c.h.b16 %v136
  %v2298 = vunpack.c.l.b16 %v137
  %v2299 = vunpack.c.h.b16 %v137
  %v2300 = vunpack.c.l.b16 %v138
  %v2301 = vunpack.c.h.b16 %v138
  %v2302 = vunpack.c.l.b16 %v139
  %v2303 = vunpack.c.h.b16 %v139
  %v2304 = vunpack.c.l.b16 %v140
  %v2305 = vunpack.c.h.b16 %v140
  %v2306 = vunpack.c.l.b16 %v141
  %v2307 = vunpack.c.h.b16 %v141
  %v2308 = vunpack.c.l.b16 %v142
  %v2309 = vunpack.c.h.b16 %v142
  %v2310 = vunpack.c.l.b16 %v143
  %v2311 = vunpack.c.h.b16 %v143
  %v2312 = vunpack.c.l.b16 %v144
  %v2313 = vunpack.c.h.b16 %v144
  %v2314 = vunpack.c.l.b16 %v145
  %v2315 = vunpack.c.h.b16 %v145
  %v2316 = vunpack.c.l.b16 %v146
  %v2317 = vunpack.c.h.b16 %v146
  %v2318 = vunpack.c.l.b16 %v147
  %v2319 = vunpack.c.h.b16 %v147
  %v2320 = vunpack.c.l.b16 %v148
  %v2321 = vunpack.c.h.b16 %v148
  %v2322 = vunpack.c.l.b16 %v149
  %v2323 = vunpack.c.h.b16 %v149
  %v2324 = vunpack.c.l.b16 %v150
  %v2325 = vunpack.c.h.b16 %v150
  %v2326 = vunpack.c.l.b16 %v151
  %v2327 = vunpack.c.h.b16 %v151
  %v2328 = vunpack.c.l.b16 %v152
  %v2329 = vunpack.c.h.b16 %v152
  %v2330 = vunpack.c.l.b16 %v153
  %v2331 = vunpack.c.h.b16 %v153
  %v2332 = vunpack.c.l.b16 %v154
  %v2333 = vunpack.c.h.b16 %v154
  %v2334 = vunpack.c.l.b16 %v155
  %v2335 = vunpack.c.h.b16 %v155
  %v2336 = vunpack.c.l.b16 %v156
  %v2337 = vunpack.c.h.b16 %v156
  %v2338 = vunpack.c.l.b16 %v157
  %v2339 = vunpack.c.h.b16 %v157
  %v2340 = vunpack.c.l.b16 %v158
  %v2341 = vunpack.c.h.b16 %v158
  %v2342 = vunpack.c.l.b16 %v159
  %v2343 = vunpack.c.h.b16 %v159
  %v2344 = vunpack.c.l.b16 %v160
  %v2345 = vunpack.c.h.b16 %v160
  %v2346 = vunpack.c.l.b16 %v161
  %v2347 = vunpack.c.h.b16 %v161
  %v2348 = vunpack.c.l.b16 %v162
  %v2349 = vunpack.c.h.b16 %v162
  %v2350 = vunpack.c.l.b16 %v163
  %v2351 = vunpack.c.h.b16 %v163
  %v2352 = vunpack.c.l.b16 %v164
  %v2353 = vunpack.c.h.b16 %v164
  %v2354 = vunpack.c.l.b16 %v165
  %v2355 = vunpack.c.h.b16 %v165
  %v2356 = vunpack.c.l.b16 %v166
  %v2357 = vunpack.c.h.b16 %v166
  %v2358 = vunpack.c.l.b16 %v167
  %v2359 = vunpack.c.h.b16 %v167
  %v2360 = vunpack.c.l.b16 %v168
  %v2361 = vunpack.c.h.b16 %v168
  %v2362 = vunpack.c.l.b16 %v169
  %v2363 = vunpack.c.h.b16 %v169
  %v2364 = vunpack.c.l.b16 %v170
  %v2365 = vunpack.c.h.b16 %v170
  %v2366 = vunpack.c.l.b16 %v171
  %v2367 = vunpack.c.h.b16 %v171
  %v2368 = vunpack.c.l.b16 %v172
  %v2369 = vunpack.c.h.b16 %v172
  %v2370 = vunpack.c.l.b16 %v173
  %v2371 = vunpack.c.h.b16 %v173
  %v2372 = vunpack.c.l.b16 %v174
  %v2373 = vunpack.c.h.b16 %v174
  %v2374 = vunpack.c.l.b16 %v175
  %v2375 = vunpack.c.h.b16 %v175
  %v2376 = vunpack.c.l.b16 %v176
  %v2377 = vunpack.c.h.b16 %v176
  %v2378 = vunpack.c.l.b16 %v177
  %v2379 = vunpack.c.h.b16 %v177
  %v2380 = vunpack.c.l.b16 %v178
  %v2381 = vunpack.c.h.b16 %v178
  %v2382 = vunpack.c.l.b16 %v179
  %v2383 = vunpack.c.h.b16 %v179
  %v2384 = vunpack.c.l.b16 %v180
  %v2385 = vunpack.c.h.b16 %v180
  %v2386 = vunpack.c.l.b16 %v181
  %v2387 = vunpack.c.h.b16 %v181
  %v2388 = vunpack.c.l.b16 %v182
  %v2389 = vunpack.c.h.b16 %v182
  %v2390 = vunpack.c.l.b16 %v183
  %v2391 = vunpack.c.h.b16 %v183
  %v2392 = vunpack.c.l.b16 %v184
  %v2393 = vunpack.c.h.b16 %v184
  %v2394 = vunpack.c.l.b16 %v185
  %v2395 = vunpack.c.h.b16 %v185
  %v2396 = vunpack.c.l.b16 %v186
  %v2397 = vunpack.c.h.b16 %v186
  %v2398 = vunpack.c.l.b16 %v187
  %v2399 = vunpack.c.h.b16 %v187
  %v2400 = vunpack.c.l.b16 %v188
  %v2401 = vunpack.c.h.b16 %v188
  %v2402 = vunpack.c.l.b16 %v189
  %v2403 = vunpack.c.h.b16 %v189
  %v2404 = vunpack.c.l.b16 %v190
  %v2405 = vunpack.c.h.b16 %v190
  %v2406 = vunpack.c.l.b16 %v191
  %v2407 = vunpack.c.h.b16 %v191
  %v2408 = vunpack.c.l.b16 %v192
  %v2409 = vunpack.c.h.b16 %v192
  %v2410 = vunpack.c.l.b16 %v193
  %v2411 = vunpack.c.h.b16 %v193
  %v2412 = vunpack.c.l.b16 %v194
  %v2413 = vunpack.c.h.b16 %v194
  %v2414 = vunpack.c.l.b16 %v195
  %v2415 = vunpack.c.h.b16 %v195
  %v2416 = vunpack.c.l.b16 %v196
  %v2417 = vunpack.c.h.b16 %v196
  %v2418 = vunpack.c.l.b16 %v197
  %v2419 = vunpack.c.h.b16 %v197
  %v2420 = vunpack.c.l.b16 %v198
  %v2421 = vunpack.c.h.b16 %v198
  %v2422 = vunpack.c.l.b16 %v199
  %v2423 = vunpack.c.h.b16 %v199
  %v2424 = vunpack.c.l.b16 %v200
  %v2425 = vunpack.c.h.b16 %v200
  %v2426 = vunpack.c.l.b16 %v201
  %v2427 = vunpack.c.h.b16 %v201
  %v2428 = vunpack.c.l.b16 %v202
  %v2429 = vunpack.c.h.b16 %v202
  %v2430 = vunpack.c.l.b16 %v203
  %v2431 = vunpack.c.h.b16 %v203
  %v2432 = vunpack.c.l.b16 %v204
  %v2433 = vunpack.c.h.b16 %v204
  %v2434 = vunpack.c.l.b16 %v205
  %v2435 = vunpack.c.h.b16 %v205
  %v2436 = vunpack.c.l.b16 %v206
  %v2437 = vunpack.c.h.b16 %v206
  %v2438 = vunpack.c.l.b16 %v207
  %v2439 = vunpack.c.h.b16 %v207
  %v2440 = vunpack.c.l.b16 %v208
  %v2441 = vunpack.c.h.b16 %v208
  %v2442 = vunpack.c.l.b16 %v209
  %v2443 = vunpack.c.h.b16 %v209
  %v2444 = vunpack.c.l.b16 %v210
  %v2445 = vunpack.c.h.b16 %v210
  %v2446 = vunpack.c.l.b16 %v211
  %v2447 = vunpack.c.h.b16 %v211
  %v2448 = vunpack.c.l.b16 %v212
  %v2449 = vunpack.c.h.b16 %v212
  %v2450 = vunpack.c.l.b16 %v213
  %v2451 = vunpack.c.h.b16 %v213
  %v2452 = vunpack.c.l.b16 %v214
  %v2453 = vunpack.c.h.b16 %v214
  %v2454 = vunpack.c.l.b16 %v215
  %v2455 = vunpack.c.h.b16 %v215
  %v2456 = vunpack.c.l.b16 %v216
  %v2457 = vunpack.c.h.b16 %v216
  %v2458 = vunpack.c.l.b16 %v217
  %v2459 = vunpack.c.h.b16 %v217
  %v2460 = vunpack.c.l.b16 %v218
  %v2461 = vunpack.c.h.b16 %v218
  %v2462 = vunpack.c.l.b16 %v219
  %v2463 = vunpack.c.h.b16 %v219
  %v2464 = vunpack.c.l.b16 %v220
  %v2465 = vunpack.c.h.b16 %v220
  %v2466 = vunpack.c.l.b16 %v221
  %v2467 = vunpack.c.h.b16 %v221
  %v2468 = vunpack.c.l.b16 %v222
  %v2469 = vunpack.c.h.b16 %v222
  %v2470 = vunpack.c.l.b16 %v223
  %v2471 = vunpack.c.h.b16 %v223
  %v2472 = vunpack.c.l.b16 %v224
  %v2473 = vunpack.c.h.b16 %v224
  %v2474 = vunpack.c.l.b16 %v225
  %v2475 = vunpack.c.h.b16 %v225
  %v2476 = vunpack.c.l.b16 %v226
  %v2477 = vunpack.c.h.b16 %v226
  %v2478 = vunpack.c.l.b16 %v227
  %v2479 = vunpack.c.h.b16 %v227
  %v2480 = vunpack.c.l.b16 %v228
  %v2481 = vunpack.c.h.b16 %v228
  %v2482 = vunpack.c.l.b16 %v229
  %v2483 = vunpack.c.h.b16 %v229
  %v2484 = vunpack.c.l.b16 %v230
  %v2485 = vunpack.c.h.b16 %v230
  %v2486 = vunpack.c.l.b16 %v231
  %v2487 = vunpack.c.h.b16 %v231
  %v2488 = vunpack.c.l.b16 %v232
  %v2489 = vunpack.c.h.b16 %v232
  %v2490 = vunpack.c.l.b16 %v233
  %v2491 = vunpack.c.h.b16 %v233
  %v2492 = vunpack.c.l.b16 %v234
  %v2493 = vunpack.c.h.b16 %v234
  %v2494 = vunpack.c.l.b16 %v235
  %v2495 = vunpack.c.h.b16 %v235
  %v2496 = vunpack.c.l.b16 %v236
  %v2497 = vunpack.c.h.b16 %v236
  %v2498 = vunpack.c.l.b16 %v237
  %v2499 = vunpack.c.h.b16 %v237
  %v2500 = vunpack.c.l.b16 %v238
  %v2501 = vunpack.c.h.b16 %v238
  %v2502 = vunpack.c.l.b16 %v239
  %v2503 = vunpack.c.h.b16 %v239
  %v2504 = vunpack.c.l.b16 %v240
  %v2505 = vunpack.c.h.b16 %v240
  %v2506 = vunpack.c.l.b16 %v241
  %v2507 = vunpack.c.h.b16 %v241
  %v2508 = vunpack.c.l.b16 %v242
  %v2509 = vunpack.c.h.b16 %v242
  %v2510 = vunpack.c.l.b16 %v243
  %v2511 = vunpack.c.h.b16 %v243
  %v2512 = vunpack.c.l.b16 %v244
  %v2513 = vunpack.c.h.b16 %v244
  %v2514 = vunpack.c.l.b16 %v245
  %v2515 = vunpack.c.h.b16 %v245
  %v2516 = vunpack.c.l.b16 %v246
  %v2517 = vunpack.c.h.b16 %v246
  %v2518 = vunpack.c.l.b16 %v247
  %v2519 = vunpack.c.h.b16 %v247
  %v2520 = vunpack.c.l.b16 %v248
  %v2521 = vunpack.c.h.b16 %v248
  %v2522 = vunpack.c.l.b16 %v249
  %v2523 = vunpack.c.h.b16 %v249
  %v2524 = vunpack.c.l.b16 %v250
  %v2525 = vunpack.c.h.b16 %v250
  %v2526 = vunpack.c.l.b16 %v251
  %v2527 = vunpack.c.h.b16 %v251
  %v2528 = vunpack.c.l.b16 %v252
  %v2529 = vunpack.c.h.b16 %v252
  %v2530 = vunpack.c.l.b16 %v253
  %v2531 = vunpack.c.h.b16 %v253
  %v2532 = vunpack.c.l.b16 %v254
  %v2533 = vunpack.c.h.b16 %v254
  %v2534 = vunpack.c.l.b16 %v255
  %v2535 = vunpack.c.h.b16 %v255
  %v2536 = vunpack.c.l.b16 %v256
  %v2537 = vunpack.c.h.b16 %v256
  %v2538 = vunpack.c.l.b16 %v257
  %v2539 = vunpack.c.h.b16 %v257
  %v2540 = vunpack.c.l.b16 %v258
  %v2541 = vunpack.c.h.b16 %v258
  %v2542 = vunpack.c.l.b16 %v259
  %v2543 = vunpack.c.h.b16 %v259
  %v2544 = vunpack.c.l.b16 %v260
  %v2545 = vunpack.c.h.b16 %v260
  %v2546 = vunpack.c.l.b16 %v261
  %v2547 = vunpack.c.h.b16 %v261
  %v2548 = vunpack.c.l.b16 %v262
  %v2549 = vunpack.c.h.b16 %v262
  %v2550 = vunpack.c.l.b16 %v263
  %v2551 = vunpack.c.h.b16 %v263
  %v2552 = vunpack.c.l.b16 %v264
  %v2553 = vunpack.c.h.b16 %v264
  %v2554 = vunpack.c.l.b16 %v265
  %v2555 = vunpack.c.h.b16 %v265
  %v2556 = vunpack.c.l.b16 %v266
  %v2557 = vunpack.c.h.b16 %v266
  %v2558 = vunpack.c.l.b16 %v267
  %v2559 = vunpack.c.h.b16 %v267
  %v2560 = vunpack.c.l.b16 %v268
  %v2561 = vunpack.c.h.b16 %v268
  %v2562 = vunpack.c.l.b16 %v269
  %v2563 = vunpack.c.h.b16 %v269
  %v2564 = vunpack.c.l.b16 %v270
  %v2565 = vunpack.c.h.b16 %v270
  %v2566 = vunpack.c.l.b16 %v271
  %v2567 = vunpack.c.h.b16 %v271
  %v2568 = vunpack.c.l.b16 %v272
  %v2569 = vunpack.c.h.b16 %v272
  %v2570 = vunpack.c.l.b16 %v273
  %v2571 = vunpack.c.h.b16 %v273
  %v2572 = vunpack.c.l.b16 %v274
  %v2573 = vunpack.c.h.b16 %v274
  %v2574 = vunpack.c.l.b16 %v275
  %v2575 = vunpack.c.h.b16 %v275
  %v2576 = vunpack.c.l.b16 %v276
  %v2577 = vunpack.c.h.b16 %v276
  %v2578 = vunpack.c.l.b16 %v277
  %v2579 = vunpack.c.h.b16 %v277
  %v2580 = vunpack.c.l.b16 %v278
  %v2581 = vunpack.c.h.b16 %v278
  %v2582 = vunpack.c.l.b16 %v279
  %v2583 = vunpack.c.h.b16 %v279
  %v2584 = vunpack.c.l.b16 %v280
  %v2585 = vunpack.c.h.b16 %v280
  %v2586 = vunpack.c.l.b16 %v281
  %v2587 = vunpack.c.h.b16 %v281
  %v2588 = vunpack.c.l.b16 %v282
  %v2589 = vunpack.c.h.b16 %v282
  %v2590 = vunpack.c.l.b16 %v283
  %v2591 = vunpack.c.h.b16 %v283
  %v2592 = vunpack.c.l.b16 %v284
  %v2593 = vunpack.c.h.b16 %v284
  %v2594 = vunpack.c.l.b16 %v285
  %v2595 = vunpack.c.h.b16 %v285
  %v2596 = vunpack.c.l.b16 %v286
  %v2597 = vunpack.c.h.b16 %v286
  %v2598 = vunpack.c.l.b16 %v287
  %v2599 = vunpack.c.h.b16 %v287
  %v2600 = vunpack.c.l.b16 %v288
  %v2601 = vunpack.c.h.b16 %v288
  %v2602 = vunpack.c.l.b16 %v289
  %v2603 = vunpack.c.h.b16 %v289
  %v2604 = vunpack.c.l.b16 %v290
  %v2605 = vunpack.c.h.b16 %v290
  %v2606 = vunpack.c.l.b16 %v291
  %v2607 = vunpack.c.h.b16 %v291
  %v2608 = vunpack.c.l.b16 %v292
  %v2609 = vunpack.c.h.b16 %v292
  %v2610 = vunpack.c.l.b16 %v293
  %v2611 = vunpack.c.h.b16 %v293
  %v2612 = vunpack.c.l.b16 %v294
  %v2613 = vunpack.c.h.b16 %v294
  %v2614 = vunpack.c.l.b16 %v295
  %v2615 = vunpack.c.h.b16 %v295
  %v2616 = vunpack.c.l.b16 %v296
  %v2617 = vunpack.c.h.b16 %v296
  %v2618 = vunpack.c.l.b16 %v297
  %v2619 = vunpack.c.h.b16 %v297
  %v2620 = vunpack.c.l.b16 %v298
  %v2621 = vunpack.c.h.b16 %v298
  %v2622 = vunpack.c.l.b16 %v299
  %v2623 = vunpack.c.h.b16 %v299
  %v2624 = vunpack.c.l.b16 %v300
  %v2625 = vunpack.c.h.b16 %v300
  %v2626 = vunpack.c.l.b16 %v301
  %v2627 = vunpack.c.h.b16 %v301
  %v2628 = vunpack.c.l.b16 %v302
  %v2629 = vunpack.c.h.b16 %v302
  %v2630 = vunpack.c.l.b16 %v303
  %v2631 = vunpack.c.h.b16 %v303
  %v2632 = vunpack.c.l.b16 %v304
  %v2633 = vunpack.c.h.b16 %v304
  %v2634 = vunpack.c.l.b16 %v305
  %v2635 = vunpack.c.h.b16 %v305
  %v2636 = vunpack.c.l.b16 %v306
  %v2637 = vunpack.c.h.b16 %v306
  %v2638 = vunpack.c.l.b16 %v307
  %v2639 = vunpack.c.h.b16 %v307
  %v2640 = vunpack.c.l.b16 %v308
  %v2641 = vunpack.c.h.b16 %v308
  %v2642 = vunpack.c.l.b16 %v309
  %v2643 = vunpack.c.h.b16 %v309
  %v2644 = vunpack.c.l.b16 %v310
  %v2645 = vunpack.c.h.b16 %v310
  %v2646 = vunpack.c.l.b16 %v311
  %v2647 = vunpack.c.h.b16 %v311
  %v2648 = vunpack.c.l.b16 %v312
  %v2649 = vunpack.c.h.b16 %v312
  %v2650 = vunpack.c.l.b16 %v313
  %v2651 = vunpack.c.h.b16 %v313
  %v2652 = vunpack.c.l.b16 %v314
  %v2653 = vunpack.c.h.b16 %v314
  %v2654 = vunpack.c.l.b16 %v315
  %v2655 = vunpack.c.h.b16 %v315
  %v2656 = vunpack.c.l.b16 %v316
  %v2657 = vunpack.c.h.b16 %v316
  %v2658 = vunpack.c.l.b16 %v317
  %v2659 = vunpack.c.h.b16 %v317
  %v2660 = vunpack.c.l.b16 %v318
  %v2661 = vunpack.c.h.b16 %v318
  %v2662 = vunpack.c.l.b16 %v319
  %v2663 = vunpack.c.h.b16 %v319
  %v2664 = vunpack.c.l.b16 %v320
  %v2665 = vunpack.c.h.b16 %v320
  %v2666 = vunpack.c.l.b16 %v321
  %v2667 = vunpack.c.h.b16 %v321
  %v2668 = vunpack.c.l.b16 %v322
  %v2669 = vunpack.c.h.b16 %v322
  %v2670 = vunpack.c.l.b16 %v323
  %v2671 = vunpack.c.h.b16 %v323
  %v2672 = vunpack.c.l.b16 %v324
  %v2673 = vunpack.c.h.b16 %v324
  %v2674 = vunpack.c.l.b16 %v325
  %v2675 = vunpack.c.h.b16 %v325
  %v2676 = vunpack.c.l.b16 %v326
  %v2677 = vunpack.c.h.b16 %v326
  %v2678 = vunpack.c.l.b16 %v327
  %v2679 = vunpack.c.h.b16 %v327
  %v2680 = vunpack.c.l.b16 %v328
  %v2681 = vunpack.c.h.b16 %v328
  %v2682 = vunpack.c.l.b16 %v329
  %v2683 = vunpack.c.h.b16 %v329
  %v2684 = vunpack.c.l.b16 %v330
  %v2685 = vunpack.c.h.b16 %v330
  %v2686 = vunpack.c.l.b16 %v331
  %v2687 = vunpack.c.h.b16 %v331
  %v2688 = vunpack.c.l.b16 %v332
  %v2689 = vunpack.c.h.b16 %v332
  %v2690 = vunpack.c.l.b16 %v333
  %v2691 = vunpack.c.h.b16 %v333
  %v2692 = vunpack.c.l.b16 %v334
  %v2693 = vunpack.c.h.b16 %v334
  %v2694 = vunpack.c.l.b16 %v335
  %v2695 = vunpack.c.h.b16 %v335
  %v2696 = vunpack.c.l.b16 %v336
  %v2697 = vunpack.c.h.b16 %v336
  %v2698 = vunpack.c.l.b16 %v337
  %v2699 = vunpack.c.h.b16 %v337
  %v2700 = vunpack.c.l.b16 %v338
  %v2701 = vunpack.c.h.b16 %v338
  %v2702 = vunpack.c.l.b16 %v339
  %v2703 = vunpack.c.h.b16 %v339
  %v2704 = vunpack.c.l.b16 %v340
  %v2705 = vunpack.c.h.b16 %v340
  %v2706 = vunpack.c.l.b16 %v341
  %v2707 = vunpack.c.h.b16 %v341
  %v2708 = vunpack.c.l.b16 %v342
  %v2709 = vunpack.c.h.b16 %v342
  %v2710 = vunpack.c.l.b16 %v343
  %v2711 = vunpack.c.h.b16 %v343
  %v2712 = vunpack.c.l.b16 %v344
  %v2713 = vunpack.c.h.b16 %v344
  %v2714 = vunpack.c.l.b16 %v345
  %v2715 = vunpack.c.h.b16 %v345
  %v2716 = vunpack.c.l.b16 %v346
  %v2717 = vunpack.c.h.b16 %v346
  %v2718 = vunpack.c.l.b16 %v347
  %v2719 = vunpack.c.h.b16 %v347
  %v2720 = vunpack.c.l.b16 %v348
  %v2721 = vunpack.c.h.b16 %v348
  %v2722 = vunpack.c.l.b16 %v349
  %v2723 = vunpack.c.h.b16 %v349
  %v2724 = vunpack.c.l.b16 %v350
  %v2725 = vunpack.c.h.b16 %v350
  %v2726 = vunpack.c.l.b16 %v351
  %v2727 = vunpack.c.h.b16 %v351
  %v2728 = vunpack.c.l.b16 %v352
  %v2729 = vunpack.c.h.b16 %v352
  %v2730 = vunpack.c.l.b16 %v353
  %v2731 = vunpack.c.h.b16 %v353
  %v2732 = vunpack.c.l.b16 %v354
  %v2733 = vunpack.c.h.b16 %v354
  %v2734 = vunpack.c.l.b16 %v355
  %v2735 = vunpack.c.h.b16 %v355
  %v2736 = vunpack.c.l.b16 %v356
  %v2737 = vunpack.c.h.b16 %v356
  %v2738 = vunpack.c.l.b16 %v357
  %v2739 = vunpack.c.h.b16 %v357
  %v2740 = vunpack.c.l.b16 %v358
  %v2741 = vunpack.c.h.b16 %v358
  %v2742 = vunpack.c.l.b16 %v359
  %v2743 = vunpack.c.h.b16 %v359
  %v2744 = vunpack.c.l.b16 %v360
  %v2745 = vunpack.c.h.b16 %v360
  %v2746 = vunpack.c.l.b16 %v361
  %v2747 = vunpack.c.h.b16 %v361
  %v2748 = vunpack.c.l.b16 %v362
  %v2749 = vunpack.c.h.b16 %v362
  %v2750 = vunpack.c.l.b16 %v363
  %v2751 = vunpack.c.h.b16 %v363
  %v2752 = vunpack.c.l.b16 %v364
  %v2753 = vunpack.c.h.b16 %v364
  %v2754 = vunpack.c.l.b16 %v365
  %v2755 = vunpack.c.h.b16 %v365
  %v2756 = vunpack.c.l.b16 %v366
  %v2757 = vunpack.c.h.b16 %v366
  %v2758 = vunpack.c.l.b16 %v367
  %v2759 = vunpack.c.h.b16 %v367
  %v2760 = vunpack.c.l.b16 %v368
  %v2761 = vunpack.c.h.b16 %v368
  %v2762 = vunpack.c.l.b16 %v369
  %v2763 = vunpack.c.h.b16 %v369
  %v2764 = vunpack.c.l.b16 %v370
  %v2765 = vunpack.c.h.b16 %v370
  %v2766 = vunpack.c.l.b16 %v371
  %v2767 = vunpack.c.h.b16 %v371
  %v2768 = vunpack.c.l.b16 %v372
  %v2769 = vunpack.c.h.b16 %v372
  %v2770 = vunpack.c.l.b16 %v373
  %v2771 = vunpack.c.h.b16 %v373
  %v2772 = vunpack.c.l.b16 %v374
  %v2773 = vunpack.c.h.b16 %v374
  %v2774 = vunpack.c.l.b16 %v375
  %v2775 = vunpack.c.h.b16 %v375
  %v2776 = vunpack.c.l.b16 %v376
  %v2777 = vunpack.c.h.b16 %v376
  %v2778 = vunpack.c.l.b16 %v377
  %v2779 = vunpack.c.h.b16 %v377
  %v2780 = vunpack.c.l.b16 %v378
  %v2781 = vunpack.c.h.b16 %v378
  %v2782 = vunpack.c.l.b16 %v379
  %v2783 = vunpack.c.h.b16 %v379
  %v2784 = vunpack.c.l.b16 %v380
  %v2785 = vunpack.c.h.b16 %v380
  %v2786 = vunpack.c.l.b16 %v381
  %v2787 = vunpack.c.h.b16 %v381
  %v2788 = vunpack.c.l.b16 %v382
  %v2789 = vunpack.c.h.b16 %v382
  %v2790 = vunpack.c.l.b16 %v383
  %v2791 = vunpack.c.h.b16 %v383
  %v2792 = vunpack.c.l.b16 %v384
  %v2793 = vunpack.c.h.b16 %v384
  %v2794 = vunpack.c.l.b16 %v385
  %v2795 = vunpack.c.h.b16 %v385
  %v2796 = vunpack.c.l.b16 %v386
  %v2797 = vunpack.c.h.b16 %v386
  %v2798 = vunpack.c.l.b16 %v387
  %v2799 = vunpack.c.h.b16 %v387
  %v2800 = vunpack.c.l.b16 %v388
  %v2801 = vunpack.c.h.b16 %v388
  %v2802 = vunpack.c.l.b16 %v389
  %v2803 = vunpack.c.h.b16 %v389
  %v2804 = vunpack.c.l.b16 %v390
  %v2805 = vunpack.c.h.b16 %v390
  %v2806 = vunpack.c.l.b16 %v391
  %v2807 = vunpack.c.h.b16 %v391
  %v2808 = vunpack.c.l.b16 %v392
  %v2809 = vunpack.c.h.b16 %v392
  %v2810 = vunpack.c.l.b16 %v393
  %v2811 = vunpack.c.h.b16 %v393
  %v2812 = vunpack.c.l.b16 %v394
  %v2813 = vunpack.c.h.b16 %v394
  %v2814 = vunpack.c.l.b16 %v395
  %v2815 = vunpack.c.h.b16 %v395
  %v2816 = vunpack.c.l.b16 %v396
  %v2817 = vunpack.c.h.b16 %v396
  %v2818 = vunpack.c.l.b16 %v397
  %v2819 = vunpack.c.h.b16 %v397
  %v2820 = vunpack.c.l.b16 %v398
  %v2821 = vunpack.c.h.b16 %v398
  %v2822 = vunpack.c.l.b16 %v399
  %v2823 = vunpack.c.h.b16 %v399
  %v2824 = vunpack.c.l.b16 %v400
  %v2825 = vunpack.c.h.b16 %v400
  %v2826 = vunpack.c.l.b16 %v401
  %v2827 = vunpack.c.h.b16 %v401
  %v2828 = vunpack.c.l.b16 %v402
  %v2829 = vunpack.c.h.b16 %v402
  %v2830 = vunpack.c.l.b16 %v403
  %v2831 = vunpack.c.h.b16 %v403
  %v2832 = vunpack.c.l.b16 %v404
  %v2833 = vunpack.c.h.b16 %v404
  %v2834 = vunpack.c.l.b16 %v405
  %v2835 = vunpack.c.h.b16 %v405
  %v2836 = vunpack.c.l.b16 %v406
  %v2837 = vunpack.c.h.b16 %v406
  %v2838 = vunpack.c.l.b16 %v407
  %v2839 = vunpack.c.h.b16 %v407
  %v2840 = vunpack.c.l.b16 %v408
  %v2841 = vunpack.c.h.b16 %v408
  %v2842 = vunpack.c.l.b16 %v409
  %v2843 = vunpack.c.h.b16 %v409
  %v2844 = vunpack.c.l.b16 %v410
  %v2845 = vunpack.c.h.b16 %v410
  %v2846 = vunpack.c.l.b16 %v411
  %v2847 = vunpack.c.h.b16 %v411
  %v2848 = vunpack.c.l.b16 %v412
  %v2849 = vunpack.c.h.b16 %v412
  %v2850 = vunpack.c.l.b16 %v413
  %v2851 = vunpack.c.h.b16 %v413
  %v2852 = vunpack.c.l.b16 %v414
  %v2853 = vunpack.c.h.b16 %v414
  %v2854 = vunpack.c.l.b16 %v415
  %v2855 = vunpack.c.h.b16 %v415
  %v2856 = vunpack.c.l.b16 %v416
  %v2857 = vunpack.c.h.b16 %v416
  %v2858 = vunpack.c.l.b16 %v417
  %v2859 = vunpack.c.h.b16 %v417
  %v2860 = vunpack.c.l.b16 %v418
  %v2861 = vunpack.c.h.b16 %v418
  %v2862 = vunpack.c.l.b16 %v419
  %v2863 = vunpack.c.h.b16 %v419
  %v2864 = vunpack.c.l.b16 %v420
  %v2865 = vunpack.c.h.b16 %v420
  %v2866 = vunpack.c.l.b16 %v421
  %v2867 = vunpack.c.h.b16 %v421
  %v2868 = vunpack.c.l.b16 %v422
  %v2869 = vunpack.c.h.b16 %v422
  %v2870 = vunpack.c.l.b16 %v423
  %v2871 = vunpack.c.h.b16 %v423
  %v2872 = vunpack.c.l.b16 %v424
  %v2873 = vunpack.c.h.b16 %v424
  %v2874 = vunpack.c.l.b16 %v425
  %v2875 = vunpack.c.h.b16 %v425
  %v2876 = vunpack.c.l.b16 %v426
  %v2877 = vunpack.c.h.b16 %v426
  %v2878 = vunpack.c.l.b16 %v427
  %v2879 = vunpack.c.h.b16 %v427
  %v2880 = vunpack.c.l.b16 %v428
  %v2881 = vunpack.c.h.b16 %v428
  %v2882 = vunpack.c.l.b16 %v429
  %v2883 = vunpack.c.h.b16 %v429
  %v2884 = vunpack.c.l.b16 %v430
  %v2885 = vunpack.c.h.b16 %v430
  %v2886 = vunpack.c.l.b16 %v431
  %v2887 = vunpack.c.h.b16 %v431
  %v2888 = vunpack.c.l.b16 %v432
  %v2889 = vunpack.c.h.b16 %v432
  %v2890 = vunpack.c.l.b16 %v433
  %v2891 = vunpack.c.h.b16 %v433
  %v2892 = vunpack.c.l.b16 %v434
  %v2893 = vunpack.c.h.b16 %v434
  %v2894 = vunpack.c.l.b16 %v435
  %v2895 = vunpack.c.h.b16 %v435
  %v2896 = vunpack.c.l.b16 %v436
  %v2897 = vunpack.c.h.b16 %v436
  %v2898 = vunpack.c.l.b16 %v437
  %v2899 = vunpack.c.h.b16 %v437
  %v2900 = vunpack.c.l.b16 %v438
  %v2901 = vunpack.c.h.b16 %v438
  %v2902 = vunpack.c.l.b16 %v439
  %v2903 = vunpack.c.h.b16 %v439
  %v2904 = vunpack.c.l.b16 %v440
  %v2905 = vunpack.c.h.b16 %v440
  %v2906 = vunpack.c.l.b16 %v441
  %v2907 = vunpack.c.h.b16 %v441
  %v2908 = vunpack.c.l.b16 %v442
  %v2909 = vunpack.c.h.b16 %v442
  %v2910 = vunpack.c.l.b16 %v443
  %v2911 = vunpack.c.h.b16 %v443
  %v2912 = vunpack.c.l.b16 %v444
  %v2913 = vunpack.c.h.b16 %v444
  %v2914 = vunpack.c.l.b16 %v445
  %v2915 = vunpack.c.h.b16 %v445
  %v2916 = vunpack.c.l.b16 %v446
  %v2917 = vunpack.c.h.b16 %v446
  %v2918 = vunpack.c.l.b16 %v447
  %v2919 = vunpack.c.h.b16 %v447
  %v2920 = vunpack.c.l.b16 %v448
  %v2921 = vunpack.c.h.b16 %v448
  %v2922 = vunpack.c.l.b16 %v449
  %v2923 = vunpack.c.h.b16 %v449
  %v2924 = vunpack.c.l.b16 %v450
  %v2925 = vunpack.c.h.b16 %v450
  %v2926 = vunpack.c.l.b16 %v451
  %v2927 = vunpack.c.h.b16 %v451
  %v2928 = vunpack.c.l.b16 %v452
  %v2929 = vunpack.c.h.b16 %v452
  %v2930 = vunpack.c.l.b16 %v453
  %v2931 = vunpack.c.h.b16 %v453
  %v2932 = vunpack.c.l.b16 %v454
  %v2933 = vunpack.c.h.b16 %v454
  %v2934 = vunpack.c.l.b16 %v455
  %v2935 = vunpack.c.h.b16 %v455
  %v2936 = vunpack.c.l.b16 %v456
  %v2937 = vunpack.c.h.b16 %v456
  %v2938 = vunpack.c.l.b16 %v457
  %v2939 = vunpack.c.h.b16 %v457
  %v2940 = vunpack.c.l.b16 %v458
  %v2941 = vunpack.c.h.b16 %v458
  %v2942 = vunpack.c.l.b16 %v459
  %v2943 = vunpack.c.h.b16 %v459
  %v2944 = vunpack.c.l.b16 %v460
  %v2945 = vunpack.c.h.b16 %v460
  %v2946 = vunpack.c.l.b16 %v461
  %v2947 = vunpack.c.h.b16 %v461
  %v2948 = vunpack.c.l.b16 %v462
  %v2949 = vunpack.c.h.b16 %v462
  %v2950 = vunpack.c.l.b16 %v463
  %v2951 = vunpack.c.h.b16 %v463
  %v2952 = vunpack.c.l.b16 %v464
  %v2953 = vunpack.c.h.b16 %v464
  %v2954 = vunpack.c.l.b16 %v465
  %v2955 = vunpack.c.h.b16 %v465
  %v2956 = vunpack.c.l.b16 %v466
  %v2957 = vunpack.c.h.b16 %v466
  %v2958 = vunpack.c.l.b16 %v467
  %v2959 = vunpack.c.h.b16 %v467
  %v2960 = vunpack.c.l.b16 %v468
  %v2961 = vunpack.c.h.b16 %v468
  %v2962 = vunpack.c.l.b16 %v469
  %v2963 = vunpack.c.h.b16 %v469
  %v2964 = vunpack.c.l.b16 %v470
  %v2965 = vunpack.c.h.b16 %v470
  %v2966 = vunpack.c.l.b16 %v471
  %v2967 = vunpack.c.h.b16 %v471
  %v2968 = vunpack.c.l.b16 %v472
  %v2969 = vunpack.c.h.b16 %v472
  %v2970 = vunpack.c.l.b16 %v473
  %v2971 = vunpack.c.h.b16 %v473
  %v2972 = vunpack.c.l.b16 %v474
  %v2973 = vunpack.c.h.b16 %v474
  %v2974 = vunpack.c.l.b16 %v475
  %v2975 = vunpack.c.h.b16 %v475
  %v2976 = vunpack.c.l.b16 %v476
  %v2977 = vunpack.c.h.b16 %v476
  %v2978 = vunpack.c.l.b16 %v477
  %v2979 = vunpack.c.h.b16 %v477
  %v2980 = vunpack.c.l.b16 %v478
  %v2981 = vunpack.c.h.b16 %v478
  %v2982 = vunpack.c.l.b16 %v479
  %v2983 = vunpack.c.h.b16 %v479
  %v2984 = vunpack.c.l.b16 %v480
  %v2985 = vunpack.c.h.b16 %v480
  %v2986 = vunpack.c.l.b16 %v481
  %v2987 = vunpack.c.h.b16 %v481
  %v2988 = vunpack.c.l.b16 %v482
  %v2989 = vunpack.c.h.b16 %v482
  %v2990 = vunpack.c.l.b16 %v483
  %v2991 = vunpack.c.h.b16 %v483
  %v2992 = vunpack.c.l.b16 %v484
  %v2993 = vunpack.c.h.b16 %v484
  %v2994 = vunpack.c.l.b16 %v485
  %v2995 = vunpack.c.h.b16 %v485
  %v2996 = vunpack.c.l.b16 %v486
  %v2997 = vunpack.c.h.b16 %v486
  %v2998 = vunpack.c.l.b16 %v487
  %v2999 = vunpack.c.h.b16 %v487
  %v3000 = vunpack.c.l.b16 %v488
  %v3001 = vunpack.c.h.b16 %v488
  %v3002 = vunpack.c.l.b16 %v489
  %v3003 = vunpack.c.h.b16 %v489
  %v3004 = vunpack.c.l.b16 %v490
  %v3005 = vunpack.c.h.b16 %v490
  %v3006 = vunpack.c.l.b16 %v491
  %v3007 = vunpack.c.h.b16 %v491
  %v3008 = vunpack.c.l.b16 %v492
  %v3009 = vunpack.c.h.b16 %v492
  %v3010 = vunpack.c.l.b16 %v493
  %v3011 = vunpack.c.h.b16 %v493
  %v3012 = vunpack.c.l.b16 %v494
  %v3013 = vunpack.c.h.b16 %v494
  %v3014 = vunpack.c.l.b16 %v495
  %v3015 = vunpack.c.h.b16 %v495
  %v3016 = vunpack.c.l.b16 %v496
  %v3017 = vunpack.c.h.b16 %v496
  %v3018 = vunpack.c.l.b16 %v497
  %v3019 = vunpack.c.h.b16 %v497
  %v3020 = vunpack.c.l.b16 %v498
  %v3021 = vunpack.c.h.b16 %v498
  %v3022 = vunpack.c.l.b16 %v499
  %v3023 = vunpack.c.h.b16 %v499
  %v3024 = vunpack.c.l.b16 %v500
  %v3025 = vunpack.c.h.b16 %v500
  %v3026 = vunpack.c.l.b16 %v501
  %v3027 = vunpack.c.h.b16 %v501
  %v3028 = vunpack.c.l.b16 %v502
  %v3029 = vunpack.c.h.b16 %v502
  %v3030 = vunpack.c.l.b16 %v503
  %v3031 = vunpack.c.h.b16 %v503
  %v3032 = vunpack.c.l.b16 %v504
  %v3033 = vunpack.c.h.b16 %v504
  %v3034 = vunpack.c.l.b16 %v505
  %v3035 = vunpack.c.h.b16 %v505
  %v3036 = vunpack.c.l.b16 %v506
  %v3037 = vunpack.c.h.b16 %v506
  %v3038 = vunpack.c.l.b16 %v507
  %v3039 = vunpack.c.h.b16 %v507
  %v3040 = vunpack.c.l.b16 %v508
  %v3041 = vunpack.c.h.b16 %v508
  %v3042 = vunpack.c.l.b16 %v509
  %v3043 = vunpack.c.h.b16 %v509
  %v3044 = vunpack.c.l.b16 %v510
  %v3045 = vunpack.c.h.b16 %v510
  %v3046 = vunpack.c.l.b16 %v511
  %v3047 = vunpack.c.h.b16 %v511
  %v3048 = vunpack.c.l.b16 %v512
  %v3049 = vunpack.c.h.b16 %v512
  %v3050 = vunpack.c.l.b16 %v513
  %v3051 = vunpack.c.h.b16 %v513
  %v3052 = vunpack.c.l.b16 %v514
  %v3053 = vunpack.c.h.b16 %v514
  %v3054 = vunpack.c.l.b16 %v515
  %v3055 = vunpack.c.h.b16 %v515
  %v3056 = vunpack.c.l.b16 %v516
  %v3057 = vunpack.c.h.b16 %v516
  %v3058 = vunpack.c.l.b16 %v517
  %v3059 = vunpack.c.h.b16 %v517
  %v3060 = vunpack.c.l.b16 %v518
  %v3061 = vunpack.c.h.b16 %v518
  %v3062 = vunpack.c.l.b16 %v519
  %v3063 = vunpack.c.h.b16 %v519
  %v3064 = vunpack.c.l.b16 %v520
  %v3065 = vunpack.c.h.b16 %v520
  %v3066 = vunpack.c.l.b16 %v521
  %v3067 = vunpack.c.h.b16 %v521
  %v3068 = vunpack.c.l.b16 %v522
  %v3069 = vunpack.c.h.b16 %v522
  %v3070 = vunpack.c.l.b16 %v523
  %v3071 = vunpack.c.h.b16 %v523
  %v3072 = vunpack.c.l.b16 %v524
  %v3073 = vunpack.c.h.b16 %v524
  %v3074 = vunpack.c.l.b16 %v525
  %v3075 = vunpack.c.h.b16 %v525
  %v3076 = vunpack.c.l.b16 %v526
  %v3077 = vunpack.c.h.b16 %v526
  %v3078 = vunpack.c.l.b16 %v527
  %v3079 = vunpack.c.h.b16 %v527
  %v3080 = vunpack.c.l.b16 %v528
  %v3081 = vunpack.c.h.b16 %v528
  %v3082 = vunpack.c.l.b16 %v529
  %v3083 = vunpack.c.h.b16 %v529
  %v3084 = vunpack.c.l.b16 %v530
  %v3085 = vunpack.c.h.b16 %v530
  %v3086 = vunpack.c.l.b16 %v531
  %v3087 = vunpack.c.h.b16 %v531
  %v3088 = vunpack.c.l.b16 %v532
  %v3089 = vunpack.c.h.b16 %v532
  %v3090 = vunpack.c.l.b16 %v533
  %v3091 = vunpack.c.h.b16 %v533
  %v3092 = vunpack.c.l.b16 %v534
  %v3093 = vunpack.c.h.b16 %v534
  %v3094 = vunpack.c.l.b16 %v535
  %v3095 = vunpack.c.h.b16 %v535
  %v3096 = vunpack.c.l.b16 %v536
  %v3097 = vunpack.c.h.b16 %v536
  %v3098 = vunpack.c.l.b16 %v537
  %v3099 = vunpack.c.h.b16 %v537
  %v3100 = vunpack.c.l.b16 %v538
  %v3101 = vunpack.c.h.b16 %v538
  %v3102 = vunpack.c.l.b16 %v539
  %v3103 = vunpack.c.h.b16 %v539
  %v3104 = vunpack.c.l.b16 %v540
  %v3105 = vunpack.c.h.b16 %v540
  %v3106 = vunpack.c.l.b16 %v541
  %v3107 = vunpack.c.h.b16 %v541
  %v3108 = vunpack.c.l.b16 %v542
  %v3109 = vunpack.c.h.b16 %v542
  %v3110 = vunpack.c.l.b16 %v543
  %v3111 = vunpack.c.h.b16 %v543
  %v3112 = vunpack.c.l.b16 %v544
  %v3113 = vunpack.c.h.b16 %v544
  %v3114 = vunpack.c.l.b16 %v545
  %v3115 = vunpack.c.h.b16 %v545
  %v3116 = vunpack.c.l.b16 %v546
  %v3117 = vunpack.c.h.b16 %v546
  %v3118 = vunpack.c.l.b16 %v547
  %v3119 = vunpack.c.h.b16 %v547
  %v3120 = vunpack.c.l.b16 %v548
  %v3121 = vunpack.c.h.b16 %v548
  %v3122 = vunpack.c.l.b16 %v549
  %v3123 = vunpack.c.h.b16 %v549
  %v3124 = vunpack.c.l.b16 %v550
  %v3125 = vunpack.c.h.b16 %v550
  %v3126 = vunpack.c.l.b16 %v551
  %v3127 = vunpack.c.h.b16 %v551
  %v3128 = vunpack.c.l.b16 %v552
  %v3129 = vunpack.c.h.b16 %v552
  %v3130 = vunpack.c.l.b16 %v553
  %v3131 = vunpack.c.h.b16 %v553
  %v3132 = vunpack.c.l.b16 %v554
  %v3133 = vunpack.c.h.b16 %v554
  %v3134 = vunpack.c.l.b16 %v555
  %v3135 = vunpack.c.h.b16 %v555
  %v3136 = vunpack.c.l.b16 %v556
  %v3137 = vunpack.c.h.b16 %v556
  %v3138 = vunpack.c.l.b16 %v557
  %v3139 = vunpack.c.h.b16 %v557
  %v3140 = vunpack.c.l.b16 %v558
  %v3141 = vunpack.c.h.b16 %v558
  %v3142 = vunpack.c.l.b16 %v559
  %v3143 = vunpack.c.h.b16 %v559
  %v3144 = vunpack.c.l.b16 %v560
  %v3145 = vunpack.c.h.b16 %v560
  %v3146 = vunpack.c.l.b16 %v561
  %v3147 = vunpack.c.h.b16 %v561
  %v3148 = vunpack.c.l.b16 %v562
  %v3149 = vunpack.c.h.b16 %v562
  %v3150 = vunpack.c.l.b16 %v563
  %v3151 = vunpack.c.h.b16 %v563
  %v3152 = vunpack.c.l.b16 %v564
  %v3153 = vunpack.c.h.b16 %v564
  %v3154 = vunpack.c.l.b16 %v565
  %v3155 = vunpack.c.h.b16 %v565
  %v3156 = vunpack.c.l.b16 %v566
  %v3157 = vunpack.c.h.b16 %v566
  %v3158 = vunpack.c.l.b16 %v567
  %v3159 = vunpack.c.h.b16 %v567
  %v3160 = vunpack.c.l.b16 %v568
  %v3161 = vunpack.c.h.b16 %v568
  %v3162 = vunpack.c.l.b16 %v569
  %v3163 = vunpack.c.h.b16 %v569
  %v3164 = vunpack.c.l.b16 %v570
  %v3165 = vunpack.c.h.b16 %v570
  %v3166 = vunpack.c.l.b16 %v571
  %v3167 = vunpack.c.h.b16 %v571
  %v3168 = vunpack.c.l.b16 %v572
  %v3169 = vunpack.c.h.b16 %v572
  %v3170 = vunpack.c.l.b16 %v573
  %v3171 = vunpack.c.h.b16 %v573
  %v3172 = vunpack.c.l.b16 %v574
  %v3173 = vunpack.c.h.b16 %v574
  %v3174 = vunpack.c.l.b16 %v575
  %v3175 = vunpack.c.h.b16 %v575
  %v3176 = vunpack.c.l.b16 %v576
  %v3177 = vunpack.c.h.b16 %v576
  %v3178 = vunpack.c.l.b16 %v577
  %v3179 = vunpack.c.h.b16 %v577
  %v3180 = vunpack.c.l.b16 %v578
  %v3181 = vunpack.c.h.b16 %v578
  %v3182 = vunpack.c.l.b16 %v579
  %v3183 = vunpack.c.h.b16 %v579
  %v3184 = vunpack.c.l.b16 %v580
  %v3185 = vunpack.c.h.b16 %v580
  %v3186 = vunpack.c.l.b16 %v581
  %v3187 = vunpack.c.h.b16 %v581
  %v3188 = vunpack.c.l.b16 %v582
  %v3189 = vunpack.c.h.b16 %v582
  %v3190 = vunpack.c.l.b16 %v583
  %v3191 = vunpack.c.h.b16 %v583
  %v3192 = vunpack.c.l.b16 %v584
  %v3193 = vunpack.c.h.b16 %v584
  %v3194 = vunpack.c.l.b16 %v585
  %v3195 = vunpack.c.h.b16 %v585
  %v3196 = vunpack.c.l.b16 %v586
  %v3197 = vunpack.c.h.b16 %v586
  %v3198 = vunpack.c.l.b16 %v587
  %v3199 = vunpack.c.h.b16 %v587
  %v3200 = vunpack.c.l.b16 %v588
  %v3201 = vunpack.c.h.b16 %v588
  %v3202 = vunpack.c.l.b16 %v589
  %v3203 = vunpack.c.h.b16 %v589
  %v3204 = vunpack.c.l.b16 %v590
  %v3205 = vunpack.c.h.b16 %v590
  %v3206 = vunpack.c.l.b16 %v591
  %v3207 = vunpack.c.h.b16 %v591
  %v3208 = vunpack.c.l.b16 %v592
  %v3209 = vunpack.c.h.b16 %v592
  %v3210 = vunpack.c.l.b16 %v593
  %v3211 = vunpack.c.h.b16 %v593
  %v3212 = vunpack.c.l.b16 %v594
  %v3213 = vunpack.c.h.b16 %v594
  %v3214 = vunpack.c.l.b16 %v595
  %v3215 = vunpack.c.h.b16 %v595
  %v3216 = vunpack.c.l.b16 %v596
  %v3217 = vunpack.c.h.b16 %v596
  %v3218 = vunpack.c.l.b16 %v597
  %v3219 = vunpack.c.h.b16 %v597
  %v3220 = vunpack.c.l.b16 %v598
  %v3221 = vunpack.c.h.b16 %v598
  %v3222 = vunpack.c.l.b16 %v599
  %v3223 = vunpack.c.h.b16 %v599
  %v3224 = vunpack.c.l.b16 %v600
  %v3225 = vunpack.c.h.b16 %v600
  %v3226 = vunpack.c.l.b16 %v601
  %v3227 = vunpack.c.h.b16 %v601
  %v3228 = vunpack.c.l.b16 %v602
  %v3229 = vunpack.c.h.b16 %v602
  %v3230 = vunpack.c.l.b16 %v603
  %v3231 = vunpack.c.h.b16 %v603
  %v3232 = vunpack.c.l.b16 %v604
  %v3233 = vunpack.c.h.b16 %v604
  %v3234 = vunpack.c.l.b16 %v605
  %v3235 = vunpack.c.h.b16 %v605
  %v3236 = vunpack.c.l.b16 %v606
  %v3237 = vunpack.c.h.b16 %v606
  %v3238 = vunpack.c.l.b16 %v607
  %v3239 = vunpack.c.h.b16 %v607
  %v3240 = vunpack.c.l.b16 %v608
  %v3241 = vunpack.c.h.b16 %v608
  %v3242 = vunpack.c.l.b16 %v609
  %v3243 = vunpack.c.h.b16 %v609
  %v3244 = vunpack.c.l.b16 %v610
  %v3245 = vunpack.c.h.b16 %v610
  %v3246 = vunpack.c.l.b16 %v611
  %v3247 = vunpack.c.h.b16 %v611
  %v3248 = vunpack.c.l.b16 %v612
  %v3249 = vunpack.c.h.b16 %v612
  %v3250 = vunpack.c.l.b16 %v613
  %v3251 = vunpack.c.h.b16 %v613
  %v3252 = vunpack.c.l.b16 %v614
  %v3253 = vunpack.c.h.b16 %v614
  %v3254 = vunpack.c.l.b16 %v615
  %v3255 = vunpack.c.h.b16 %v615
  %v3256 = vunpack.c.l.b16 %v616
  %v3257 = vunpack.c.h.b16 %v616
  %v3258 = vunpack.c.l.b16 %v617
  %v3259 = vunpack.c.h.b16 %v617
  %v3260 = vunpack.c.l.b16 %v618
  %v3261 = vunpack.c.h.b16 %v618
  %v3262 = vunpack.c.l.b16 %v619
  %v3263 = vunpack.c.h.b16 %v619
  %v3264 = vunpack.c.l.b16 %v620
  %v3265 = vunpack.c.h.b16 %v620
  %v3266 = vunpack.c.l.b16 %v621
  %v3267 = vunpack.c.h.b16 %v621
  %v3268 = vunpack.c.l.b16 %v622
  %v3269 = vunpack.c.h.b16 %v622
  %v3270 = vunpack.c.l.b16 %v623
  %v3271 = vunpack.c.h.b16 %v623
  %v3272 = vunpack.c.l.b16 %v624
  %v3273 = vunpack.c.h.b16 %v624
  %v3274 = vunpack.c.l.b16 %v625
  %v3275 = vunpack.c.h.b16 %v625
  %v3276 = vunpack.c.l.b16 %v626
  %v3277 = vunpack.c.h.b16 %v626
  %v3278 = vunpack.c.l.b16 %v627
  %v3279 = vunpack.c.h.b16 %v627
  %v3280 = vunpack.c.l.b16 %v628
  %v3281 = vunpack.c.h.b16 %v628
  %v3282 = vunpack.c.l.b16 %v629
  %v3283 = vunpack.c.h.b16 %v629
  %v3284 = vunpack.c.l.b16 %v630
  %v3285 = vunpack.c.h.b16 %v630
  %v3286 = vunpack.c.l.b16 %v631
  %v3287 = vunpack.c.h.b16 %v631
  %v3288 = vunpack.c.l.b16 %v632
  %v3289 = vunpack.c.h.b16 %v632
  %v3290 = vunpack.c.l.b16 %v633
  %v3291 = vunpack.c.h.b16 %v633
  %v3292 = vunpack.c.l.b16 %v634
  %v3293 = vunpack.c.h.b16 %v634
  %v3294 = vunpack.c.l.b16 %v635
  %v3295 = vunpack.c.h.b16 %v635
  %v3296 = vunpack.c.l.b16 %v636
  %v3297 = vunpack.c.h.b16 %v636
  %v3298 = vunpack.c.l.b16 %v637
  %v3299 = vunpack.c.h.b16 %v637
  %v3300 = vunpack.c.l.b16 %v638
  %v3301 = vunpack.c.h.b16 %v638
  %v3302 = vunpack.c.l.b16 %v639
  %v3303 = vunpack.c.h.b16 %v639
  %v3304 = vunpack.c.l.b16 %v640
  %v3305 = vunpack.c.h.b16 %v640
  %v3306 = vunpack.c.l.b16 %v641
  %v3307 = vunpack.c.h.b16 %v641
  %v3308 = vunpack.c.l.b16 %v642
  %v3309 = vunpack.c.h.b16 %v642
  %v3310 = vunpack.c.l.b16 %v643
  %v3311 = vunpack.c.h.b16 %v643
  %v3312 = vunpack.c.l.b16 %v644
  %v3313 = vunpack.c.h.b16 %v644
  %v3314 = vunpack.c.l.b16 %v645
  %v3315 = vunpack.c.h.b16 %v645
  %v3316 = vunpack.c.l.b16 %v646
  %v3317 = vunpack.c.h.b16 %v646
  %v3318 = vunpack.c.l.b16 %v647
  %v3319 = vunpack.c.h.b16 %v647
  %v3320 = vunpack.c.l.b16 %v648
  %v3321 = vunpack.c.h.b16 %v648
  %v3322 = vunpack.c.l.b16 %v649
  %v3323 = vunpack.c.h.b16 %v649
  %v3324 = vunpack.c.l.b16 %v650
  %v3325 = vunpack.c.h.b16 %v650
  %v3326 = vunpack.c.l.b16 %v651
  %v3327 = vunpack.c.h.b16 %v651
  %v3328 = vunpack.c.l.b16 %v652
  %v3329 = vunpack.c.h.b16 %v652
  %v3330 = vunpack.c.l.b16 %v653
  %v3331 = vunpack.c.h.b16 %v653
  %v3332 = vunpack.c.l.b16 %v654
  %v3333 = vunpack.c.h.b16 %v654
  %v3334 = vunpack.c.l.b16 %v655
  %v3335 = vunpack.c.h.b16 %v655
  %v3336 = vunpack.c.l.b16 %v656
  %v3337 = vunpack.c.h.b16 %v656
  %v3338 = vunpack.c.l.b16 %v657
  %v3339 = vunpack.c.h.b16 %v657
  %v3340 = vunpack.c.l.b16 %v658
  %v3341 = vunpack.c.h.b16 %v658
  %v3342 = vunpack.c.l.b16 %v659
  %v3343 = vunpack.c.h.b16 %v659
  %v3344 = vunpack.c.l.b16 %v660
  %v3345 = vunpack.c.h.b16 %v660
  %v3346 = vunpack.c.l.b16 %v661
  %v3347 = vunpack.c.h.b16 %v661
  %v3348 = vunpack.c.l.b16 %v662
  %v3349 = vunpack.c.h.b16 %v662
  %v3350 = vunpack.c.l.b16 %v663
  %v3351 = vunpack.c.h.b16 %v663
  %v3352 = vunpack.c.l.b16 %v664
  %v3353 = vunpack.c.h.b16 %v664
  %v3354 = vunpack.c.l.b16 %v665
  %v3355 = vunpack.c.h.b16 %v665
  %v3356 = vunpack.c.l.b16 %v666
  %v3357 = vunpack.c.h.b16 %v666
  %v3358 = vunpack.c.l.b16 %v667
  %v3359 = vunpack.c.h.b16 %v667
  %v3360 = vunpack.c.l.b16 %v668
  %v3361 = vunpack.c.h.b16 %v668
  %v3362 = vunpack.c.l.b16 %v669
  %v3363 = vunpack.c.h.b16 %v669
  %v3364 = vunpack.c.l.b16 %v670
  %v3365 = vunpack.c.h.b16 %v670
  %v3366 = vunpack.c.l.b16 %v671
  %v3367 = vunpack.c.h.b16 %v671
  %v3368 = vunpack.c.l.b16 %v672
  %v3369 = vunpack.c.h.b16 %v672
  %v3370 = vunpack.c.l.b16 %v673
  %v3371 = vunpack.c.h.b16 %v673
  %v3372 = vunpack.c.l.b16 %v674
  %v3373 = vunpack.c.h.b16 %v674
  %v3374 = vunpack.c.l.b16 %v675
  %v3375 = vunpack.c.h.b16 %v675
  %v3376 = vunpack.c.l.b16 %v676
  %v3377 = vunpack.c.h.b16 %v676
  %v3378 = vunpack.c.l.b16 %v677
  %v3379 = vunpack.c.h.b16 %v677
  %v3380 = vunpack.c.l.b16 %v678
  %v3381 = vunpack.c.h.b16 %v678
  %v3382 = vunpack.c.l.b16 %v679
  %v3383 = vunpack.c.h.b16 %v679
  %v3384 = vunpack.c.l.b16 %v680
  %v3385 = vunpack.c.h.b16 %v680
  %v3386 = vunpack.c.l.b16 %v681
  %v3387 = vunpack.c.h.b16 %v681
  %v3388 = vunpack.c.l.b16 %v682
  %v3389 = vunpack.c.h.b16 %v682
  %v3390 = vunpack.c.l.b16 %v683
  %v3391 = vunpack.c.h.b16 %v683
  %v3392 = vunpack.c.l.b16 %v684
  %v3393 = vunpack.c.h.b16 %v684
  %v3394 = vunpack.c.l.b16 %v685
  %v3395 = vunpack.c.h.b16 %v685
  %v3396 = vunpack.c.l.b16 %v686
  %v3397 = vunpack.c.h.b16 %v686
  %v3398 = vunpack.c.l.b16 %v687
  %v3399 = vunpack.c.h.b16 %v687
  %v3400 = vunpack.c.l.b16 %v688
  %v3401 = vunpack.c.h.b16 %v688
  %v3402 = vunpack.c.l.b16 %v689
  %v3403 = vunpack.c.h.b16 %v689
  %v3404 = vunpack.c.l.b16 %v690
  %v3405 = vunpack.c.h.b16 %v690
  %v3406 = vunpack.c.l.b16 %v691
  %v3407 = vunpack.c.h.b16 %v691
  %v3408 = vunpack.c.l.b16 %v692
  %v3409 = vunpack.c.h.b16 %v692
  %v3410 = vunpack.c.l.b16 %v693
  %v3411 = vunpack.c.h.b16 %v693
  %v3412 = vunpack.c.l.b16 %v694
  %v3413 = vunpack.c.h.b16 %v694
  %v3414 = vunpack.c.l.b16 %v695
  %v3415 = vunpack.c.h.b16 %v695
  %v3416 = vunpack.c.l.b16 %v696
  %v3417 = vunpack.c.h.b16 %v696
  %v3418 = vunpack.c.l.b16 %v697
  %v3419 = vunpack.c.h.b16 %v697
  %v3420 = vunpack.c.l.b16 %v698
  %v3421 = vunpack.c.h.b16 %v698
  %v3422 = vunpack.c.l.b16 %v699
  %v3423 = vunpack.c.h.b16 %v699
  %v3424 = vunpack.c.l.b16 %v700
  %v3425 = vunpack.c.h.b16 %v700
  %v3426 = vunpack.c.l.b16 %v701
  %v3427 = vunpack.c.h.b16 %v701
  %v3428 = vunpack.c.l.b16 %v702
  %v3429 = vunpack.c.h.b16 %v702
  %v3430 = vunpack.c.l.b16 %v703
  %v3431 = vunpack.c.h.b16 %v703
  %v3432 = vunpack.c.l.b16 %v704
  %v3433 = vunpack.c.h.b16 %v704
  %v3434 = vunpack.c.l.b16 %v705
  %v3435 = vunpack.c.h.b16 %v705
  %v3436 = vunpack.c.l.b16 %v706
  %v3437 = vunpack.c.h.b16 %v706
  %v3438 = vunpack.c.l.b16 %v707
  %v3439 = vunpack.c.h.b16 %v707
  %v3440 = vunpack.c.l.b16 %v708
  %v3441 = vunpack.c.h.b16 %v708
  %v3442 = vunpack.c.l.b16 %v709
  %v3443 = vunpack.c.h.b16 %v709
  %v3444 = vunpack.c.l.b16 %v710
  %v3445 = vunpack.c.h.b16 %v710
  %v3446 = vunpack.c.l.b16 %v711
  %v3447 = vunpack.c.h.b16 %v711
  %v3448 = vunpack.c.l.b16 %v712
  %v3449 = vunpack.c.h.b16 %v712
  %v3450 = vunpack.c.l.b16 %v713
  %v3451 = vunpack.c.h.b16 %v713
  %v3452 = vunpack.c.l.b16 %v714
  %v3453 = vunpack.c.h.b16 %v714
  %v3454 = vunpack.c.l.b16 %v715
  %v3455 = vunpack.c.h.b16 %v715
  %v3456 = vunpack.c.l.b16 %v716
  %v3457 = vunpack.c.h.b16 %v716
  %v3458 = vunpack.c.l.b16 %v717
  %v3459 = vunpack.c.h.b16 %v717
  %v3460 = vunpack.c.l.b16 %v718
  %v3461 = vunpack.c.h.b16 %v718
  %v3462 = vunpack.c.l.b16 %v719
  %v3463 = vunpack.c.h.b16 %v719
  %v3464 = vunpack.c.l.b16 %v720
  %v3465 = vunpack.c.h.b16 %v720
  %v3466 = vunpack.c.l.b16 %v721
  %v3467 = vunpack.c.h.b16 %v721
  %v3468 = vunpack.c.l.b16 %v722
  %v3469 = vunpack.c.h.b16 %v722
  %v3470 = vunpack.c.l.b16 %v723
  %v3471 = vunpack.c.h.b16 %v723
  %v3472 = vunpack.c.l.b16 %v724
  %v3473 = vunpack.c.h.b16 %v724
  %v3474 = vunpack.c.l.b16 %v725
  %v3475 = vunpack.c.h.b16 %v725
  %v3476 = vunpack.c.l.b16 %v726
  %v3477 = vunpack.c.h.b16 %v726
  %v3478 = vunpack.c.l.b16 %v727
  %v3479 = vunpack.c.h.b16 %v727
  %v3480 = vunpack.c.l.b16 %v728
  %v3481 = vunpack.c.h.b16 %v728
  %v3482 = vunpack.c.l.b16 %v729
  %v3483 = vunpack.c.h.b16 %v729
  %v3484 = vunpack.c.l.b16 %v730
  %v3485 = vunpack.c.h.b16 %v730
  %v3486 = vunpack.c.l.b16 %v731
  %v3487 = vunpack.c.h.b16 %v731
  %v3488 = vunpack.c.l.b16 %v732
  %v3489 = vunpack.c.h.b16 %v732
  %v3490 = vunpack.c.l.b16 %v733
  %v3491 = vunpack.c.h.b16 %v733
  %v3492 = vunpack.c.l.b16 %v734
  %v3493 = vunpack.c.h.b16 %v734
  %v3494 = vunpack.c.l.b16 %v735
  %v3495 = vunpack.c.h.b16 %v735
  %v3496 = vunpack.c.l.b16 %v736
  %v3497 = vunpack.c.h.b16 %v736
  %v3498 = vunpack.c.l.b16 %v737
  %v3499 = vunpack.c.h.b16 %v737
  %v3500 = vunpack.c.l.b16 %v738
  %v3501 = vunpack.c.h.b16 %v738
  %v3502 = vunpack.c.l.b16 %v739
  %v3503 = vunpack.c.h.b16 %v739
  %v3504 = vunpack.c.l.b16 %v740
  %v3505 = vunpack.c.h.b16 %v740
  %v3506 = vunpack.c.l.b16 %v741
  %v3507 = vunpack.c.h.b16 %v741
  %v3508 = vunpack.c.l.b16 %v742
  %v3509 = vunpack.c.h.b16 %v742
  %v3510 = vunpack.c.l.b16 %v743
  %v3511 = vunpack.c.h.b16 %v743
  %v3512 = vunpack.c.l.b16 %v744
  %v3513 = vunpack.c.h.b16 %v744
  %v3514 = vunpack.c.l.b16 %v745
  %v3515 = vunpack.c.h.b16 %v745
  %v3516 = vunpack.c.l.b16 %v746
  %v3517 = vunpack.c.h.b16 %v746
  %v3518 = vunpack.c.l.b16 %v747
  %v3519 = vunpack.c.h.b16 %v747
  %v3520 = vunpack.c.l.b16 %v748
  %v3521 = vunpack.c.h.b16 %v748
  %v3522 = vunpack.c.l.b16 %v749
  %v3523 = vunpack.c.h.b16 %v749
  %v3524 = vunpack.c.l.b16 %v750
  %v3525 = vunpack.c.h.b16 %v750
  %v3526 = vunpack.c.l.b16 %v751
  %v3527 = vunpack.c.h.b16 %v751
  %v3528 = vunpack.c.l.b16 %v752
  %v3529 = vunpack.c.h.b16 %v752
  %v3530 = vunpack.c.l.b16 %v753
  %v3531 = vunpack.c.h.b16 %v753
  %v3532 = vunpack.c.l.b16 %v754
  %v3533 = vunpack.c.h.b16 %v754
  %v3534 = vunpack.c.l.b16 %v755
  %v3535 = vunpack.c.h.b16 %v755
  %v3536 = vunpack.c.l.b16 %v756
  %v3537 = vunpack.c.h.b16 %v756
  %v3538 = vunpack.c.l.b16 %v757
  %v3539 = vunpack.c.h.b16 %v757
  %v3540 = vunpack.c.l.b16 %v758
  %v3541 = vunpack.c.h.b16 %v758
  %v3542 = vunpack.c.l.b16 %v759
  %v3543 = vunpack.c.h.b16 %v759
  %v3544 = vunpack.c.l.b16 %v760
  %v3545 = vunpack.c.h.b16 %v760
  %v3546 = vunpack.c.l.b16 %v761
  %v3547 = vunpack.c.h.b16 %v761
  %v3548 = vunpack.c.l.b16 %v762
  %v3549 = vunpack.c.h.b16 %v762
  %v3550 = vunpack.c.l.b16 %v763
  %v3551 = vunpack.c.h.b16 %v763
  %v3552 = vunpack.c.l.b16 %v764
  %v3553 = vunpack.c.h.b16 %v764
  %v3554 = vunpack.c.l.b16 %v765
  %v3555 = vunpack.c.h.b16 %v765
  %v3556 = vunpack.c.l.b16 %v766
  %v3557 = vunpack.c.h.b16 %v766
  %v3558 = vunpack.c.l.b16 %v767
  %v3559 = vunpack.c.h.b16 %v767
  %v3560 = vunpack.c.l.b16 %v768
  %v3561 = vunpack.c.h.b16 %v768
  %v3562 = vunpack.c.l.b16 %v769
  %v3563 = vunpack.c.h.b16 %v769
  %v3564 = vunpack.c.l.b16 %v770
  %v3565 = vunpack.c.h.b16 %v770
  %v3566 = vunpack.c.l.b16 %v771
  %v3567 = vunpack.c.h.b16 %v771
  %v3568 = vunpack.c.l.b16 %v772
  %v3569 = vunpack.c.h.b16 %v772
  %v3570 = vunpack.c.l.b16 %v773
  %v3571 = vunpack.c.h.b16 %v773
  %v3572 = vunpack.c.l.b16 %v774
  %v3573 = vunpack.c.h.b16 %v774
  %v3574 = vunpack.c.l.b16 %v775
  %v3575 = vunpack.c.h.b16 %v775
  %v3576 = vunpack.c.l.b16 %v776
  %v3577 = vunpack.c.h.b16 %v776
  %v3578 = vunpack.c.l.b16 %v777
  %v3579 = vunpack.c.h.b16 %v777
  %v3580 = vunpack.c.l.b16 %v778
  %v3581 = vunpack.c.h.b16 %v778
  %v3582 = vunpack.c.l.b16 %v779
  %v3583 = vunpack.c.h.b16 %v779
  %v3584 = vunpack.c.l.b16 %v780
  %v3585 = vunpack.c.h.b16 %v780
  %v3586 = vunpack.c.l.b16 %v781
  %v3587 = vunpack.c.h.b16 %v781
  %v3588 = vunpack.c.l.b16 %v782
  %v3589 = vunpack.c.h.b16 %v782
  %v3590 = vunpack.c.l.b16 %v783
  %v3591 = vunpack.c.h.b16 %v783
  %v3592 = vunpack.c.l.b16 %v784
  %v3593 = vunpack.c.h.b16 %v784
  %v3594 = vunpack.c.l.b16 %v785
  %v3595 = vunpack.c.h.b16 %v785
  %v3596 = vunpack.c.l.b16 %v786
  %v3597 = vunpack.c.h.b16 %v786
  %v3598 = vunpack.c.l.b16 %v787
  %v3599 = vunpack.c.h.b16 %v787
  %v3600 = vunpack.c.l.b16 %v788
  %v3601 = vunpack.c.h.b16 %v788
  %v3602 = vunpack.c.l.b16 %v789
  %v3603 = vunpack.c.h.b16 %v789
  %v3604 = vunpack.c.l.b16 %v790
  %v3605 = vunpack.c.h.b16 %v790
  %v3606 = vunpack.c.l.b16 %v791
  %v3607 = vunpack.c.h.b16 %v791
  %v3608 = vunpack.c.l.b16 %v792
  %v3609 = vunpack.c.h.b16 %v792
  %v3610 = vunpack.c.l.b16 %v793
  %v3611 = vunpack.c.h.b16 %v793
  %v3612 = vunpack.c.l.b16 %v794
  %v3613 = vunpack.c.h.b16 %v794
  %v3614 = vunpack.c.l.b16 %v795
  %v3615 = vunpack.c.h.b16 %v795
  %v3616 = vunpack.c.l.b16 %v796
  %v3617 = vunpack.c.h.b16 %v796
  %v3618 = vunpack.c.l.b16 %v797
  %v3619 = vunpack.c.h.b16 %v797
  %v3620 = vunpack.c.l.b16 %v798
  %v3621 = vunpack.c.h.b16 %v798
  %v3622 = vunpack.c.l.b16 %v799
  %v3623 = vunpack.c.h.b16 %v799
  %v3624 = vunpack.c.l.b16 %v800
  %v3625 = vunpack.c.h.b16 %v800
  %v3626 = vunpack.c.l.b16 %v801
  %v3627 = vunpack.c.h.b16 %v801
  %v3628 = vunpack.c.l.b16 %v802
  %v3629 = vunpack.c.h.b16 %v802
  %v3630 = vunpack.c.l.b16 %v803
  %v3631 = vunpack.c.h.b16 %v803
  %v3632 = vunpack.c.l.b16 %v804
  %v3633 = vunpack.c.h.b16 %v804
  %v3634 = vunpack.c.l.b16 %v805
  %v3635 = vunpack.c.h.b16 %v805
  %v3636 = vunpack.c.l.b16 %v806
  %v3637 = vunpack.c.h.b16 %v806
  %v3638 = vunpack.c.l.b16 %v807
  %v3639 = vunpack.c.h.b16 %v807
  %v3640 = vunpack.c.l.b16 %v808
  %v3641 = vunpack.c.h.b16 %v808
  %v3642 = vunpack.c.l.b16 %v809
  %v3643 = vunpack.c.h.b16 %v809
  %v3644 = vunpack.c.l.b16 %v810
  %v3645 = vunpack.c.h.b16 %v810
  %v3646 = vunpack.c.l.b16 %v811
  %v3647 = vunpack.c.h.b16 %v811
  %v3648 = vunpack.c.l.b16 %v812
  %v3649 = vunpack.c.h.b16 %v812
  %v3650 = vunpack.c.l.b16 %v813
  %v3651 = vunpack.c.h.b16 %v813
  %v3652 = vunpack.c.l.b16 %v814
  %v3653 = vunpack.c.h.b16 %v814
  %v3654 = vunpack.c.l.b16 %v815
  %v3655 = vunpack.c.h.b16 %v815
  %v3656 = vunpack.c.l.b16 %v816
  %v3657 = vunpack.c.h.b16 %v816
  %v3658 = vunpack.c.l.b16 %v817
  %v3659 = vunpack.c.h.b16 %v817
  %v3660 = vunpack.c.l.b16 %v818
  %v3661 = vunpack.c.h.b16 %v818
  %v3662 = vunpack.c.l.b16 %v819
  %v3663 = vunpack.c.h.b16 %v819
  %v3664 = vunpack.c.l.b16 %v820
  %v3665 = vunpack.c.h.b16 %v820
  %v3666 = vunpack.c.l.b16 %v821
  %v3667 = vunpack.c.h.b16 %v821
  %v3668 = vunpack.c.l.b16 %v822
  %v3669 = vunpack.c.h.b16 %v822
  %v3670 = vunpack.c.l.b16 %v823
  %v3671 = vunpack.c.h.b16 %v823
  %v3672 = vunpack.c.l.b16 %v824
  %v3673 = vunpack.c.h.b16 %v824
  %v3674 = vunpack.c.l.b16 %v825
  %v3675 = vunpack.c.h.b16 %v825
  %v3676 = vunpack.c.l.b16 %v826
  %v3677 = vunpack.c.h.b16 %v826
  %v3678 = vunpack.c.l.b16 %v827
  %v3679 = vunpack.c.h.b16 %v827
  %v3680 = vunpack.c.l.b16 %v828
  %v3681 = vunpack.c.h.b16 %v828
  %v3682 = vunpack.c.l.b16 %v829
  %v3683 = vunpack.c.h.b16 %v829
  %v3684 = vunpack.c.l.b16 %v830
  %v3685 = vunpack.c.h.b16 %v830
  %v3686 = vunpack.c.l.b16 %v831
  %v3687 = vunpack.c.h.b16 %v831
  %v3688 = vunpack.c.l.b16 %v832
  %v3689 = vunpack.c.h.b16 %v832
  %v3690 = vunpack.c.l.b16 %v833
  %v3691 = vunpack.c.h.b16 %v833
  %v3692 = vunpack.c.l.b16 %v834
  %v3693 = vunpack.c.h.b16 %v834
  %v3694 = vunpack.c.l.b16 %v835
  %v3695 = vunpack.c.h.b16 %v835
  %v3696 = vunpack.c.l.b16 %v836
  %v3697 = vunpack.c.h.b16 %v836
  %v3698 = vunpack.c.l.b16 %v837
  %v3699 = vunpack.c.h.b16 %v837
  %v3700 = vunpack.c.l.b16 %v838
  %v3701 = vunpack.c.h.b16 %v838
  %v3702 = vunpack.c.l.b16 %v839
  %v3703 = vunpack.c.h.b16 %v839
  %v3704 = vunpack.c.l.b16 %v840
  %v3705 = vunpack.c.h.b16 %v840
  %v3706 = vunpack.c.l.b16 %v841
  %v3707 = vunpack.c.h.b16 %v841
  %v3708 = vunpack.c.l.b16 %v842
  %v3709 = vunpack.c.h.b16 %v842
  %v3710 = vunpack.c.l.b16 %v843
  %v3711 = vunpack.c.h.b16 %v843
  %v3712 = vunpack.c.l.b16 %v844
  %v3713 = vunpack.c.h.b16 %v844
  %v3714 = vunpack.c.l.b16 %v845
  %v3715 = vunpack.c.h.b16 %v845
  %v3716 = vunpack.c.l.b16 %v846
  %v3717 = vunpack.c.h.b16 %v846
  %v3718 = vunpack.c.l.b16 %v847
  %v3719 = vunpack.c.h.b16 %v847
  %v3720 = vunpack.c.l.b16 %v848
  %v3721 = vunpack.c.h.b16 %v848
  %v3722 = vunpack.c.l.b16 %v849
  %v3723 = vunpack.c.h.b16 %v849
  %v3724 = vunpack.c.l.b16 %v850
  %v3725 = vunpack.c.h.b16 %v850
  %v3726 = vunpack.c.l.b16 %v851
  %v3727 = vunpack.c.h.b16 %v851
  %v3728 = vunpack.c.l.b16 %v852
  %v3729 = vunpack.c.h.b16 %v852
  %v3730 = vunpack.c.l.b16 %v853
  %v3731 = vunpack.c.h.b16 %v853
  %v3732 = vunpack.c.l.b16 %v854
  %v3733 = vunpack.c.h.b16 %v854
  %v3734 = vunpack.c.l.b16 %v855
  %v3735 = vunpack.c.h.b16 %v855
  %v3736 = vunpack.c.l.b16 %v856
  %v3737 = vunpack.c.h.b16 %v856
  %v3738 = vunpack.c.l.b16 %v857
  %v3739 = vunpack.c.h.b16 %v857
  %v3740 = vunpack.c.l.b16 %v858
  %v3741 = vunpack.c.h.b16 %v858
  %v3742 = vunpack.c.l.b16 %v859
  %v3743 = vunpack.c.h.b16 %v859
  %v3744 = vunpack.c.l.b16 %v860
  %v3745 = vunpack.c.h.b16 %v860
  %v3746 = vunpack.c.l.b16 %v861
  %v3747 = vunpack.c.h.b16 %v861
  %v3748 = vunpack.c.l.b16 %v862
  %v3749 = vunpack.c.h.b16 %v862
  %v3750 = vunpack.c.l.b16 %v863
  %v3751 = vunpack.c.h.b16 %v863
  %v3752 = vunpack.c.l.b16 %v864
  %v3753 = vunpack.c.h.b16 %v864
  %v3754 = vunpack.c.l.b16 %v865
  %v3755 = vunpack.c.h.b16 %v865
  %v3756 = vunpack.c.l.b16 %v866
  %v3757 = vunpack.c.h.b16 %v866
  %v3758 = vunpack.c.l.b16 %v867
  %v3759 = vunpack.c.h.b16 %v867
  %v3760 = vunpack.c.l.b16 %v868
  %v3761 = vunpack.c.h.b16 %v868
  %v3762 = vunpack.c.l.b16 %v869
  %v3763 = vunpack.c.h.b16 %v869
  %v3764 = vunpack.c.l.b16 %v870
  %v3765 = vunpack.c.h.b16 %v870
  %v3766 = vunpack.c.l.b16 %v871
  %v3767 = vunpack.c.h.b16 %v871
  %v3768 = vunpack.c.l.b16 %v872
  %v3769 = vunpack.c.h.b16 %v872
  %v3770 = vunpack.c.l.b16 %v873
  %v3771 = vunpack.c.h.b16 %v873
  %v3772 = vunpack.c.l.b16 %v874
  %v3773 = vunpack.c.h.b16 %v874
  %v3774 = vunpack.c.l.b16 %v875
  %v3775 = vunpack.c.h.b16 %v875
  %v3776 = vunpack.c.l.b16 %v876
  %v3777 = vunpack.c.h.b16 %v876
  %v3778 = vunpack.c.l.b16 %v877
  %v3779 = vunpack.c.h.b16 %v877
  %v3780 = vunpack.c.l.b16 %v878
  %v3781 = vunpack.c.h.b16 %v878
  %v3782 = vunpack.c.l.b16 %v879
  %v3783 = vunpack.c.h.b16 %v879
  %v3784 = vunpack.c.l.b16 %v880
  %v3785 = vunpack.c.h.b16 %v880
  %v3786 = vunpack.c.l.b16 %v881
  %v3787 = vunpack.c.h.b16 %v881
  %v3788 = vunpack.c.l.b16 %v882
  %v3789 = vunpack.c.h.b16 %v882
  %v3790 = vunpack.c.l.b16 %v883
  %v3791 = vunpack.c.h.b16 %v883
  %v3792 = vunpack.c.l.b16 %v884
  %v3793 = vunpack.c.h.b16 %v884
  %v3794 = vunpack.c.l.b16 %v885
  %v3795 = vunpack.c.h.b16 %v885
  %v3796 = vunpack.c.l.b16 %v886
  %v3797 = vunpack.c.h.b16 %v886
  %v3798 = vunpack.c.l.b16 %v887
  %v3799 = vunpack.c.h.b16 %v887
  %v3800 = vunpack.c.l.b16 %v888
  %v3801 = vunpack.c.h.b16 %v888
  %v3802 = vunpack.c.l.b16 %v889
  %v3803 = vunpack.c.h.b16 %v889
  %v3804 = vunpack.c.l.b16 %v890
  %v3805 = vunpack.c.h.b16 %v890
  %v3806 = vunpack.c.l.b16 %v891
  %v3807 = vunpack.c.h.b16 %v891
  %v3808 = vunpack.c.l.b16 %v892
  %v3809 = vunpack.c.h.b16 %v892
  %v3810 = vunpack.c.l.b16 %v893
  %v3811 = vunpack.c.h.b16 %v893
  %v3812 = vunpack.c.l.b16 %v894
  %v3813 = vunpack.c.h.b16 %v894
  %v3814 = vunpack.c.l.b16 %v895
  %v3815 = vunpack.c.h.b16 %v895
  %v3816 = vunpack.c.l.b16 %v896
  %v3817 = vunpack.c.h.b16 %v896
  %v3818 = vunpack.c.l.b16 %v897
  %v3819 = vunpack.c.h.b16 %v897
  %v3820 = vunpack.c.l.b16 %v898
  %v3821 = vunpack.c.h.b16 %v898
  %v3822 = vunpack.c.l.b16 %v899
  %v3823 = vunpack.c.h.b16 %v899
  %v3824 = vunpack.c.l.b16 %v900
  %v3825 = vunpack.c.h.b16 %v900
  %v3826 = vunpack.c.l.b16 %v901
  %v3827 = vunpack.c.h.b16 %v901
  %v3828 = vunpack.c.l.b16 %v902
  %v3829 = vunpack.c.h.b16 %v902
  %v3830 = vunpack.c.l.b16 %v903
  %v3831 = vunpack.c.h.b16 %v903
  %v3832 = vunpack.c.l.b16 %v904
  %v3833 = vunpack.c.h.b16 %v904
  %v3834 = vunpack.c.l.b16 %v905
  %v3835 = vunpack.c.h.b16 %v905
  %v3836 = vunpack.c.l.b16 %v906
  %v3837 = vunpack.c.h.b16 %v906
  %v3838 = vunpack.c.l.b16 %v907
  %v3839 = vunpack.c.h.b16 %v907
  %v3840 = vunpack.c.l.b16 %v908
  %v3841 = vunpack.c.h.b16 %v908
  %v3842 = vunpack.c.l.b16 %v909
  %v3843 = vunpack.c.h.b16 %v909
  %v3844 = vunpack.c.l.b16 %v910
  %v3845 = vunpack.c.h.b16 %v910
  %v3846 = vunpack.c.l.b16 %v911
  %v3847 = vunpack.c.h.b16 %v911
  %v3848 = vunpack.c.l.b16 %v912
  %v3849 = vunpack.c.h.b16 %v912
  %v3850 = vunpack.c.l.b16 %v913
  %v3851 = vunpack.c.h.b16 %v913
  %v3852 = vunpack.c.l.b16 %v914
  %v3853 = vunpack.c.h.b16 %v914
  %v3854 = vunpack.c.l.b16 %v915
  %v3855 = vunpack.c.h.b16 %v915
  %v3856 = vunpack.c.l.b16 %v916
  %v3857 = vunpack.c.h.b16 %v916
  %v3858 = vunpack.c.l.b16 %v917
  %v3859 = vunpack.c.h.b16 %v917
  %v3860 = vunpack.c.l.b16 %v918
  %v3861 = vunpack.c.h.b16 %v918
  %v3862 = vunpack.c.l.b16 %v919
  %v3863 = vunpack.c.h.b16 %v919
  %v3864 = vunpack.c.l.b16 %v920
  %v3865 = vunpack.c.h.b16 %v920
  %v3866 = vunpack.c.l.b16 %v921
  %v3867 = vunpack.c.h.b16 %v921
  %v3868 = vunpack.c.l.b16 %v922
  %v3869 = vunpack.c.h.b16 %v922
  %v3870 = vunpack.c.l.b16 %v923
  %v3871 = vunpack.c.h.b16 %v923
  %v3872 = vunpack.c.l.b16 %v924
  %v3873 = vunpack.c.h.b16 %v924
  %v3874 = vunpack.c.l.b16 %v925
  %v3875 = vunpack.c.h.b16 %v925
  %v3876 = vunpack.c.l.b16 %v926
  %v3877 = vunpack.c.h.b16 %v926
  %v3878 = vunpack.c.l.b16 %v927
  %v3879 = vunpack.c.h.b16 %v927
  %v3880 = vunpack.c.l.b16 %v928
  %v3881 = vunpack.c.h.b16 %v928
  %v3882 = vunpack.c.l.b16 %v929
  %v3883 = vunpack.c.h.b16 %v929
  %v3884 = vunpack.c.l.b16 %v930
  %v3885 = vunpack.c.h.b16 %v930
  %v3886 = vunpack.c.l.b16 %v931
  %v3887 = vunpack.c.h.b16 %v931
  %v3888 = vunpack.c.l.b16 %v932
  %v3889 = vunpack.c.h.b16 %v932
  %v3890 = vunpack.c.l.b16 %v933
  %v3891 = vunpack.c.h.b16 %v933
  %v3892 = vunpack.c.l.b16 %v934
  %v3893 = vunpack.c.h.b16 %v934
  %v3894 = vunpack.c.l.b16 %v935
  %v3895 = vunpack.c.h.b16 %v935
  %v3896 = vunpack.c.l.b16 %v936
  %v3897 = vunpack.c.h.b16 %v936
  %v3898 = vunpack.c.l.b16 %v937
  %v3899 = vunpack.c.h.b16 %v937
  %v3900 = vunpack.c.l.b16 %v938
  %v3901 = vunpack.c.h.b16 %v938
  %v3902 = vunpack.c.l.b16 %v939
  %v3903 = vunpack.c.h.b16 %v939
  %v3904 = vunpack.c.l.b16 %v940
  %v3905 = vunpack.c.h.b16 %v940
  %v3906 = vunpack.c.l.b16 %v941
  %v3907 = vunpack.c.h.b16 %v941
  %v3908 = vunpack.c.l.b16 %v942
  %v3909 = vunpack.c.h.b16 %v942
  %v3910 = vunpack.c.l.b16 %v943
  %v3911 = vunpack.c.h.b16 %v943
  %v3912 = vunpack.c.l.b16 %v944
  %v3913 = vunpack.c.h.b16 %v944
  %v3914 = vunpack.c.l.b16 %v945
  %v3915 = vunpack.c.h.b16 %v945
  %v3916 = vunpack.c.l.b16 %v946
  %v3917 = vunpack.c.h.b16 %v946
  %v3918 = vunpack.c.l.b16 %v947
  %v3919 = vunpack.c.h.b16 %v947
  %v3920 = vunpack.c.l.b16 %v948
  %v3921 = vunpack.c.h.b16 %v948
  %v3922 = vunpack.c.l.b16 %v949
  %v3923 = vunpack.c.h.b16 %v949
  %v3924 = vunpack.c.l.b16 %v950
  %v3925 = vunpack.c.h.b16 %v950
  %v3926 = vunpack.c.l.b16 %v951
  %v3927 = vunpack.c.h.b16 %v951
  %v3928 = vunpack.c.l.b16 %v952
  %v3929 = vunpack.c.h.b16 %v952
  %v3930 = vunpack.c.l.b16 %v953
  %v3931 = vunpack.c.h.b16 %v953
  %v3932 = vunpack.c.l.b16 %v954
  %v3933 = vunpack.c.h.b16 %v954
  %v3934 = vunpack.c.l.b16 %v955
  %v3935 = vunpack.c.h.b16 %v955
  %v3936 = vunpack.c.l.b16 %v956
  %v3937 = vunpack.c.h.b16 %v956
  %v3938 = vunpack.c.l.b16 %v957
  %v3939 = vunpack.c.h.b16 %v957
  %v3940 = vunpack.c.l.b16 %v958
  %v3941 = vunpack.c.h.b16 %v958
  %v3942 = vunpack.c.l.b16 %v959
  %v3943 = vunpack.c.h.b16 %v959
  %v3944 = vunpack.c.l.b16 %v960
  %v3945 = vunpack.c.h.b16 %v960
  %v3946 = vunpack.c.l.b16 %v961
  %v3947 = vunpack.c.h.b16 %v961
  %v3948 = vunpack.c.l.b16 %v962
  %v3949 = vunpack.c.h.b16 %v962
  %v3950 = vunpack.c.l.b16 %v963
  %v3951 = vunpack.c.h.b16 %v963
  %v3952 = vunpack.c.l.b16 %v964
  %v3953 = vunpack.c.h.b16 %v964
  %v3954 = vunpack.c.l.b16 %v965
  %v3955 = vunpack.c.h.b16 %v965
  %v3956 = vunpack.c.l.b16 %v966
  %v3957 = vunpack.c.h.b16 %v966
  %v3958 = vunpack.c.l.b16 %v967
  %v3959 = vunpack.c.h.b16 %v967
  %v3960 = vunpack.c.l.b16 %v968
  %v3961 = vunpack.c.h.b16 %v968
  %v3962 = vunpack.c.l.b16 %v969
  %v3963 = vunpack.c.h.b16 %v969
  %v3964 = vunpack.c.l.b16 %v970
  %v3965 = vunpack.c.h.b16 %v970
  %v3966 = vunpack.c.l.b16 %v971
  %v3967 = vunpack.c.h.b16 %v971
  %v3968 = vunpack.c.l.b16 %v972
  %v3969 = vunpack.c.h.b16 %v972
  %v3970 = vunpack.c.l.b16 %v973
  %v3971 = vunpack.c.h.b16 %v973
  %v3972 = vunpack.c.l.b16 %v974
  %v3973 = vunpack.c.h.b16 %v974
  %v3974 = vunpack.c.l.b16 %v975
  %v3975 = vunpack.c.h.b16 %v975
  %v3976 = vunpack.c.l.b16 %v976
  %v3977 = vunpack.c.h.b16 %v976
  %v3978 = vunpack.c.l.b16 %v977
  %v3979 = vunpack.c.h.b16 %v977
  %v3980 = vunpack.c.l.b16 %v978
  %v3981 = vunpack.c.h.b16 %v978
  %v3982 = vunpack.c.l.b16 %v979
  %v3983 = vunpack.c.h.b16 %v979
  %v3984 = vunpack.c.l.b16 %v980
  %v3985 = vunpack.c.h.b16 %v980
  %v3986 = vunpack.c.l.b16 %v981
  %v3987 = vunpack.c.h.b16 %v981
  %v3988 = vunpack.c.l.b16 %v982
  %v3989 = vunpack.c.h.b16 %v982
  %v3990 = vunpack.c.l.b16 %v983
  %v3991 = vunpack.c.h.b16 %v983
  %v3992 = vunpack.c.l.b16 %v984
  %v3993 = vunpack.c.h.b16 %v984
  %v3994 = vunpack.c.l.b16 %v985
  %v3995 = vunpack.c.h.b16 %v985
  %v3996 = vunpack.c.l.b16 %v986
  %v3997 = vunpack.c.h.b16 %v986
  %v3998 = vunpack.c.l.b16 %v987
  %v3999 = vunpack.c.h.b16 %v987
  %v4000 = vunpack.c.l.b16 %v988
  %v4001 = vunpack.c.h.b16 %v988
  %v4002 = vunpack.c.l.b16 %v989
  %v4003 = vunpack.c.h.b16 %v989
  %v4004 = vunpack.c.l.b16 %v990
  %v4005 = vunpack.c.h.b16 %v990
  %v4006 = vunpack.c.l.b16 %v991
  %v4007 = vunpack.c.h.b16 %v991
  %v4008 = vunpack.c.l.b16 %v992
  %v4009 = vunpack.c.h.b16 %v992
  %v4010 = vunpack.c.l.b16 %v993
  %v4011 = vunpack.c.h.b16 %v993
  %v4012 = vunpack.c.l.b16 %v994
  %v4013 = vunpack.c.h.b16 %v994
  %v4014 = vunpack.c.l.b16 %v995
  %v4015 = vunpack.c.h.b16 %v995
  %v4016 = vunpack.c.l.b16 %v996
  %v4017 = vunpack.c.h.b16 %v996
  %v4018 = vunpack.c.l.b16 %v997
  %v4019 = vunpack.c.h.b16 %v997
  %v4020 = vunpack.c.l.b16 %v998
  %v4021 = vunpack.c.h.b16 %v998
  %v4022 = vunpack.c.l.b16 %v999
  %v4023 = vunpack.c.h.b16 %v999
  %v4024 = vunpack.c.l.b16 %v1000
  %v4025 = vunpack.c.h.b16 %v1000
  %v4026 = vunpack.c.l.b16 %v1001
  %v4027 = vunpack.c.h.b16 %v1001
  %v4028 = vunpack.c.l.b16 %v1002
  %v4029 = vunpack.c.h.b16 %v1002
  %v4030 = vunpack.c.l.b16 %v1003
  %v4031 = vunpack.c.h.b16 %v1003
  %v4032 = vunpack.c.l.b16 %v1004
  %v4033 = vunpack.c.h.b16 %v1004
  %v4034 = vunpack.c.l.b16 %v1005
  %v4035 = vunpack.c.h.b16 %v1005
  %v4036 = vunpack.c.l.b16 %v1006
  %v4037 = vunpack.c.h.b16 %v1006
  %v4038 = vunpack.c.l.b16 %v1007
  %v4039 = vunpack.c.h.b16 %v1007
  %v4040 = vunpack.c.l.b16 %v1008
  %v4041 = vunpack.c.h.b16 %v1008
  %v4042 = vunpack.c.l.b16 %v1009
  %v4043 = vunpack.c.h.b16 %v1009
  %v4044 = vunpack.c.l.b16 %v1010
  %v4045 = vunpack.c.h.b16 %v1010
  %v4046 = vunpack.c.l.b16 %v1011
  %v4047 = vunpack.c.h.b16 %v1011
  %v4048 = vunpack.c.l.b16 %v1012
  %v4049 = vunpack.c.h.b16 %v1012
  %v4050 = vunpack.c.l.b16 %v1013
  %v4051 = vunpack.c.h.b16 %v1013
  %v4052 = vunpack.c.l.b16 %v1014
  %v4053 = vunpack.c.h.b16 %v1014
  %v4054 = vunpack.c.l.b16 %v1015
  %v4055 = vunpack.c.h.b16 %v1015
  %v4056 = vunpack.c.l.b16 %v1016
  %v4057 = vunpack.c.h.b16 %v1016
  %v4058 = vunpack.c.l.b16 %v1017
  %v4059 = vunpack.c.h.b16 %v1017
  %v4060 = vunpack.c.l.b16 %v1018
  %v4061 = vunpack.c.h.b16 %v1018
  %v4062 = vunpack.c.l.b16 %v1019
  %v4063 = vunpack.c.h.b16 %v1019
  %v4064 = vunpack.c.l.b16 %v1020
  %v4065 = vunpack.c.h.b16 %v1020
  %v4066 = vunpack.c.l.b16 %v1021
  %v4067 = vunpack.c.h.b16 %v1021
  %v4068 = vunpack.c.l.b16 %v1022
  %v4069 = vunpack.c.h.b16 %v1022
  %v4070 = vunpack.c.l.b16 %v1023
  %v4071 = vunpack.c.h.b16 %v1023
  %v4072 = vunpack.c.l.b16 %v1024
  %v4073 = vunpack.c.h.b16 %v1024
  %v4074 = vunpack.c.l.b16 %v1025
  %v4075 = vunpack.c.h.b16 %v1025
  %v4076 = vunpack.c.l.b16 %v1026
  %v4077 = vunpack.c.h.b16 %v1026
  %v4078 = vunpack.c.l.b16 %v1027
  %v4079 = vunpack.c.h.b16 %v1027
  %v4080 = vunpack.c.l.b16 %v1028
  %v4081 = vunpack.c.h.b16 %v1028
  %v4082 = vunpack.c.l.b16 %v1029
  %v4083 = vunpack.c.h.b16 %v1029
  %v4084 = vunpack.c.l.b16 %v1030
  %v4085 = vunpack.c.h.b16 %v1030
  %v4086 = vunpack.c.l.b16 %v1031
  %v4087 = vunpack.c.h.b16 %v1031
  %v4088 = vunpack.c.l.b16 %v1032
  %v4089 = vunpack.c.h.b16 %v1032
  %v4090 = vunpack.c.l.b16 %v1033
  %v4091 = vunpack.c.h.b16 %v1033
  %v4092 = vunpack.c.l.b16 %v1034
  %v4093 = vunpack.c.h.b16 %v1034
  %v4094 = vunpack.c.l.b16 %v1035
  %v4095 = vunpack.c.h.b16 %v1035
  %v4096 = vunpack.c.l.b16 %v1036
  %v4097 = vunpack.c.h.b16 %v1036
  %v4098 = vunpack.c.l.b16 %v1037
  %v4099 = vunpack.c.h.b16 %v1037
  %v4100 = vunpack.c.l.b16 %v1038
  %v4101 = vunpack.c.h.b16 %v1038
  %v4102 = vunpack.c.l.b16 %v1039
  %v4103 = vunpack.c.h.b16 %v1039
  %v4104 = vunpack.c.l.b16 %v1040
  %v4105 = vunpack.c.h.b16 %v1040
  %v4106 = vunpack.c.l.b16 %v1041
  %v4107 = vunpack.c.h.b16 %v1041
  %v4108 = vunpack.c.l.b16 %v1042
  %v4109 = vunpack.c.h.b16 %v1042
  %v4110 = vunpack.c.l.b16 %v1043
  %v4111 = vunpack.c.h.b16 %v1043
  %v4112 = vunpack.c.l.b16 %v1044
  %v4113 = vunpack.c.h.b16 %v1044
  %v4114 = vunpack.c.l.b16 %v1045
  %v4115 = vunpack.c.h.b16 %v1045
  %v4116 = vunpack.c.l.b16 %v1046
  %v4117 = vunpack.c.h.b16 %v1046
  %v4118 = vunpack.c.l.b16 %v1047
  %v4119 = vunpack.c.h.b16 %v1047
  %v4120 = vunpack.c.l.b16 %v1048
  %v4121 = vunpack.c.h.b16 %v1048
  %v4122 = vunpack.c.l.b16 %v1049
  %v4123 = vunpack.c.h.b16 %v1049
  %v4124 = vunpack.c.l.b16 %v1050
  %v4125 = vunpack.c.h.b16 %v1050
  %v4126 = vunpack.c.l.b16 %v1051
  %v4127 = vunpack.c.h.b16 %v1051
  %v4128 = vunpack.c.l.b16 %v1052
  %v4129 = vunpack.c.h.b16 %v1052
  %v4130 = vunpack.c.l.b16 %v1053
  %v4131 = vunpack.c.h.b16 %v1053
  %v4132 = vunpack.c.l.b16 %v1054
  %v4133 = vunpack.c.h.b16 %v1054
  %v4134 = vunpack.c.l.b16 %v1055
  %v4135 = vunpack.c.h.b16 %v1055
  %v4136 = vunpack.c.l.b16 %v1056
  %v4137 = vunpack.c.h.b16 %v1056
  %v4138 = vunpack.c.l.b16 %v1057
  %v4139 = vunpack.c.h.b16 %v1057
  %v4140 = vunpack.c.l.b16 %v1058
  %v4141 = vunpack.c.h.b16 %v1058
  %v4142 = vunpack.c.l.b16 %v1059
  %v4143 = vunpack.c.h.b16 %v1059
  %v4144 = vunpack.c.l.b16 %v1060
  %v4145 = vunpack.c.h.b16 %v1060
  %v4146 = vpack.c.b16 %v2162, %v2098
  %v4147 = vpack.c.b16 %v2163, %v2099
  %v4148 = vpack.c.b16 %v2164, %v2100
  %v4149 = vpack.c.b16 %v2165, %v2101
  %v4150 = vpack.c.b16 %v2166, %v2102
  %v4151 = vpack.c.b16 %v2167, %v2103
  %v4152 = vpack.c.b16 %v2168, %v2104
  %v4153 = vpack.c.b16 %v2169, %v2105
  %v4154 = vpack.c.b16 %v2170, %v2106
  %v4155 = vpack.c.b16 %v2171, %v2107
  %v4156 = vpack.c.b16 %v2172, %v2108
  %v4157 = vpack.c.b16 %v2173, %v2109
  %v4158 = vpack.c.b16 %v2174, %v2110
  %v4159 = vpack.c.b16 %v2175, %v2111
  %v4160 = vpack.c.b16 %v2176, %v2112
  %v4161 = vpack.c.b16 %v2177, %v2113
  %v4162 = vpack.c.b16 %v2178, %v2114
  %v4163 = vpack.c.b16 %v2179, %v2115
  %v4164 = vpack.c.b16 %v2180, %v2116
  %v4165 = vpack.c.b16 %v2181, %v2117
  %v4166 = vpack.c.b16 %v2182, %v2118
  %v4167 = vpack.c.b16 %v2183, %v2119
  %v4168 = vpack.c.b16 %v2184, %v2120
  %v4169 = vpack.c.b16 %v2185, %v2121
  %v4170 = vpack.c.b16 %v2186, %v2122
  %v4171 = vpack.c.b16 %v2187, %v2123
  %v4172 = vpack.c.b16 %v2188, %v2124
  %v4173 = vpack.c.b16 %v2189, %v2125
  %v4174 = vpack.c.b16 %v2190, %v2126
  %v4175 = vpack.c.b16 %v2191, %v2127
  %v4176 = vpack.c.b16 %v2192, %v2128
  %v4177 = vpack.c.b16 %v2193, %v2129
  %v4178 = vpack.c.b16 %v2194, %v2130
  %v4179 = vpack.c.b16 %v2195, %v2131
  %v4180 = vpack.c.b16 %v2196, %v2132
  %v4181 = vpack.c.b16 %v2197, %v2133
  %v4182 = vpack.c.b16 %v2198, %v2134
  %v4183 = vpack.c.b16 %v2199, %v2135
  %v4184 = vpack.c.b16 %v2200, %v2136
  %v4185 = vpack.c.b16 %v2201, %v2137
  %v4186 = vpack.c.b16 %v2202, %v2138
  %v4187 = vpack.c.b16 %v2203, %v2139
  %v4188 = vpack.c.b16 %v2204, %v2140
  %v4189 = vpack.c.b16 %v2205, %v2141
  %v4190 = vpack.c.b16 %v2206, %v2142
  %v4191 = vpack.c.b16 %v2207, %v2143
  %v4192 = vpack.c.b16 %v2208, %v2144
  %v4193 = vpack.c.b16 %v2209, %v2145
  %v4194 = vpack.c.b16 %v2210, %v2146
  %v4195 = vpack.c.b16 %v2211, %v2147
  %v4196 = vpack.c.b16 %v2212, %v2148
  %v4197 = vpack.c.b16 %v2213, %v2149
  %v4198 = vpack.c.b16 %v2214, %v2150
  %v4199 = vpack.c.b16 %v2215, %v2151
  %v4200 = vpack.c.b16 %v2216, %v2152
  %v4201 = vpack.c.b16 %v2217, %v2153
  %v4202 = vpack.c.b16 %v2218, %v2154
  %v4203 = vpack.c.b16 %v2219, %v2155
  %v4204 = vpack.c.b16 %v2220, %v2156
  %v4205 = vpack.c.b16 %v2221, %v2157
  %v4206 = vpack.c.b16 %v2222, %v2158
  %v4207 = vpack.c.b16 %v2223, %v2159
  %v4208 = vpack.c.b16 %v2224, %v2160
  %v4209 = vpack.c.b16 %v2225, %v2161
  %v4210 = vpack.c.b16 %v2290, %v2226
  %v4211 = vpack.c.b16 %v2291, %v2227
  %v4212 = vpack.c.b16 %v2292, %v2228
  %v4213 = vpack.c.b16 %v2293, %v2229
  %v4214 = vpack.c.b16 %v2294, %v2230
  %v4215 = vpack.c.b16 %v2295, %v2231
  %v4216 = vpack.c.b16 %v2296, %v2232
  %v4217 = vpack.c.b16 %v2297, %v2233
  %v4218 = vpack.c.b16 %v2298, %v2234
  %v4219 = vpack.c.b16 %v2299, %v2235
  %v4220 = vpack.c.b16 %v2300, %v2236
  %v4221 = vpack.c.b16 %v2301, %v2237
  %v4222 = vpack.c.b16 %v2302, %v2238
  %v4223 = vpack.c.b16 %v2303, %v2239
  %v4224 = vpack.c.b16 %v2304, %v2240
  %v4225 = vpack.c.b16 %v2305, %v2241
  %v4226 = vpack.c.b16 %v2306, %v2242
  %v4227 = vpack.c.b16 %v2307, %v2243
  %v4228 = vpack.c.b16 %v2308, %v2244
  %v4229 = vpack.c.b16 %v2309, %v2245
  %v4230 = vpack.c.b16 %v2310, %v2246
  %v4231 = vpack.c.b16 %v2311, %v2247
  %v4232 = vpack.c.b16 %v2312, %v2248
  %v4233 = vpack.c.b16 %v2313, %v2249
  %v4234 = vpack.c.b16 %v2314, %v2250
  %v4235 = vpack.c.b16 %v2315, %v2251
  %v4236 = vpack.c.b16 %v2316, %v2252
  %v4237 = vpack.c.b16 %v2317, %v2253
  %v4238 = vpack.c.b16 %v2318, %v2254
  %v4239 = vpack.c.b16 %v2319, %v2255
  %v4240 = vpack.c.b16 %v2320, %v2256
  %v4241 = vpack.c.b16 %v2321, %v2257
  %v4242 = vpack.c.b16 %v2322, %v2258
  %v4243 = vpack.c.b16 %v2323, %v2259
  %v4244 = vpack.c.b16 %v2324, %v2260
  %v4245 = vpack.c.b16 %v2325, %v2261
  %v4246 = vpack.c.b16 %v2326, %v2262
  %v4247 = vpack.c.b16 %v2327, %v2263
  %v4248 = vpack.c.b16 %v2328, %v2264
  %v4249 = vpack.c.b16 %v2329, %v2265
  %v4250 = vpack.c.b16 %v2330, %v2266
  %v4251 = vpack.c.b16 %v2331, %v2267
  %v4252 = vpack.c.b16 %v2332, %v2268
  %v4253 = vpack.c.b16 %v2333, %v2269
  %v4254 = vpack.c.b16 %v2334, %v2270
  %v4255 = vpack.c.b16 %v2335, %v2271
  %v4256 = vpack.c.b16 %v2336, %v2272
  %v4257 = vpack.c.b16 %v2337, %v2273
  %v4258 = vpack.c.b16 %v2338, %v2274
  %v4259 = vpack.c.b16 %v2339, %v2275
  %v4260 = vpack.c.b16 %v2340, %v2276
  %v4261 = vpack.c.b16 %v2341, %v2277
  %v4262 = vpack.c.b16 %v2342, %v2278
  %v4263 = vpack.c.b16 %v2343, %v2279
  %v4264 = vpack.c.b16 %v2344, %v2280
  %v4265 = vpack.c.b16 %v2345, %v2281
  %v4266 = vpack.c.b16 %v2346, %v2282
  %v4267 = vpack.c.b16 %v2347, %v2283
  %v4268 = vpack.c.b16 %v2348, %v2284
  %v4269 = vpack.c.b16 %v2349, %v2285
  %v4270 = vpack.c.b16 %v2350, %v2286
  %v4271 = vpack.c.b16 %v2351, %v2287
  %v4272 = vpack.c.b16 %v2352, %v2288
  %v4273 = vpack.c.b16 %v2353, %v2289
  %v4274 = vpack.c.b16 %v2418, %v2354
  %v4275 = vpack.c.b16 %v2419, %v2355
  %v4276 = vpack.c.b16 %v2420, %v2356
  %v4277 = vpack.c.b16 %v2421, %v2357
  %v4278 = vpack.c.b16 %v2422, %v2358
  %v4279 = vpack.c.b16 %v2423, %v2359
  %v4280 = vpack.c.b16 %v2424, %v2360
  %v4281 = vpack.c.b16 %v2425, %v2361
  %v4282 = vpack.c.b16 %v2426, %v2362
  %v4283 = vpack.c.b16 %v2427, %v2363
  %v4284 = vpack.c.b16 %v2428, %v2364
  %v4285 = vpack.c.b16 %v2429, %v2365
  %v4286 = vpack.c.b16 %v2430, %v2366
  %v4287 = vpack.c.b16 %v2431, %v2367
  %v4288 = vpack.c.b16 %v2432, %v2368
  %v4289 = vpack.c.b16 %v2433, %v2369
  %v4290 = vpack.c.b16 %v2434, %v2370
  %v4291 = vpack.c.b16 %v2435, %v2371
  %v4292 = vpack.c.b16 %v2436, %v2372
  %v4293 = vpack.c.b16 %v2437, %v2373
  %v4294 = vpack.c.b16 %v2438, %v2374
  %v4295 = vpack.c.b16 %v2439, %v2375
  %v4296 = vpack.c.b16 %v2440, %v2376
  %v4297 = vpack.c.b16 %v2441, %v2377
  %v4298 = vpack.c.b16 %v2442, %v2378
  %v4299 = vpack.c.b16 %v2443, %v2379
  %v4300 = vpack.c.b16 %v2444, %v2380
  %v4301 = vpack.c.b16 %v2445, %v2381
  %v4302 = vpack.c.b16 %v2446, %v2382
  %v4303 = vpack.c.b16 %v2447, %v2383
  %v4304 = vpack.c.b16 %v2448, %v2384
  %v4305 = vpack.c.b16 %v2449, %v2385
  %v4306 = vpack.c.b16 %v2450, %v2386
  %v4307 = vpack.c.b16 %v2451, %v2387
  %v4308 = vpack.c.b16 %v2452, %v2388
  %v4309 = vpack.c.b16 %v2453, %v2389
  %v4310 = vpack.c.b16 %v2454, %v2390
  %v4311 = vpack.c.b16 %v2455, %v2391
  %v4312 = vpack.c.b16 %v2456, %v2392
  %v4313 = vpack.c.b16 %v2457, %v2393
  %v4314 = vpack.c.b16 %v2458, %v2394
  %v4315 = vpack.c.b16 %v2459, %v2395
  %v4316 = vpack.c.b16 %v2460, %v2396
  %v4317 = vpack.c.b16 %v2461, %v2397
  %v4318 = vpack.c.b16 %v2462, %v2398
  %v4319 = vpack.c.b16 %v2463, %v2399
  %v4320 = vpack.c.b16 %v2464, %v2400
  %v4321 = vpack.c.b16 %v2465, %v2401
  %v4322 = vpack.c.b16 %v2466, %v2402
  %v4323 = vpack.c.b16 %v2467, %v2403
  %v4324 = vpack.c.b16 %v2468, %v2404
  %v4325 = vpack.c.b16 %v2469, %v2405
  %v4326 = vpack.c.b16 %v2470, %v2406
  %v4327 = vpack.c.b16 %v2471, %v2407
  %v4328 = vpack.c.b16 %v2472, %v2408
  %v4329 = vpack.c.b16 %v2473, %v2409
  %v4330 = vpack.c.b16 %v2474, %v2410
  %v4331 = vpack.c.b16 %v2475, %v2411
  %v4332 = vpack.c.b16 %v2476, %v2412
  %v4333 = vpack.c.b16 %v2477, %v2413
  %v4334 = vpack.c.b16 %v2478, %v2414
  %v4335 = vpack.c.b16 %v2479, %v2415
  %v4336 = vpack.c.b16 %v2480, %v2416
  %v4337 = vpack.c.b16 %v2481, %v2417
  %v4338 = vpack.c.b16 %v2546, %v2482
  %v4339 = vpack.c.b16 %v2547, %v2483
  %v4340 = vpack.c.b16 %v2548, %v2484
  %v4341 = vpack.c.b16 %v2549, %v2485
  %v4342 = vpack.c.b16 %v2550, %v2486
  %v4343 = vpack.c.b16 %v2551, %v2487
  %v4344 = vpack.c.b16 %v2552, %v2488
  %v4345 = vpack.c.b16 %v2553, %v2489
  %v4346 = vpack.c.b16 %v2554, %v2490
  %v4347 = vpack.c.b16 %v2555, %v2491
  %v4348 = vpack.c.b16 %v2556, %v2492
  %v4349 = vpack.c.b16 %v2557, %v2493
  %v4350 = vpack.c.b16 %v2558, %v2494
  %v4351 = vpack.c.b16 %v2559, %v2495
  %v4352 = vpack.c.b16 %v2560, %v2496
  %v4353 = vpack.c.b16 %v2561, %v2497
  %v4354 = vpack.c.b16 %v2562, %v2498
  %v4355 = vpack.c.b16 %v2563, %v2499
  %v4356 = vpack.c.b16 %v2564, %v2500
  %v4357 = vpack.c.b16 %v2565, %v2501
  %v4358 = vpack.c.b16 %v2566, %v2502
  %v4359 = vpack.c.b16 %v2567, %v2503
  %v4360 = vpack.c.b16 %v2568, %v2504
  %v4361 = vpack.c.b16 %v2569, %v2505
  %v4362 = vpack.c.b16 %v2570, %v2506
  %v4363 = vpack.c.b16 %v2571, %v2507
  %v4364 = vpack.c.b16 %v2572, %v2508
  %v4365 = vpack.c.b16 %v2573, %v2509
  %v4366 = vpack.c.b16 %v2574, %v2510
  %v4367 = vpack.c.b16 %v2575, %v2511
  %v4368 = vpack.c.b16 %v2576, %v2512
  %v4369 = vpack.c.b16 %v2577, %v2513
  %v4370 = vpack.c.b16 %v2578, %v2514
  %v4371 = vpack.c.b16 %v2579, %v2515
  %v4372 = vpack.c.b16 %v2580, %v2516
  %v4373 = vpack.c.b16 %v2581, %v2517
  %v4374 = vpack.c.b16 %v2582, %v2518
  %v4375 = vpack.c.b16 %v2583, %v2519
  %v4376 = vpack.c.b16 %v2584, %v2520
  %v4377 = vpack.c.b16 %v2585, %v2521
  %v4378 = vpack.c.b16 %v2586, %v2522
  %v4379 = vpack.c.b16 %v2587, %v2523
  %v4380 = vpack.c.b16 %v2588, %v2524
  %v4381 = vpack.c.b16 %v2589, %v2525
  %v4382 = vpack.c.b16 %v2590, %v2526
  %v4383 = vpack.c.b16 %v2591, %v2527
  %v4384 = vpack.c.b16 %v2592, %v2528
  %v4385 = vpack.c.b16 %v2593, %v2529
  %v4386 = vpack.c.b16 %v2594, %v2530
  %v4387 = vpack.c.b16 %v2595, %v2531
  %v4388 = vpack.c.b16 %v2596, %v2532
  %v4389 = vpack.c.b16 %v2597, %v2533
  %v4390 = vpack.c.b16 %v2598, %v2534
  %v4391 = vpack.c.b16 %v2599, %v2535
  %v4392 = vpack.c.b16 %v2600, %v2536
  %v4393 = vpack.c.b16 %v2601, %v2537
  %v4394 = vpack.c.b16 %v2602, %v2538
  %v4395 = vpack.c.b16 %v2603, %v2539
  %v4396 = vpack.c.b16 %v2604, %v2540
  %v4397 = vpack.c.b16 %v2605, %v2541
  %v4398 = vpack.c.b16 %v2606, %v2542
  %v4399 = vpack.c.b16 %v2607, %v2543
  %v4400 = vpack.c.b16 %v2608, %v2544
  %v4401 = vpack.c.b16 %v2609, %v2545
  %v4402 = vpack.c.b16 %v2674, %v2610
  %v4403 = vpack.c.b16 %v2675, %v2611
  %v4404 = vpack.c.b16 %v2676, %v2612
  %v4405 = vpack.c.b16 %v2677, %v2613
  %v4406 = vpack.c.b16 %v2678, %v2614
  %v4407 = vpack.c.b16 %v2679, %v2615
  %v4408 = vpack.c.b16 %v2680, %v2616
  %v4409 = vpack.c.b16 %v2681, %v2617
  %v4410 = vpack.c.b16 %v2682, %v2618
  %v4411 = vpack.c.b16 %v2683, %v2619
  %v4412 = vpack.c.b16 %v2684, %v2620
  %v4413 = vpack.c.b16 %v2685, %v2621
  %v4414 = vpack.c.b16 %v2686, %v2622
  %v4415 = vpack.c.b16 %v2687, %v2623
  %v4416 = vpack.c.b16 %v2688, %v2624
  %v4417 = vpack.c.b16 %v2689, %v2625
  %v4418 = vpack.c.b16 %v2690, %v2626
  %v4419 = vpack.c.b16 %v2691, %v2627
  %v4420 = vpack.c.b16 %v2692, %v2628
  %v4421 = vpack.c.b16 %v2693, %v2629
  %v4422 = vpack.c.b16 %v2694, %v2630
  %v4423 = vpack.c.b16 %v2695, %v2631
  %v4424 = vpack.c.b16 %v2696, %v2632
  %v4425 = vpack.c.b16 %v2697, %v2633
  %v4426 = vpack.c.b16 %v2698, %v2634
  %v4427 = vpack.c.b16 %v2699, %v2635
  %v4428 = vpack.c.b16 %v2700, %v2636
  %v4429 = vpack.c.b16 %v2701, %v2637
  %v4430 = vpack.c.b16 %v2702, %v2638
  %v4431 = vpack.c.b16 %v2703, %v2639
  %v4432 = vpack.c.b16 %v2704, %v2640
  %v4433 = vpack.c.b16 %v2705, %v2641
  %v4434 = vpack.c.b16 %v2706, %v2642
  %v4435 = vpack.c.b16 %v2707, %v2643
  %v4436 = vpack.c.b16 %v2708, %v2644
  %v4437 = vpack.c.b16 %v2709, %v2645
  %v4438 = vpack.c.b16 %v2710, %v2646
  %v4439 = vpack.c.b16 %v2711, %v2647
  %v4440 = vpack.c.b16 %v2712, %v2648
  %v4441 = vpack.c.b16 %v2713, %v2649
  %v4442 = vpack.c.b16 %v2714, %v2650
  %v4443 = vpack.c.b16 %v2715, %v2651
  %v4444 = vpack.c.b16 %v2716, %v2652
  %v4445 = vpack.c.b16 %v2717, %v2653
  %v4446 = vpack.c.b16 %v2718, %v2654
  %v4447 = vpack.c.b16 %v2719, %v2655
  %v4448 = vpack.c.b16 %v2720, %v2656
  %v4449 = vpack.c.b16 %v2721, %v2657
  %v4450 = vpack.c.b16 %v2722, %v2658
  %v4451 = vpack.c.b16 %v2723, %v2659
  %v4452 = vpack.c.b16 %v2724, %v2660
  %v4453 = vpack.c.b16 %v2725, %v2661
  %v4454 = vpack.c.b16 %v2726, %v2662
  %v4455 = vpack.c.b16 %v2727, %v2663
  %v4456 = vpack.c.b16 %v2728, %v2664
  %v4457 = vpack.c.b16 %v2729, %v2665
  %v4458 = vpack.c.b16 %v2730, %v2666
  %v4459 = vpack.c.b16 %v2731, %v2667
  %v4460 = vpack.c.b16 %v2732, %v2668
  %v4461 = vpack.c.b16 %v2733, %v2669
  %v4462 = vpack.c.b16 %v2734, %v2670
  %v4463 = vpack.c.b16 %v2735, %v2671
  %v4464 = vpack.c.b16 %v2736, %v2672
  %v4465 = vpack.c.b16 %v2737, %v2673
  %v4466 = vpack.c.b16 %v2802, %v2738
  %v4467 = vpack.c.b16 %v2803, %v2739
  %v4468 = vpack.c.b16 %v2804, %v2740
  %v4469 = vpack.c.b16 %v2805, %v2741
  %v4470 = vpack.c.b16 %v2806, %v2742
  %v4471 = vpack.c.b16 %v2807, %v2743
  %v4472 = vpack.c.b16 %v2808, %v2744
  %v4473 = vpack.c.b16 %v2809, %v2745
  %v4474 = vpack.c.b16 %v2810, %v2746
  %v4475 = vpack.c.b16 %v2811, %v2747
  %v4476 = vpack.c.b16 %v2812, %v2748
  %v4477 = vpack.c.b16 %v2813, %v2749
  %v4478 = vpack.c.b16 %v2814, %v2750
  %v4479 = vpack.c.b16 %v2815, %v2751
  %v4480 = vpack.c.b16 %v2816, %v2752
  %v4481 = vpack.c.b16 %v2817, %v2753
  %v4482 = vpack.c.b16 %v2818, %v2754
  %v4483 = vpack.c.b16 %v2819, %v2755
  %v4484 = vpack.c.b16 %v2820, %v2756
  %v4485 = vpack.c.b16 %v2821, %v2757
  %v4486 = vpack.c.b16 %v2822, %v2758
  %v4487 = vpack.c.b16 %v2823, %v2759
  %v4488 = vpack.c.b16 %v2824, %v2760
  %v4489 = vpack.c.b16 %v2825, %v2761
  %v4490 = vpack.c.b16 %v2826, %v2762
  %v4491 = vpack.c.b16 %v2827, %v2763
  %v4492 = vpack.c.b16 %v2828, %v2764
  %v4493 = vpack.c.b16 %v2829, %v2765
  %v4494 = vpack.c.b16 %v2830, %v2766
  %v4495 = vpack.c.b16 %v2831, %v2767
  %v4496 = vpack.c.b16 %v2832, %v2768
  %v4497 = vpack.c.b16 %v2833, %v2769
  %v4498 = vpack.c.b16 %v2834, %v2770
  %v4499 = vpack.c.b16 %v2835, %v2771
  %v4500 = vpack.c.b16 %v2836, %v2772
  %v4501 = vpack.c.b16 %v2837, %v2773
  %v4502 = vpack.c.b16 %v2838, %v2774
  %v4503 = vpack.c.b16 %v2839, %v2775
  %v4504 = vpack.c.b16 %v2840, %v2776
  %v4505 = vpack.c.b16 %v2841, %v2777
  %v4506 = vpack.c.b16 %v2842, %v2778
  %v4507 = vpack.c.b16 %v2843, %v2779
  %v4508 = vpack.c.b16 %v2844, %v2780
  %v4509 = vpack.c.b16 %v2845, %v2781
  %v4510 = vpack.c.b16 %v2846, %v2782
  %v4511 = vpack.c.b16 %v2847, %v2783
  %v4512 = vpack.c.b16 %v2848, %v2784
  %v4513 = vpack.c.b16 %v2849, %v2785
  %v4514 = vpack.c.b16 %v2850, %v2786
  %v4515 = vpack.c.b16 %v2851, %v2787
  %v4516 = vpack.c.b16 %v2852, %v2788
  %v4517 = vpack.c.b16 %v2853, %v2789
  %v4518 = vpack.c.b16 %v2854, %v2790
  %v4519 = vpack.c.b16 %v2855, %v2791
  %v4520 = vpack.c.b16 %v2856, %v2792
  %v4521 = vpack.c.b16 %v2857, %v2793
  %v4522 = vpack.c.b16 %v2858, %v2794
  %v4523 = vpack.c.b16 %v2859, %v2795
  %v4524 = vpack.c.b16 %v2860, %v2796
  %v4525 = vpack.c.b16 %v2861, %v2797
  %v4526 = vpack.c.b16 %v2862, %v2798
  %v4527 = vpack.c.b16 %v2863, %v2799
  %v4528 = vpack.c.b16 %v2864, %v2800
  %v4529 = vpack.c.b16 %v2865, %v2801
  %v4530 = vpack.c.b16 %v2930, %v2866
  %v4531 = vpack.c.b16 %v2931, %v2867
  %v4532 = vpack.c.b16 %v2932, %v2868
  %v4533 = vpack.c.b16 %v2933, %v2869
  %v4534 = vpack.c.b16 %v2934, %v2870
  %v4535 = vpack.c.b16 %v2935, %v2871
  %v4536 = vpack.c.b16 %v2936, %v2872
  %v4537 = vpack.c.b16 %v2937, %v2873
  %v4538 = vpack.c.b16 %v2938, %v2874
  %v4539 = vpack.c.b16 %v2939, %v2875
  %v4540 = vpack.c.b16 %v2940, %v2876
  %v4541 = vpack.c.b16 %v2941, %v2877
  %v4542 = vpack.c.b16 %v2942, %v2878
  %v4543 = vpack.c.b16 %v2943, %v2879
  %v4544 = vpack.c.b16 %v2944, %v2880
  %v4545 = vpack.c.b16 %v2945, %v2881
  %v4546 = vpack.c.b16 %v2946, %v2882
  %v4547 = vpack.c.b16 %v2947, %v2883
  %v4548 = vpack.c.b16 %v2948, %v2884
  %v4549 = vpack.c.b16 %v2949, %v2885
  %v4550 = vpack.c.b16 %v2950, %v2886
  %v4551 = vpack.c.b16 %v2951, %v2887
  %v4552 = vpack.c.b16 %v2952, %v2888
  %v4553 = vpack.c.b16 %v2953, %v2889
  %v4554 = vpack.c.b16 %v2954, %v2890
  %v4555 = vpack.c.b16 %v2955, %v2891
  %v4556 = vpack.c.b16 %v2956, %v2892
  %v4557 = vpack.c.b16 %v2957, %v2893
  %v4558 = vpack.c.b16 %v2958, %v2894
  %v4559 = vpack.c.b16 %v2959, %v2895
  %v4560 = vpack.c.b16 %v2960, %v2896
  %v4561 = vpack.c.b16 %v2961, %v2897
  %v4562 = vpack.c.b16 %v2962, %v2898
  %v4563 = vpack.c.b16 %v2963, %v2899
  %v4564 = vpack.c.b16 %v2964, %v2900
  %v4565 = vpack.c.b16 %v2965, %v2901
  %v4566 = vpack.c.b16 %v2966, %v2902
  %v4567 = vpack.c.b16 %v2967, %v2903
  %v4568 = vpack.c.b16 %v2968, %v2904
  %v4569 = vpack.c.b16 %v2969, %v2905
  %v4570 = vpack.c.b16 %v2970, %v2906
  %v4571 = vpack.c.b16 %v2971, %v2907
  %v4572 = vpack.c.b16 %v2972, %v2908
  %v4573 = vpack.c.b16 %v2973, %v2909
  %v4574 = vpack.c.b16 %v2974, %v2910
  %v4575 = vpack.c.b16 %v2975, %v2911
  %v4576 = vpack.c.b16 %v2976, %v2912
  %v4577 = vpack.c.b16 %v2977, %v2913
  %v4578 = vpack.c.b16 %v2978, %v2914
  %v4579 = vpack.c.b16 %v2979, %v2915
  %v4580 = vpack.c.b16 %v2980, %v2916
  %v4581 = vpack.c.b16 %v2981, %v2917
  %v4582 = vpack.c.b16 %v2982, %v2918
  %v4583 = vpack.c.b16 %v2983, %v2919
  %v4584 = vpack.c.b16 %v2984, %v2920
  %v4585 = vpack.c.b16 %v2985, %v2921
  %v4586 = vpack.c.b16 %v2986, %v2922
  %v4587 = vpack.c.b16 %v2987, %v2923
  %v4588 = vpack.c.b16 %v2988, %v2924
  %v4589 = vpack.c.b16 %v2989, %v2925
  %v4590 = vpack.c.b16 %v2990, %v2926
  %v4591 = vpack.c.b16 %v2991, %v2927
  %v4592 = vpack.c.b16 %v2992, %v2928
  %v4593 = vpack.c.b16 %v2993, %v2929
  %v4594 = vpack.c.b16 %v3058, %v2994
  %v4595 = vpack.c.b16 %v3059, %v2995
  %v4596 = vpack.c.b16 %v3060, %v2996
  %v4597 = vpack.c.b16 %v3061, %v2997
  %v4598 = vpack.c.b16 %v3062, %v2998
  %v4599 = vpack.c.b16 %v3063, %v2999
  %v4600 = vpack.c.b16 %v3064, %v3000
  %v4601 = vpack.c.b16 %v3065, %v3001
  %v4602 = vpack.c.b16 %v3066, %v3002
  %v4603 = vpack.c.b16 %v3067, %v3003
  %v4604 = vpack.c.b16 %v3068, %v3004
  %v4605 = vpack.c.b16 %v3069, %v3005
  %v4606 = vpack.c.b16 %v3070, %v3006
  %v4607 = vpack.c.b16 %v3071, %v3007
  %v4608 = vpack.c.b16 %v3072, %v3008
  %v4609 = vpack.c.b16 %v3073, %v3009
  %v4610 = vpack.c.b16 %v3074, %v3010
  %v4611 = vpack.c.b16 %v3075, %v3011
  %v4612 = vpack.c.b16 %v3076, %v3012
  %v4613 = vpack.c.b16 %v3077, %v3013
  %v4614 = vpack.c.b16 %v3078, %v3014
  %v4615 = vpack.c.b16 %v3079, %v3015
  %v4616 = vpack.c.b16 %v3080, %v3016
  %v4617 = vpack.c.b16 %v3081, %v3017
  %v4618 = vpack.c.b16 %v3082, %v3018
  %v4619 = vpack.c.b16 %v3083, %v3019
  %v4620 = vpack.c.b16 %v3084, %v3020
  %v4621 = vpack.c.b16 %v3085, %v3021
  %v4622 = vpack.c.b16 %v3086, %v3022
  %v4623 = vpack.c.b16 %v3087, %v3023
  %v4624 = vpack.c.b16 %v3088, %v3024
  %v4625 = vpack.c.b16 %v3089, %v3025
  %v4626 = vpack.c.b16 %v3090, %v3026
  %v4627 = vpack.c.b16 %v3091, %v3027
  %v4628 = vpack.c.b16 %v3092, %v3028
  %v4629 = vpack.c.b16 %v3093, %v3029
  %v4630 = vpack.c.b16 %v3094, %v3030
  %v4631 = vpack.c.b16 %v3095, %v3031
  %v4632 = vpack.c.b16 %v3096, %v3032
  %v4633 = vpack.c.b16 %v3097, %v3033
  %v4634 = vpack.c.b16 %v3098, %v3034
  %v4635 = vpack.c.b16 %v3099, %v3035
  %v4636 = vpack.c.b16 %v3100, %v3036
  %v4637 = vpack.c.b16 %v3101, %v3037
  %v4638 = vpack.c.b16 %v3102, %v3038
  %v4639 = vpack.c.b16 %v3103, %v3039
  %v4640 = vpack.c.b16 %v3104, %v3040
  %v4641 = vpack.c.b16 %v3105, %v3041
  %v4642 = vpack.c.b16 %v3106, %v3042
  %v4643 = vpack.c.b16 %v3107, %v3043
  %v4644 = vpack.c.b16 %v3108, %v3044
  %v4645 = vpack.c.b16 %v3109, %v3045
  %v4646 = vpack.c.b16 %v3110, %v3046
  %v4647 = vpack.c.b16 %v3111, %v3047
  %v4648 = vpack.c.b16 %v3112, %v3048
  %v4649 = vpack.c.b16 %v3113, %v3049
  %v4650 = vpack.c.b16 %v3114, %v3050
  %v4651 = vpack.c.b16 %v3115, %v3051
  %v4652 = vpack.c.b16 %v3116, %v3052
  %v4653 = vpack.c.b16 %v3117, %v3053
  %v4654 = vpack.c.b16 %v3118, %v3054
  %v4655 = vpack.c.b16 %v3119, %v3055
  %v4656 = vpack.c.b16 %v3120, %v3056
  %v4657 = vpack.c.b16 %v3121, %v3057
  %v4658 = vpack.c.b16 %v3186, %v3122
  %v4659 = vpack.c.b16 %v3187, %v3123
  %v4660 = vpack.c.b16 %v3188, %v3124
  %v4661 = vpack.c.b16 %v3189, %v3125
  %v4662 = vpack.c.b16 %v3190, %v3126
  %v4663 = vpack.c.b16 %v3191, %v3127
  %v4664 = vpack.c.b16 %v3192, %v3128
  %v4665 = vpack.c.b16 %v3193, %v3129
  %v4666 = vpack.c.b16 %v3194, %v3130
  %v4667 = vpack.c.b16 %v3195, %v3131
  %v4668 = vpack.c.b16 %v3196, %v3132
  %v4669 = vpack.c.b16 %v3197, %v3133
  %v4670 = vpack.c.b16 %v3198, %v3134
  %v4671 = vpack.c.b16 %v3199, %v3135
  %v4672 = vpack.c.b16 %v3200, %v3136
  %v4673 = vpack.c.b16 %v3201, %v3137
  %v4674 = vpack.c.b16 %v3202, %v3138
  %v4675 = vpack.c.b16 %v3203, %v3139
  %v4676 = vpack.c.b16 %v3204, %v3140
  %v4677 = vpack.c.b16 %v3205, %v3141
  %v4678 = vpack.c.b16 %v3206, %v3142
  %v4679 = vpack.c.b16 %v3207, %v3143
  %v4680 = vpack.c.b16 %v3208, %v3144
  %v4681 = vpack.c.b16 %v3209, %v3145
  %v4682 = vpack.c.b16 %v3210, %v3146
  %v4683 = vpack.c.b16 %v3211, %v3147
  %v4684 = vpack.c.b16 %v3212, %v3148
  %v4685 = vpack.c.b16 %v3213, %v3149
  %v4686 = vpack.c.b16 %v3214, %v3150
  %v4687 = vpack.c.b16 %v3215, %v3151
  %v4688 = vpack.c.b16 %v3216, %v3152
  %v4689 = vpack.c.b16 %v3217, %v3153
  %v4690 = vpack.c.b16 %v3218, %v3154
  %v4691 = vpack.c.b16 %v3219, %v3155
  %v4692 = vpack.c.b16 %v3220, %v3156
  %v4693 = vpack.c.b16 %v3221, %v3157
  %v4694 = vpack.c.b16 %v3222, %v3158
  %v4695 = vpack.c.b16 %v3223, %v3159
  %v4696 = vpack.c.b16 %v3224, %v3160
  %v4697 = vpack.c.b16 %v3225, %v3161
  %v4698 = vpack.c.b16 %v3226, %v3162
  %v4699 = vpack.c.b16 %v3227, %v3163
  %v4700 = vpack.c.b16 %v3228, %v3164
  %v4701 = vpack.c.b16 %v3229, %v3165
  %v4702 = vpack.c.b16 %v3230, %v3166
  %v4703 = vpack.c.b16 %v3231, %v3167
  %v4704 = vpack.c.b16 %v3232, %v3168
  %v4705 = vpack.c.b16 %v3233, %v3169
  %v4706 = vpack.c.b16 %v3234, %v3170
  %v4707 = vpack.c.b16 %v3235, %v3171
  %v4708 = vpack.c.b16 %v3236, %v3172
  %v4709 = vpack.c.b16 %v3237, %v3173
  %v4710 = vpack.c.b16 %v3238, %v3174
  %v4711 = vpack.c.b16 %v3239, %v3175
  %v4712 = vpack.c.b16 %v3240, %v3176
  %v4713 = vpack.c.b16 %v3241, %v3177
  %v4714 = vpack.c.b16 %v3242, %v3178
  %v4715 = vpack.c.b16 %v3243, %v3179
  %v4716 = vpack.c.b16 %v3244, %v3180
  %v4717 = vpack.c.b16 %v3245, %v3181
  %v4718 = vpack.c.b16 %v3246, %v3182
  %v4719 = vpack.c.b16 %v3247, %v3183
  %v4720 = vpack.c.b16 %v3248, %v3184
  %v4721 = vpack.c.b16 %v3249, %v3185
  %v4722 = vpack.c.b16 %v3314, %v3250
  %v4723 = vpack.c.b16 %v3315, %v3251
  %v4724 = vpack.c.b16 %v3316, %v3252
  %v4725 = vpack.c.b16 %v3317, %v3253
  %v4726 = vpack.c.b16 %v3318, %v3254
  %v4727 = vpack.c.b16 %v3319, %v3255
  %v4728 = vpack.c.b16 %v3320, %v3256
  %v4729 = vpack.c.b16 %v3321, %v3257
  %v4730 = vpack.c.b16 %v3322, %v3258
  %v4731 = vpack.c.b16 %v3323, %v3259
  %v4732 = vpack.c.b16 %v3324, %v3260
  %v4733 = vpack.c.b16 %v3325, %v3261
  %v4734 = vpack.c.b16 %v3326, %v3262
  %v4735 = vpack.c.b16 %v3327, %v3263
  %v4736 = vpack.c.b16 %v3328, %v3264
  %v4737 = vpack.c.b16 %v3329, %v3265
  %v4738 = vpack.c.b16 %v3330, %v3266
  %v4739 = vpack.c.b16 %v3331, %v3267
  %v4740 = vpack.c.b16 %v3332, %v3268
  %v4741 = vpack.c.b16 %v3333, %v3269
  %v4742 = vpack.c.b16 %v3334, %v3270
  %v4743 = vpack.c.b16 %v3335, %v3271
  %v4744 = vpack.c.b16 %v3336, %v3272
  %v4745 = vpack.c.b16 %v3337, %v3273
  %v4746 = vpack.c.b16 %v3338, %v3274
  %v4747 = vpack.c.b16 %v3339, %v3275
  %v4748 = vpack.c.b16 %v3340, %v3276
  %v4749 = vpack.c.b16 %v3341, %v3277
  %v4750 = vpack.c.b16 %v3342, %v3278
  %v4751 = vpack.c.b16 %v3343, %v3279
  %v4752 = vpack.c.b16 %v3344, %v3280
  %v4753 = vpack.c.b16 %v3345, %v3281
  %v4754 = vpack.c.b16 %v3346, %v3282
  %v4755 = vpack.c.b16 %v3347, %v3283
  %v4756 = vpack.c.b16 %v3348, %v3284
  %v4757 = vpack.c.b16 %v3349, %v3285
  %v4758 = vpack.c.b16 %v3350, %v3286
  %v4759 = vpack.c.b16 %v3351, %v3287
  %v4760 = vpack.c.b16 %v3352, %v3288
  %v4761 = vpack.c.b16 %v3353, %v3289
  %v4762 = vpack.c.b16 %v3354, %v3290
  %v4763 = vpack.c.b16 %v3355, %v3291
  %v4764 = vpack.c.b16 %v3356, %v3292
  %v4765 = vpack.c.b16 %v3357, %v3293
  %v4766 = vpack.c.b16 %v3358, %v3294
  %v4767 = vpack.c.b16 %v3359, %v3295
  %v4768 = vpack.c.b16 %v3360, %v3296
  %v4769 = vpack.c.b16 %v3361, %v3297
  %v4770 = vpack.c.b16 %v3362, %v3298
  %v4771 = vpack.c.b16 %v3363, %v3299
  %v4772 = vpack.c.b16 %v3364, %v3300
  %v4773 = vpack.c.b16 %v3365, %v3301
  %v4774 = vpack.c.b16 %v3366, %v3302
  %v4775 = vpack.c.b16 %v3367, %v3303
  %v4776 = vpack.c.b16 %v3368, %v3304
  %v4777 = vpack.c.b16 %v3369, %v3305
  %v4778 = vpack.c.b16 %v3370, %v3306
  %v4779 = vpack.c.b16 %v3371, %v3307
  %v4780 = vpack.c.b16 %v3372, %v3308
  %v4781 = vpack.c.b16 %v3373, %v3309
  %v4782 = vpack.c.b16 %v3374, %v3310
  %v4783 = vpack.c.b16 %v3375, %v3311
  %v4784 = vpack.c.b16 %v3376, %v3312
  %v4785 = vpack.c.b16 %v3377, %v3313
  %v4786 = vpack.c.b16 %v3442, %v3378
  %v4787 = vpack.c.b16 %v3443, %v3379
  %v4788 = vpack.c.b16 %v3444, %v3380
  %v4789 = vpack.c.b16 %v3445, %v3381
  %v4790 = vpack.c.b16 %v3446, %v3382
  %v4791 = vpack.c.b16 %v3447, %v3383
  %v4792 = vpack.c.b16 %v3448, %v3384
  %v4793 = vpack.c.b16 %v3449, %v3385
  %v4794 = vpack.c.b16 %v3450, %v3386
  %v4795 = vpack.c.b16 %v3451, %v3387
  %v4796 = vpack.c.b16 %v3452, %v3388
  %v4797 = vpack.c.b16 %v3453, %v3389
  %v4798 = vpack.c.b16 %v3454, %v3390
  %v4799 = vpack.c.b16 %v3455, %v3391
  %v4800 = vpack.c.b16 %v3456, %v3392
  %v4801 = vpack.c.b16 %v3457, %v3393
  %v4802 = vpack.c.b16 %v3458, %v3394
  %v4803 = vpack.c.b16 %v3459, %v3395
  %v4804 = vpack.c.b16 %v3460, %v3396
  %v4805 = vpack.c.b16 %v3461, %v3397
  %v4806 = vpack.c.b16 %v3462, %v3398
  %v4807 = vpack.c.b16 %v3463, %v3399
  %v4808 = vpack.c.b16 %v3464, %v3400
  %v4809 = vpack.c.b16 %v3465, %v3401
  %v4810 = vpack.c.b16 %v3466, %v3402
  %v4811 = vpack.c.b16 %v3467, %v3403
  %v4812 = vpack.c.b16 %v3468, %v3404
  %v4813 = vpack.c.b16 %v3469, %v3405
  %v4814 = vpack.c.b16 %v3470, %v3406
  %v4815 = vpack.c.b16 %v3471, %v3407
  %v4816 = vpack.c.b16 %v3472, %v3408
  %v4817 = vpack.c.b16 %v3473, %v3409
  %v4818 = vpack.c.b16 %v3474, %v3410
  %v4819 = vpack.c.b16 %v3475, %v3411
  %v4820 = vpack.c.b16 %v3476, %v3412
  %v4821 = vpack.c.b16 %v3477, %v3413
  %v4822 = vpack.c.b16 %v3478, %v3414
  %v4823 = vpack.c.b16 %v3479, %v3415
  %v4824 = vpack.c.b16 %v3480, %v3416
  %v4825 = vpack.c.b16 %v3481, %v3417
  %v4826 = vpack.c.b16 %v3482, %v3418
  %v4827 = vpack.c.b16 %v3483, %v3419
  %v4828 = vpack.c.b16 %v3484, %v3420
  %v4829 = vpack.c.b16 %v3485, %v3421
  %v4830 = vpack.c.b16 %v3486, %v3422
  %v4831 = vpack.c.b16 %v3487, %v3423
  %v4832 = vpack.c.b16 %v3488, %v3424
  %v4833 = vpack.c.b16 %v3489, %v3425
  %v4834 = vpack.c.b16 %v3490, %v3426
  %v4835 = vpack.c.b16 %v3491, %v3427
  %v4836 = vpack.c.b16 %v3492, %v3428
  %v4837 = vpack.c.b16 %v3493, %v3429
  %v4838 = vpack.c.b16 %v3494, %v3430
  %v4839 = vpack.c.b16 %v3495, %v3431
  %v4840 = vpack.c.b16 %v3496, %v3432
  %v4841 = vpack.c.b16 %v3497, %v3433
  %v4842 = vpack.c.b16 %v3498, %v3434
  %v4843 = vpack.c.b16 %v3499, %v3435
  %v4844 = vpack.c.b16 %v3500, %v3436
  %v4845 = vpack.c.b16 %v3501, %v3437
  %v4846 = vpack.c.b16 %v3502, %v3438
  %v4847 = vpack.c.b16 %v3503, %v3439
  %v4848 = vpack.c.b16 %v3504, %v3440
  %v4849 = vpack.c.b16 %v3505, %v3441
  %v4850 = vpack.c.b16 %v3570, %v3506
  %v4851 = vpack.c.b16 %v3571, %v3507
  %v4852 = vpack.c.b16 %v3572, %v3508
  %v4853 = vpack.c.b16 %v3573, %v3509
  %v4854 = vpack.c.b16 %v3574, %v3510
  %v4855 = vpack.c.b16 %v3575, %v3511
  %v4856 = vpack.c.b16 %v3576, %v3512
  %v4857 = vpack.c.b16 %v3577, %v3513
  %v4858 = vpack.c.b16 %v3578, %v3514
  %v4859 = vpack.c.b16 %v3579, %v3515
  %v4860 = vpack.c.b16 %v3580, %v3516
  %v4861 = vpack.c.b16 %v3581, %v3517
  %v4862 = vpack.c.b16 %v3582, %v3518
  %v4863 = vpack.c.b16 %v3583, %v3519
  %v4864 = vpack.c.b16 %v3584, %v3520
  %v4865 = vpack.c.b16 %v3585, %v3521
  %v4866 = vpack.c.b16 %v3586, %v3522
  %v4867 = vpack.c.b16 %v3587, %v3523
  %v4868 = vpack.c.b16 %v3588, %v3524
  %v4869 = vpack.c.b16 %v3589, %v3525
  %v4870 = vpack.c.b16 %v3590, %v3526
  %v4871 = vpack.c.b16 %v3591, %v3527
  %v4872 = vpack.c.b16 %v3592, %v3528
  %v4873 = vpack.c.b16 %v3593, %v3529
  %v4874 = vpack.c.b16 %v3594, %v3530
  %v4875 = vpack.c.b16 %v3595, %v3531
  %v4876 = vpack.c.b16 %v3596, %v3532
  %v4877 = vpack.c.b16 %v3597, %v3533
  %v4878 = vpack.c.b16 %v3598, %v3534
  %v4879 = vpack.c.b16 %v3599, %v3535
  %v4880 = vpack.c.b16 %v3600, %v3536
  %v4881 = vpack.c.b16 %v3601, %v3537
  %v4882 = vpack.c.b16 %v3602, %v3538
  %v4883 = vpack.c.b16 %v3603, %v3539
  %v4884 = vpack.c.b16 %v3604, %v3540
  %v4885 = vpack.c.b16 %v3605, %v3541
  %v4886 = vpack.c.b16 %v3606, %v3542
  %v4887 = vpack.c.b16 %v3607, %v3543
  %v4888 = vpack.c.b16 %v3608, %v3544
  %v4889 = vpack.c.b16 %v3609, %v3545
  %v4890 = vpack.c.b16 %v3610, %v3546
  %v4891 = vpack.c.b16 %v3611, %v3547
  %v4892 = vpack.c.b16 %v3612, %v3548
  %v4893 = vpack.c.b16 %v3613, %v3549
  %v4894 = vpack.c.b16 %v3614, %v3550
  %v4895 = vpack.c.b16 %v3615, %v3551
  %v4896 = vpack.c.b16 %v3616, %v3552
  %v4897 = vpack.c.b16 %v3617, %v3553
  %v4898 = vpack.c.b16 %v3618, %v3554
  %v4899 = vpack.c.b16 %v3619, %v3555
  %v4900 = vpack.c.b16 %v3620, %v3556
  %v4901 = vpack.c.b16 %v3621, %v3557
  %v4902 = vpack.c.b16 %v3622, %v3558
  %v4903 = vpack.c.b16 %v3623, %v3559
  %v4904 = vpack.c.b16 %v3624, %v3560
  %v4905 = vpack.c.b16 %v3625, %v3561
  %v4906 = vpack.c.b16 %v3626, %v3562
  %v4907 = vpack.c.b16 %v3627, %v3563
  %v4908 = vpack.c.b16 %v3628, %v3564
  %v4909 = vpack.c.b16 %v3629, %v3565
  %v4910 = vpack.c.b16 %v3630, %v3566
  %v4911 = vpack.c.b16 %v3631, %v3567
  %v4912 = vpack.c.b16 %v3632, %v3568
  %v4913 = vpack.c.b16 %v3633, %v3569
  %v4914 = vpack.c.b16 %v3698, %v3634
  %v4915 = vpack.c.b16 %v3699, %v3635
  %v4916 = vpack.c.b16 %v3700, %v3636
  %v4917 = vpack.c.b16 %v3701, %v3637
  %v4918 = vpack.c.b16 %v3702, %v3638
  %v4919 = vpack.c.b16 %v3703, %v3639
  %v4920 = vpack.c.b16 %v3704, %v3640
  %v4921 = vpack.c.b16 %v3705, %v3641
  %v4922 = vpack.c.b16 %v3706, %v3642
  %v4923 = vpack.c.b16 %v3707, %v3643
  %v4924 = vpack.c.b16 %v3708, %v3644
  %v4925 = vpack.c.b16 %v3709, %v3645
  %v4926 = vpack.c.b16 %v3710, %v3646
  %v4927 = vpack.c.b16 %v3711, %v3647
  %v4928 = vpack.c.b16 %v3712, %v3648
  %v4929 = vpack.c.b16 %v3713, %v3649
  %v4930 = vpack.c.b16 %v3714, %v3650
  %v4931 = vpack.c.b16 %v3715, %v3651
  %v4932 = vpack.c.b16 %v3716, %v3652
  %v4933 = vpack.c.b16 %v3717, %v3653
  %v4934 = vpack.c.b16 %v3718, %v3654
  %v4935 = vpack.c.b16 %v3719, %v3655
  %v4936 = vpack.c.b16 %v3720, %v3656
  %v4937 = vpack.c.b16 %v3721, %v3657
  %v4938 = vpack.c.b16 %v3722, %v3658
  %v4939 = vpack.c.b16 %v3723, %v3659
  %v4940 = vpack.c.b16 %v3724, %v3660
  %v4941 = vpack.c.b16 %v3725, %v3661
  %v4942 = vpack.c.b16 %v3726, %v3662
  %v4943 = vpack.c.b16 %v3727, %v3663
  %v4944 = vpack.c.b16 %v3728, %v3664
  %v4945 = vpack.c.b16 %v3729, %v3665
  %v4946 = vpack.c.b16 %v3730, %v3666
  %v4947 = vpack.c.b16 %v3731, %v3667
  %v4948 = vpack.c.b16 %v3732, %v3668
  %v4949 = vpack.c.b16 %v3733, %v3669
  %v4950 = vpack.c.b16 %v3734, %v3670
  %v4951 = vpack.c.b16 %v3735, %v3671
  %v4952 = vpack.c.b16 %v3736, %v3672
  %v4953 = vpack.c.b16 %v3737, %v3673
  %v4954 = vpack.c.b16 %v3738, %v3674
  %v4955 = vpack.c.b16 %v3739, %v3675
  %v4956 = vpack.c.b16 %v3740, %v3676
  %v4957 = vpack.c.b16 %v3741, %v3677
  %v4958 = vpack.c.b16 %v3742, %v3678
  %v4959 = vpack.c.b16 %v3743, %v3679
  %v4960 = vpack.c.b16 %v3744, %v3680
  %v4961 = vpack.c.b16 %v3745, %v3681
  %v4962 = vpack.c.b16 %v3746, %v3682
  %v4963 = vpack.c.b16 %v3747, %v3683
  %v4964 = vpack.c.b16 %v3748, %v3684
  %v4965 = vpack.c.b16 %v3749, %v3685
  %v4966 = vpack.c.b16 %v3750, %v3686
  %v4967 = vpack.c.b16 %v3751, %v3687
  %v4968 = vpack.c.b16 %v3752, %v3688
  %v4969 = vpack.c.b16 %v3753, %v3689
  %v4970 = vpack.c.b16 %v3754, %v3690
  %v4971 = vpack.c.b16 %v3755, %v3691
  %v4972 = vpack.c.b16 %v3756, %v3692
  %v4973 = vpack.c.b16 %v3757, %v3693
  %v4974 = vpack.c.b16 %v3758, %v3694
  %v4975 = vpack.c.b16 %v3759, %v3695
  %v4976 = vpack.c.b16 %v3760, %v3696
  %v4977 = vpack.c.b16 %v3761, %v3697
  %v4978 = vpack.c.b16 %v3826, %v3762
  %v4979 = vpack.c.b16 %v3827, %v3763
  %v4980 = vpack.c.b16 %v3828, %v3764
  %v4981 = vpack.c.b16 %v3829, %v3765
  %v4982 = vpack.c.b16 %v3830, %v3766
  %v4983 = vpack.c.b16 %v3831, %v3767
  %v4984 = vpack.c.b16 %v3832, %v3768
  %v4985 = vpack.c.b16 %v3833, %v3769
  %v4986 = vpack.c.b16 %v3834, %v3770
  %v4987 = vpack.c.b16 %v3835, %v3771
  %v4988 = vpack.c.b16 %v3836, %v3772
  %v4989 = vpack.c.b16 %v3837, %v3773
  %v4990 = vpack.c.b16 %v3838, %v3774
  %v4991 = vpack.c.b16 %v3839, %v3775
  %v4992 = vpack.c.b16 %v3840, %v3776
  %v4993 = vpack.c.b16 %v3841, %v3777
  %v4994 = vpack.c.b16 %v3842, %v3778
  %v4995 = vpack.c.b16 %v3843, %v3779
  %v4996 = vpack.c.b16 %v3844, %v3780
  %v4997 = vpack.c.b16 %v3845, %v3781
  %v4998 = vpack.c.b16 %v3846, %v3782
  %v4999 = vpack.c.b16 %v3847, %v3783
  %v5000 = vpack.c.b16 %v3848, %v3784
  %v5001 = vpack.c.b16 %v3849, %v3785
  %v5002 = vpack.c.b16 %v3850, %v3786
  %v5003 = vpack.c.b16 %v3851, %v3787
  %v5004 = vpack.c.b16 %v3852, %v3788
  %v5005 = vpack.c.b16 %v3853, %v3789
  %v5006 = vpack.c.b16 %v3854, %v3790
  %v5007 = vpack.c.b16 %v3855, %v3791
  %v5008 = vpack.c.b16 %v3856, %v3792
  %v5009 = vpack.c.b16 %v3857, %v3793
  %v5010 = vpack.c.b16 %v3858, %v3794
  %v5011 = vpack.c.b16 %v3859, %v3795
  %v5012 = vpack.c.b16 %v3860, %v3796
  %v5013 = vpack.c.b16 %v3861, %v3797
  %v5014 = vpack.c.b16 %v3862, %v3798
  %v5015 = vpack.c.b16 %v3863, %v3799
  %v5016 = vpack.c.b16 %v3864, %v3800
  %v5017 = vpack.c.b16 %v3865, %v3801
  %v5018 = vpack.c.b16 %v3866, %v3802
  %v5019 = vpack.c.b16 %v3867, %v3803
  %v5020 = vpack.c.b16 %v3868, %v3804
  %v5021 = vpack.c.b16 %v3869, %v3805
  %v5022 = vpack.c.b16 %v3870, %v3806
  %v5023 = vpack.c.b16 %v3871, %v3807
  %v5024 = vpack.c.b16 %v3872, %v3808
  %v5025 = vpack.c.b16 %v3873, %v3809
  %v5026 = vpack.c.b16 %v3874, %v3810
  %v5027 = vpack.c.b16 %v3875, %v3811
  %v5028 = vpack.c.b16 %v3876, %v3812
  %v5029 = vpack.c.b16 %v3877, %v3813
  %v5030 = vpack.c.b16 %v3878, %v3814
  %v5031 = vpack.c.b16 %v3879, %v3815
  %v5032 = vpack.c.b16 %v3880, %v3816
  %v5033 = vpack.c.b16 %v3881, %v3817
  %v5034 = vpack.c.b16 %v3882, %v3818
  %v5035 = vpack.c.b16 %v3883, %v3819
  %v5036 = vpack.c.b16 %v3884, %v3820
  %v5037 = vpack.c.b16 %v3885, %v3821
  %v5038 = vpack.c.b16 %v3886, %v3822
  %v5039 = vpack.c.b16 %v3887, %v3823
  %v5040 = vpack.c.b16 %v3888, %v3824
  %v5041 = vpack.c.b16 %v3889, %v3825
  %v5042 = vpack.c.b16 %v3954, %v3890
  %v5043 = vpack.c.b16 %v3955, %v3891
  %v5044 = vpack.c.b16 %v3956, %v3892
  %v5045 = vpack.c.b16 %v3957, %v3893
  %v5046 = vpack.c.b16 %v3958, %v3894
  %v5047 = vpack.c.b16 %v3959, %v3895
  %v5048 = vpack.c.b16 %v3960, %v3896
  %v5049 = vpack.c.b16 %v3961, %v3897
  %v5050 = vpack.c.b16 %v3962, %v3898
  %v5051 = vpack.c.b16 %v3963, %v3899
  %v5052 = vpack.c.b16 %v3964, %v3900
  %v5053 = vpack.c.b16 %v3965, %v3901
  %v5054 = vpack.c.b16 %v3966, %v3902
  %v5055 = vpack.c.b16 %v3967, %v3903
  %v5056 = vpack.c.b16 %v3968, %v3904
  %v5057 = vpack.c.b16 %v3969, %v3905
  %v5058 = vpack.c.b16 %v3970, %v3906
  %v5059 = vpack.c.b16 %v3971, %v3907
  %v5060 = vpack.c.b16 %v3972, %v3908
  %v5061 = vpack.c.b16 %v3973, %v3909
  %v5062 = vpack.c.b16 %v3974, %v3910
  %v5063 = vpack.c.b16 %v3975, %v3911
  %v5064 = vpack.c.b16 %v3976, %v3912
  %v5065 = vpack.c.b16 %v3977, %v3913
  %v5066 = vpack.c.b16 %v3978, %v3914
  %v5067 = vpack.c.b16 %v3979, %v3915
  %v5068 = vpack.c.b16 %v3980, %v3916
  %v5069 = vpack.c.b16 %v3981, %v3917
  %v5070 = vpack.c.b16 %v3982, %v3918
  %v5071 = vpack.c.b16 %v3983, %v3919
  %v5072 = vpack.c.b16 %v3984, %v3920
  %v5073 = vpack.c.b16 %v3985, %v3921
  %v5074 = vpack.c.b16 %v3986, %v3922
  %v5075 = vpack.c.b16 %v3987, %v3923
  %v5076 = vpack.c.b16 %v3988, %v3924
  %v5077 = vpack.c.b16 %v3989, %v3925
  %v5078 = vpack.c.b16 %v3990, %v3926
  %v5079 = vpack.c.b16 %v3991, %v3927
  %v5080 = vpack.c.b16 %v3992, %v3928
  %v5081 = vpack.c.b16 %v3993, %v3929
  %v5082 = vpack.c.b16 %v3994, %v3930
  %v5083 = vpack.c.b16 %v3995, %v3931
  %v5084 = vpack.c.b16 %v3996, %v3932
  %v5085 = vpack.c.b16 %v3997, %v3933
  %v5086 = vpack.c.b16 %v3998, %v3934
  %v5087 = vpack.c.b16 %v3999, %v3935
  %v5088 = vpack.c.b16 %v4000, %v3936
  %v5089 = vpack.c.b16 %v4001, %v3937
  %v5090 = vpack.c.b16 %v4002, %v3938
  %v5091 = vpack.c.b16 %v4003, %v3939
  %v5092 = vpack.c.b16 %v4004, %v3940
  %v5093 = vpack.c.b16 %v4005, %v3941
  %v5094 = vpack.c.b16 %v4006, %v3942
  %v5095 = vpack.c.b16 %v4007, %v3943
  %v5096 = vpack.c.b16 %v4008, %v3944
  %v5097 = vpack.c.b16 %v4009, %v3945
  %v5098 = vpack.c.b16 %v4010, %v3946
  %v5099 = vpack.c.b16 %v4011, %v3947
  %v5100 = vpack.c.b16 %v4012, %v3948
  %v5101 = vpack.c.b16 %v4013, %v3949
  %v5102 = vpack.c.b16 %v4014, %v3950
  %v5103 = vpack.c.b16 %v4015, %v3951
  %v5104 = vpack.c.b16 %v4016, %v3952
  %v5105 = vpack.c.b16 %v4017, %v3953
  %v5106 = vpack.c.b16 %v4082, %v4018
  %v5107 = vpack.c.b16 %v4083, %v4019
  %v5108 = vpack.c.b16 %v4084, %v4020
  %v5109 = vpack.c.b16 %v4085, %v4021
  %v5110 = vpack.c.b16 %v4086, %v4022
  %v5111 = vpack.c.b16 %v4087, %v4023
  %v5112 = vpack.c.b16 %v4088, %v4024
  %v5113 = vpack.c.b16 %v4089, %v4025
  %v5114 = vpack.c.b16 %v4090, %v4026
  %v5115 = vpack.c.b16 %v4091, %v4027
  %v5116 = vpack.c.b16 %v4092, %v4028
  %v5117 = vpack.c.b16 %v4093, %v4029
  %v5118 = vpack.c.b16 %v4094, %v4030
  %v5119 = vpack.c.b16 %v4095, %v4031
  %v5120 = vpack.c.b16 %v4096, %v4032
  %v5121 = vpack.c.b16 %v4097, %v4033
  %v5122 = vpack.c.b16 %v4098, %v4034
  %v5123 = vpack.c.b16 %v4099, %v4035
  %v5124 = vpack.c.b16 %v4100, %v4036
  %v5125 = vpack.c.b16 %v4101, %v4037
  %v5126 = vpack.c.b16 %v4102, %v4038
  %v5127 = vpack.c.b16 %v4103, %v4039
  %v5128 = vpack.c.b16 %v4104, %v4040
  %v5129 = vpack.c.b16 %v4105, %v4041
  %v5130 = vpack.c.b16 %v4106, %v4042
  %v5131 = vpack.c.b16 %v4107, %v4043
  %v5132 = vpack.c.b16 %v4108, %v4044
  %v5133 = vpack.c.b16 %v4109, %v4045
  %v5134 = vpack.c.b16 %v4110, %v4046
  %v5135 = vpack.c.b16 %v4111, %v4047
  %v5136 = vpack.c.b16 %v4112, %v4048
  %v5137 = vpack.c.b16 %v4113, %v4049
  %v5138 = vpack.c.b16 %v4114, %v4050
  %v5139 = vpack.c.b16 %v4115, %v4051
  %v5140 = vpack.c.b16 %v4116, %v4052
  %v5141 = vpack.c.b16 %v4117, %v4053
  %v5142 = vpack.c.b16 %v4118, %v4054
  %v5143 = vpack.c.b16 %v4119, %v4055
  %v5144 = vpack.c.b16 %v4120, %v4056
  %v5145 = vpack.c.b16 %v4121, %v4057
  %v5146 = vpack.c.b16 %v4122, %v4058
  %v5147 = vpack.c.b16 %v4123, %v4059
  %v5148 = vpack.c.b16 %v4124, %v4060
  %v5149 = vpack.c.b16 %v4125, %v4061
  %v5150 = vpack.c.b16 %v4126, %v4062
  %v5151 = vpack.c.b16 %v4127, %v4063
  %v5152 = vpack.c.b16 %v4128, %v4064
  %v5153 = vpack.c.b16 %v4129, %v4065
  %v5154 = vpack.c.b16 %v4130, %v4066
  %v5155 = vpack.c.b16 %v4131, %v4067
  %v5156 = vpack.c.b16 %v4132, %v4068
  %v5157 = vpack.c.b16 %v4133, %v4069
  %v5158 = vpack.c.b16 %v4134, %v4070
  %v5159 = vpack.c.b16 %v4135, %v4071
  %v5160 = vpack.c.b16 %v4136, %v4072
  %v5161 = vpack.c.b16 %v4137, %v4073
  %v5162 = vpack.c.b16 %v4138, %v4074
  %v5163 = vpack.c.b16 %v4139, %v4075
  %v5164 = vpack.c.b16 %v4140, %v4076
  %v5165 = vpack.c.b16 %v4141, %v4077
  %v5166 = vpack.c.b16 %v4142, %v4078
  %v5167 = vpack.c.b16 %v4143, %v4079
  %v5168 = vpack.c.b16 %v4144, %v4080
  %v5169 = vpack.c.b16 %v4145, %v4081
  %6194 = vmatpush.bf16.msra.mxu0 %v4594
  %6195 = vmatpush.bf16.msra.mxu0 %v4530
  %6196 = vmatpush.bf16.msra.mxu0 %v4466
  %6197 = vmatpush.bf16.msra.mxu0 %v4402
  %6198 = vmatpush.bf16.msra.mxu0 %v4338
  %6199 = vmatpush.bf16.msra.mxu0 %v4274
  %6200 = vmatpush.bf16.msra.mxu0 %v4210
  %6201 = vmatpush.bf16.msra.mxu0 %v4146
  %6202 = vmatmul.bf16.gmra.mxu0 %v1070
  %v6203 = vpop.f32.mrf.mxu0
  %v6204 = vadd.f32 %v1065, %v6203
  %v6205 = vpop.f32.mrf.mxu0
  %6206 = vdwg.mxu0
  %6207 = vmatpush.bf16.msra.mxu0 %v5106
  %6208 = vmatpush.bf16.msra.mxu0 %v5042
  %6209 = vmatpush.bf16.msra.mxu0 %v4978
  %6210 = vmatpush.bf16.msra.mxu0 %v4914
  %6211 = vmatpush.bf16.msra.mxu0 %v4850
  %6212 = vmatpush.bf16.msra.mxu0 %v4786
  %6213 = vmatpush.bf16.msra.mxu0 %v4722
  %6214 = vmatpush.bf16.msra.mxu0 %v4658
  %6215 = vmatmul.bf16.gmra.mxu0 %v1071
  %v6216 = vpop.f32.mrf.mxu0
  %v6217 = vadd.f32 %v6204, %v6216
  %v6218 = vpop.f32.mrf.mxu0
  %6219 = vdwg.mxu0
  %6220 = vmatpush.bf16.msra.mxu0 %v4595
  %6221 = vmatpush.bf16.msra.mxu0 %v4531
  %6222 = vmatpush.bf16.msra.mxu0 %v4467
  %6223 = vmatpush.bf16.msra.mxu0 %v4403
  %6224 = vmatpush.bf16.msra.mxu0 %v4339
  %6225 = vmatpush.bf16.msra.mxu0 %v4275
  %6226 = vmatpush.bf16.msra.mxu0 %v4211
  %6227 = vmatpush.bf16.msra.mxu0 %v4147
  %6228 = vmatmul.bf16.gmra.mxu0 %v1070
  %v6229 = vpop.f32.mrf.mxu0
  %v6230 = vadd.f32 %v1065, %v6229
  %v6231 = vpop.f32.mrf.mxu0
  %6232 = vdwg.mxu0
  %6233 = vmatpush.bf16.msra.mxu0 %v5107
  %6234 = vmatpush.bf16.msra.mxu0 %v5043
  %6235 = vmatpush.bf16.msra.mxu0 %v4979
  %6236 = vmatpush.bf16.msra.mxu0 %v4915
  %6237 = vmatpush.bf16.msra.mxu0 %v4851
  %6238 = vmatpush.bf16.msra.mxu0 %v4787
  %6239 = vmatpush.bf16.msra.mxu0 %v4723
  %6240 = vmatpush.bf16.msra.mxu0 %v4659
  %6241 = vmatmul.bf16.gmra.mxu0 %v1071
  %v6242 = vpop.f32.mrf.mxu0
  %v6243 = vadd.f32 %v6230, %v6242
  %v6244 = vpop.f32.mrf.mxu0
  %6245 = vdwg.mxu0
  %6246 = vmatpush.bf16.msra.mxu0 %v4596
  %6247 = vmatpush.bf16.msra.mxu0 %v4532
  %6248 = vmatpush.bf16.msra.mxu0 %v4468
  %6249 = vmatpush.bf16.msra.mxu0 %v4404
  %6250 = vmatpush.bf16.msra.mxu0 %v4340
  %6251 = vmatpush.bf16.msra.mxu0 %v4276
  %6252 = vmatpush.bf16.msra.mxu0 %v4212
  %6253 = vmatpush.bf16.msra.mxu0 %v4148
  %6254 = vmatmul.bf16.gmra.mxu0 %v1070
  %v6255 = vpop.f32.mrf.mxu0
  %v6256 = vadd.f32 %v1065, %v6255
  %v6257 = vpop.f32.mrf.mxu0
  %6258 = vdwg.mxu0
  %6259 = vmatpush.bf16.msra.mxu0 %v5108
  %6260 = vmatpush.bf16.msra.mxu0 %v5044
  %6261 = vmatpush.bf16.msra.mxu0 %v4980
  %6262 = vmatpush.bf16.msra.mxu0 %v4916
  %6263 = vmatpush.bf16.msra.mxu0 %v4852
  %6264 = vmatpush.bf16.msra.mxu0 %v4788
  %6265 = vmatpush.bf16.msra.mxu0 %v4724
  %6266 = vmatpush.bf16.msra.mxu0 %v4660
  %6267 = vmatmul.bf16.gmra.mxu0 %v1071
  %v6268 = vpop.f32.mrf.mxu0
  %v6269 = vadd.f32 %v6256, %v6268
  %v6270 = vpop.f32.mrf.mxu0
  %6271 = vdwg.mxu0
  %6272 = vmatpush.bf16.msra.mxu0 %v4597
  %6273 = vmatpush.bf16.msra.mxu0 %v4533
  %6274 = vmatpush.bf16.msra.mxu0 %v4469
  %6275 = vmatpush.bf16.msra.mxu0 %v4405
  %6276 = vmatpush.bf16.msra.mxu0 %v4341
  %6277 = vmatpush.bf16.msra.mxu0 %v4277
  %6278 = vmatpush.bf16.msra.mxu0 %v4213
  %6279 = vmatpush.bf16.msra.mxu0 %v4149
  %6280 = vmatmul.bf16.gmra.mxu0 %v1070
  %v6281 = vpop.f32.mrf.mxu0
  %v6282 = vadd.f32 %v1065, %v6281
  %v6283 = vpop.f32.mrf.mxu0
  %6284 = vdwg.mxu0
  %6285 = vmatpush.bf16.msra.mxu0 %v5109
  %6286 = vmatpush.bf16.msra.mxu0 %v5045
  %6287 = vmatpush.bf16.msra.mxu0 %v4981
  %6288 = vmatpush.bf16.msra.mxu0 %v4917
  %6289 = vmatpush.bf16.msra.mxu0 %v4853
  %6290 = vmatpush.bf16.msra.mxu0 %v4789
  %6291 = vmatpush.bf16.msra.mxu0 %v4725
  %6292 = vmatpush.bf16.msra.mxu0 %v4661
  %6293 = vmatmul.bf16.gmra.mxu0 %v1071
  %v6294 = vpop.f32.mrf.mxu0
  %v6295 = vadd.f32 %v6282, %v6294
  %v6296 = vpop.f32.mrf.mxu0
  %6297 = vdwg.mxu0
  %6298 = vmatpush.bf16.msra.mxu0 %v4598
  %6299 = vmatpush.bf16.msra.mxu0 %v4534
  %6300 = vmatpush.bf16.msra.mxu0 %v4470
  %6301 = vmatpush.bf16.msra.mxu0 %v4406
  %6302 = vmatpush.bf16.msra.mxu0 %v4342
  %6303 = vmatpush.bf16.msra.mxu0 %v4278
  %6304 = vmatpush.bf16.msra.mxu0 %v4214
  %6305 = vmatpush.bf16.msra.mxu0 %v4150
  %6306 = vmatmul.bf16.gmra.mxu0 %v1070
  %v6307 = vpop.f32.mrf.mxu0
  %v6308 = vadd.f32 %v1065, %v6307
  %v6309 = vpop.f32.mrf.mxu0
  %6310 = vdwg.mxu0
  %6311 = vmatpush.bf16.msra.mxu0 %v5110
  %6312 = vmatpush.bf16.msra.mxu0 %v5046
  %6313 = vmatpush.bf16.msra.mxu0 %v4982
  %6314 = vmatpush.bf16.msra.mxu0 %v4918
  %6315 = vmatpush.bf16.msra.mxu0 %v4854
  %6316 = vmatpush.bf16.msra.mxu0 %v4790
  %6317 = vmatpush.bf16.msra.mxu0 %v4726
  %6318 = vmatpush.bf16.msra.mxu0 %v4662
  %6319 = vmatmul.bf16.gmra.mxu0 %v1071
  %v6320 = vpop.f32.mrf.mxu0
  %v6321 = vadd.f32 %v6308, %v6320
  %v6322 = vpop.f32.mrf.mxu0
  %6323 = vdwg.mxu0
  %6324 = vmatpush.bf16.msra.mxu0 %v4599
  %6325 = vmatpush.bf16.msra.mxu0 %v4535
  %6326 = vmatpush.bf16.msra.mxu0 %v4471
  %6327 = vmatpush.bf16.msra.mxu0 %v4407
  %6328 = vmatpush.bf16.msra.mxu0 %v4343
  %6329 = vmatpush.bf16.msra.mxu0 %v4279
  %6330 = vmatpush.bf16.msra.mxu0 %v4215
  %6331 = vmatpush.bf16.msra.mxu0 %v4151
  %6332 = vmatmul.bf16.gmra.mxu0 %v1070
  %v6333 = vpop.f32.mrf.mxu0
  %v6334 = vadd.f32 %v1065, %v6333
  %v6335 = vpop.f32.mrf.mxu0
  %6336 = vdwg.mxu0
  %6337 = vmatpush.bf16.msra.mxu0 %v5111
  %6338 = vmatpush.bf16.msra.mxu0 %v5047
  %6339 = vmatpush.bf16.msra.mxu0 %v4983
  %6340 = vmatpush.bf16.msra.mxu0 %v4919
  %6341 = vmatpush.bf16.msra.mxu0 %v4855
  %6342 = vmatpush.bf16.msra.mxu0 %v4791
  %6343 = vmatpush.bf16.msra.mxu0 %v4727
  %6344 = vmatpush.bf16.msra.mxu0 %v4663
  %6345 = vmatmul.bf16.gmra.mxu0 %v1071
  %v6346 = vpop.f32.mrf.mxu0
  %v6347 = vadd.f32 %v6334, %v6346
  %v6348 = vpop.f32.mrf.mxu0
  %6349 = vdwg.mxu0
  %6350 = vmatpush.bf16.msra.mxu0 %v4600
  %6351 = vmatpush.bf16.msra.mxu0 %v4536
  %6352 = vmatpush.bf16.msra.mxu0 %v4472
  %6353 = vmatpush.bf16.msra.mxu0 %v4408
  %6354 = vmatpush.bf16.msra.mxu0 %v4344
  %6355 = vmatpush.bf16.msra.mxu0 %v4280
  %6356 = vmatpush.bf16.msra.mxu0 %v4216
  %6357 = vmatpush.bf16.msra.mxu0 %v4152
  %6358 = vmatmul.bf16.gmra.mxu0 %v1070
  %v6359 = vpop.f32.mrf.mxu0
  %v6360 = vadd.f32 %v1065, %v6359
  %v6361 = vpop.f32.mrf.mxu0
  %6362 = vdwg.mxu0
  %6363 = vmatpush.bf16.msra.mxu0 %v5112
  %6364 = vmatpush.bf16.msra.mxu0 %v5048
  %6365 = vmatpush.bf16.msra.mxu0 %v4984
  %6366 = vmatpush.bf16.msra.mxu0 %v4920
  %6367 = vmatpush.bf16.msra.mxu0 %v4856
  %6368 = vmatpush.bf16.msra.mxu0 %v4792
  %6369 = vmatpush.bf16.msra.mxu0 %v4728
  %6370 = vmatpush.bf16.msra.mxu0 %v4664
  %6371 = vmatmul.bf16.gmra.mxu0 %v1071
  %v6372 = vpop.f32.mrf.mxu0
  %v6373 = vadd.f32 %v6360, %v6372
  %v6374 = vpop.f32.mrf.mxu0
  %6375 = vdwg.mxu0
  %6376 = vmatpush.bf16.msra.mxu0 %v4601
  %6377 = vmatpush.bf16.msra.mxu0 %v4537
  %6378 = vmatpush.bf16.msra.mxu0 %v4473
  %6379 = vmatpush.bf16.msra.mxu0 %v4409
  %6380 = vmatpush.bf16.msra.mxu0 %v4345
  %6381 = vmatpush.bf16.msra.mxu0 %v4281
  %6382 = vmatpush.bf16.msra.mxu0 %v4217
  %6383 = vmatpush.bf16.msra.mxu0 %v4153
  %6384 = vmatmul.bf16.gmra.mxu0 %v1070
  %v6385 = vpop.f32.mrf.mxu0
  %v6386 = vadd.f32 %v1065, %v6385
  %v6387 = vpop.f32.mrf.mxu0
  %6388 = vdwg.mxu0
  %6389 = vmatpush.bf16.msra.mxu0 %v5113
  %6390 = vmatpush.bf16.msra.mxu0 %v5049
  %6391 = vmatpush.bf16.msra.mxu0 %v4985
  %6392 = vmatpush.bf16.msra.mxu0 %v4921
  %6393 = vmatpush.bf16.msra.mxu0 %v4857
  %6394 = vmatpush.bf16.msra.mxu0 %v4793
  %6395 = vmatpush.bf16.msra.mxu0 %v4729
  %6396 = vmatpush.bf16.msra.mxu0 %v4665
  %6397 = vmatmul.bf16.gmra.mxu0 %v1071
  %v6398 = vpop.f32.mrf.mxu0
  %v6399 = vadd.f32 %v6386, %v6398
  %v6400 = vpop.f32.mrf.mxu0
  %6401 = vdwg.mxu0
  %6402 = vmatpush.bf16.msra.mxu0 %v4602
  %6403 = vmatpush.bf16.msra.mxu0 %v4538
  %6404 = vmatpush.bf16.msra.mxu0 %v4474
  %6405 = vmatpush.bf16.msra.mxu0 %v4410
  %6406 = vmatpush.bf16.msra.mxu0 %v4346
  %6407 = vmatpush.bf16.msra.mxu0 %v4282
  %6408 = vmatpush.bf16.msra.mxu0 %v4218
  %6409 = vmatpush.bf16.msra.mxu0 %v4154
  %6410 = vmatmul.bf16.gmra.mxu0 %v1070
  %v6411 = vpop.f32.mrf.mxu0
  %v6412 = vadd.f32 %v1065, %v6411
  %v6413 = vpop.f32.mrf.mxu0
  %6414 = vdwg.mxu0
  %6415 = vmatpush.bf16.msra.mxu0 %v5114
  %6416 = vmatpush.bf16.msra.mxu0 %v5050
  %6417 = vmatpush.bf16.msra.mxu0 %v4986
  %6418 = vmatpush.bf16.msra.mxu0 %v4922
  %6419 = vmatpush.bf16.msra.mxu0 %v4858
  %6420 = vmatpush.bf16.msra.mxu0 %v4794
  %6421 = vmatpush.bf16.msra.mxu0 %v4730
  %6422 = vmatpush.bf16.msra.mxu0 %v4666
  %6423 = vmatmul.bf16.gmra.mxu0 %v1071
  %v6424 = vpop.f32.mrf.mxu0
  %v6425 = vadd.f32 %v6412, %v6424
  %v6426 = vpop.f32.mrf.mxu0
  %6427 = vdwg.mxu0
  %6428 = vmatpush.bf16.msra.mxu0 %v4603
  %6429 = vmatpush.bf16.msra.mxu0 %v4539
  %6430 = vmatpush.bf16.msra.mxu0 %v4475
  %6431 = vmatpush.bf16.msra.mxu0 %v4411
  %6432 = vmatpush.bf16.msra.mxu0 %v4347
  %6433 = vmatpush.bf16.msra.mxu0 %v4283
  %6434 = vmatpush.bf16.msra.mxu0 %v4219
  %6435 = vmatpush.bf16.msra.mxu0 %v4155
  %6436 = vmatmul.bf16.gmra.mxu0 %v1070
  %v6437 = vpop.f32.mrf.mxu0
  %v6438 = vadd.f32 %v1065, %v6437
  %v6439 = vpop.f32.mrf.mxu0
  %6440 = vdwg.mxu0
  %6441 = vmatpush.bf16.msra.mxu0 %v5115
  %6442 = vmatpush.bf16.msra.mxu0 %v5051
  %6443 = vmatpush.bf16.msra.mxu0 %v4987
  %6444 = vmatpush.bf16.msra.mxu0 %v4923
  %6445 = vmatpush.bf16.msra.mxu0 %v4859
  %6446 = vmatpush.bf16.msra.mxu0 %v4795
  %6447 = vmatpush.bf16.msra.mxu0 %v4731
  %6448 = vmatpush.bf16.msra.mxu0 %v4667
  %6449 = vmatmul.bf16.gmra.mxu0 %v1071
  %v6450 = vpop.f32.mrf.mxu0
  %v6451 = vadd.f32 %v6438, %v6450
  %v6452 = vpop.f32.mrf.mxu0
  %6453 = vdwg.mxu0
  %6454 = vmatpush.bf16.msra.mxu0 %v4604
  %6455 = vmatpush.bf16.msra.mxu0 %v4540
  %6456 = vmatpush.bf16.msra.mxu0 %v4476
  %6457 = vmatpush.bf16.msra.mxu0 %v4412
  %6458 = vmatpush.bf16.msra.mxu0 %v4348
  %6459 = vmatpush.bf16.msra.mxu0 %v4284
  %6460 = vmatpush.bf16.msra.mxu0 %v4220
  %6461 = vmatpush.bf16.msra.mxu0 %v4156
  %6462 = vmatmul.bf16.gmra.mxu0 %v1070
  %v6463 = vpop.f32.mrf.mxu0
  %v6464 = vadd.f32 %v1065, %v6463
  %v6465 = vpop.f32.mrf.mxu0
  %6466 = vdwg.mxu0
  %6467 = vmatpush.bf16.msra.mxu0 %v5116
  %6468 = vmatpush.bf16.msra.mxu0 %v5052
  %6469 = vmatpush.bf16.msra.mxu0 %v4988
  %6470 = vmatpush.bf16.msra.mxu0 %v4924
  %6471 = vmatpush.bf16.msra.mxu0 %v4860
  %6472 = vmatpush.bf16.msra.mxu0 %v4796
  %6473 = vmatpush.bf16.msra.mxu0 %v4732
  %6474 = vmatpush.bf16.msra.mxu0 %v4668
  %6475 = vmatmul.bf16.gmra.mxu0 %v1071
  %v6476 = vpop.f32.mrf.mxu0
  %v6477 = vadd.f32 %v6464, %v6476
  %v6478 = vpop.f32.mrf.mxu0
  %6479 = vdwg.mxu0
  %6480 = vmatpush.bf16.msra.mxu0 %v4605
  %6481 = vmatpush.bf16.msra.mxu0 %v4541
  %6482 = vmatpush.bf16.msra.mxu0 %v4477
  %6483 = vmatpush.bf16.msra.mxu0 %v4413
  %6484 = vmatpush.bf16.msra.mxu0 %v4349
  %6485 = vmatpush.bf16.msra.mxu0 %v4285
  %6486 = vmatpush.bf16.msra.mxu0 %v4221
  %6487 = vmatpush.bf16.msra.mxu0 %v4157
  %6488 = vmatmul.bf16.gmra.mxu0 %v1070
  %v6489 = vpop.f32.mrf.mxu0
  %v6490 = vadd.f32 %v1065, %v6489
  %v6491 = vpop.f32.mrf.mxu0
  %6492 = vdwg.mxu0
  %6493 = vmatpush.bf16.msra.mxu0 %v5117
  %6494 = vmatpush.bf16.msra.mxu0 %v5053
  %6495 = vmatpush.bf16.msra.mxu0 %v4989
  %6496 = vmatpush.bf16.msra.mxu0 %v4925
  %6497 = vmatpush.bf16.msra.mxu0 %v4861
  %6498 = vmatpush.bf16.msra.mxu0 %v4797
  %6499 = vmatpush.bf16.msra.mxu0 %v4733
  %6500 = vmatpush.bf16.msra.mxu0 %v4669
  %6501 = vmatmul.bf16.gmra.mxu0 %v1071
  %v6502 = vpop.f32.mrf.mxu0
  %v6503 = vadd.f32 %v6490, %v6502
  %v6504 = vpop.f32.mrf.mxu0
  %6505 = vdwg.mxu0
  %6506 = vmatpush.bf16.msra.mxu0 %v4606
  %6507 = vmatpush.bf16.msra.mxu0 %v4542
  %6508 = vmatpush.bf16.msra.mxu0 %v4478
  %6509 = vmatpush.bf16.msra.mxu0 %v4414
  %6510 = vmatpush.bf16.msra.mxu0 %v4350
  %6511 = vmatpush.bf16.msra.mxu0 %v4286
  %6512 = vmatpush.bf16.msra.mxu0 %v4222
  %6513 = vmatpush.bf16.msra.mxu0 %v4158
  %6514 = vmatmul.bf16.gmra.mxu0 %v1070
  %v6515 = vpop.f32.mrf.mxu0
  %v6516 = vadd.f32 %v1065, %v6515
  %v6517 = vpop.f32.mrf.mxu0
  %6518 = vdwg.mxu0
  %6519 = vmatpush.bf16.msra.mxu0 %v5118
  %6520 = vmatpush.bf16.msra.mxu0 %v5054
  %6521 = vmatpush.bf16.msra.mxu0 %v4990
  %6522 = vmatpush.bf16.msra.mxu0 %v4926
  %6523 = vmatpush.bf16.msra.mxu0 %v4862
  %6524 = vmatpush.bf16.msra.mxu0 %v4798
  %6525 = vmatpush.bf16.msra.mxu0 %v4734
  %6526 = vmatpush.bf16.msra.mxu0 %v4670
  %6527 = vmatmul.bf16.gmra.mxu0 %v1071
  %v6528 = vpop.f32.mrf.mxu0
  %v6529 = vadd.f32 %v6516, %v6528
  %v6530 = vpop.f32.mrf.mxu0
  %6531 = vdwg.mxu0
  %6532 = vmatpush.bf16.msra.mxu0 %v4607
  %6533 = vmatpush.bf16.msra.mxu0 %v4543
  %6534 = vmatpush.bf16.msra.mxu0 %v4479
  %6535 = vmatpush.bf16.msra.mxu0 %v4415
  %6536 = vmatpush.bf16.msra.mxu0 %v4351
  %6537 = vmatpush.bf16.msra.mxu0 %v4287
  %6538 = vmatpush.bf16.msra.mxu0 %v4223
  %6539 = vmatpush.bf16.msra.mxu0 %v4159
  %6540 = vmatmul.bf16.gmra.mxu0 %v1070
  %v6541 = vpop.f32.mrf.mxu0
  %v6542 = vadd.f32 %v1065, %v6541
  %v6543 = vpop.f32.mrf.mxu0
  %6544 = vdwg.mxu0
  %6545 = vmatpush.bf16.msra.mxu0 %v5119
  %6546 = vmatpush.bf16.msra.mxu0 %v5055
  %6547 = vmatpush.bf16.msra.mxu0 %v4991
  %6548 = vmatpush.bf16.msra.mxu0 %v4927
  %6549 = vmatpush.bf16.msra.mxu0 %v4863
  %6550 = vmatpush.bf16.msra.mxu0 %v4799
  %6551 = vmatpush.bf16.msra.mxu0 %v4735
  %6552 = vmatpush.bf16.msra.mxu0 %v4671
  %6553 = vmatmul.bf16.gmra.mxu0 %v1071
  %v6554 = vpop.f32.mrf.mxu0
  %v6555 = vadd.f32 %v6542, %v6554
  %v6556 = vpop.f32.mrf.mxu0
  %6557 = vdwg.mxu0
  %6558 = vmatpush.bf16.msra.mxu0 %v4608
  %6559 = vmatpush.bf16.msra.mxu0 %v4544
  %6560 = vmatpush.bf16.msra.mxu0 %v4480
  %6561 = vmatpush.bf16.msra.mxu0 %v4416
  %6562 = vmatpush.bf16.msra.mxu0 %v4352
  %6563 = vmatpush.bf16.msra.mxu0 %v4288
  %6564 = vmatpush.bf16.msra.mxu0 %v4224
  %6565 = vmatpush.bf16.msra.mxu0 %v4160
  %6566 = vmatmul.bf16.gmra.mxu0 %v1070
  %v6567 = vpop.f32.mrf.mxu0
  %v6568 = vadd.f32 %v1065, %v6567
  %v6569 = vpop.f32.mrf.mxu0
  %6570 = vdwg.mxu0
  %6571 = vmatpush.bf16.msra.mxu0 %v5120
  %6572 = vmatpush.bf16.msra.mxu0 %v5056
  %6573 = vmatpush.bf16.msra.mxu0 %v4992
  %6574 = vmatpush.bf16.msra.mxu0 %v4928
  %6575 = vmatpush.bf16.msra.mxu0 %v4864
  %6576 = vmatpush.bf16.msra.mxu0 %v4800
  %6577 = vmatpush.bf16.msra.mxu0 %v4736
  %6578 = vmatpush.bf16.msra.mxu0 %v4672
  %6579 = vmatmul.bf16.gmra.mxu0 %v1071
  %v6580 = vpop.f32.mrf.mxu0
  %v6581 = vadd.f32 %v6568, %v6580
  %v6582 = vpop.f32.mrf.mxu0
  %6583 = vdwg.mxu0
  %6584 = vmatpush.bf16.msra.mxu0 %v4609
  %6585 = vmatpush.bf16.msra.mxu0 %v4545
  %6586 = vmatpush.bf16.msra.mxu0 %v4481
  %6587 = vmatpush.bf16.msra.mxu0 %v4417
  %6588 = vmatpush.bf16.msra.mxu0 %v4353
  %6589 = vmatpush.bf16.msra.mxu0 %v4289
  %6590 = vmatpush.bf16.msra.mxu0 %v4225
  %6591 = vmatpush.bf16.msra.mxu0 %v4161
  %6592 = vmatmul.bf16.gmra.mxu0 %v1070
  %v6593 = vpop.f32.mrf.mxu0
  %v6594 = vadd.f32 %v1065, %v6593
  %v6595 = vpop.f32.mrf.mxu0
  %6596 = vdwg.mxu0
  %6597 = vmatpush.bf16.msra.mxu0 %v5121
  %6598 = vmatpush.bf16.msra.mxu0 %v5057
  %6599 = vmatpush.bf16.msra.mxu0 %v4993
  %6600 = vmatpush.bf16.msra.mxu0 %v4929
  %6601 = vmatpush.bf16.msra.mxu0 %v4865
  %6602 = vmatpush.bf16.msra.mxu0 %v4801
  %6603 = vmatpush.bf16.msra.mxu0 %v4737
  %6604 = vmatpush.bf16.msra.mxu0 %v4673
  %6605 = vmatmul.bf16.gmra.mxu0 %v1071
  %v6606 = vpop.f32.mrf.mxu0
  %v6607 = vadd.f32 %v6594, %v6606
  %v6608 = vpop.f32.mrf.mxu0
  %6609 = vdwg.mxu0
  %6610 = vmatpush.bf16.msra.mxu0 %v4610
  %6611 = vmatpush.bf16.msra.mxu0 %v4546
  %6612 = vmatpush.bf16.msra.mxu0 %v4482
  %6613 = vmatpush.bf16.msra.mxu0 %v4418
  %6614 = vmatpush.bf16.msra.mxu0 %v4354
  %6615 = vmatpush.bf16.msra.mxu0 %v4290
  %6616 = vmatpush.bf16.msra.mxu0 %v4226
  %6617 = vmatpush.bf16.msra.mxu0 %v4162
  %6618 = vmatmul.bf16.gmra.mxu0 %v1070
  %v6619 = vpop.f32.mrf.mxu0
  %v6620 = vadd.f32 %v1065, %v6619
  %v6621 = vpop.f32.mrf.mxu0
  %6622 = vdwg.mxu0
  %6623 = vmatpush.bf16.msra.mxu0 %v5122
  %6624 = vmatpush.bf16.msra.mxu0 %v5058
  %6625 = vmatpush.bf16.msra.mxu0 %v4994
  %6626 = vmatpush.bf16.msra.mxu0 %v4930
  %6627 = vmatpush.bf16.msra.mxu0 %v4866
  %6628 = vmatpush.bf16.msra.mxu0 %v4802
  %6629 = vmatpush.bf16.msra.mxu0 %v4738
  %6630 = vmatpush.bf16.msra.mxu0 %v4674
  %6631 = vmatmul.bf16.gmra.mxu0 %v1071
  %v6632 = vpop.f32.mrf.mxu0
  %v6633 = vadd.f32 %v6620, %v6632
  %v6634 = vpop.f32.mrf.mxu0
  %6635 = vdwg.mxu0
  %6636 = vmatpush.bf16.msra.mxu0 %v4611
  %6637 = vmatpush.bf16.msra.mxu0 %v4547
  %6638 = vmatpush.bf16.msra.mxu0 %v4483
  %6639 = vmatpush.bf16.msra.mxu0 %v4419
  %6640 = vmatpush.bf16.msra.mxu0 %v4355
  %6641 = vmatpush.bf16.msra.mxu0 %v4291
  %6642 = vmatpush.bf16.msra.mxu0 %v4227
  %6643 = vmatpush.bf16.msra.mxu0 %v4163
  %6644 = vmatmul.bf16.gmra.mxu0 %v1070
  %v6645 = vpop.f32.mrf.mxu0
  %v6646 = vadd.f32 %v1065, %v6645
  %v6647 = vpop.f32.mrf.mxu0
  %6648 = vdwg.mxu0
  %6649 = vmatpush.bf16.msra.mxu0 %v5123
  %6650 = vmatpush.bf16.msra.mxu0 %v5059
  %6651 = vmatpush.bf16.msra.mxu0 %v4995
  %6652 = vmatpush.bf16.msra.mxu0 %v4931
  %6653 = vmatpush.bf16.msra.mxu0 %v4867
  %6654 = vmatpush.bf16.msra.mxu0 %v4803
  %6655 = vmatpush.bf16.msra.mxu0 %v4739
  %6656 = vmatpush.bf16.msra.mxu0 %v4675
  %6657 = vmatmul.bf16.gmra.mxu0 %v1071
  %v6658 = vpop.f32.mrf.mxu0
  %v6659 = vadd.f32 %v6646, %v6658
  %v6660 = vpop.f32.mrf.mxu0
  %6661 = vdwg.mxu0
  %6662 = vmatpush.bf16.msra.mxu0 %v4612
  %6663 = vmatpush.bf16.msra.mxu0 %v4548
  %6664 = vmatpush.bf16.msra.mxu0 %v4484
  %6665 = vmatpush.bf16.msra.mxu0 %v4420
  %6666 = vmatpush.bf16.msra.mxu0 %v4356
  %6667 = vmatpush.bf16.msra.mxu0 %v4292
  %6668 = vmatpush.bf16.msra.mxu0 %v4228
  %6669 = vmatpush.bf16.msra.mxu0 %v4164
  %6670 = vmatmul.bf16.gmra.mxu0 %v1070
  %v6671 = vpop.f32.mrf.mxu0
  %v6672 = vadd.f32 %v1065, %v6671
  %v6673 = vpop.f32.mrf.mxu0
  %6674 = vdwg.mxu0
  %6675 = vmatpush.bf16.msra.mxu0 %v5124
  %6676 = vmatpush.bf16.msra.mxu0 %v5060
  %6677 = vmatpush.bf16.msra.mxu0 %v4996
  %6678 = vmatpush.bf16.msra.mxu0 %v4932
  %6679 = vmatpush.bf16.msra.mxu0 %v4868
  %6680 = vmatpush.bf16.msra.mxu0 %v4804
  %6681 = vmatpush.bf16.msra.mxu0 %v4740
  %6682 = vmatpush.bf16.msra.mxu0 %v4676
  %6683 = vmatmul.bf16.gmra.mxu0 %v1071
  %v6684 = vpop.f32.mrf.mxu0
  %v6685 = vadd.f32 %v6672, %v6684
  %v6686 = vpop.f32.mrf.mxu0
  %6687 = vdwg.mxu0
  %6688 = vmatpush.bf16.msra.mxu0 %v4613
  %6689 = vmatpush.bf16.msra.mxu0 %v4549
  %6690 = vmatpush.bf16.msra.mxu0 %v4485
  %6691 = vmatpush.bf16.msra.mxu0 %v4421
  %6692 = vmatpush.bf16.msra.mxu0 %v4357
  %6693 = vmatpush.bf16.msra.mxu0 %v4293
  %6694 = vmatpush.bf16.msra.mxu0 %v4229
  %6695 = vmatpush.bf16.msra.mxu0 %v4165
  %6696 = vmatmul.bf16.gmra.mxu0 %v1070
  %v6697 = vpop.f32.mrf.mxu0
  %v6698 = vadd.f32 %v1065, %v6697
  %v6699 = vpop.f32.mrf.mxu0
  %6700 = vdwg.mxu0
  %6701 = vmatpush.bf16.msra.mxu0 %v5125
  %6702 = vmatpush.bf16.msra.mxu0 %v5061
  %6703 = vmatpush.bf16.msra.mxu0 %v4997
  %6704 = vmatpush.bf16.msra.mxu0 %v4933
  %6705 = vmatpush.bf16.msra.mxu0 %v4869
  %6706 = vmatpush.bf16.msra.mxu0 %v4805
  %6707 = vmatpush.bf16.msra.mxu0 %v4741
  %6708 = vmatpush.bf16.msra.mxu0 %v4677
  %6709 = vmatmul.bf16.gmra.mxu0 %v1071
  %v6710 = vpop.f32.mrf.mxu0
  %v6711 = vadd.f32 %v6698, %v6710
  %v6712 = vpop.f32.mrf.mxu0
  %6713 = vdwg.mxu0
  %6714 = vmatpush.bf16.msra.mxu0 %v4614
  %6715 = vmatpush.bf16.msra.mxu0 %v4550
  %6716 = vmatpush.bf16.msra.mxu0 %v4486
  %6717 = vmatpush.bf16.msra.mxu0 %v4422
  %6718 = vmatpush.bf16.msra.mxu0 %v4358
  %6719 = vmatpush.bf16.msra.mxu0 %v4294
  %6720 = vmatpush.bf16.msra.mxu0 %v4230
  %6721 = vmatpush.bf16.msra.mxu0 %v4166
  %6722 = vmatmul.bf16.gmra.mxu0 %v1070
  %v6723 = vpop.f32.mrf.mxu0
  %v6724 = vadd.f32 %v1065, %v6723
  %v6725 = vpop.f32.mrf.mxu0
  %6726 = vdwg.mxu0
  %6727 = vmatpush.bf16.msra.mxu0 %v5126
  %6728 = vmatpush.bf16.msra.mxu0 %v5062
  %6729 = vmatpush.bf16.msra.mxu0 %v4998
  %6730 = vmatpush.bf16.msra.mxu0 %v4934
  %6731 = vmatpush.bf16.msra.mxu0 %v4870
  %6732 = vmatpush.bf16.msra.mxu0 %v4806
  %6733 = vmatpush.bf16.msra.mxu0 %v4742
  %6734 = vmatpush.bf16.msra.mxu0 %v4678
  %6735 = vmatmul.bf16.gmra.mxu0 %v1071
  %v6736 = vpop.f32.mrf.mxu0
  %v6737 = vadd.f32 %v6724, %v6736
  %v6738 = vpop.f32.mrf.mxu0
  %6739 = vdwg.mxu0
  %6740 = vmatpush.bf16.msra.mxu0 %v4615
  %6741 = vmatpush.bf16.msra.mxu0 %v4551
  %6742 = vmatpush.bf16.msra.mxu0 %v4487
  %6743 = vmatpush.bf16.msra.mxu0 %v4423
  %6744 = vmatpush.bf16.msra.mxu0 %v4359
  %6745 = vmatpush.bf16.msra.mxu0 %v4295
  %6746 = vmatpush.bf16.msra.mxu0 %v4231
  %6747 = vmatpush.bf16.msra.mxu0 %v4167
  %6748 = vmatmul.bf16.gmra.mxu0 %v1070
  %v6749 = vpop.f32.mrf.mxu0
  %v6750 = vadd.f32 %v1065, %v6749
  %v6751 = vpop.f32.mrf.mxu0
  %6752 = vdwg.mxu0
  %6753 = vmatpush.bf16.msra.mxu0 %v5127
  %6754 = vmatpush.bf16.msra.mxu0 %v5063
  %6755 = vmatpush.bf16.msra.mxu0 %v4999
  %6756 = vmatpush.bf16.msra.mxu0 %v4935
  %6757 = vmatpush.bf16.msra.mxu0 %v4871
  %6758 = vmatpush.bf16.msra.mxu0 %v4807
  %6759 = vmatpush.bf16.msra.mxu0 %v4743
  %6760 = vmatpush.bf16.msra.mxu0 %v4679
  %6761 = vmatmul.bf16.gmra.mxu0 %v1071
  %v6762 = vpop.f32.mrf.mxu0
  %v6763 = vadd.f32 %v6750, %v6762
  %v6764 = vpop.f32.mrf.mxu0
  %6765 = vdwg.mxu0
  %6766 = vmatpush.bf16.msra.mxu0 %v4616
  %6767 = vmatpush.bf16.msra.mxu0 %v4552
  %6768 = vmatpush.bf16.msra.mxu0 %v4488
  %6769 = vmatpush.bf16.msra.mxu0 %v4424
  %6770 = vmatpush.bf16.msra.mxu0 %v4360
  %6771 = vmatpush.bf16.msra.mxu0 %v4296
  %6772 = vmatpush.bf16.msra.mxu0 %v4232
  %6773 = vmatpush.bf16.msra.mxu0 %v4168
  %6774 = vmatmul.bf16.gmra.mxu0 %v1070
  %v6775 = vpop.f32.mrf.mxu0
  %v6776 = vadd.f32 %v1065, %v6775
  %v6777 = vpop.f32.mrf.mxu0
  %6778 = vdwg.mxu0
  %6779 = vmatpush.bf16.msra.mxu0 %v5128
  %6780 = vmatpush.bf16.msra.mxu0 %v5064
  %6781 = vmatpush.bf16.msra.mxu0 %v5000
  %6782 = vmatpush.bf16.msra.mxu0 %v4936
  %6783 = vmatpush.bf16.msra.mxu0 %v4872
  %6784 = vmatpush.bf16.msra.mxu0 %v4808
  %6785 = vmatpush.bf16.msra.mxu0 %v4744
  %6786 = vmatpush.bf16.msra.mxu0 %v4680
  %6787 = vmatmul.bf16.gmra.mxu0 %v1071
  %v6788 = vpop.f32.mrf.mxu0
  %v6789 = vadd.f32 %v6776, %v6788
  %v6790 = vpop.f32.mrf.mxu0
  %6791 = vdwg.mxu0
  %6792 = vmatpush.bf16.msra.mxu0 %v4617
  %6793 = vmatpush.bf16.msra.mxu0 %v4553
  %6794 = vmatpush.bf16.msra.mxu0 %v4489
  %6795 = vmatpush.bf16.msra.mxu0 %v4425
  %6796 = vmatpush.bf16.msra.mxu0 %v4361
  %6797 = vmatpush.bf16.msra.mxu0 %v4297
  %6798 = vmatpush.bf16.msra.mxu0 %v4233
  %6799 = vmatpush.bf16.msra.mxu0 %v4169
  %6800 = vmatmul.bf16.gmra.mxu0 %v1070
  %v6801 = vpop.f32.mrf.mxu0
  %v6802 = vadd.f32 %v1065, %v6801
  %v6803 = vpop.f32.mrf.mxu0
  %6804 = vdwg.mxu0
  %6805 = vmatpush.bf16.msra.mxu0 %v5129
  %6806 = vmatpush.bf16.msra.mxu0 %v5065
  %6807 = vmatpush.bf16.msra.mxu0 %v5001
  %6808 = vmatpush.bf16.msra.mxu0 %v4937
  %6809 = vmatpush.bf16.msra.mxu0 %v4873
  %6810 = vmatpush.bf16.msra.mxu0 %v4809
  %6811 = vmatpush.bf16.msra.mxu0 %v4745
  %6812 = vmatpush.bf16.msra.mxu0 %v4681
  %6813 = vmatmul.bf16.gmra.mxu0 %v1071
  %v6814 = vpop.f32.mrf.mxu0
  %v6815 = vadd.f32 %v6802, %v6814
  %v6816 = vpop.f32.mrf.mxu0
  %6817 = vdwg.mxu0
  %6818 = vmatpush.bf16.msra.mxu0 %v4618
  %6819 = vmatpush.bf16.msra.mxu0 %v4554
  %6820 = vmatpush.bf16.msra.mxu0 %v4490
  %6821 = vmatpush.bf16.msra.mxu0 %v4426
  %6822 = vmatpush.bf16.msra.mxu0 %v4362
  %6823 = vmatpush.bf16.msra.mxu0 %v4298
  %6824 = vmatpush.bf16.msra.mxu0 %v4234
  %6825 = vmatpush.bf16.msra.mxu0 %v4170
  %6826 = vmatmul.bf16.gmra.mxu0 %v1070
  %v6827 = vpop.f32.mrf.mxu0
  %v6828 = vadd.f32 %v1065, %v6827
  %v6829 = vpop.f32.mrf.mxu0
  %6830 = vdwg.mxu0
  %6831 = vmatpush.bf16.msra.mxu0 %v5130
  %6832 = vmatpush.bf16.msra.mxu0 %v5066
  %6833 = vmatpush.bf16.msra.mxu0 %v5002
  %6834 = vmatpush.bf16.msra.mxu0 %v4938
  %6835 = vmatpush.bf16.msra.mxu0 %v4874
  %6836 = vmatpush.bf16.msra.mxu0 %v4810
  %6837 = vmatpush.bf16.msra.mxu0 %v4746
  %6838 = vmatpush.bf16.msra.mxu0 %v4682
  %6839 = vmatmul.bf16.gmra.mxu0 %v1071
  %v6840 = vpop.f32.mrf.mxu0
  %v6841 = vadd.f32 %v6828, %v6840
  %v6842 = vpop.f32.mrf.mxu0
  %6843 = vdwg.mxu0
  %6844 = vmatpush.bf16.msra.mxu0 %v4619
  %6845 = vmatpush.bf16.msra.mxu0 %v4555
  %6846 = vmatpush.bf16.msra.mxu0 %v4491
  %6847 = vmatpush.bf16.msra.mxu0 %v4427
  %6848 = vmatpush.bf16.msra.mxu0 %v4363
  %6849 = vmatpush.bf16.msra.mxu0 %v4299
  %6850 = vmatpush.bf16.msra.mxu0 %v4235
  %6851 = vmatpush.bf16.msra.mxu0 %v4171
  %6852 = vmatmul.bf16.gmra.mxu0 %v1070
  %v6853 = vpop.f32.mrf.mxu0
  %v6854 = vadd.f32 %v1065, %v6853
  %v6855 = vpop.f32.mrf.mxu0
  %6856 = vdwg.mxu0
  %6857 = vmatpush.bf16.msra.mxu0 %v5131
  %6858 = vmatpush.bf16.msra.mxu0 %v5067
  %6859 = vmatpush.bf16.msra.mxu0 %v5003
  %6860 = vmatpush.bf16.msra.mxu0 %v4939
  %6861 = vmatpush.bf16.msra.mxu0 %v4875
  %6862 = vmatpush.bf16.msra.mxu0 %v4811
  %6863 = vmatpush.bf16.msra.mxu0 %v4747
  %6864 = vmatpush.bf16.msra.mxu0 %v4683
  %6865 = vmatmul.bf16.gmra.mxu0 %v1071
  %v6866 = vpop.f32.mrf.mxu0
  %v6867 = vadd.f32 %v6854, %v6866
  %v6868 = vpop.f32.mrf.mxu0
  %6869 = vdwg.mxu0
  %6870 = vmatpush.bf16.msra.mxu0 %v4620
  %6871 = vmatpush.bf16.msra.mxu0 %v4556
  %6872 = vmatpush.bf16.msra.mxu0 %v4492
  %6873 = vmatpush.bf16.msra.mxu0 %v4428
  %6874 = vmatpush.bf16.msra.mxu0 %v4364
  %6875 = vmatpush.bf16.msra.mxu0 %v4300
  %6876 = vmatpush.bf16.msra.mxu0 %v4236
  %6877 = vmatpush.bf16.msra.mxu0 %v4172
  %6878 = vmatmul.bf16.gmra.mxu0 %v1070
  %v6879 = vpop.f32.mrf.mxu0
  %v6880 = vadd.f32 %v1065, %v6879
  %v6881 = vpop.f32.mrf.mxu0
  %6882 = vdwg.mxu0
  %6883 = vmatpush.bf16.msra.mxu0 %v5132
  %6884 = vmatpush.bf16.msra.mxu0 %v5068
  %6885 = vmatpush.bf16.msra.mxu0 %v5004
  %6886 = vmatpush.bf16.msra.mxu0 %v4940
  %6887 = vmatpush.bf16.msra.mxu0 %v4876
  %6888 = vmatpush.bf16.msra.mxu0 %v4812
  %6889 = vmatpush.bf16.msra.mxu0 %v4748
  %6890 = vmatpush.bf16.msra.mxu0 %v4684
  %6891 = vmatmul.bf16.gmra.mxu0 %v1071
  %v6892 = vpop.f32.mrf.mxu0
  %v6893 = vadd.f32 %v6880, %v6892
  %v6894 = vpop.f32.mrf.mxu0
  %6895 = vdwg.mxu0
  %6896 = vmatpush.bf16.msra.mxu0 %v4621
  %6897 = vmatpush.bf16.msra.mxu0 %v4557
  %6898 = vmatpush.bf16.msra.mxu0 %v4493
  %6899 = vmatpush.bf16.msra.mxu0 %v4429
  %6900 = vmatpush.bf16.msra.mxu0 %v4365
  %6901 = vmatpush.bf16.msra.mxu0 %v4301
  %6902 = vmatpush.bf16.msra.mxu0 %v4237
  %6903 = vmatpush.bf16.msra.mxu0 %v4173
  %6904 = vmatmul.bf16.gmra.mxu0 %v1070
  %v6905 = vpop.f32.mrf.mxu0
  %v6906 = vadd.f32 %v1065, %v6905
  %v6907 = vpop.f32.mrf.mxu0
  %6908 = vdwg.mxu0
  %6909 = vmatpush.bf16.msra.mxu0 %v5133
  %6910 = vmatpush.bf16.msra.mxu0 %v5069
  %6911 = vmatpush.bf16.msra.mxu0 %v5005
  %6912 = vmatpush.bf16.msra.mxu0 %v4941
  %6913 = vmatpush.bf16.msra.mxu0 %v4877
  %6914 = vmatpush.bf16.msra.mxu0 %v4813
  %6915 = vmatpush.bf16.msra.mxu0 %v4749
  %6916 = vmatpush.bf16.msra.mxu0 %v4685
  %6917 = vmatmul.bf16.gmra.mxu0 %v1071
  %v6918 = vpop.f32.mrf.mxu0
  %v6919 = vadd.f32 %v6906, %v6918
  %v6920 = vpop.f32.mrf.mxu0
  %6921 = vdwg.mxu0
  %6922 = vmatpush.bf16.msra.mxu0 %v4622
  %6923 = vmatpush.bf16.msra.mxu0 %v4558
  %6924 = vmatpush.bf16.msra.mxu0 %v4494
  %6925 = vmatpush.bf16.msra.mxu0 %v4430
  %6926 = vmatpush.bf16.msra.mxu0 %v4366
  %6927 = vmatpush.bf16.msra.mxu0 %v4302
  %6928 = vmatpush.bf16.msra.mxu0 %v4238
  %6929 = vmatpush.bf16.msra.mxu0 %v4174
  %6930 = vmatmul.bf16.gmra.mxu0 %v1070
  %v6931 = vpop.f32.mrf.mxu0
  %v6932 = vadd.f32 %v1065, %v6931
  %v6933 = vpop.f32.mrf.mxu0
  %6934 = vdwg.mxu0
  %6935 = vmatpush.bf16.msra.mxu0 %v5134
  %6936 = vmatpush.bf16.msra.mxu0 %v5070
  %6937 = vmatpush.bf16.msra.mxu0 %v5006
  %6938 = vmatpush.bf16.msra.mxu0 %v4942
  %6939 = vmatpush.bf16.msra.mxu0 %v4878
  %6940 = vmatpush.bf16.msra.mxu0 %v4814
  %6941 = vmatpush.bf16.msra.mxu0 %v4750
  %6942 = vmatpush.bf16.msra.mxu0 %v4686
  %6943 = vmatmul.bf16.gmra.mxu0 %v1071
  %v6944 = vpop.f32.mrf.mxu0
  %v6945 = vadd.f32 %v6932, %v6944
  %v6946 = vpop.f32.mrf.mxu0
  %6947 = vdwg.mxu0
  %6948 = vmatpush.bf16.msra.mxu0 %v4623
  %6949 = vmatpush.bf16.msra.mxu0 %v4559
  %6950 = vmatpush.bf16.msra.mxu0 %v4495
  %6951 = vmatpush.bf16.msra.mxu0 %v4431
  %6952 = vmatpush.bf16.msra.mxu0 %v4367
  %6953 = vmatpush.bf16.msra.mxu0 %v4303
  %6954 = vmatpush.bf16.msra.mxu0 %v4239
  %6955 = vmatpush.bf16.msra.mxu0 %v4175
  %6956 = vmatmul.bf16.gmra.mxu0 %v1070
  %v6957 = vpop.f32.mrf.mxu0
  %v6958 = vadd.f32 %v1065, %v6957
  %v6959 = vpop.f32.mrf.mxu0
  %6960 = vdwg.mxu0
  %6961 = vmatpush.bf16.msra.mxu0 %v5135
  %6962 = vmatpush.bf16.msra.mxu0 %v5071
  %6963 = vmatpush.bf16.msra.mxu0 %v5007
  %6964 = vmatpush.bf16.msra.mxu0 %v4943
  %6965 = vmatpush.bf16.msra.mxu0 %v4879
  %6966 = vmatpush.bf16.msra.mxu0 %v4815
  %6967 = vmatpush.bf16.msra.mxu0 %v4751
  %6968 = vmatpush.bf16.msra.mxu0 %v4687
  %6969 = vmatmul.bf16.gmra.mxu0 %v1071
  %v6970 = vpop.f32.mrf.mxu0
  %v6971 = vadd.f32 %v6958, %v6970
  %v6972 = vpop.f32.mrf.mxu0
  %6973 = vdwg.mxu0
  %6974 = vmatpush.bf16.msra.mxu0 %v4624
  %6975 = vmatpush.bf16.msra.mxu0 %v4560
  %6976 = vmatpush.bf16.msra.mxu0 %v4496
  %6977 = vmatpush.bf16.msra.mxu0 %v4432
  %6978 = vmatpush.bf16.msra.mxu0 %v4368
  %6979 = vmatpush.bf16.msra.mxu0 %v4304
  %6980 = vmatpush.bf16.msra.mxu0 %v4240
  %6981 = vmatpush.bf16.msra.mxu0 %v4176
  %6982 = vmatmul.bf16.gmra.mxu0 %v1070
  %v6983 = vpop.f32.mrf.mxu0
  %v6984 = vadd.f32 %v1065, %v6983
  %v6985 = vpop.f32.mrf.mxu0
  %6986 = vdwg.mxu0
  %6987 = vmatpush.bf16.msra.mxu0 %v5136
  %6988 = vmatpush.bf16.msra.mxu0 %v5072
  %6989 = vmatpush.bf16.msra.mxu0 %v5008
  %6990 = vmatpush.bf16.msra.mxu0 %v4944
  %6991 = vmatpush.bf16.msra.mxu0 %v4880
  %6992 = vmatpush.bf16.msra.mxu0 %v4816
  %6993 = vmatpush.bf16.msra.mxu0 %v4752
  %6994 = vmatpush.bf16.msra.mxu0 %v4688
  %6995 = vmatmul.bf16.gmra.mxu0 %v1071
  %v6996 = vpop.f32.mrf.mxu0
  %v6997 = vadd.f32 %v6984, %v6996
  %v6998 = vpop.f32.mrf.mxu0
  %6999 = vdwg.mxu0
  %7000 = vmatpush.bf16.msra.mxu0 %v4625
  %7001 = vmatpush.bf16.msra.mxu0 %v4561
  %7002 = vmatpush.bf16.msra.mxu0 %v4497
  %7003 = vmatpush.bf16.msra.mxu0 %v4433
  %7004 = vmatpush.bf16.msra.mxu0 %v4369
  %7005 = vmatpush.bf16.msra.mxu0 %v4305
  %7006 = vmatpush.bf16.msra.mxu0 %v4241
  %7007 = vmatpush.bf16.msra.mxu0 %v4177
  %7008 = vmatmul.bf16.gmra.mxu0 %v1070
  %v7009 = vpop.f32.mrf.mxu0
  %v7010 = vadd.f32 %v1065, %v7009
  %v7011 = vpop.f32.mrf.mxu0
  %7012 = vdwg.mxu0
  %7013 = vmatpush.bf16.msra.mxu0 %v5137
  %7014 = vmatpush.bf16.msra.mxu0 %v5073
  %7015 = vmatpush.bf16.msra.mxu0 %v5009
  %7016 = vmatpush.bf16.msra.mxu0 %v4945
  %7017 = vmatpush.bf16.msra.mxu0 %v4881
  %7018 = vmatpush.bf16.msra.mxu0 %v4817
  %7019 = vmatpush.bf16.msra.mxu0 %v4753
  %7020 = vmatpush.bf16.msra.mxu0 %v4689
  %7021 = vmatmul.bf16.gmra.mxu0 %v1071
  %v7022 = vpop.f32.mrf.mxu0
  %v7023 = vadd.f32 %v7010, %v7022
  %v7024 = vpop.f32.mrf.mxu0
  %7025 = vdwg.mxu0
  %7026 = vmatpush.bf16.msra.mxu0 %v4626
  %7027 = vmatpush.bf16.msra.mxu0 %v4562
  %7028 = vmatpush.bf16.msra.mxu0 %v4498
  %7029 = vmatpush.bf16.msra.mxu0 %v4434
  %7030 = vmatpush.bf16.msra.mxu0 %v4370
  %7031 = vmatpush.bf16.msra.mxu0 %v4306
  %7032 = vmatpush.bf16.msra.mxu0 %v4242
  %7033 = vmatpush.bf16.msra.mxu0 %v4178
  %7034 = vmatmul.bf16.gmra.mxu0 %v1070
  %v7035 = vpop.f32.mrf.mxu0
  %v7036 = vadd.f32 %v1065, %v7035
  %v7037 = vpop.f32.mrf.mxu0
  %7038 = vdwg.mxu0
  %7039 = vmatpush.bf16.msra.mxu0 %v5138
  %7040 = vmatpush.bf16.msra.mxu0 %v5074
  %7041 = vmatpush.bf16.msra.mxu0 %v5010
  %7042 = vmatpush.bf16.msra.mxu0 %v4946
  %7043 = vmatpush.bf16.msra.mxu0 %v4882
  %7044 = vmatpush.bf16.msra.mxu0 %v4818
  %7045 = vmatpush.bf16.msra.mxu0 %v4754
  %7046 = vmatpush.bf16.msra.mxu0 %v4690
  %7047 = vmatmul.bf16.gmra.mxu0 %v1071
  %v7048 = vpop.f32.mrf.mxu0
  %v7049 = vadd.f32 %v7036, %v7048
  %v7050 = vpop.f32.mrf.mxu0
  %7051 = vdwg.mxu0
  %7052 = vmatpush.bf16.msra.mxu0 %v4627
  %7053 = vmatpush.bf16.msra.mxu0 %v4563
  %7054 = vmatpush.bf16.msra.mxu0 %v4499
  %7055 = vmatpush.bf16.msra.mxu0 %v4435
  %7056 = vmatpush.bf16.msra.mxu0 %v4371
  %7057 = vmatpush.bf16.msra.mxu0 %v4307
  %7058 = vmatpush.bf16.msra.mxu0 %v4243
  %7059 = vmatpush.bf16.msra.mxu0 %v4179
  %7060 = vmatmul.bf16.gmra.mxu0 %v1070
  %v7061 = vpop.f32.mrf.mxu0
  %v7062 = vadd.f32 %v1065, %v7061
  %v7063 = vpop.f32.mrf.mxu0
  %7064 = vdwg.mxu0
  %7065 = vmatpush.bf16.msra.mxu0 %v5139
  %7066 = vmatpush.bf16.msra.mxu0 %v5075
  %7067 = vmatpush.bf16.msra.mxu0 %v5011
  %7068 = vmatpush.bf16.msra.mxu0 %v4947
  %7069 = vmatpush.bf16.msra.mxu0 %v4883
  %7070 = vmatpush.bf16.msra.mxu0 %v4819
  %7071 = vmatpush.bf16.msra.mxu0 %v4755
  %7072 = vmatpush.bf16.msra.mxu0 %v4691
  %7073 = vmatmul.bf16.gmra.mxu0 %v1071
  %v7074 = vpop.f32.mrf.mxu0
  %v7075 = vadd.f32 %v7062, %v7074
  %v7076 = vpop.f32.mrf.mxu0
  %7077 = vdwg.mxu0
  %7078 = vmatpush.bf16.msra.mxu0 %v4628
  %7079 = vmatpush.bf16.msra.mxu0 %v4564
  %7080 = vmatpush.bf16.msra.mxu0 %v4500
  %7081 = vmatpush.bf16.msra.mxu0 %v4436
  %7082 = vmatpush.bf16.msra.mxu0 %v4372
  %7083 = vmatpush.bf16.msra.mxu0 %v4308
  %7084 = vmatpush.bf16.msra.mxu0 %v4244
  %7085 = vmatpush.bf16.msra.mxu0 %v4180
  %7086 = vmatmul.bf16.gmra.mxu0 %v1070
  %v7087 = vpop.f32.mrf.mxu0
  %v7088 = vadd.f32 %v1065, %v7087
  %v7089 = vpop.f32.mrf.mxu0
  %7090 = vdwg.mxu0
  %7091 = vmatpush.bf16.msra.mxu0 %v5140
  %7092 = vmatpush.bf16.msra.mxu0 %v5076
  %7093 = vmatpush.bf16.msra.mxu0 %v5012
  %7094 = vmatpush.bf16.msra.mxu0 %v4948
  %7095 = vmatpush.bf16.msra.mxu0 %v4884
  %7096 = vmatpush.bf16.msra.mxu0 %v4820
  %7097 = vmatpush.bf16.msra.mxu0 %v4756
  %7098 = vmatpush.bf16.msra.mxu0 %v4692
  %7099 = vmatmul.bf16.gmra.mxu0 %v1071
  %v7100 = vpop.f32.mrf.mxu0
  %v7101 = vadd.f32 %v7088, %v7100
  %v7102 = vpop.f32.mrf.mxu0
  %7103 = vdwg.mxu0
  %7104 = vmatpush.bf16.msra.mxu0 %v4629
  %7105 = vmatpush.bf16.msra.mxu0 %v4565
  %7106 = vmatpush.bf16.msra.mxu0 %v4501
  %7107 = vmatpush.bf16.msra.mxu0 %v4437
  %7108 = vmatpush.bf16.msra.mxu0 %v4373
  %7109 = vmatpush.bf16.msra.mxu0 %v4309
  %7110 = vmatpush.bf16.msra.mxu0 %v4245
  %7111 = vmatpush.bf16.msra.mxu0 %v4181
  %7112 = vmatmul.bf16.gmra.mxu0 %v1070
  %v7113 = vpop.f32.mrf.mxu0
  %v7114 = vadd.f32 %v1065, %v7113
  %v7115 = vpop.f32.mrf.mxu0
  %7116 = vdwg.mxu0
  %7117 = vmatpush.bf16.msra.mxu0 %v5141
  %7118 = vmatpush.bf16.msra.mxu0 %v5077
  %7119 = vmatpush.bf16.msra.mxu0 %v5013
  %7120 = vmatpush.bf16.msra.mxu0 %v4949
  %7121 = vmatpush.bf16.msra.mxu0 %v4885
  %7122 = vmatpush.bf16.msra.mxu0 %v4821
  %7123 = vmatpush.bf16.msra.mxu0 %v4757
  %7124 = vmatpush.bf16.msra.mxu0 %v4693
  %7125 = vmatmul.bf16.gmra.mxu0 %v1071
  %v7126 = vpop.f32.mrf.mxu0
  %v7127 = vadd.f32 %v7114, %v7126
  %v7128 = vpop.f32.mrf.mxu0
  %7129 = vdwg.mxu0
  %7130 = vmatpush.bf16.msra.mxu0 %v4630
  %7131 = vmatpush.bf16.msra.mxu0 %v4566
  %7132 = vmatpush.bf16.msra.mxu0 %v4502
  %7133 = vmatpush.bf16.msra.mxu0 %v4438
  %7134 = vmatpush.bf16.msra.mxu0 %v4374
  %7135 = vmatpush.bf16.msra.mxu0 %v4310
  %7136 = vmatpush.bf16.msra.mxu0 %v4246
  %7137 = vmatpush.bf16.msra.mxu0 %v4182
  %7138 = vmatmul.bf16.gmra.mxu0 %v1070
  %v7139 = vpop.f32.mrf.mxu0
  %v7140 = vadd.f32 %v1065, %v7139
  %v7141 = vpop.f32.mrf.mxu0
  %7142 = vdwg.mxu0
  %7143 = vmatpush.bf16.msra.mxu0 %v5142
  %7144 = vmatpush.bf16.msra.mxu0 %v5078
  %7145 = vmatpush.bf16.msra.mxu0 %v5014
  %7146 = vmatpush.bf16.msra.mxu0 %v4950
  %7147 = vmatpush.bf16.msra.mxu0 %v4886
  %7148 = vmatpush.bf16.msra.mxu0 %v4822
  %7149 = vmatpush.bf16.msra.mxu0 %v4758
  %7150 = vmatpush.bf16.msra.mxu0 %v4694
  %7151 = vmatmul.bf16.gmra.mxu0 %v1071
  %v7152 = vpop.f32.mrf.mxu0
  %v7153 = vadd.f32 %v7140, %v7152
  %v7154 = vpop.f32.mrf.mxu0
  %7155 = vdwg.mxu0
  %7156 = vmatpush.bf16.msra.mxu0 %v4631
  %7157 = vmatpush.bf16.msra.mxu0 %v4567
  %7158 = vmatpush.bf16.msra.mxu0 %v4503
  %7159 = vmatpush.bf16.msra.mxu0 %v4439
  %7160 = vmatpush.bf16.msra.mxu0 %v4375
  %7161 = vmatpush.bf16.msra.mxu0 %v4311
  %7162 = vmatpush.bf16.msra.mxu0 %v4247
  %7163 = vmatpush.bf16.msra.mxu0 %v4183
  %7164 = vmatmul.bf16.gmra.mxu0 %v1070
  %v7165 = vpop.f32.mrf.mxu0
  %v7166 = vadd.f32 %v1065, %v7165
  %v7167 = vpop.f32.mrf.mxu0
  %7168 = vdwg.mxu0
  %7169 = vmatpush.bf16.msra.mxu0 %v5143
  %7170 = vmatpush.bf16.msra.mxu0 %v5079
  %7171 = vmatpush.bf16.msra.mxu0 %v5015
  %7172 = vmatpush.bf16.msra.mxu0 %v4951
  %7173 = vmatpush.bf16.msra.mxu0 %v4887
  %7174 = vmatpush.bf16.msra.mxu0 %v4823
  %7175 = vmatpush.bf16.msra.mxu0 %v4759
  %7176 = vmatpush.bf16.msra.mxu0 %v4695
  %7177 = vmatmul.bf16.gmra.mxu0 %v1071
  %v7178 = vpop.f32.mrf.mxu0
  %v7179 = vadd.f32 %v7166, %v7178
  %v7180 = vpop.f32.mrf.mxu0
  %7181 = vdwg.mxu0
  %7182 = vmatpush.bf16.msra.mxu0 %v4632
  %7183 = vmatpush.bf16.msra.mxu0 %v4568
  %7184 = vmatpush.bf16.msra.mxu0 %v4504
  %7185 = vmatpush.bf16.msra.mxu0 %v4440
  %7186 = vmatpush.bf16.msra.mxu0 %v4376
  %7187 = vmatpush.bf16.msra.mxu0 %v4312
  %7188 = vmatpush.bf16.msra.mxu0 %v4248
  %7189 = vmatpush.bf16.msra.mxu0 %v4184
  %7190 = vmatmul.bf16.gmra.mxu0 %v1070
  %v7191 = vpop.f32.mrf.mxu0
  %v7192 = vadd.f32 %v1065, %v7191
  %v7193 = vpop.f32.mrf.mxu0
  %7194 = vdwg.mxu0
  %7195 = vmatpush.bf16.msra.mxu0 %v5144
  %7196 = vmatpush.bf16.msra.mxu0 %v5080
  %7197 = vmatpush.bf16.msra.mxu0 %v5016
  %7198 = vmatpush.bf16.msra.mxu0 %v4952
  %7199 = vmatpush.bf16.msra.mxu0 %v4888
  %7200 = vmatpush.bf16.msra.mxu0 %v4824
  %7201 = vmatpush.bf16.msra.mxu0 %v4760
  %7202 = vmatpush.bf16.msra.mxu0 %v4696
  %7203 = vmatmul.bf16.gmra.mxu0 %v1071
  %v7204 = vpop.f32.mrf.mxu0
  %v7205 = vadd.f32 %v7192, %v7204
  %v7206 = vpop.f32.mrf.mxu0
  %7207 = vdwg.mxu0
  %7208 = vmatpush.bf16.msra.mxu0 %v4633
  %7209 = vmatpush.bf16.msra.mxu0 %v4569
  %7210 = vmatpush.bf16.msra.mxu0 %v4505
  %7211 = vmatpush.bf16.msra.mxu0 %v4441
  %7212 = vmatpush.bf16.msra.mxu0 %v4377
  %7213 = vmatpush.bf16.msra.mxu0 %v4313
  %7214 = vmatpush.bf16.msra.mxu0 %v4249
  %7215 = vmatpush.bf16.msra.mxu0 %v4185
  %7216 = vmatmul.bf16.gmra.mxu0 %v1070
  %v7217 = vpop.f32.mrf.mxu0
  %v7218 = vadd.f32 %v1065, %v7217
  %v7219 = vpop.f32.mrf.mxu0
  %7220 = vdwg.mxu0
  %7221 = vmatpush.bf16.msra.mxu0 %v5145
  %7222 = vmatpush.bf16.msra.mxu0 %v5081
  %7223 = vmatpush.bf16.msra.mxu0 %v5017
  %7224 = vmatpush.bf16.msra.mxu0 %v4953
  %7225 = vmatpush.bf16.msra.mxu0 %v4889
  %7226 = vmatpush.bf16.msra.mxu0 %v4825
  %7227 = vmatpush.bf16.msra.mxu0 %v4761
  %7228 = vmatpush.bf16.msra.mxu0 %v4697
  %7229 = vmatmul.bf16.gmra.mxu0 %v1071
  %v7230 = vpop.f32.mrf.mxu0
  %v7231 = vadd.f32 %v7218, %v7230
  %v7232 = vpop.f32.mrf.mxu0
  %7233 = vdwg.mxu0
  %7234 = vmatpush.bf16.msra.mxu0 %v4634
  %7235 = vmatpush.bf16.msra.mxu0 %v4570
  %7236 = vmatpush.bf16.msra.mxu0 %v4506
  %7237 = vmatpush.bf16.msra.mxu0 %v4442
  %7238 = vmatpush.bf16.msra.mxu0 %v4378
  %7239 = vmatpush.bf16.msra.mxu0 %v4314
  %7240 = vmatpush.bf16.msra.mxu0 %v4250
  %7241 = vmatpush.bf16.msra.mxu0 %v4186
  %7242 = vmatmul.bf16.gmra.mxu0 %v1070
  %v7243 = vpop.f32.mrf.mxu0
  %v7244 = vadd.f32 %v1065, %v7243
  %v7245 = vpop.f32.mrf.mxu0
  %7246 = vdwg.mxu0
  %7247 = vmatpush.bf16.msra.mxu0 %v5146
  %7248 = vmatpush.bf16.msra.mxu0 %v5082
  %7249 = vmatpush.bf16.msra.mxu0 %v5018
  %7250 = vmatpush.bf16.msra.mxu0 %v4954
  %7251 = vmatpush.bf16.msra.mxu0 %v4890
  %7252 = vmatpush.bf16.msra.mxu0 %v4826
  %7253 = vmatpush.bf16.msra.mxu0 %v4762
  %7254 = vmatpush.bf16.msra.mxu0 %v4698
  %7255 = vmatmul.bf16.gmra.mxu0 %v1071
  %v7256 = vpop.f32.mrf.mxu0
  %v7257 = vadd.f32 %v7244, %v7256
  %v7258 = vpop.f32.mrf.mxu0
  %7259 = vdwg.mxu0
  %7260 = vmatpush.bf16.msra.mxu0 %v4635
  %7261 = vmatpush.bf16.msra.mxu0 %v4571
  %7262 = vmatpush.bf16.msra.mxu0 %v4507
  %7263 = vmatpush.bf16.msra.mxu0 %v4443
  %7264 = vmatpush.bf16.msra.mxu0 %v4379
  %7265 = vmatpush.bf16.msra.mxu0 %v4315
  %7266 = vmatpush.bf16.msra.mxu0 %v4251
  %7267 = vmatpush.bf16.msra.mxu0 %v4187
  %7268 = vmatmul.bf16.gmra.mxu0 %v1070
  %v7269 = vpop.f32.mrf.mxu0
  %v7270 = vadd.f32 %v1065, %v7269
  %v7271 = vpop.f32.mrf.mxu0
  %7272 = vdwg.mxu0
  %7273 = vmatpush.bf16.msra.mxu0 %v5147
  %7274 = vmatpush.bf16.msra.mxu0 %v5083
  %7275 = vmatpush.bf16.msra.mxu0 %v5019
  %7276 = vmatpush.bf16.msra.mxu0 %v4955
  %7277 = vmatpush.bf16.msra.mxu0 %v4891
  %7278 = vmatpush.bf16.msra.mxu0 %v4827
  %7279 = vmatpush.bf16.msra.mxu0 %v4763
  %7280 = vmatpush.bf16.msra.mxu0 %v4699
  %7281 = vmatmul.bf16.gmra.mxu0 %v1071
  %v7282 = vpop.f32.mrf.mxu0
  %v7283 = vadd.f32 %v7270, %v7282
  %v7284 = vpop.f32.mrf.mxu0
  %7285 = vdwg.mxu0
  %7286 = vmatpush.bf16.msra.mxu0 %v4636
  %7287 = vmatpush.bf16.msra.mxu0 %v4572
  %7288 = vmatpush.bf16.msra.mxu0 %v4508
  %7289 = vmatpush.bf16.msra.mxu0 %v4444
  %7290 = vmatpush.bf16.msra.mxu0 %v4380
  %7291 = vmatpush.bf16.msra.mxu0 %v4316
  %7292 = vmatpush.bf16.msra.mxu0 %v4252
  %7293 = vmatpush.bf16.msra.mxu0 %v4188
  %7294 = vmatmul.bf16.gmra.mxu0 %v1070
  %v7295 = vpop.f32.mrf.mxu0
  %v7296 = vadd.f32 %v1065, %v7295
  %v7297 = vpop.f32.mrf.mxu0
  %7298 = vdwg.mxu0
  %7299 = vmatpush.bf16.msra.mxu0 %v5148
  %7300 = vmatpush.bf16.msra.mxu0 %v5084
  %7301 = vmatpush.bf16.msra.mxu0 %v5020
  %7302 = vmatpush.bf16.msra.mxu0 %v4956
  %7303 = vmatpush.bf16.msra.mxu0 %v4892
  %7304 = vmatpush.bf16.msra.mxu0 %v4828
  %7305 = vmatpush.bf16.msra.mxu0 %v4764
  %7306 = vmatpush.bf16.msra.mxu0 %v4700
  %7307 = vmatmul.bf16.gmra.mxu0 %v1071
  %v7308 = vpop.f32.mrf.mxu0
  %v7309 = vadd.f32 %v7296, %v7308
  %v7310 = vpop.f32.mrf.mxu0
  %7311 = vdwg.mxu0
  %7312 = vmatpush.bf16.msra.mxu0 %v4637
  %7313 = vmatpush.bf16.msra.mxu0 %v4573
  %7314 = vmatpush.bf16.msra.mxu0 %v4509
  %7315 = vmatpush.bf16.msra.mxu0 %v4445
  %7316 = vmatpush.bf16.msra.mxu0 %v4381
  %7317 = vmatpush.bf16.msra.mxu0 %v4317
  %7318 = vmatpush.bf16.msra.mxu0 %v4253
  %7319 = vmatpush.bf16.msra.mxu0 %v4189
  %7320 = vmatmul.bf16.gmra.mxu0 %v1070
  %v7321 = vpop.f32.mrf.mxu0
  %v7322 = vadd.f32 %v1065, %v7321
  %v7323 = vpop.f32.mrf.mxu0
  %7324 = vdwg.mxu0
  %7325 = vmatpush.bf16.msra.mxu0 %v5149
  %7326 = vmatpush.bf16.msra.mxu0 %v5085
  %7327 = vmatpush.bf16.msra.mxu0 %v5021
  %7328 = vmatpush.bf16.msra.mxu0 %v4957
  %7329 = vmatpush.bf16.msra.mxu0 %v4893
  %7330 = vmatpush.bf16.msra.mxu0 %v4829
  %7331 = vmatpush.bf16.msra.mxu0 %v4765
  %7332 = vmatpush.bf16.msra.mxu0 %v4701
  %7333 = vmatmul.bf16.gmra.mxu0 %v1071
  %v7334 = vpop.f32.mrf.mxu0
  %v7335 = vadd.f32 %v7322, %v7334
  %v7336 = vpop.f32.mrf.mxu0
  %7337 = vdwg.mxu0
  %7338 = vmatpush.bf16.msra.mxu0 %v4638
  %7339 = vmatpush.bf16.msra.mxu0 %v4574
  %7340 = vmatpush.bf16.msra.mxu0 %v4510
  %7341 = vmatpush.bf16.msra.mxu0 %v4446
  %7342 = vmatpush.bf16.msra.mxu0 %v4382
  %7343 = vmatpush.bf16.msra.mxu0 %v4318
  %7344 = vmatpush.bf16.msra.mxu0 %v4254
  %7345 = vmatpush.bf16.msra.mxu0 %v4190
  %7346 = vmatmul.bf16.gmra.mxu0 %v1070
  %v7347 = vpop.f32.mrf.mxu0
  %v7348 = vadd.f32 %v1065, %v7347
  %v7349 = vpop.f32.mrf.mxu0
  %7350 = vdwg.mxu0
  %7351 = vmatpush.bf16.msra.mxu0 %v5150
  %7352 = vmatpush.bf16.msra.mxu0 %v5086
  %7353 = vmatpush.bf16.msra.mxu0 %v5022
  %7354 = vmatpush.bf16.msra.mxu0 %v4958
  %7355 = vmatpush.bf16.msra.mxu0 %v4894
  %7356 = vmatpush.bf16.msra.mxu0 %v4830
  %7357 = vmatpush.bf16.msra.mxu0 %v4766
  %7358 = vmatpush.bf16.msra.mxu0 %v4702
  %7359 = vmatmul.bf16.gmra.mxu0 %v1071
  %v7360 = vpop.f32.mrf.mxu0
  %v7361 = vadd.f32 %v7348, %v7360
  %v7362 = vpop.f32.mrf.mxu0
  %7363 = vdwg.mxu0
  %7364 = vmatpush.bf16.msra.mxu0 %v4639
  %7365 = vmatpush.bf16.msra.mxu0 %v4575
  %7366 = vmatpush.bf16.msra.mxu0 %v4511
  %7367 = vmatpush.bf16.msra.mxu0 %v4447
  %7368 = vmatpush.bf16.msra.mxu0 %v4383
  %7369 = vmatpush.bf16.msra.mxu0 %v4319
  %7370 = vmatpush.bf16.msra.mxu0 %v4255
  %7371 = vmatpush.bf16.msra.mxu0 %v4191
  %7372 = vmatmul.bf16.gmra.mxu0 %v1070
  %v7373 = vpop.f32.mrf.mxu0
  %v7374 = vadd.f32 %v1065, %v7373
  %v7375 = vpop.f32.mrf.mxu0
  %7376 = vdwg.mxu0
  %7377 = vmatpush.bf16.msra.mxu0 %v5151
  %7378 = vmatpush.bf16.msra.mxu0 %v5087
  %7379 = vmatpush.bf16.msra.mxu0 %v5023
  %7380 = vmatpush.bf16.msra.mxu0 %v4959
  %7381 = vmatpush.bf16.msra.mxu0 %v4895
  %7382 = vmatpush.bf16.msra.mxu0 %v4831
  %7383 = vmatpush.bf16.msra.mxu0 %v4767
  %7384 = vmatpush.bf16.msra.mxu0 %v4703
  %7385 = vmatmul.bf16.gmra.mxu0 %v1071
  %v7386 = vpop.f32.mrf.mxu0
  %v7387 = vadd.f32 %v7374, %v7386
  %v7388 = vpop.f32.mrf.mxu0
  %7389 = vdwg.mxu0
  %7390 = vmatpush.bf16.msra.mxu0 %v4640
  %7391 = vmatpush.bf16.msra.mxu0 %v4576
  %7392 = vmatpush.bf16.msra.mxu0 %v4512
  %7393 = vmatpush.bf16.msra.mxu0 %v4448
  %7394 = vmatpush.bf16.msra.mxu0 %v4384
  %7395 = vmatpush.bf16.msra.mxu0 %v4320
  %7396 = vmatpush.bf16.msra.mxu0 %v4256
  %7397 = vmatpush.bf16.msra.mxu0 %v4192
  %7398 = vmatmul.bf16.gmra.mxu0 %v1070
  %v7399 = vpop.f32.mrf.mxu0
  %v7400 = vadd.f32 %v1065, %v7399
  %v7401 = vpop.f32.mrf.mxu0
  %7402 = vdwg.mxu0
  %7403 = vmatpush.bf16.msra.mxu0 %v5152
  %7404 = vmatpush.bf16.msra.mxu0 %v5088
  %7405 = vmatpush.bf16.msra.mxu0 %v5024
  %7406 = vmatpush.bf16.msra.mxu0 %v4960
  %7407 = vmatpush.bf16.msra.mxu0 %v4896
  %7408 = vmatpush.bf16.msra.mxu0 %v4832
  %7409 = vmatpush.bf16.msra.mxu0 %v4768
  %7410 = vmatpush.bf16.msra.mxu0 %v4704
  %7411 = vmatmul.bf16.gmra.mxu0 %v1071
  %v7412 = vpop.f32.mrf.mxu0
  %v7413 = vadd.f32 %v7400, %v7412
  %v7414 = vpop.f32.mrf.mxu0
  %7415 = vdwg.mxu0
  %7416 = vmatpush.bf16.msra.mxu0 %v4641
  %7417 = vmatpush.bf16.msra.mxu0 %v4577
  %7418 = vmatpush.bf16.msra.mxu0 %v4513
  %7419 = vmatpush.bf16.msra.mxu0 %v4449
  %7420 = vmatpush.bf16.msra.mxu0 %v4385
  %7421 = vmatpush.bf16.msra.mxu0 %v4321
  %7422 = vmatpush.bf16.msra.mxu0 %v4257
  %7423 = vmatpush.bf16.msra.mxu0 %v4193
  %7424 = vmatmul.bf16.gmra.mxu0 %v1070
  %v7425 = vpop.f32.mrf.mxu0
  %v7426 = vadd.f32 %v1065, %v7425
  %v7427 = vpop.f32.mrf.mxu0
  %7428 = vdwg.mxu0
  %7429 = vmatpush.bf16.msra.mxu0 %v5153
  %7430 = vmatpush.bf16.msra.mxu0 %v5089
  %7431 = vmatpush.bf16.msra.mxu0 %v5025
  %7432 = vmatpush.bf16.msra.mxu0 %v4961
  %7433 = vmatpush.bf16.msra.mxu0 %v4897
  %7434 = vmatpush.bf16.msra.mxu0 %v4833
  %7435 = vmatpush.bf16.msra.mxu0 %v4769
  %7436 = vmatpush.bf16.msra.mxu0 %v4705
  %7437 = vmatmul.bf16.gmra.mxu0 %v1071
  %v7438 = vpop.f32.mrf.mxu0
  %v7439 = vadd.f32 %v7426, %v7438
  %v7440 = vpop.f32.mrf.mxu0
  %7441 = vdwg.mxu0
  %7442 = vmatpush.bf16.msra.mxu0 %v4642
  %7443 = vmatpush.bf16.msra.mxu0 %v4578
  %7444 = vmatpush.bf16.msra.mxu0 %v4514
  %7445 = vmatpush.bf16.msra.mxu0 %v4450
  %7446 = vmatpush.bf16.msra.mxu0 %v4386
  %7447 = vmatpush.bf16.msra.mxu0 %v4322
  %7448 = vmatpush.bf16.msra.mxu0 %v4258
  %7449 = vmatpush.bf16.msra.mxu0 %v4194
  %7450 = vmatmul.bf16.gmra.mxu0 %v1070
  %v7451 = vpop.f32.mrf.mxu0
  %v7452 = vadd.f32 %v1065, %v7451
  %v7453 = vpop.f32.mrf.mxu0
  %7454 = vdwg.mxu0
  %7455 = vmatpush.bf16.msra.mxu0 %v5154
  %7456 = vmatpush.bf16.msra.mxu0 %v5090
  %7457 = vmatpush.bf16.msra.mxu0 %v5026
  %7458 = vmatpush.bf16.msra.mxu0 %v4962
  %7459 = vmatpush.bf16.msra.mxu0 %v4898
  %7460 = vmatpush.bf16.msra.mxu0 %v4834
  %7461 = vmatpush.bf16.msra.mxu0 %v4770
  %7462 = vmatpush.bf16.msra.mxu0 %v4706
  %7463 = vmatmul.bf16.gmra.mxu0 %v1071
  %v7464 = vpop.f32.mrf.mxu0
  %v7465 = vadd.f32 %v7452, %v7464
  %v7466 = vpop.f32.mrf.mxu0
  %7467 = vdwg.mxu0
  %7468 = vmatpush.bf16.msra.mxu0 %v4643
  %7469 = vmatpush.bf16.msra.mxu0 %v4579
  %7470 = vmatpush.bf16.msra.mxu0 %v4515
  %7471 = vmatpush.bf16.msra.mxu0 %v4451
  %7472 = vmatpush.bf16.msra.mxu0 %v4387
  %7473 = vmatpush.bf16.msra.mxu0 %v4323
  %7474 = vmatpush.bf16.msra.mxu0 %v4259
  %7475 = vmatpush.bf16.msra.mxu0 %v4195
  %7476 = vmatmul.bf16.gmra.mxu0 %v1070
  %v7477 = vpop.f32.mrf.mxu0
  %v7478 = vadd.f32 %v1065, %v7477
  %v7479 = vpop.f32.mrf.mxu0
  %7480 = vdwg.mxu0
  %7481 = vmatpush.bf16.msra.mxu0 %v5155
  %7482 = vmatpush.bf16.msra.mxu0 %v5091
  %7483 = vmatpush.bf16.msra.mxu0 %v5027
  %7484 = vmatpush.bf16.msra.mxu0 %v4963
  %7485 = vmatpush.bf16.msra.mxu0 %v4899
  %7486 = vmatpush.bf16.msra.mxu0 %v4835
  %7487 = vmatpush.bf16.msra.mxu0 %v4771
  %7488 = vmatpush.bf16.msra.mxu0 %v4707
  %7489 = vmatmul.bf16.gmra.mxu0 %v1071
  %v7490 = vpop.f32.mrf.mxu0
  %v7491 = vadd.f32 %v7478, %v7490
  %v7492 = vpop.f32.mrf.mxu0
  %7493 = vdwg.mxu0
  %7494 = vmatpush.bf16.msra.mxu0 %v4644
  %7495 = vmatpush.bf16.msra.mxu0 %v4580
  %7496 = vmatpush.bf16.msra.mxu0 %v4516
  %7497 = vmatpush.bf16.msra.mxu0 %v4452
  %7498 = vmatpush.bf16.msra.mxu0 %v4388
  %7499 = vmatpush.bf16.msra.mxu0 %v4324
  %7500 = vmatpush.bf16.msra.mxu0 %v4260
  %7501 = vmatpush.bf16.msra.mxu0 %v4196
  %7502 = vmatmul.bf16.gmra.mxu0 %v1070
  %v7503 = vpop.f32.mrf.mxu0
  %v7504 = vadd.f32 %v1065, %v7503
  %v7505 = vpop.f32.mrf.mxu0
  %7506 = vdwg.mxu0
  %7507 = vmatpush.bf16.msra.mxu0 %v5156
  %7508 = vmatpush.bf16.msra.mxu0 %v5092
  %7509 = vmatpush.bf16.msra.mxu0 %v5028
  %7510 = vmatpush.bf16.msra.mxu0 %v4964
  %7511 = vmatpush.bf16.msra.mxu0 %v4900
  %7512 = vmatpush.bf16.msra.mxu0 %v4836
  %7513 = vmatpush.bf16.msra.mxu0 %v4772
  %7514 = vmatpush.bf16.msra.mxu0 %v4708
  %7515 = vmatmul.bf16.gmra.mxu0 %v1071
  %v7516 = vpop.f32.mrf.mxu0
  %v7517 = vadd.f32 %v7504, %v7516
  %v7518 = vpop.f32.mrf.mxu0
  %7519 = vdwg.mxu0
  %7520 = vmatpush.bf16.msra.mxu0 %v4645
  %7521 = vmatpush.bf16.msra.mxu0 %v4581
  %7522 = vmatpush.bf16.msra.mxu0 %v4517
  %7523 = vmatpush.bf16.msra.mxu0 %v4453
  %7524 = vmatpush.bf16.msra.mxu0 %v4389
  %7525 = vmatpush.bf16.msra.mxu0 %v4325
  %7526 = vmatpush.bf16.msra.mxu0 %v4261
  %7527 = vmatpush.bf16.msra.mxu0 %v4197
  %7528 = vmatmul.bf16.gmra.mxu0 %v1070
  %v7529 = vpop.f32.mrf.mxu0
  %v7530 = vadd.f32 %v1065, %v7529
  %v7531 = vpop.f32.mrf.mxu0
  %7532 = vdwg.mxu0
  %7533 = vmatpush.bf16.msra.mxu0 %v5157
  %7534 = vmatpush.bf16.msra.mxu0 %v5093
  %7535 = vmatpush.bf16.msra.mxu0 %v5029
  %7536 = vmatpush.bf16.msra.mxu0 %v4965
  %7537 = vmatpush.bf16.msra.mxu0 %v4901
  %7538 = vmatpush.bf16.msra.mxu0 %v4837
  %7539 = vmatpush.bf16.msra.mxu0 %v4773
  %7540 = vmatpush.bf16.msra.mxu0 %v4709
  %7541 = vmatmul.bf16.gmra.mxu0 %v1071
  %v7542 = vpop.f32.mrf.mxu0
  %v7543 = vadd.f32 %v7530, %v7542
  %v7544 = vpop.f32.mrf.mxu0
  %7545 = vdwg.mxu0
  %7546 = vmatpush.bf16.msra.mxu0 %v4646
  %7547 = vmatpush.bf16.msra.mxu0 %v4582
  %7548 = vmatpush.bf16.msra.mxu0 %v4518
  %7549 = vmatpush.bf16.msra.mxu0 %v4454
  %7550 = vmatpush.bf16.msra.mxu0 %v4390
  %7551 = vmatpush.bf16.msra.mxu0 %v4326
  %7552 = vmatpush.bf16.msra.mxu0 %v4262
  %7553 = vmatpush.bf16.msra.mxu0 %v4198
  %7554 = vmatmul.bf16.gmra.mxu0 %v1070
  %v7555 = vpop.f32.mrf.mxu0
  %v7556 = vadd.f32 %v1065, %v7555
  %v7557 = vpop.f32.mrf.mxu0
  %7558 = vdwg.mxu0
  %7559 = vmatpush.bf16.msra.mxu0 %v5158
  %7560 = vmatpush.bf16.msra.mxu0 %v5094
  %7561 = vmatpush.bf16.msra.mxu0 %v5030
  %7562 = vmatpush.bf16.msra.mxu0 %v4966
  %7563 = vmatpush.bf16.msra.mxu0 %v4902
  %7564 = vmatpush.bf16.msra.mxu0 %v4838
  %7565 = vmatpush.bf16.msra.mxu0 %v4774
  %7566 = vmatpush.bf16.msra.mxu0 %v4710
  %7567 = vmatmul.bf16.gmra.mxu0 %v1071
  %v7568 = vpop.f32.mrf.mxu0
  %v7569 = vadd.f32 %v7556, %v7568
  %v7570 = vpop.f32.mrf.mxu0
  %7571 = vdwg.mxu0
  %7572 = vmatpush.bf16.msra.mxu0 %v4647
  %7573 = vmatpush.bf16.msra.mxu0 %v4583
  %7574 = vmatpush.bf16.msra.mxu0 %v4519
  %7575 = vmatpush.bf16.msra.mxu0 %v4455
  %7576 = vmatpush.bf16.msra.mxu0 %v4391
  %7577 = vmatpush.bf16.msra.mxu0 %v4327
  %7578 = vmatpush.bf16.msra.mxu0 %v4263
  %7579 = vmatpush.bf16.msra.mxu0 %v4199
  %7580 = vmatmul.bf16.gmra.mxu0 %v1070
  %v7581 = vpop.f32.mrf.mxu0
  %v7582 = vadd.f32 %v1065, %v7581
  %v7583 = vpop.f32.mrf.mxu0
  %7584 = vdwg.mxu0
  %7585 = vmatpush.bf16.msra.mxu0 %v5159
  %7586 = vmatpush.bf16.msra.mxu0 %v5095
  %7587 = vmatpush.bf16.msra.mxu0 %v5031
  %7588 = vmatpush.bf16.msra.mxu0 %v4967
  %7589 = vmatpush.bf16.msra.mxu0 %v4903
  %7590 = vmatpush.bf16.msra.mxu0 %v4839
  %7591 = vmatpush.bf16.msra.mxu0 %v4775
  %7592 = vmatpush.bf16.msra.mxu0 %v4711
  %7593 = vmatmul.bf16.gmra.mxu0 %v1071
  %v7594 = vpop.f32.mrf.mxu0
  %v7595 = vadd.f32 %v7582, %v7594
  %v7596 = vpop.f32.mrf.mxu0
  %7597 = vdwg.mxu0
  %7598 = vmatpush.bf16.msra.mxu0 %v4648
  %7599 = vmatpush.bf16.msra.mxu0 %v4584
  %7600 = vmatpush.bf16.msra.mxu0 %v4520
  %7601 = vmatpush.bf16.msra.mxu0 %v4456
  %7602 = vmatpush.bf16.msra.mxu0 %v4392
  %7603 = vmatpush.bf16.msra.mxu0 %v4328
  %7604 = vmatpush.bf16.msra.mxu0 %v4264
  %7605 = vmatpush.bf16.msra.mxu0 %v4200
  %7606 = vmatmul.bf16.gmra.mxu0 %v1070
  %v7607 = vpop.f32.mrf.mxu0
  %v7608 = vadd.f32 %v1065, %v7607
  %v7609 = vpop.f32.mrf.mxu0
  %7610 = vdwg.mxu0
  %7611 = vmatpush.bf16.msra.mxu0 %v5160
  %7612 = vmatpush.bf16.msra.mxu0 %v5096
  %7613 = vmatpush.bf16.msra.mxu0 %v5032
  %7614 = vmatpush.bf16.msra.mxu0 %v4968
  %7615 = vmatpush.bf16.msra.mxu0 %v4904
  %7616 = vmatpush.bf16.msra.mxu0 %v4840
  %7617 = vmatpush.bf16.msra.mxu0 %v4776
  %7618 = vmatpush.bf16.msra.mxu0 %v4712
  %7619 = vmatmul.bf16.gmra.mxu0 %v1071
  %v7620 = vpop.f32.mrf.mxu0
  %v7621 = vadd.f32 %v7608, %v7620
  %v7622 = vpop.f32.mrf.mxu0
  %7623 = vdwg.mxu0
  %7624 = vmatpush.bf16.msra.mxu0 %v4649
  %7625 = vmatpush.bf16.msra.mxu0 %v4585
  %7626 = vmatpush.bf16.msra.mxu0 %v4521
  %7627 = vmatpush.bf16.msra.mxu0 %v4457
  %7628 = vmatpush.bf16.msra.mxu0 %v4393
  %7629 = vmatpush.bf16.msra.mxu0 %v4329
  %7630 = vmatpush.bf16.msra.mxu0 %v4265
  %7631 = vmatpush.bf16.msra.mxu0 %v4201
  %7632 = vmatmul.bf16.gmra.mxu0 %v1070
  %v7633 = vpop.f32.mrf.mxu0
  %v7634 = vadd.f32 %v1065, %v7633
  %v7635 = vpop.f32.mrf.mxu0
  %7636 = vdwg.mxu0
  %7637 = vmatpush.bf16.msra.mxu0 %v5161
  %7638 = vmatpush.bf16.msra.mxu0 %v5097
  %7639 = vmatpush.bf16.msra.mxu0 %v5033
  %7640 = vmatpush.bf16.msra.mxu0 %v4969
  %7641 = vmatpush.bf16.msra.mxu0 %v4905
  %7642 = vmatpush.bf16.msra.mxu0 %v4841
  %7643 = vmatpush.bf16.msra.mxu0 %v4777
  %7644 = vmatpush.bf16.msra.mxu0 %v4713
  %7645 = vmatmul.bf16.gmra.mxu0 %v1071
  %v7646 = vpop.f32.mrf.mxu0
  %v7647 = vadd.f32 %v7634, %v7646
  %v7648 = vpop.f32.mrf.mxu0
  %7649 = vdwg.mxu0
  %7650 = vmatpush.bf16.msra.mxu0 %v4650
  %7651 = vmatpush.bf16.msra.mxu0 %v4586
  %7652 = vmatpush.bf16.msra.mxu0 %v4522
  %7653 = vmatpush.bf16.msra.mxu0 %v4458
  %7654 = vmatpush.bf16.msra.mxu0 %v4394
  %7655 = vmatpush.bf16.msra.mxu0 %v4330
  %7656 = vmatpush.bf16.msra.mxu0 %v4266
  %7657 = vmatpush.bf16.msra.mxu0 %v4202
  %7658 = vmatmul.bf16.gmra.mxu0 %v1070
  %v7659 = vpop.f32.mrf.mxu0
  %v7660 = vadd.f32 %v1065, %v7659
  %v7661 = vpop.f32.mrf.mxu0
  %7662 = vdwg.mxu0
  %7663 = vmatpush.bf16.msra.mxu0 %v5162
  %7664 = vmatpush.bf16.msra.mxu0 %v5098
  %7665 = vmatpush.bf16.msra.mxu0 %v5034
  %7666 = vmatpush.bf16.msra.mxu0 %v4970
  %7667 = vmatpush.bf16.msra.mxu0 %v4906
  %7668 = vmatpush.bf16.msra.mxu0 %v4842
  %7669 = vmatpush.bf16.msra.mxu0 %v4778
  %7670 = vmatpush.bf16.msra.mxu0 %v4714
  %7671 = vmatmul.bf16.gmra.mxu0 %v1071
  %v7672 = vpop.f32.mrf.mxu0
  %v7673 = vadd.f32 %v7660, %v7672
  %v7674 = vpop.f32.mrf.mxu0
  %7675 = vdwg.mxu0
  %7676 = vmatpush.bf16.msra.mxu0 %v4651
  %7677 = vmatpush.bf16.msra.mxu0 %v4587
  %7678 = vmatpush.bf16.msra.mxu0 %v4523
  %7679 = vmatpush.bf16.msra.mxu0 %v4459
  %7680 = vmatpush.bf16.msra.mxu0 %v4395
  %7681 = vmatpush.bf16.msra.mxu0 %v4331
  %7682 = vmatpush.bf16.msra.mxu0 %v4267
  %7683 = vmatpush.bf16.msra.mxu0 %v4203
  %7684 = vmatmul.bf16.gmra.mxu0 %v1070
  %v7685 = vpop.f32.mrf.mxu0
  %v7686 = vadd.f32 %v1065, %v7685
  %v7687 = vpop.f32.mrf.mxu0
  %7688 = vdwg.mxu0
  %7689 = vmatpush.bf16.msra.mxu0 %v5163
  %7690 = vmatpush.bf16.msra.mxu0 %v5099
  %7691 = vmatpush.bf16.msra.mxu0 %v5035
  %7692 = vmatpush.bf16.msra.mxu0 %v4971
  %7693 = vmatpush.bf16.msra.mxu0 %v4907
  %7694 = vmatpush.bf16.msra.mxu0 %v4843
  %7695 = vmatpush.bf16.msra.mxu0 %v4779
  %7696 = vmatpush.bf16.msra.mxu0 %v4715
  %7697 = vmatmul.bf16.gmra.mxu0 %v1071
  %v7698 = vpop.f32.mrf.mxu0
  %v7699 = vadd.f32 %v7686, %v7698
  %v7700 = vpop.f32.mrf.mxu0
  %7701 = vdwg.mxu0
  %7702 = vmatpush.bf16.msra.mxu0 %v4652
  %7703 = vmatpush.bf16.msra.mxu0 %v4588
  %7704 = vmatpush.bf16.msra.mxu0 %v4524
  %7705 = vmatpush.bf16.msra.mxu0 %v4460
  %7706 = vmatpush.bf16.msra.mxu0 %v4396
  %7707 = vmatpush.bf16.msra.mxu0 %v4332
  %7708 = vmatpush.bf16.msra.mxu0 %v4268
  %7709 = vmatpush.bf16.msra.mxu0 %v4204
  %7710 = vmatmul.bf16.gmra.mxu0 %v1070
  %v7711 = vpop.f32.mrf.mxu0
  %v7712 = vadd.f32 %v1065, %v7711
  %v7713 = vpop.f32.mrf.mxu0
  %7714 = vdwg.mxu0
  %7715 = vmatpush.bf16.msra.mxu0 %v5164
  %7716 = vmatpush.bf16.msra.mxu0 %v5100
  %7717 = vmatpush.bf16.msra.mxu0 %v5036
  %7718 = vmatpush.bf16.msra.mxu0 %v4972
  %7719 = vmatpush.bf16.msra.mxu0 %v4908
  %7720 = vmatpush.bf16.msra.mxu0 %v4844
  %7721 = vmatpush.bf16.msra.mxu0 %v4780
  %7722 = vmatpush.bf16.msra.mxu0 %v4716
  %7723 = vmatmul.bf16.gmra.mxu0 %v1071
  %v7724 = vpop.f32.mrf.mxu0
  %v7725 = vadd.f32 %v7712, %v7724
  %v7726 = vpop.f32.mrf.mxu0
  %7727 = vdwg.mxu0
  %7728 = vmatpush.bf16.msra.mxu0 %v4653
  %7729 = vmatpush.bf16.msra.mxu0 %v4589
  %7730 = vmatpush.bf16.msra.mxu0 %v4525
  %7731 = vmatpush.bf16.msra.mxu0 %v4461
  %7732 = vmatpush.bf16.msra.mxu0 %v4397
  %7733 = vmatpush.bf16.msra.mxu0 %v4333
  %7734 = vmatpush.bf16.msra.mxu0 %v4269
  %7735 = vmatpush.bf16.msra.mxu0 %v4205
  %7736 = vmatmul.bf16.gmra.mxu0 %v1070
  %v7737 = vpop.f32.mrf.mxu0
  %v7738 = vadd.f32 %v1065, %v7737
  %v7739 = vpop.f32.mrf.mxu0
  %7740 = vdwg.mxu0
  %7741 = vmatpush.bf16.msra.mxu0 %v5165
  %7742 = vmatpush.bf16.msra.mxu0 %v5101
  %7743 = vmatpush.bf16.msra.mxu0 %v5037
  %7744 = vmatpush.bf16.msra.mxu0 %v4973
  %7745 = vmatpush.bf16.msra.mxu0 %v4909
  %7746 = vmatpush.bf16.msra.mxu0 %v4845
  %7747 = vmatpush.bf16.msra.mxu0 %v4781
  %7748 = vmatpush.bf16.msra.mxu0 %v4717
  %7749 = vmatmul.bf16.gmra.mxu0 %v1071
  %v7750 = vpop.f32.mrf.mxu0
  %v7751 = vadd.f32 %v7738, %v7750
  %v7752 = vpop.f32.mrf.mxu0
  %7753 = vdwg.mxu0
  %7754 = vmatpush.bf16.msra.mxu0 %v4654
  %7755 = vmatpush.bf16.msra.mxu0 %v4590
  %7756 = vmatpush.bf16.msra.mxu0 %v4526
  %7757 = vmatpush.bf16.msra.mxu0 %v4462
  %7758 = vmatpush.bf16.msra.mxu0 %v4398
  %7759 = vmatpush.bf16.msra.mxu0 %v4334
  %7760 = vmatpush.bf16.msra.mxu0 %v4270
  %7761 = vmatpush.bf16.msra.mxu0 %v4206
  %7762 = vmatmul.bf16.gmra.mxu0 %v1070
  %v7763 = vpop.f32.mrf.mxu0
  %v7764 = vadd.f32 %v1065, %v7763
  %v7765 = vpop.f32.mrf.mxu0
  %7766 = vdwg.mxu0
  %7767 = vmatpush.bf16.msra.mxu0 %v5166
  %7768 = vmatpush.bf16.msra.mxu0 %v5102
  %7769 = vmatpush.bf16.msra.mxu0 %v5038
  %7770 = vmatpush.bf16.msra.mxu0 %v4974
  %7771 = vmatpush.bf16.msra.mxu0 %v4910
  %7772 = vmatpush.bf16.msra.mxu0 %v4846
  %7773 = vmatpush.bf16.msra.mxu0 %v4782
  %7774 = vmatpush.bf16.msra.mxu0 %v4718
  %7775 = vmatmul.bf16.gmra.mxu0 %v1071
  %v7776 = vpop.f32.mrf.mxu0
  %v7777 = vadd.f32 %v7764, %v7776
  %v7778 = vpop.f32.mrf.mxu0
  %7779 = vdwg.mxu0
  %7780 = vmatpush.bf16.msra.mxu0 %v4655
  %7781 = vmatpush.bf16.msra.mxu0 %v4591
  %7782 = vmatpush.bf16.msra.mxu0 %v4527
  %7783 = vmatpush.bf16.msra.mxu0 %v4463
  %7784 = vmatpush.bf16.msra.mxu0 %v4399
  %7785 = vmatpush.bf16.msra.mxu0 %v4335
  %7786 = vmatpush.bf16.msra.mxu0 %v4271
  %7787 = vmatpush.bf16.msra.mxu0 %v4207
  %7788 = vmatmul.bf16.gmra.mxu0 %v1070
  %v7789 = vpop.f32.mrf.mxu0
  %v7790 = vadd.f32 %v1065, %v7789
  %v7791 = vpop.f32.mrf.mxu0
  %7792 = vdwg.mxu0
  %7793 = vmatpush.bf16.msra.mxu0 %v5167
  %7794 = vmatpush.bf16.msra.mxu0 %v5103
  %7795 = vmatpush.bf16.msra.mxu0 %v5039
  %7796 = vmatpush.bf16.msra.mxu0 %v4975
  %7797 = vmatpush.bf16.msra.mxu0 %v4911
  %7798 = vmatpush.bf16.msra.mxu0 %v4847
  %7799 = vmatpush.bf16.msra.mxu0 %v4783
  %7800 = vmatpush.bf16.msra.mxu0 %v4719
  %7801 = vmatmul.bf16.gmra.mxu0 %v1071
  %v7802 = vpop.f32.mrf.mxu0
  %v7803 = vadd.f32 %v7790, %v7802
  %v7804 = vpop.f32.mrf.mxu0
  %7805 = vdwg.mxu0
  %7806 = vmatpush.bf16.msra.mxu0 %v4656
  %7807 = vmatpush.bf16.msra.mxu0 %v4592
  %7808 = vmatpush.bf16.msra.mxu0 %v4528
  %7809 = vmatpush.bf16.msra.mxu0 %v4464
  %7810 = vmatpush.bf16.msra.mxu0 %v4400
  %7811 = vmatpush.bf16.msra.mxu0 %v4336
  %7812 = vmatpush.bf16.msra.mxu0 %v4272
  %7813 = vmatpush.bf16.msra.mxu0 %v4208
  %7814 = vmatmul.bf16.gmra.mxu0 %v1070
  %v7815 = vpop.f32.mrf.mxu0
  %v7816 = vadd.f32 %v1065, %v7815
  %v7817 = vpop.f32.mrf.mxu0
  %7818 = vdwg.mxu0
  %7819 = vmatpush.bf16.msra.mxu0 %v5168
  %7820 = vmatpush.bf16.msra.mxu0 %v5104
  %7821 = vmatpush.bf16.msra.mxu0 %v5040
  %7822 = vmatpush.bf16.msra.mxu0 %v4976
  %7823 = vmatpush.bf16.msra.mxu0 %v4912
  %7824 = vmatpush.bf16.msra.mxu0 %v4848
  %7825 = vmatpush.bf16.msra.mxu0 %v4784
  %7826 = vmatpush.bf16.msra.mxu0 %v4720
  %7827 = vmatmul.bf16.gmra.mxu0 %v1071
  %v7828 = vpop.f32.mrf.mxu0
  %v7829 = vadd.f32 %v7816, %v7828
  %v7830 = vpop.f32.mrf.mxu0
  %7831 = vdwg.mxu0
  %7832 = vmatpush.bf16.msra.mxu0 %v4657
  %7833 = vmatpush.bf16.msra.mxu0 %v4593
  %7834 = vmatpush.bf16.msra.mxu0 %v4529
  %7835 = vmatpush.bf16.msra.mxu0 %v4465
  %7836 = vmatpush.bf16.msra.mxu0 %v4401
  %7837 = vmatpush.bf16.msra.mxu0 %v4337
  %7838 = vmatpush.bf16.msra.mxu0 %v4273
  %7839 = vmatpush.bf16.msra.mxu0 %v4209
  %7840 = vmatmul.bf16.gmra.mxu0 %v1070
  %v7841 = vpop.f32.mrf.mxu0
  %v7842 = vadd.f32 %v1065, %v7841
  %v7843 = vpop.f32.mrf.mxu0
  %7844 = vdwg.mxu0
  %7845 = vmatpush.bf16.msra.mxu0 %v5169
  %7846 = vmatpush.bf16.msra.mxu0 %v5105
  %7847 = vmatpush.bf16.msra.mxu0 %v5041
  %7848 = vmatpush.bf16.msra.mxu0 %v4977
  %7849 = vmatpush.bf16.msra.mxu0 %v4913
  %7850 = vmatpush.bf16.msra.mxu0 %v4849
  %7851 = vmatpush.bf16.msra.mxu0 %v4785
  %7852 = vmatpush.bf16.msra.mxu0 %v4721
  %7853 = vmatmul.bf16.gmra.mxu0 %v1071
  %v7854 = vpop.f32.mrf.mxu0
  %v7855 = vadd.f32 %v7842, %v7854
  %v7856 = vpop.f32.mrf.mxu0
  %7857 = vdwg.mxu0
  %vm7858 = vcmp.gt.f32.partialorder %v6217, 0.0
  %vm7859 = vcmp.gt.f32.partialorder %v6243, 0.0
  %vm7860 = vcmp.gt.f32.partialorder %v6269, 0.0
  %vm7861 = vcmp.gt.f32.partialorder %v6295, 0.0
  %vm7862 = vcmp.gt.f32.partialorder %v6321, 0.0
  %vm7863 = vcmp.gt.f32.partialorder %v6347, 0.0
  %vm7864 = vcmp.gt.f32.partialorder %v6373, 0.0
  %vm7865 = vcmp.gt.f32.partialorder %v6399, 0.0
  %vm7866 = vcmp.gt.f32.partialorder %v6425, 0.0
  %vm7867 = vcmp.gt.f32.partialorder %v6451, 0.0
  %vm7868 = vcmp.gt.f32.partialorder %v6477, 0.0
  %vm7869 = vcmp.gt.f32.partialorder %v6503, 0.0
  %vm7870 = vcmp.gt.f32.partialorder %v6529, 0.0
  %vm7871 = vcmp.gt.f32.partialorder %v6555, 0.0
  %vm7872 = vcmp.gt.f32.partialorder %v6581, 0.0
  %vm7873 = vcmp.gt.f32.partialorder %v6607, 0.0
  %vm7874 = vcmp.gt.f32.partialorder %v6633, 0.0
  %vm7875 = vcmp.gt.f32.partialorder %v6659, 0.0
  %vm7876 = vcmp.gt.f32.partialorder %v6685, 0.0
  %vm7877 = vcmp.gt.f32.partialorder %v6711, 0.0
  %vm7878 = vcmp.gt.f32.partialorder %v6737, 0.0
  %vm7879 = vcmp.gt.f32.partialorder %v6763, 0.0
  %vm7880 = vcmp.gt.f32.partialorder %v6789, 0.0
  %vm7881 = vcmp.gt.f32.partialorder %v6815, 0.0
  %vm7882 = vcmp.gt.f32.partialorder %v6841, 0.0
  %vm7883 = vcmp.gt.f32.partialorder %v6867, 0.0
  %vm7884 = vcmp.gt.f32.partialorder %v6893, 0.0
  %vm7885 = vcmp.gt.f32.partialorder %v6919, 0.0
  %vm7886 = vcmp.gt.f32.partialorder %v6945, 0.0
  %vm7887 = vcmp.gt.f32.partialorder %v6971, 0.0
  %vm7888 = vcmp.gt.f32.partialorder %v6997, 0.0
  %vm7889 = vcmp.gt.f32.partialorder %v7023, 0.0
  %vm7890 = vcmp.gt.f32.partialorder %v7049, 0.0
  %vm7891 = vcmp.gt.f32.partialorder %v7075, 0.0
  %vm7892 = vcmp.gt.f32.partialorder %v7101, 0.0
  %vm7893 = vcmp.gt.f32.partialorder %v7127, 0.0
  %vm7894 = vcmp.gt.f32.partialorder %v7153, 0.0
  %vm7895 = vcmp.gt.f32.partialorder %v7179, 0.0
  %vm7896 = vcmp.gt.f32.partialorder %v7205, 0.0
  %vm7897 = vcmp.gt.f32.partialorder %v7231, 0.0
  %vm7898 = vcmp.gt.f32.partialorder %v7257, 0.0
  %vm7899 = vcmp.gt.f32.partialorder %v7283, 0.0
  %vm7900 = vcmp.gt.f32.partialorder %v7309, 0.0
  %vm7901 = vcmp.gt.f32.partialorder %v7335, 0.0
  %vm7902 = vcmp.gt.f32.partialorder %v7361, 0.0
  %vm7903 = vcmp.gt.f32.partialorder %v7387, 0.0
  %vm7904 = vcmp.gt.f32.partialorder %v7413, 0.0
  %vm7905 = vcmp.gt.f32.partialorder %v7439, 0.0
  %vm7906 = vcmp.gt.f32.partialorder %v7465, 0.0
  %vm7907 = vcmp.gt.f32.partialorder %v7491, 0.0
  %vm7908 = vcmp.gt.f32.partialorder %v7517, 0.0
  %vm7909 = vcmp.gt.f32.partialorder %v7543, 0.0
  %vm7910 = vcmp.gt.f32.partialorder %v7569, 0.0
  %vm7911 = vcmp.gt.f32.partialorder %v7595, 0.0
  %vm7912 = vcmp.gt.f32.partialorder %v7621, 0.0
  %vm7913 = vcmp.gt.f32.partialorder %v7647, 0.0
  %vm7914 = vcmp.gt.f32.partialorder %v7673, 0.0
  %vm7915 = vcmp.gt.f32.partialorder %v7699, 0.0
  %vm7916 = vcmp.gt.f32.partialorder %v7725, 0.0
  %vm7917 = vcmp.gt.f32.partialorder %v7751, 0.0
  %vm7918 = vcmp.gt.f32.partialorder %v7777, 0.0
  %vm7919 = vcmp.gt.f32.partialorder %v7803, 0.0
  %vm7920 = vcmp.gt.f32.partialorder %v7829, 0.0
  %vm7921 = vcmp.gt.f32.partialorder %v7855, 0.0
  %v7922 = vmul.f32 %v6217, 1.442695
  %v7923 = vpow.pop %v7922
  %v7924 = vmul.f32 %v6243, 1.442695
  %v7925 = vpow.pop %v7924
  %v7926 = vmul.f32 %v6269, 1.442695
  %v7927 = vpow.pop %v7926
  %v7928 = vmul.f32 %v6295, 1.442695
  %v7929 = vpow.pop %v7928
  %v7930 = vmul.f32 %v6321, 1.442695
  %v7931 = vpow.pop %v7930
  %v7932 = vmul.f32 %v6347, 1.442695
  %v7933 = vpow.pop %v7932
  %v7934 = vmul.f32 %v6373, 1.442695
  %v7935 = vpow.pop %v7934
  %v7936 = vmul.f32 %v6399, 1.442695
  %v7937 = vpow.pop %v7936
  %v7938 = vmul.f32 %v6425, 1.442695
  %v7939 = vpow.pop %v7938
  %v7940 = vmul.f32 %v6451, 1.442695
  %v7941 = vpow.pop %v7940
  %v7942 = vmul.f32 %v6477, 1.442695
  %v7943 = vpow.pop %v7942
  %v7944 = vmul.f32 %v6503, 1.442695
  %v7945 = vpow.pop %v7944
  %v7946 = vmul.f32 %v6529, 1.442695
  %v7947 = vpow.pop %v7946
  %v7948 = vmul.f32 %v6555, 1.442695
  %v7949 = vpow.pop %v7948
  %v7950 = vmul.f32 %v6581, 1.442695
  %v7951 = vpow.pop %v7950
  %v7952 = vmul.f32 %v6607, 1.442695
  %v7953 = vpow.pop %v7952
  %v7954 = vmul.f32 %v6633, 1.442695
  %v7955 = vpow.pop %v7954
  %v7956 = vmul.f32 %v6659, 1.442695
  %v7957 = vpow.pop %v7956
  %v7958 = vmul.f32 %v6685, 1.442695
  %v7959 = vpow.pop %v7958
  %v7960 = vmul.f32 %v6711, 1.442695
  %v7961 = vpow.pop %v7960
  %v7962 = vmul.f32 %v6737, 1.442695
  %v7963 = vpow.pop %v7962
  %v7964 = vmul.f32 %v6763, 1.442695
  %v7965 = vpow.pop %v7964
  %v7966 = vmul.f32 %v6789, 1.442695
  %v7967 = vpow.pop %v7966
  %v7968 = vmul.f32 %v6815, 1.442695
  %v7969 = vpow.pop %v7968
  %v7970 = vmul.f32 %v6841, 1.442695
  %v7971 = vpow.pop %v7970
  %v7972 = vmul.f32 %v6867, 1.442695
  %v7973 = vpow.pop %v7972
  %v7974 = vmul.f32 %v6893, 1.442695
  %v7975 = vpow.pop %v7974
  %v7976 = vmul.f32 %v6919, 1.442695
  %v7977 = vpow.pop %v7976
  %v7978 = vmul.f32 %v6945, 1.442695
  %v7979 = vpow.pop %v7978
  %v7980 = vmul.f32 %v6971, 1.442695
  %v7981 = vpow.pop %v7980
  %v7982 = vmul.f32 %v6997, 1.442695
  %v7983 = vpow.pop %v7982
  %v7984 = vmul.f32 %v7023, 1.442695
  %v7985 = vpow.pop %v7984
  %v7986 = vmul.f32 %v7049, 1.442695
  %v7987 = vpow.pop %v7986
  %v7988 = vmul.f32 %v7075, 1.442695
  %v7989 = vpow.pop %v7988
  %v7990 = vmul.f32 %v7101, 1.442695
  %v7991 = vpow.pop %v7990
  %v7992 = vmul.f32 %v7127, 1.442695
  %v7993 = vpow.pop %v7992
  %v7994 = vmul.f32 %v7153, 1.442695
  %v7995 = vpow.pop %v7994
  %v7996 = vmul.f32 %v7179, 1.442695
  %v7997 = vpow.pop %v7996
  %v7998 = vmul.f32 %v7205, 1.442695
  %v7999 = vpow.pop %v7998
  %v8000 = vmul.f32 %v7231, 1.442695
  %v8001 = vpow.pop %v8000
  %v8002 = vmul.f32 %v7257, 1.442695
  %v8003 = vpow.pop %v8002
  %v8004 = vmul.f32 %v7283, 1.442695
  %v8005 = vpow.pop %v8004
  %v8006 = vmul.f32 %v7309, 1.442695
  %v8007 = vpow.pop %v8006
  %v8008 = vmul.f32 %v7335, 1.442695
  %v8009 = vpow.pop %v8008
  %v8010 = vmul.f32 %v7361, 1.442695
  %v8011 = vpow.pop %v8010
  %v8012 = vmul.f32 %v7387, 1.442695
  %v8013 = vpow.pop %v8012
  %v8014 = vmul.f32 %v7413, 1.442695
  %v8015 = vpow.pop %v8014
  %v8016 = vmul.f32 %v7439, 1.442695
  %v8017 = vpow.pop %v8016
  %v8018 = vmul.f32 %v7465, 1.442695
  %v8019 = vpow.pop %v8018
  %v8020 = vmul.f32 %v7491, 1.442695
  %v8021 = vpow.pop %v8020
  %v8022 = vmul.f32 %v7517, 1.442695
  %v8023 = vpow.pop %v8022
  %v8024 = vmul.f32 %v7543, 1.442695
  %v8025 = vpow.pop %v8024
  %v8026 = vmul.f32 %v7569, 1.442695
  %v8027 = vpow.pop %v8026
  %v8028 = vmul.f32 %v7595, 1.442695
  %v8029 = vpow.pop %v8028
  %v8030 = vmul.f32 %v7621, 1.442695
  %v8031 = vpow.pop %v8030
  %v8032 = vmul.f32 %v7647, 1.442695
  %v8033 = vpow.pop %v8032
  %v8034 = vmul.f32 %v7673, 1.442695
  %v8035 = vpow.pop %v8034
  %v8036 = vmul.f32 %v7699, 1.442695
  %v8037 = vpow.pop %v8036
  %v8038 = vmul.f32 %v7725, 1.442695
  %v8039 = vpow.pop %v8038
  %v8040 = vmul.f32 %v7751, 1.442695
  %v8041 = vpow.pop %v8040
  %v8042 = vmul.f32 %v7777, 1.442695
  %v8043 = vpow.pop %v8042
  %v8044 = vmul.f32 %v7803, 1.442695
  %v8045 = vpow.pop %v8044
  %v8046 = vmul.f32 %v7829, 1.442695
  %v8047 = vpow.pop %v8046
  %v8048 = vmul.f32 %v7855, 1.442695
  %v8049 = vpow.pop %v8048
  %v8050 = vsub.f32 %v7923, 1.0
  %v8051 = vsub.f32 %v7925, 1.0
  %v8052 = vsub.f32 %v7927, 1.0
  %v8053 = vsub.f32 %v7929, 1.0
  %v8054 = vsub.f32 %v7931, 1.0
  %v8055 = vsub.f32 %v7933, 1.0
  %v8056 = vsub.f32 %v7935, 1.0
  %v8057 = vsub.f32 %v7937, 1.0
  %v8058 = vsub.f32 %v7939, 1.0
  %v8059 = vsub.f32 %v7941, 1.0
  %v8060 = vsub.f32 %v7943, 1.0
  %v8061 = vsub.f32 %v7945, 1.0
  %v8062 = vsub.f32 %v7947, 1.0
  %v8063 = vsub.f32 %v7949, 1.0
  %v8064 = vsub.f32 %v7951, 1.0
  %v8065 = vsub.f32 %v7953, 1.0
  %v8066 = vsub.f32 %v7955, 1.0
  %v8067 = vsub.f32 %v7957, 1.0
  %v8068 = vsub.f32 %v7959, 1.0
  %v8069 = vsub.f32 %v7961, 1.0
  %v8070 = vsub.f32 %v7963, 1.0
  %v8071 = vsub.f32 %v7965, 1.0
  %v8072 = vsub.f32 %v7967, 1.0
  %v8073 = vsub.f32 %v7969, 1.0
  %v8074 = vsub.f32 %v7971, 1.0
  %v8075 = vsub.f32 %v7973, 1.0
  %v8076 = vsub.f32 %v7975, 1.0
  %v8077 = vsub.f32 %v7977, 1.0
  %v8078 = vsub.f32 %v7979, 1.0
  %v8079 = vsub.f32 %v7981, 1.0
  %v8080 = vsub.f32 %v7983, 1.0
  %v8081 = vsub.f32 %v7985, 1.0
  %v8082 = vsub.f32 %v7987, 1.0
  %v8083 = vsub.f32 %v7989, 1.0
  %v8084 = vsub.f32 %v7991, 1.0
  %v8085 = vsub.f32 %v7993, 1.0
  %v8086 = vsub.f32 %v7995, 1.0
  %v8087 = vsub.f32 %v7997, 1.0
  %v8088 = vsub.f32 %v7999, 1.0
  %v8089 = vsub.f32 %v8001, 1.0
  %v8090 = vsub.f32 %v8003, 1.0
  %v8091 = vsub.f32 %v8005, 1.0
  %v8092 = vsub.f32 %v8007, 1.0
  %v8093 = vsub.f32 %v8009, 1.0
  %v8094 = vsub.f32 %v8011, 1.0
  %v8095 = vsub.f32 %v8013, 1.0
  %v8096 = vsub.f32 %v8015, 1.0
  %v8097 = vsub.f32 %v8017, 1.0
  %v8098 = vsub.f32 %v8019, 1.0
  %v8099 = vsub.f32 %v8021, 1.0
  %v8100 = vsub.f32 %v8023, 1.0
  %v8101 = vsub.f32 %v8025, 1.0
  %v8102 = vsub.f32 %v8027, 1.0
  %v8103 = vsub.f32 %v8029, 1.0
  %v8104 = vsub.f32 %v8031, 1.0
  %v8105 = vsub.f32 %v8033, 1.0
  %v8106 = vsub.f32 %v8035, 1.0
  %v8107 = vsub.f32 %v8037, 1.0
  %v8108 = vsub.f32 %v8039, 1.0
  %v8109 = vsub.f32 %v8041, 1.0
  %v8110 = vsub.f32 %v8043, 1.0
  %v8111 = vsub.f32 %v8045, 1.0
  %v8112 = vsub.f32 %v8047, 1.0
  %v8113 = vsub.f32 %v8049, 1.0
  %v8114 = vsel %vm7858, %v6217, %v8050
  %v8115 = vsel %vm7859, %v6243, %v8051
  %v8116 = vsel %vm7860, %v6269, %v8052
  %v8117 = vsel %vm7861, %v6295, %v8053
  %v8118 = vsel %vm7862, %v6321, %v8054
  %v8119 = vsel %vm7863, %v6347, %v8055
  %v8120 = vsel %vm7864, %v6373, %v8056
  %v8121 = vsel %vm7865, %v6399, %v8057
  %v8122 = vsel %vm7866, %v6425, %v8058
  %v8123 = vsel %vm7867, %v6451, %v8059
  %v8124 = vsel %vm7868, %v6477, %v8060
  %v8125 = vsel %vm7869, %v6503, %v8061
  %v8126 = vsel %vm7870, %v6529, %v8062
  %v8127 = vsel %vm7871, %v6555, %v8063
  %v8128 = vsel %vm7872, %v6581, %v8064
  %v8129 = vsel %vm7873, %v6607, %v8065
  %v8130 = vsel %vm7874, %v6633, %v8066
  %v8131 = vsel %vm7875, %v6659, %v8067
  %v8132 = vsel %vm7876, %v6685, %v8068
  %v8133 = vsel %vm7877, %v6711, %v8069
  %v8134 = vsel %vm7878, %v6737, %v8070
  %v8135 = vsel %vm7879, %v6763, %v8071
  %v8136 = vsel %vm7880, %v6789, %v8072
  %v8137 = vsel %vm7881, %v6815, %v8073
  %v8138 = vsel %vm7882, %v6841, %v8074
  %v8139 = vsel %vm7883, %v6867, %v8075
  %v8140 = vsel %vm7884, %v6893, %v8076
  %v8141 = vsel %vm7885, %v6919, %v8077
  %v8142 = vsel %vm7886, %v6945, %v8078
  %v8143 = vsel %vm7887, %v6971, %v8079
  %v8144 = vsel %vm7888, %v6997, %v8080
  %v8145 = vsel %vm7889, %v7023, %v8081
  %v8146 = vsel %vm7890, %v7049, %v8082
  %v8147 = vsel %vm7891, %v7075, %v8083
  %v8148 = vsel %vm7892, %v7101, %v8084
  %v8149 = vsel %vm7893, %v7127, %v8085
  %v8150 = vsel %vm7894, %v7153, %v8086
  %v8151 = vsel %vm7895, %v7179, %v8087
  %v8152 = vsel %vm7896, %v7205, %v8088
  %v8153 = vsel %vm7897, %v7231, %v8089
  %v8154 = vsel %vm7898, %v7257, %v8090
  %v8155 = vsel %vm7899, %v7283, %v8091
  %v8156 = vsel %vm7900, %v7309, %v8092
  %v8157 = vsel %vm7901, %v7335, %v8093
  %v8158 = vsel %vm7902, %v7361, %v8094
  %v8159 = vsel %vm7903, %v7387, %v8095
  %v8160 = vsel %vm7904, %v7413, %v8096
  %v8161 = vsel %vm7905, %v7439, %v8097
  %v8162 = vsel %vm7906, %v7465, %v8098
  %v8163 = vsel %vm7907, %v7491, %v8099
  %v8164 = vsel %vm7908, %v7517, %v8100
  %v8165 = vsel %vm7909, %v7543, %v8101
  %v8166 = vsel %vm7910, %v7569, %v8102
  %v8167 = vsel %vm7911, %v7595, %v8103
  %v8168 = vsel %vm7912, %v7621, %v8104
  %v8169 = vsel %vm7913, %v7647, %v8105
  %v8170 = vsel %vm7914, %v7673, %v8106
  %v8171 = vsel %vm7915, %v7699, %v8107
  %v8172 = vsel %vm7916, %v7725, %v8108
  %v8173 = vsel %vm7917, %v7751, %v8109
  %v8174 = vsel %vm7918, %v7777, %v8110
  %v8175 = vsel %vm7919, %v7803, %v8111
  %v8176 = vsel %vm7920, %v7829, %v8112
  %v8177 = vsel %vm7921, %v7855, %v8113
  %v8178 = vld [vmem:[%s3] sm:$0xf]
  %v8179 = vld [vmem:[%s4] sm:$0xf]
  %8181 = vset.pattern.permute.xlu0 0
  %8182 = vperm.xlu0 %8181, %v8179
  %v8183 = vpop.permute.xlu0 %8182
  %vm8185 = vcmask 64512
  %v8187 = vsel %vm8185, %v8178, 0
  %8189 = vmatpush.msra.mxu0 0.0
  %8190 = vmatpush.msra.mxu0 0.0
  %8191 = vmatpush.msra.mxu0 0.0
  %8192 = vmatpush.msra.mxu0 0.0
  %8193 = vmatpush.msra.mxu0 0.0
  %8194 = vmatpush.msra.mxu0 0.0
  %8195 = vmatpush.msra.mxu0 0.0
  %8196 = vmatpush.msra.mxu0 0.0
  %8197 = vmatpush.msra.mxu0 0.0
  %8198 = vmatpush.msra.mxu0 0.0
  %8199 = vmatpush.msra.mxu0 0.0
  %8200 = vmatpush.msra.mxu0 0.0
  %8201 = vmatpush.msra.mxu0 0.0
  %8202 = vmatpush.msra.mxu0 0.0
  %8203 = vmatpush.msra.mxu0 0.0
  %8204 = vmatpush.msra.mxu0 %v8114
  %8205 = vmatmul.f32.gmra.mxu0 %v8187
  %v8206 = vpop.f32.mrf.mxu0
  %v8207 = vadd.f32 %v8183, %v8206
  %8208 = vdwg.mxu0
  %8209 = vmatpush.msra.mxu0 0.0
  %8210 = vmatpush.msra.mxu0 0.0
  %8211 = vmatpush.msra.mxu0 0.0
  %8212 = vmatpush.msra.mxu0 0.0
  %8213 = vmatpush.msra.mxu0 0.0
  %8214 = vmatpush.msra.mxu0 0.0
  %8215 = vmatpush.msra.mxu0 0.0
  %8216 = vmatpush.msra.mxu0 0.0
  %8217 = vmatpush.msra.mxu0 0.0
  %8218 = vmatpush.msra.mxu0 0.0
  %8219 = vmatpush.msra.mxu0 0.0
  %8220 = vmatpush.msra.mxu0 0.0
  %8221 = vmatpush.msra.mxu0 0.0
  %8222 = vmatpush.msra.mxu0 0.0
  %8223 = vmatpush.msra.mxu0 0.0
  %8224 = vmatpush.msra.mxu0 %v8115
  %8225 = vmatmul.f32.gmra.mxu0 %v8187
  %v8226 = vpop.f32.mrf.mxu0
  %v8227 = vadd.f32 %v8183, %v8226
  %8228 = vdwg.mxu0
  %8229 = vmatpush.msra.mxu0 0.0
  %8230 = vmatpush.msra.mxu0 0.0
  %8231 = vmatpush.msra.mxu0 0.0
  %8232 = vmatpush.msra.mxu0 0.0
  %8233 = vmatpush.msra.mxu0 0.0
  %8234 = vmatpush.msra.mxu0 0.0
  %8235 = vmatpush.msra.mxu0 0.0
  %8236 = vmatpush.msra.mxu0 0.0
  %8237 = vmatpush.msra.mxu0 0.0
  %8238 = vmatpush.msra.mxu0 0.0
  %8239 = vmatpush.msra.mxu0 0.0
  %8240 = vmatpush.msra.mxu0 0.0
  %8241 = vmatpush.msra.mxu0 0.0
  %8242 = vmatpush.msra.mxu0 0.0
  %8243 = vmatpush.msra.mxu0 0.0
  %8244 = vmatpush.msra.mxu0 %v8116
  %8245 = vmatmul.f32.gmra.mxu0 %v8187
  %v8246 = vpop.f32.mrf.mxu0
  %v8247 = vadd.f32 %v8183, %v8246
  %8248 = vdwg.mxu0
  %8249 = vmatpush.msra.mxu0 0.0
  %8250 = vmatpush.msra.mxu0 0.0
  %8251 = vmatpush.msra.mxu0 0.0
  %8252 = vmatpush.msra.mxu0 0.0
  %8253 = vmatpush.msra.mxu0 0.0
  %8254 = vmatpush.msra.mxu0 0.0
  %8255 = vmatpush.msra.mxu0 0.0
  %8256 = vmatpush.msra.mxu0 0.0
  %8257 = vmatpush.msra.mxu0 0.0
  %8258 = vmatpush.msra.mxu0 0.0
  %8259 = vmatpush.msra.mxu0 0.0
  %8260 = vmatpush.msra.mxu0 0.0
  %8261 = vmatpush.msra.mxu0 0.0
  %8262 = vmatpush.msra.mxu0 0.0
  %8263 = vmatpush.msra.mxu0 0.0
  %8264 = vmatpush.msra.mxu0 %v8117
  %8265 = vmatmul.f32.gmra.mxu0 %v8187
  %v8266 = vpop.f32.mrf.mxu0
  %v8267 = vadd.f32 %v8183, %v8266
  %8268 = vdwg.mxu0
  %8269 = vmatpush.msra.mxu0 0.0
  %8270 = vmatpush.msra.mxu0 0.0
  %8271 = vmatpush.msra.mxu0 0.0
  %8272 = vmatpush.msra.mxu0 0.0
  %8273 = vmatpush.msra.mxu0 0.0
  %8274 = vmatpush.msra.mxu0 0.0
  %8275 = vmatpush.msra.mxu0 0.0
  %8276 = vmatpush.msra.mxu0 0.0
  %8277 = vmatpush.msra.mxu0 0.0
  %8278 = vmatpush.msra.mxu0 0.0
  %8279 = vmatpush.msra.mxu0 0.0
  %8280 = vmatpush.msra.mxu0 0.0
  %8281 = vmatpush.msra.mxu0 0.0
  %8282 = vmatpush.msra.mxu0 0.0
  %8283 = vmatpush.msra.mxu0 0.0
  %8284 = vmatpush.msra.mxu0 %v8118
  %8285 = vmatmul.f32.gmra.mxu0 %v8187
  %v8286 = vpop.f32.mrf.mxu0
  %v8287 = vadd.f32 %v8183, %v8286
  %8288 = vdwg.mxu0
  %8289 = vmatpush.msra.mxu0 0.0
  %8290 = vmatpush.msra.mxu0 0.0
  %8291 = vmatpush.msra.mxu0 0.0
  %8292 = vmatpush.msra.mxu0 0.0
  %8293 = vmatpush.msra.mxu0 0.0
  %8294 = vmatpush.msra.mxu0 0.0
  %8295 = vmatpush.msra.mxu0 0.0
  %8296 = vmatpush.msra.mxu0 0.0
  %8297 = vmatpush.msra.mxu0 0.0
  %8298 = vmatpush.msra.mxu0 0.0
  %8299 = vmatpush.msra.mxu0 0.0
  %8300 = vmatpush.msra.mxu0 0.0
  %8301 = vmatpush.msra.mxu0 0.0
  %8302 = vmatpush.msra.mxu0 0.0
  %8303 = vmatpush.msra.mxu0 0.0
  %8304 = vmatpush.msra.mxu0 %v8119
  %8305 = vmatmul.f32.gmra.mxu0 %v8187
  %v8306 = vpop.f32.mrf.mxu0
  %v8307 = vadd.f32 %v8183, %v8306
  %8308 = vdwg.mxu0
  %8309 = vmatpush.msra.mxu0 0.0
  %8310 = vmatpush.msra.mxu0 0.0
  %8311 = vmatpush.msra.mxu0 0.0
  %8312 = vmatpush.msra.mxu0 0.0
  %8313 = vmatpush.msra.mxu0 0.0
  %8314 = vmatpush.msra.mxu0 0.0
  %8315 = vmatpush.msra.mxu0 0.0
  %8316 = vmatpush.msra.mxu0 0.0
  %8317 = vmatpush.msra.mxu0 0.0
  %8318 = vmatpush.msra.mxu0 0.0
  %8319 = vmatpush.msra.mxu0 0.0
  %8320 = vmatpush.msra.mxu0 0.0
  %8321 = vmatpush.msra.mxu0 0.0
  %8322 = vmatpush.msra.mxu0 0.0
  %8323 = vmatpush.msra.mxu0 0.0
  %8324 = vmatpush.msra.mxu0 %v8120
  %8325 = vmatmul.f32.gmra.mxu0 %v8187
  %v8326 = vpop.f32.mrf.mxu0
  %v8327 = vadd.f32 %v8183, %v8326
  %8328 = vdwg.mxu0
  %8329 = vmatpush.msra.mxu0 0.0
  %8330 = vmatpush.msra.mxu0 0.0
  %8331 = vmatpush.msra.mxu0 0.0
  %8332 = vmatpush.msra.mxu0 0.0
  %8333 = vmatpush.msra.mxu0 0.0
  %8334 = vmatpush.msra.mxu0 0.0
  %8335 = vmatpush.msra.mxu0 0.0
  %8336 = vmatpush.msra.mxu0 0.0
  %8337 = vmatpush.msra.mxu0 0.0
  %8338 = vmatpush.msra.mxu0 0.0
  %8339 = vmatpush.msra.mxu0 0.0
  %8340 = vmatpush.msra.mxu0 0.0
  %8341 = vmatpush.msra.mxu0 0.0
  %8342 = vmatpush.msra.mxu0 0.0
  %8343 = vmatpush.msra.mxu0 0.0
  %8344 = vmatpush.msra.mxu0 %v8121
  %8345 = vmatmul.f32.gmra.mxu0 %v8187
  %v8346 = vpop.f32.mrf.mxu0
  %v8347 = vadd.f32 %v8183, %v8346
  %8348 = vdwg.mxu0
  %8349 = vmatpush.msra.mxu0 0.0
  %8350 = vmatpush.msra.mxu0 0.0
  %8351 = vmatpush.msra.mxu0 0.0
  %8352 = vmatpush.msra.mxu0 0.0
  %8353 = vmatpush.msra.mxu0 0.0
  %8354 = vmatpush.msra.mxu0 0.0
  %8355 = vmatpush.msra.mxu0 0.0
  %8356 = vmatpush.msra.mxu0 0.0
  %8357 = vmatpush.msra.mxu0 0.0
  %8358 = vmatpush.msra.mxu0 0.0
  %8359 = vmatpush.msra.mxu0 0.0
  %8360 = vmatpush.msra.mxu0 0.0
  %8361 = vmatpush.msra.mxu0 0.0
  %8362 = vmatpush.msra.mxu0 0.0
  %8363 = vmatpush.msra.mxu0 0.0
  %8364 = vmatpush.msra.mxu0 %v8122
  %8365 = vmatmul.f32.gmra.mxu0 %v8187
  %v8366 = vpop.f32.mrf.mxu0
  %v8367 = vadd.f32 %v8183, %v8366
  %8368 = vdwg.mxu0
  %8369 = vmatpush.msra.mxu0 0.0
  %8370 = vmatpush.msra.mxu0 0.0
  %8371 = vmatpush.msra.mxu0 0.0
  %8372 = vmatpush.msra.mxu0 0.0
  %8373 = vmatpush.msra.mxu0 0.0
  %8374 = vmatpush.msra.mxu0 0.0
  %8375 = vmatpush.msra.mxu0 0.0
  %8376 = vmatpush.msra.mxu0 0.0
  %8377 = vmatpush.msra.mxu0 0.0
  %8378 = vmatpush.msra.mxu0 0.0
  %8379 = vmatpush.msra.mxu0 0.0
  %8380 = vmatpush.msra.mxu0 0.0
  %8381 = vmatpush.msra.mxu0 0.0
  %8382 = vmatpush.msra.mxu0 0.0
  %8383 = vmatpush.msra.mxu0 0.0
  %8384 = vmatpush.msra.mxu0 %v8123
  %8385 = vmatmul.f32.gmra.mxu0 %v8187
  %v8386 = vpop.f32.mrf.mxu0
  %v8387 = vadd.f32 %v8183, %v8386
  %8388 = vdwg.mxu0
  %8389 = vmatpush.msra.mxu0 0.0
  %8390 = vmatpush.msra.mxu0 0.0
  %8391 = vmatpush.msra.mxu0 0.0
  %8392 = vmatpush.msra.mxu0 0.0
  %8393 = vmatpush.msra.mxu0 0.0
  %8394 = vmatpush.msra.mxu0 0.0
  %8395 = vmatpush.msra.mxu0 0.0
  %8396 = vmatpush.msra.mxu0 0.0
  %8397 = vmatpush.msra.mxu0 0.0
  %8398 = vmatpush.msra.mxu0 0.0
  %8399 = vmatpush.msra.mxu0 0.0
  %8400 = vmatpush.msra.mxu0 0.0
  %8401 = vmatpush.msra.mxu0 0.0
  %8402 = vmatpush.msra.mxu0 0.0
  %8403 = vmatpush.msra.mxu0 0.0
  %8404 = vmatpush.msra.mxu0 %v8124
  %8405 = vmatmul.f32.gmra.mxu0 %v8187
  %v8406 = vpop.f32.mrf.mxu0
  %v8407 = vadd.f32 %v8183, %v8406
  %8408 = vdwg.mxu0
  %8409 = vmatpush.msra.mxu0 0.0
  %8410 = vmatpush.msra.mxu0 0.0
  %8411 = vmatpush.msra.mxu0 0.0
  %8412 = vmatpush.msra.mxu0 0.0
  %8413 = vmatpush.msra.mxu0 0.0
  %8414 = vmatpush.msra.mxu0 0.0
  %8415 = vmatpush.msra.mxu0 0.0
  %8416 = vmatpush.msra.mxu0 0.0
  %8417 = vmatpush.msra.mxu0 0.0
  %8418 = vmatpush.msra.mxu0 0.0
  %8419 = vmatpush.msra.mxu0 0.0
  %8420 = vmatpush.msra.mxu0 0.0
  %8421 = vmatpush.msra.mxu0 0.0
  %8422 = vmatpush.msra.mxu0 0.0
  %8423 = vmatpush.msra.mxu0 0.0
  %8424 = vmatpush.msra.mxu0 %v8125
  %8425 = vmatmul.f32.gmra.mxu0 %v8187
  %v8426 = vpop.f32.mrf.mxu0
  %v8427 = vadd.f32 %v8183, %v8426
  %8428 = vdwg.mxu0
  %8429 = vmatpush.msra.mxu0 0.0
  %8430 = vmatpush.msra.mxu0 0.0
  %8431 = vmatpush.msra.mxu0 0.0
  %8432 = vmatpush.msra.mxu0 0.0
  %8433 = vmatpush.msra.mxu0 0.0
  %8434 = vmatpush.msra.mxu0 0.0
  %8435 = vmatpush.msra.mxu0 0.0
  %8436 = vmatpush.msra.mxu0 0.0
  %8437 = vmatpush.msra.mxu0 0.0
  %8438 = vmatpush.msra.mxu0 0.0
  %8439 = vmatpush.msra.mxu0 0.0
  %8440 = vmatpush.msra.mxu0 0.0
  %8441 = vmatpush.msra.mxu0 0.0
  %8442 = vmatpush.msra.mxu0 0.0
  %8443 = vmatpush.msra.mxu0 0.0
  %8444 = vmatpush.msra.mxu0 %v8126
  %8445 = vmatmul.f32.gmra.mxu0 %v8187
  %v8446 = vpop.f32.mrf.mxu0
  %v8447 = vadd.f32 %v8183, %v8446
  %8448 = vdwg.mxu0
  %8449 = vmatpush.msra.mxu0 0.0
  %8450 = vmatpush.msra.mxu0 0.0
  %8451 = vmatpush.msra.mxu0 0.0
  %8452 = vmatpush.msra.mxu0 0.0
  %8453 = vmatpush.msra.mxu0 0.0
  %8454 = vmatpush.msra.mxu0 0.0
  %8455 = vmatpush.msra.mxu0 0.0
  %8456 = vmatpush.msra.mxu0 0.0
  %8457 = vmatpush.msra.mxu0 0.0
  %8458 = vmatpush.msra.mxu0 0.0
  %8459 = vmatpush.msra.mxu0 0.0
  %8460 = vmatpush.msra.mxu0 0.0
  %8461 = vmatpush.msra.mxu0 0.0
  %8462 = vmatpush.msra.mxu0 0.0
  %8463 = vmatpush.msra.mxu0 0.0
  %8464 = vmatpush.msra.mxu0 %v8127
  %8465 = vmatmul.f32.gmra.mxu0 %v8187
  %v8466 = vpop.f32.mrf.mxu0
  %v8467 = vadd.f32 %v8183, %v8466
  %8468 = vdwg.mxu0
  %8469 = vmatpush.msra.mxu0 0.0
  %8470 = vmatpush.msra.mxu0 0.0
  %8471 = vmatpush.msra.mxu0 0.0
  %8472 = vmatpush.msra.mxu0 0.0
  %8473 = vmatpush.msra.mxu0 0.0
  %8474 = vmatpush.msra.mxu0 0.0
  %8475 = vmatpush.msra.mxu0 0.0
  %8476 = vmatpush.msra.mxu0 0.0
  %8477 = vmatpush.msra.mxu0 0.0
  %8478 = vmatpush.msra.mxu0 0.0
  %8479 = vmatpush.msra.mxu0 0.0
  %8480 = vmatpush.msra.mxu0 0.0
  %8481 = vmatpush.msra.mxu0 0.0
  %8482 = vmatpush.msra.mxu0 0.0
  %8483 = vmatpush.msra.mxu0 0.0
  %8484 = vmatpush.msra.mxu0 %v8128
  %8485 = vmatmul.f32.gmra.mxu0 %v8187
  %v8486 = vpop.f32.mrf.mxu0
  %v8487 = vadd.f32 %v8183, %v8486
  %8488 = vdwg.mxu0
  %8489 = vmatpush.msra.mxu0 0.0
  %8490 = vmatpush.msra.mxu0 0.0
  %8491 = vmatpush.msra.mxu0 0.0
  %8492 = vmatpush.msra.mxu0 0.0
  %8493 = vmatpush.msra.mxu0 0.0
  %8494 = vmatpush.msra.mxu0 0.0
  %8495 = vmatpush.msra.mxu0 0.0
  %8496 = vmatpush.msra.mxu0 0.0
  %8497 = vmatpush.msra.mxu0 0.0
  %8498 = vmatpush.msra.mxu0 0.0
  %8499 = vmatpush.msra.mxu0 0.0
  %8500 = vmatpush.msra.mxu0 0.0
  %8501 = vmatpush.msra.mxu0 0.0
  %8502 = vmatpush.msra.mxu0 0.0
  %8503 = vmatpush.msra.mxu0 0.0
  %8504 = vmatpush.msra.mxu0 %v8129
  %8505 = vmatmul.f32.gmra.mxu0 %v8187
  %v8506 = vpop.f32.mrf.mxu0
  %v8507 = vadd.f32 %v8183, %v8506
  %8508 = vdwg.mxu0
  %8509 = vmatpush.msra.mxu0 0.0
  %8510 = vmatpush.msra.mxu0 0.0
  %8511 = vmatpush.msra.mxu0 0.0
  %8512 = vmatpush.msra.mxu0 0.0
  %8513 = vmatpush.msra.mxu0 0.0
  %8514 = vmatpush.msra.mxu0 0.0
  %8515 = vmatpush.msra.mxu0 0.0
  %8516 = vmatpush.msra.mxu0 0.0
  %8517 = vmatpush.msra.mxu0 0.0
  %8518 = vmatpush.msra.mxu0 0.0
  %8519 = vmatpush.msra.mxu0 0.0
  %8520 = vmatpush.msra.mxu0 0.0
  %8521 = vmatpush.msra.mxu0 0.0
  %8522 = vmatpush.msra.mxu0 0.0
  %8523 = vmatpush.msra.mxu0 0.0
  %8524 = vmatpush.msra.mxu0 %v8130
  %8525 = vmatmul.f32.gmra.mxu0 %v8187
  %v8526 = vpop.f32.mrf.mxu0
  %v8527 = vadd.f32 %v8183, %v8526
  %8528 = vdwg.mxu0
  %8529 = vmatpush.msra.mxu0 0.0
  %8530 = vmatpush.msra.mxu0 0.0
  %8531 = vmatpush.msra.mxu0 0.0
  %8532 = vmatpush.msra.mxu0 0.0
  %8533 = vmatpush.msra.mxu0 0.0
  %8534 = vmatpush.msra.mxu0 0.0
  %8535 = vmatpush.msra.mxu0 0.0
  %8536 = vmatpush.msra.mxu0 0.0
  %8537 = vmatpush.msra.mxu0 0.0
  %8538 = vmatpush.msra.mxu0 0.0
  %8539 = vmatpush.msra.mxu0 0.0
  %8540 = vmatpush.msra.mxu0 0.0
  %8541 = vmatpush.msra.mxu0 0.0
  %8542 = vmatpush.msra.mxu0 0.0
  %8543 = vmatpush.msra.mxu0 0.0
  %8544 = vmatpush.msra.mxu0 %v8131
  %8545 = vmatmul.f32.gmra.mxu0 %v8187
  %v8546 = vpop.f32.mrf.mxu0
  %v8547 = vadd.f32 %v8183, %v8546
  %8548 = vdwg.mxu0
  %8549 = vmatpush.msra.mxu0 0.0
  %8550 = vmatpush.msra.mxu0 0.0
  %8551 = vmatpush.msra.mxu0 0.0
  %8552 = vmatpush.msra.mxu0 0.0
  %8553 = vmatpush.msra.mxu0 0.0
  %8554 = vmatpush.msra.mxu0 0.0
  %8555 = vmatpush.msra.mxu0 0.0
  %8556 = vmatpush.msra.mxu0 0.0
  %8557 = vmatpush.msra.mxu0 0.0
  %8558 = vmatpush.msra.mxu0 0.0
  %8559 = vmatpush.msra.mxu0 0.0
  %8560 = vmatpush.msra.mxu0 0.0
  %8561 = vmatpush.msra.mxu0 0.0
  %8562 = vmatpush.msra.mxu0 0.0
  %8563 = vmatpush.msra.mxu0 0.0
  %8564 = vmatpush.msra.mxu0 %v8132
  %8565 = vmatmul.f32.gmra.mxu0 %v8187
  %v8566 = vpop.f32.mrf.mxu0
  %v8567 = vadd.f32 %v8183, %v8566
  %8568 = vdwg.mxu0
  %8569 = vmatpush.msra.mxu0 0.0
  %8570 = vmatpush.msra.mxu0 0.0
  %8571 = vmatpush.msra.mxu0 0.0
  %8572 = vmatpush.msra.mxu0 0.0
  %8573 = vmatpush.msra.mxu0 0.0
  %8574 = vmatpush.msra.mxu0 0.0
  %8575 = vmatpush.msra.mxu0 0.0
  %8576 = vmatpush.msra.mxu0 0.0
  %8577 = vmatpush.msra.mxu0 0.0
  %8578 = vmatpush.msra.mxu0 0.0
  %8579 = vmatpush.msra.mxu0 0.0
  %8580 = vmatpush.msra.mxu0 0.0
  %8581 = vmatpush.msra.mxu0 0.0
  %8582 = vmatpush.msra.mxu0 0.0
  %8583 = vmatpush.msra.mxu0 0.0
  %8584 = vmatpush.msra.mxu0 %v8133
  %8585 = vmatmul.f32.gmra.mxu0 %v8187
  %v8586 = vpop.f32.mrf.mxu0
  %v8587 = vadd.f32 %v8183, %v8586
  %8588 = vdwg.mxu0
  %8589 = vmatpush.msra.mxu0 0.0
  %8590 = vmatpush.msra.mxu0 0.0
  %8591 = vmatpush.msra.mxu0 0.0
  %8592 = vmatpush.msra.mxu0 0.0
  %8593 = vmatpush.msra.mxu0 0.0
  %8594 = vmatpush.msra.mxu0 0.0
  %8595 = vmatpush.msra.mxu0 0.0
  %8596 = vmatpush.msra.mxu0 0.0
  %8597 = vmatpush.msra.mxu0 0.0
  %8598 = vmatpush.msra.mxu0 0.0
  %8599 = vmatpush.msra.mxu0 0.0
  %8600 = vmatpush.msra.mxu0 0.0
  %8601 = vmatpush.msra.mxu0 0.0
  %8602 = vmatpush.msra.mxu0 0.0
  %8603 = vmatpush.msra.mxu0 0.0
  %8604 = vmatpush.msra.mxu0 %v8134
  %8605 = vmatmul.f32.gmra.mxu0 %v8187
  %v8606 = vpop.f32.mrf.mxu0
  %v8607 = vadd.f32 %v8183, %v8606
  %8608 = vdwg.mxu0
  %8609 = vmatpush.msra.mxu0 0.0
  %8610 = vmatpush.msra.mxu0 0.0
  %8611 = vmatpush.msra.mxu0 0.0
  %8612 = vmatpush.msra.mxu0 0.0
  %8613 = vmatpush.msra.mxu0 0.0
  %8614 = vmatpush.msra.mxu0 0.0
  %8615 = vmatpush.msra.mxu0 0.0
  %8616 = vmatpush.msra.mxu0 0.0
  %8617 = vmatpush.msra.mxu0 0.0
  %8618 = vmatpush.msra.mxu0 0.0
  %8619 = vmatpush.msra.mxu0 0.0
  %8620 = vmatpush.msra.mxu0 0.0
  %8621 = vmatpush.msra.mxu0 0.0
  %8622 = vmatpush.msra.mxu0 0.0
  %8623 = vmatpush.msra.mxu0 0.0
  %8624 = vmatpush.msra.mxu0 %v8135
  %8625 = vmatmul.f32.gmra.mxu0 %v8187
  %v8626 = vpop.f32.mrf.mxu0
  %v8627 = vadd.f32 %v8183, %v8626
  %8628 = vdwg.mxu0
  %8629 = vmatpush.msra.mxu0 0.0
  %8630 = vmatpush.msra.mxu0 0.0
  %8631 = vmatpush.msra.mxu0 0.0
  %8632 = vmatpush.msra.mxu0 0.0
  %8633 = vmatpush.msra.mxu0 0.0
  %8634 = vmatpush.msra.mxu0 0.0
  %8635 = vmatpush.msra.mxu0 0.0
  %8636 = vmatpush.msra.mxu0 0.0
  %8637 = vmatpush.msra.mxu0 0.0
  %8638 = vmatpush.msra.mxu0 0.0
  %8639 = vmatpush.msra.mxu0 0.0
  %8640 = vmatpush.msra.mxu0 0.0
  %8641 = vmatpush.msra.mxu0 0.0
  %8642 = vmatpush.msra.mxu0 0.0
  %8643 = vmatpush.msra.mxu0 0.0
  %8644 = vmatpush.msra.mxu0 %v8136
  %8645 = vmatmul.f32.gmra.mxu0 %v8187
  %v8646 = vpop.f32.mrf.mxu0
  %v8647 = vadd.f32 %v8183, %v8646
  %8648 = vdwg.mxu0
  %8649 = vmatpush.msra.mxu0 0.0
  %8650 = vmatpush.msra.mxu0 0.0
  %8651 = vmatpush.msra.mxu0 0.0
  %8652 = vmatpush.msra.mxu0 0.0
  %8653 = vmatpush.msra.mxu0 0.0
  %8654 = vmatpush.msra.mxu0 0.0
  %8655 = vmatpush.msra.mxu0 0.0
  %8656 = vmatpush.msra.mxu0 0.0
  %8657 = vmatpush.msra.mxu0 0.0
  %8658 = vmatpush.msra.mxu0 0.0
  %8659 = vmatpush.msra.mxu0 0.0
  %8660 = vmatpush.msra.mxu0 0.0
  %8661 = vmatpush.msra.mxu0 0.0
  %8662 = vmatpush.msra.mxu0 0.0
  %8663 = vmatpush.msra.mxu0 0.0
  %8664 = vmatpush.msra.mxu0 %v8137
  %8665 = vmatmul.f32.gmra.mxu0 %v8187
  %v8666 = vpop.f32.mrf.mxu0
  %v8667 = vadd.f32 %v8183, %v8666
  %8668 = vdwg.mxu0
  %8669 = vmatpush.msra.mxu0 0.0
  %8670 = vmatpush.msra.mxu0 0.0
  %8671 = vmatpush.msra.mxu0 0.0
  %8672 = vmatpush.msra.mxu0 0.0
  %8673 = vmatpush.msra.mxu0 0.0
  %8674 = vmatpush.msra.mxu0 0.0
  %8675 = vmatpush.msra.mxu0 0.0
  %8676 = vmatpush.msra.mxu0 0.0
  %8677 = vmatpush.msra.mxu0 0.0
  %8678 = vmatpush.msra.mxu0 0.0
  %8679 = vmatpush.msra.mxu0 0.0
  %8680 = vmatpush.msra.mxu0 0.0
  %8681 = vmatpush.msra.mxu0 0.0
  %8682 = vmatpush.msra.mxu0 0.0
  %8683 = vmatpush.msra.mxu0 0.0
  %8684 = vmatpush.msra.mxu0 %v8138
  %8685 = vmatmul.f32.gmra.mxu0 %v8187
  %v8686 = vpop.f32.mrf.mxu0
  %v8687 = vadd.f32 %v8183, %v8686
  %8688 = vdwg.mxu0
  %8689 = vmatpush.msra.mxu0 0.0
  %8690 = vmatpush.msra.mxu0 0.0
  %8691 = vmatpush.msra.mxu0 0.0
  %8692 = vmatpush.msra.mxu0 0.0
  %8693 = vmatpush.msra.mxu0 0.0
  %8694 = vmatpush.msra.mxu0 0.0
  %8695 = vmatpush.msra.mxu0 0.0
  %8696 = vmatpush.msra.mxu0 0.0
  %8697 = vmatpush.msra.mxu0 0.0
  %8698 = vmatpush.msra.mxu0 0.0
  %8699 = vmatpush.msra.mxu0 0.0
  %8700 = vmatpush.msra.mxu0 0.0
  %8701 = vmatpush.msra.mxu0 0.0
  %8702 = vmatpush.msra.mxu0 0.0
  %8703 = vmatpush.msra.mxu0 0.0
  %8704 = vmatpush.msra.mxu0 %v8139
  %8705 = vmatmul.f32.gmra.mxu0 %v8187
  %v8706 = vpop.f32.mrf.mxu0
  %v8707 = vadd.f32 %v8183, %v8706
  %8708 = vdwg.mxu0
  %8709 = vmatpush.msra.mxu0 0.0
  %8710 = vmatpush.msra.mxu0 0.0
  %8711 = vmatpush.msra.mxu0 0.0
  %8712 = vmatpush.msra.mxu0 0.0
  %8713 = vmatpush.msra.mxu0 0.0
  %8714 = vmatpush.msra.mxu0 0.0
  %8715 = vmatpush.msra.mxu0 0.0
  %8716 = vmatpush.msra.mxu0 0.0
  %8717 = vmatpush.msra.mxu0 0.0
  %8718 = vmatpush.msra.mxu0 0.0
  %8719 = vmatpush.msra.mxu0 0.0
  %8720 = vmatpush.msra.mxu0 0.0
  %8721 = vmatpush.msra.mxu0 0.0
  %8722 = vmatpush.msra.mxu0 0.0
  %8723 = vmatpush.msra.mxu0 0.0
  %8724 = vmatpush.msra.mxu0 %v8140
  %8725 = vmatmul.f32.gmra.mxu0 %v8187
  %v8726 = vpop.f32.mrf.mxu0
  %v8727 = vadd.f32 %v8183, %v8726
  %8728 = vdwg.mxu0
  %8729 = vmatpush.msra.mxu0 0.0
  %8730 = vmatpush.msra.mxu0 0.0
  %8731 = vmatpush.msra.mxu0 0.0
  %8732 = vmatpush.msra.mxu0 0.0
  %8733 = vmatpush.msra.mxu0 0.0
  %8734 = vmatpush.msra.mxu0 0.0
  %8735 = vmatpush.msra.mxu0 0.0
  %8736 = vmatpush.msra.mxu0 0.0
  %8737 = vmatpush.msra.mxu0 0.0
  %8738 = vmatpush.msra.mxu0 0.0
  %8739 = vmatpush.msra.mxu0 0.0
  %8740 = vmatpush.msra.mxu0 0.0
  %8741 = vmatpush.msra.mxu0 0.0
  %8742 = vmatpush.msra.mxu0 0.0
  %8743 = vmatpush.msra.mxu0 0.0
  %8744 = vmatpush.msra.mxu0 %v8141
  %8745 = vmatmul.f32.gmra.mxu0 %v8187
  %v8746 = vpop.f32.mrf.mxu0
  %v8747 = vadd.f32 %v8183, %v8746
  %8748 = vdwg.mxu0
  %8749 = vmatpush.msra.mxu0 0.0
  %8750 = vmatpush.msra.mxu0 0.0
  %8751 = vmatpush.msra.mxu0 0.0
  %8752 = vmatpush.msra.mxu0 0.0
  %8753 = vmatpush.msra.mxu0 0.0
  %8754 = vmatpush.msra.mxu0 0.0
  %8755 = vmatpush.msra.mxu0 0.0
  %8756 = vmatpush.msra.mxu0 0.0
  %8757 = vmatpush.msra.mxu0 0.0
  %8758 = vmatpush.msra.mxu0 0.0
  %8759 = vmatpush.msra.mxu0 0.0
  %8760 = vmatpush.msra.mxu0 0.0
  %8761 = vmatpush.msra.mxu0 0.0
  %8762 = vmatpush.msra.mxu0 0.0
  %8763 = vmatpush.msra.mxu0 0.0
  %8764 = vmatpush.msra.mxu0 %v8142
  %8765 = vmatmul.f32.gmra.mxu0 %v8187
  %v8766 = vpop.f32.mrf.mxu0
  %v8767 = vadd.f32 %v8183, %v8766
  %8768 = vdwg.mxu0
  %8769 = vmatpush.msra.mxu0 0.0
  %8770 = vmatpush.msra.mxu0 0.0
  %8771 = vmatpush.msra.mxu0 0.0
  %8772 = vmatpush.msra.mxu0 0.0
  %8773 = vmatpush.msra.mxu0 0.0
  %8774 = vmatpush.msra.mxu0 0.0
  %8775 = vmatpush.msra.mxu0 0.0
  %8776 = vmatpush.msra.mxu0 0.0
  %8777 = vmatpush.msra.mxu0 0.0
  %8778 = vmatpush.msra.mxu0 0.0
  %8779 = vmatpush.msra.mxu0 0.0
  %8780 = vmatpush.msra.mxu0 0.0
  %8781 = vmatpush.msra.mxu0 0.0
  %8782 = vmatpush.msra.mxu0 0.0
  %8783 = vmatpush.msra.mxu0 0.0
  %8784 = vmatpush.msra.mxu0 %v8143
  %8785 = vmatmul.f32.gmra.mxu0 %v8187
  %v8786 = vpop.f32.mrf.mxu0
  %v8787 = vadd.f32 %v8183, %v8786
  %8788 = vdwg.mxu0
  %8789 = vmatpush.msra.mxu0 0.0
  %8790 = vmatpush.msra.mxu0 0.0
  %8791 = vmatpush.msra.mxu0 0.0
  %8792 = vmatpush.msra.mxu0 0.0
  %8793 = vmatpush.msra.mxu0 0.0
  %8794 = vmatpush.msra.mxu0 0.0
  %8795 = vmatpush.msra.mxu0 0.0
  %8796 = vmatpush.msra.mxu0 0.0
  %8797 = vmatpush.msra.mxu0 0.0
  %8798 = vmatpush.msra.mxu0 0.0
  %8799 = vmatpush.msra.mxu0 0.0
  %8800 = vmatpush.msra.mxu0 0.0
  %8801 = vmatpush.msra.mxu0 0.0
  %8802 = vmatpush.msra.mxu0 0.0
  %8803 = vmatpush.msra.mxu0 0.0
  %8804 = vmatpush.msra.mxu0 %v8144
  %8805 = vmatmul.f32.gmra.mxu0 %v8187
  %v8806 = vpop.f32.mrf.mxu0
  %v8807 = vadd.f32 %v8183, %v8806
  %8808 = vdwg.mxu0
  %8809 = vmatpush.msra.mxu0 0.0
  %8810 = vmatpush.msra.mxu0 0.0
  %8811 = vmatpush.msra.mxu0 0.0
  %8812 = vmatpush.msra.mxu0 0.0
  %8813 = vmatpush.msra.mxu0 0.0
  %8814 = vmatpush.msra.mxu0 0.0
  %8815 = vmatpush.msra.mxu0 0.0
  %8816 = vmatpush.msra.mxu0 0.0
  %8817 = vmatpush.msra.mxu0 0.0
  %8818 = vmatpush.msra.mxu0 0.0
  %8819 = vmatpush.msra.mxu0 0.0
  %8820 = vmatpush.msra.mxu0 0.0
  %8821 = vmatpush.msra.mxu0 0.0
  %8822 = vmatpush.msra.mxu0 0.0
  %8823 = vmatpush.msra.mxu0 0.0
  %8824 = vmatpush.msra.mxu0 %v8145
  %8825 = vmatmul.f32.gmra.mxu0 %v8187
  %v8826 = vpop.f32.mrf.mxu0
  %v8827 = vadd.f32 %v8183, %v8826
  %8828 = vdwg.mxu0
  %8829 = vmatpush.msra.mxu0 0.0
  %8830 = vmatpush.msra.mxu0 0.0
  %8831 = vmatpush.msra.mxu0 0.0
  %8832 = vmatpush.msra.mxu0 0.0
  %8833 = vmatpush.msra.mxu0 0.0
  %8834 = vmatpush.msra.mxu0 0.0
  %8835 = vmatpush.msra.mxu0 0.0
  %8836 = vmatpush.msra.mxu0 0.0
  %8837 = vmatpush.msra.mxu0 0.0
  %8838 = vmatpush.msra.mxu0 0.0
  %8839 = vmatpush.msra.mxu0 0.0
  %8840 = vmatpush.msra.mxu0 0.0
  %8841 = vmatpush.msra.mxu0 0.0
  %8842 = vmatpush.msra.mxu0 0.0
  %8843 = vmatpush.msra.mxu0 0.0
  %8844 = vmatpush.msra.mxu0 %v8146
  %8845 = vmatmul.f32.gmra.mxu0 %v8187
  %v8846 = vpop.f32.mrf.mxu0
  %v8847 = vadd.f32 %v8183, %v8846
  %8848 = vdwg.mxu0
  %8849 = vmatpush.msra.mxu0 0.0
  %8850 = vmatpush.msra.mxu0 0.0
  %8851 = vmatpush.msra.mxu0 0.0
  %8852 = vmatpush.msra.mxu0 0.0
  %8853 = vmatpush.msra.mxu0 0.0
  %8854 = vmatpush.msra.mxu0 0.0
  %8855 = vmatpush.msra.mxu0 0.0
  %8856 = vmatpush.msra.mxu0 0.0
  %8857 = vmatpush.msra.mxu0 0.0
  %8858 = vmatpush.msra.mxu0 0.0
  %8859 = vmatpush.msra.mxu0 0.0
  %8860 = vmatpush.msra.mxu0 0.0
  %8861 = vmatpush.msra.mxu0 0.0
  %8862 = vmatpush.msra.mxu0 0.0
  %8863 = vmatpush.msra.mxu0 0.0
  %8864 = vmatpush.msra.mxu0 %v8147
  %8865 = vmatmul.f32.gmra.mxu0 %v8187
  %v8866 = vpop.f32.mrf.mxu0
  %v8867 = vadd.f32 %v8183, %v8866
  %8868 = vdwg.mxu0
  %8869 = vmatpush.msra.mxu0 0.0
  %8870 = vmatpush.msra.mxu0 0.0
  %8871 = vmatpush.msra.mxu0 0.0
  %8872 = vmatpush.msra.mxu0 0.0
  %8873 = vmatpush.msra.mxu0 0.0
  %8874 = vmatpush.msra.mxu0 0.0
  %8875 = vmatpush.msra.mxu0 0.0
  %8876 = vmatpush.msra.mxu0 0.0
  %8877 = vmatpush.msra.mxu0 0.0
  %8878 = vmatpush.msra.mxu0 0.0
  %8879 = vmatpush.msra.mxu0 0.0
  %8880 = vmatpush.msra.mxu0 0.0
  %8881 = vmatpush.msra.mxu0 0.0
  %8882 = vmatpush.msra.mxu0 0.0
  %8883 = vmatpush.msra.mxu0 0.0
  %8884 = vmatpush.msra.mxu0 %v8148
  %8885 = vmatmul.f32.gmra.mxu0 %v8187
  %v8886 = vpop.f32.mrf.mxu0
  %v8887 = vadd.f32 %v8183, %v8886
  %8888 = vdwg.mxu0
  %8889 = vmatpush.msra.mxu0 0.0
  %8890 = vmatpush.msra.mxu0 0.0
  %8891 = vmatpush.msra.mxu0 0.0
  %8892 = vmatpush.msra.mxu0 0.0
  %8893 = vmatpush.msra.mxu0 0.0
  %8894 = vmatpush.msra.mxu0 0.0
  %8895 = vmatpush.msra.mxu0 0.0
  %8896 = vmatpush.msra.mxu0 0.0
  %8897 = vmatpush.msra.mxu0 0.0
  %8898 = vmatpush.msra.mxu0 0.0
  %8899 = vmatpush.msra.mxu0 0.0
  %8900 = vmatpush.msra.mxu0 0.0
  %8901 = vmatpush.msra.mxu0 0.0
  %8902 = vmatpush.msra.mxu0 0.0
  %8903 = vmatpush.msra.mxu0 0.0
  %8904 = vmatpush.msra.mxu0 %v8149
  %8905 = vmatmul.f32.gmra.mxu0 %v8187
  %v8906 = vpop.f32.mrf.mxu0
  %v8907 = vadd.f32 %v8183, %v8906
  %8908 = vdwg.mxu0
  %8909 = vmatpush.msra.mxu0 0.0
  %8910 = vmatpush.msra.mxu0 0.0
  %8911 = vmatpush.msra.mxu0 0.0
  %8912 = vmatpush.msra.mxu0 0.0
  %8913 = vmatpush.msra.mxu0 0.0
  %8914 = vmatpush.msra.mxu0 0.0
  %8915 = vmatpush.msra.mxu0 0.0
  %8916 = vmatpush.msra.mxu0 0.0
  %8917 = vmatpush.msra.mxu0 0.0
  %8918 = vmatpush.msra.mxu0 0.0
  %8919 = vmatpush.msra.mxu0 0.0
  %8920 = vmatpush.msra.mxu0 0.0
  %8921 = vmatpush.msra.mxu0 0.0
  %8922 = vmatpush.msra.mxu0 0.0
  %8923 = vmatpush.msra.mxu0 0.0
  %8924 = vmatpush.msra.mxu0 %v8150
  %8925 = vmatmul.f32.gmra.mxu0 %v8187
  %v8926 = vpop.f32.mrf.mxu0
  %v8927 = vadd.f32 %v8183, %v8926
  %8928 = vdwg.mxu0
  %8929 = vmatpush.msra.mxu0 0.0
  %8930 = vmatpush.msra.mxu0 0.0
  %8931 = vmatpush.msra.mxu0 0.0
  %8932 = vmatpush.msra.mxu0 0.0
  %8933 = vmatpush.msra.mxu0 0.0
  %8934 = vmatpush.msra.mxu0 0.0
  %8935 = vmatpush.msra.mxu0 0.0
  %8936 = vmatpush.msra.mxu0 0.0
  %8937 = vmatpush.msra.mxu0 0.0
  %8938 = vmatpush.msra.mxu0 0.0
  %8939 = vmatpush.msra.mxu0 0.0
  %8940 = vmatpush.msra.mxu0 0.0
  %8941 = vmatpush.msra.mxu0 0.0
  %8942 = vmatpush.msra.mxu0 0.0
  %8943 = vmatpush.msra.mxu0 0.0
  %8944 = vmatpush.msra.mxu0 %v8151
  %8945 = vmatmul.f32.gmra.mxu0 %v8187
  %v8946 = vpop.f32.mrf.mxu0
  %v8947 = vadd.f32 %v8183, %v8946
  %8948 = vdwg.mxu0
  %8949 = vmatpush.msra.mxu0 0.0
  %8950 = vmatpush.msra.mxu0 0.0
  %8951 = vmatpush.msra.mxu0 0.0
  %8952 = vmatpush.msra.mxu0 0.0
  %8953 = vmatpush.msra.mxu0 0.0
  %8954 = vmatpush.msra.mxu0 0.0
  %8955 = vmatpush.msra.mxu0 0.0
  %8956 = vmatpush.msra.mxu0 0.0
  %8957 = vmatpush.msra.mxu0 0.0
  %8958 = vmatpush.msra.mxu0 0.0
  %8959 = vmatpush.msra.mxu0 0.0
  %8960 = vmatpush.msra.mxu0 0.0
  %8961 = vmatpush.msra.mxu0 0.0
  %8962 = vmatpush.msra.mxu0 0.0
  %8963 = vmatpush.msra.mxu0 0.0
  %8964 = vmatpush.msra.mxu0 %v8152
  %8965 = vmatmul.f32.gmra.mxu0 %v8187
  %v8966 = vpop.f32.mrf.mxu0
  %v8967 = vadd.f32 %v8183, %v8966
  %8968 = vdwg.mxu0
  %8969 = vmatpush.msra.mxu0 0.0
  %8970 = vmatpush.msra.mxu0 0.0
  %8971 = vmatpush.msra.mxu0 0.0
  %8972 = vmatpush.msra.mxu0 0.0
  %8973 = vmatpush.msra.mxu0 0.0
  %8974 = vmatpush.msra.mxu0 0.0
  %8975 = vmatpush.msra.mxu0 0.0
  %8976 = vmatpush.msra.mxu0 0.0
  %8977 = vmatpush.msra.mxu0 0.0
  %8978 = vmatpush.msra.mxu0 0.0
  %8979 = vmatpush.msra.mxu0 0.0
  %8980 = vmatpush.msra.mxu0 0.0
  %8981 = vmatpush.msra.mxu0 0.0
  %8982 = vmatpush.msra.mxu0 0.0
  %8983 = vmatpush.msra.mxu0 0.0
  %8984 = vmatpush.msra.mxu0 %v8153
  %8985 = vmatmul.f32.gmra.mxu0 %v8187
  %v8986 = vpop.f32.mrf.mxu0
  %v8987 = vadd.f32 %v8183, %v8986
  %8988 = vdwg.mxu0
  %8989 = vmatpush.msra.mxu0 0.0
  %8990 = vmatpush.msra.mxu0 0.0
  %8991 = vmatpush.msra.mxu0 0.0
  %8992 = vmatpush.msra.mxu0 0.0
  %8993 = vmatpush.msra.mxu0 0.0
  %8994 = vmatpush.msra.mxu0 0.0
  %8995 = vmatpush.msra.mxu0 0.0
  %8996 = vmatpush.msra.mxu0 0.0
  %8997 = vmatpush.msra.mxu0 0.0
  %8998 = vmatpush.msra.mxu0 0.0
  %8999 = vmatpush.msra.mxu0 0.0
  %9000 = vmatpush.msra.mxu0 0.0
  %9001 = vmatpush.msra.mxu0 0.0
  %9002 = vmatpush.msra.mxu0 0.0
  %9003 = vmatpush.msra.mxu0 0.0
  %9004 = vmatpush.msra.mxu0 %v8154
  %9005 = vmatmul.f32.gmra.mxu0 %v8187
  %v9006 = vpop.f32.mrf.mxu0
  %v9007 = vadd.f32 %v8183, %v9006
  %9008 = vdwg.mxu0
  %9009 = vmatpush.msra.mxu0 0.0
  %9010 = vmatpush.msra.mxu0 0.0
  %9011 = vmatpush.msra.mxu0 0.0
  %9012 = vmatpush.msra.mxu0 0.0
  %9013 = vmatpush.msra.mxu0 0.0
  %9014 = vmatpush.msra.mxu0 0.0
  %9015 = vmatpush.msra.mxu0 0.0
  %9016 = vmatpush.msra.mxu0 0.0
  %9017 = vmatpush.msra.mxu0 0.0
  %9018 = vmatpush.msra.mxu0 0.0
  %9019 = vmatpush.msra.mxu0 0.0
  %9020 = vmatpush.msra.mxu0 0.0
  %9021 = vmatpush.msra.mxu0 0.0
  %9022 = vmatpush.msra.mxu0 0.0
  %9023 = vmatpush.msra.mxu0 0.0
  %9024 = vmatpush.msra.mxu0 %v8155
  %9025 = vmatmul.f32.gmra.mxu0 %v8187
  %v9026 = vpop.f32.mrf.mxu0
  %v9027 = vadd.f32 %v8183, %v9026
  %9028 = vdwg.mxu0
  %9029 = vmatpush.msra.mxu0 0.0
  %9030 = vmatpush.msra.mxu0 0.0
  %9031 = vmatpush.msra.mxu0 0.0
  %9032 = vmatpush.msra.mxu0 0.0
  %9033 = vmatpush.msra.mxu0 0.0
  %9034 = vmatpush.msra.mxu0 0.0
  %9035 = vmatpush.msra.mxu0 0.0
  %9036 = vmatpush.msra.mxu0 0.0
  %9037 = vmatpush.msra.mxu0 0.0
  %9038 = vmatpush.msra.mxu0 0.0
  %9039 = vmatpush.msra.mxu0 0.0
  %9040 = vmatpush.msra.mxu0 0.0
  %9041 = vmatpush.msra.mxu0 0.0
  %9042 = vmatpush.msra.mxu0 0.0
  %9043 = vmatpush.msra.mxu0 0.0
  %9044 = vmatpush.msra.mxu0 %v8156
  %9045 = vmatmul.f32.gmra.mxu0 %v8187
  %v9046 = vpop.f32.mrf.mxu0
  %v9047 = vadd.f32 %v8183, %v9046
  %9048 = vdwg.mxu0
  %9049 = vmatpush.msra.mxu0 0.0
  %9050 = vmatpush.msra.mxu0 0.0
  %9051 = vmatpush.msra.mxu0 0.0
  %9052 = vmatpush.msra.mxu0 0.0
  %9053 = vmatpush.msra.mxu0 0.0
  %9054 = vmatpush.msra.mxu0 0.0
  %9055 = vmatpush.msra.mxu0 0.0
  %9056 = vmatpush.msra.mxu0 0.0
  %9057 = vmatpush.msra.mxu0 0.0
  %9058 = vmatpush.msra.mxu0 0.0
  %9059 = vmatpush.msra.mxu0 0.0
  %9060 = vmatpush.msra.mxu0 0.0
  %9061 = vmatpush.msra.mxu0 0.0
  %9062 = vmatpush.msra.mxu0 0.0
  %9063 = vmatpush.msra.mxu0 0.0
  %9064 = vmatpush.msra.mxu0 %v8157
  %9065 = vmatmul.f32.gmra.mxu0 %v8187
  %v9066 = vpop.f32.mrf.mxu0
  %v9067 = vadd.f32 %v8183, %v9066
  %9068 = vdwg.mxu0
  %9069 = vmatpush.msra.mxu0 0.0
  %9070 = vmatpush.msra.mxu0 0.0
  %9071 = vmatpush.msra.mxu0 0.0
  %9072 = vmatpush.msra.mxu0 0.0
  %9073 = vmatpush.msra.mxu0 0.0
  %9074 = vmatpush.msra.mxu0 0.0
  %9075 = vmatpush.msra.mxu0 0.0
  %9076 = vmatpush.msra.mxu0 0.0
  %9077 = vmatpush.msra.mxu0 0.0
  %9078 = vmatpush.msra.mxu0 0.0
  %9079 = vmatpush.msra.mxu0 0.0
  %9080 = vmatpush.msra.mxu0 0.0
  %9081 = vmatpush.msra.mxu0 0.0
  %9082 = vmatpush.msra.mxu0 0.0
  %9083 = vmatpush.msra.mxu0 0.0
  %9084 = vmatpush.msra.mxu0 %v8158
  %9085 = vmatmul.f32.gmra.mxu0 %v8187
  %v9086 = vpop.f32.mrf.mxu0
  %v9087 = vadd.f32 %v8183, %v9086
  %9088 = vdwg.mxu0
  %9089 = vmatpush.msra.mxu0 0.0
  %9090 = vmatpush.msra.mxu0 0.0
  %9091 = vmatpush.msra.mxu0 0.0
  %9092 = vmatpush.msra.mxu0 0.0
  %9093 = vmatpush.msra.mxu0 0.0
  %9094 = vmatpush.msra.mxu0 0.0
  %9095 = vmatpush.msra.mxu0 0.0
  %9096 = vmatpush.msra.mxu0 0.0
  %9097 = vmatpush.msra.mxu0 0.0
  %9098 = vmatpush.msra.mxu0 0.0
  %9099 = vmatpush.msra.mxu0 0.0
  %9100 = vmatpush.msra.mxu0 0.0
  %9101 = vmatpush.msra.mxu0 0.0
  %9102 = vmatpush.msra.mxu0 0.0
  %9103 = vmatpush.msra.mxu0 0.0
  %9104 = vmatpush.msra.mxu0 %v8159
  %9105 = vmatmul.f32.gmra.mxu0 %v8187
  %v9106 = vpop.f32.mrf.mxu0
  %v9107 = vadd.f32 %v8183, %v9106
  %9108 = vdwg.mxu0
  %9109 = vmatpush.msra.mxu0 0.0
  %9110 = vmatpush.msra.mxu0 0.0
  %9111 = vmatpush.msra.mxu0 0.0
  %9112 = vmatpush.msra.mxu0 0.0
  %9113 = vmatpush.msra.mxu0 0.0
  %9114 = vmatpush.msra.mxu0 0.0
  %9115 = vmatpush.msra.mxu0 0.0
  %9116 = vmatpush.msra.mxu0 0.0
  %9117 = vmatpush.msra.mxu0 0.0
  %9118 = vmatpush.msra.mxu0 0.0
  %9119 = vmatpush.msra.mxu0 0.0
  %9120 = vmatpush.msra.mxu0 0.0
  %9121 = vmatpush.msra.mxu0 0.0
  %9122 = vmatpush.msra.mxu0 0.0
  %9123 = vmatpush.msra.mxu0 0.0
  %9124 = vmatpush.msra.mxu0 %v8160
  %9125 = vmatmul.f32.gmra.mxu0 %v8187
  %v9126 = vpop.f32.mrf.mxu0
  %v9127 = vadd.f32 %v8183, %v9126
  %9128 = vdwg.mxu0
  %9129 = vmatpush.msra.mxu0 0.0
  %9130 = vmatpush.msra.mxu0 0.0
  %9131 = vmatpush.msra.mxu0 0.0
  %9132 = vmatpush.msra.mxu0 0.0
  %9133 = vmatpush.msra.mxu0 0.0
  %9134 = vmatpush.msra.mxu0 0.0
  %9135 = vmatpush.msra.mxu0 0.0
  %9136 = vmatpush.msra.mxu0 0.0
  %9137 = vmatpush.msra.mxu0 0.0
  %9138 = vmatpush.msra.mxu0 0.0
  %9139 = vmatpush.msra.mxu0 0.0
  %9140 = vmatpush.msra.mxu0 0.0
  %9141 = vmatpush.msra.mxu0 0.0
  %9142 = vmatpush.msra.mxu0 0.0
  %9143 = vmatpush.msra.mxu0 0.0
  %9144 = vmatpush.msra.mxu0 %v8161
  %9145 = vmatmul.f32.gmra.mxu0 %v8187
  %v9146 = vpop.f32.mrf.mxu0
  %v9147 = vadd.f32 %v8183, %v9146
  %9148 = vdwg.mxu0
  %9149 = vmatpush.msra.mxu0 0.0
  %9150 = vmatpush.msra.mxu0 0.0
  %9151 = vmatpush.msra.mxu0 0.0
  %9152 = vmatpush.msra.mxu0 0.0
  %9153 = vmatpush.msra.mxu0 0.0
  %9154 = vmatpush.msra.mxu0 0.0
  %9155 = vmatpush.msra.mxu0 0.0
  %9156 = vmatpush.msra.mxu0 0.0
  %9157 = vmatpush.msra.mxu0 0.0
  %9158 = vmatpush.msra.mxu0 0.0
  %9159 = vmatpush.msra.mxu0 0.0
  %9160 = vmatpush.msra.mxu0 0.0
  %9161 = vmatpush.msra.mxu0 0.0
  %9162 = vmatpush.msra.mxu0 0.0
  %9163 = vmatpush.msra.mxu0 0.0
  %9164 = vmatpush.msra.mxu0 %v8162
  %9165 = vmatmul.f32.gmra.mxu0 %v8187
  %v9166 = vpop.f32.mrf.mxu0
  %v9167 = vadd.f32 %v8183, %v9166
  %9168 = vdwg.mxu0
  %9169 = vmatpush.msra.mxu0 0.0
  %9170 = vmatpush.msra.mxu0 0.0
  %9171 = vmatpush.msra.mxu0 0.0
  %9172 = vmatpush.msra.mxu0 0.0
  %9173 = vmatpush.msra.mxu0 0.0
  %9174 = vmatpush.msra.mxu0 0.0
  %9175 = vmatpush.msra.mxu0 0.0
  %9176 = vmatpush.msra.mxu0 0.0
  %9177 = vmatpush.msra.mxu0 0.0
  %9178 = vmatpush.msra.mxu0 0.0
  %9179 = vmatpush.msra.mxu0 0.0
  %9180 = vmatpush.msra.mxu0 0.0
  %9181 = vmatpush.msra.mxu0 0.0
  %9182 = vmatpush.msra.mxu0 0.0
  %9183 = vmatpush.msra.mxu0 0.0
  %9184 = vmatpush.msra.mxu0 %v8163
  %9185 = vmatmul.f32.gmra.mxu0 %v8187
  %v9186 = vpop.f32.mrf.mxu0
  %v9187 = vadd.f32 %v8183, %v9186
  %9188 = vdwg.mxu0
  %9189 = vmatpush.msra.mxu0 0.0
  %9190 = vmatpush.msra.mxu0 0.0
  %9191 = vmatpush.msra.mxu0 0.0
  %9192 = vmatpush.msra.mxu0 0.0
  %9193 = vmatpush.msra.mxu0 0.0
  %9194 = vmatpush.msra.mxu0 0.0
  %9195 = vmatpush.msra.mxu0 0.0
  %9196 = vmatpush.msra.mxu0 0.0
  %9197 = vmatpush.msra.mxu0 0.0
  %9198 = vmatpush.msra.mxu0 0.0
  %9199 = vmatpush.msra.mxu0 0.0
  %9200 = vmatpush.msra.mxu0 0.0
  %9201 = vmatpush.msra.mxu0 0.0
  %9202 = vmatpush.msra.mxu0 0.0
  %9203 = vmatpush.msra.mxu0 0.0
  %9204 = vmatpush.msra.mxu0 %v8164
  %9205 = vmatmul.f32.gmra.mxu0 %v8187
  %v9206 = vpop.f32.mrf.mxu0
  %v9207 = vadd.f32 %v8183, %v9206
  %9208 = vdwg.mxu0
  %9209 = vmatpush.msra.mxu0 0.0
  %9210 = vmatpush.msra.mxu0 0.0
  %9211 = vmatpush.msra.mxu0 0.0
  %9212 = vmatpush.msra.mxu0 0.0
  %9213 = vmatpush.msra.mxu0 0.0
  %9214 = vmatpush.msra.mxu0 0.0
  %9215 = vmatpush.msra.mxu0 0.0
  %9216 = vmatpush.msra.mxu0 0.0
  %9217 = vmatpush.msra.mxu0 0.0
  %9218 = vmatpush.msra.mxu0 0.0
  %9219 = vmatpush.msra.mxu0 0.0
  %9220 = vmatpush.msra.mxu0 0.0
  %9221 = vmatpush.msra.mxu0 0.0
  %9222 = vmatpush.msra.mxu0 0.0
  %9223 = vmatpush.msra.mxu0 0.0
  %9224 = vmatpush.msra.mxu0 %v8165
  %9225 = vmatmul.f32.gmra.mxu0 %v8187
  %v9226 = vpop.f32.mrf.mxu0
  %v9227 = vadd.f32 %v8183, %v9226
  %9228 = vdwg.mxu0
  %9229 = vmatpush.msra.mxu0 0.0
  %9230 = vmatpush.msra.mxu0 0.0
  %9231 = vmatpush.msra.mxu0 0.0
  %9232 = vmatpush.msra.mxu0 0.0
  %9233 = vmatpush.msra.mxu0 0.0
  %9234 = vmatpush.msra.mxu0 0.0
  %9235 = vmatpush.msra.mxu0 0.0
  %9236 = vmatpush.msra.mxu0 0.0
  %9237 = vmatpush.msra.mxu0 0.0
  %9238 = vmatpush.msra.mxu0 0.0
  %9239 = vmatpush.msra.mxu0 0.0
  %9240 = vmatpush.msra.mxu0 0.0
  %9241 = vmatpush.msra.mxu0 0.0
  %9242 = vmatpush.msra.mxu0 0.0
  %9243 = vmatpush.msra.mxu0 0.0
  %9244 = vmatpush.msra.mxu0 %v8166
  %9245 = vmatmul.f32.gmra.mxu0 %v8187
  %v9246 = vpop.f32.mrf.mxu0
  %v9247 = vadd.f32 %v8183, %v9246
  %9248 = vdwg.mxu0
  %9249 = vmatpush.msra.mxu0 0.0
  %9250 = vmatpush.msra.mxu0 0.0
  %9251 = vmatpush.msra.mxu0 0.0
  %9252 = vmatpush.msra.mxu0 0.0
  %9253 = vmatpush.msra.mxu0 0.0
  %9254 = vmatpush.msra.mxu0 0.0
  %9255 = vmatpush.msra.mxu0 0.0
  %9256 = vmatpush.msra.mxu0 0.0
  %9257 = vmatpush.msra.mxu0 0.0
  %9258 = vmatpush.msra.mxu0 0.0
  %9259 = vmatpush.msra.mxu0 0.0
  %9260 = vmatpush.msra.mxu0 0.0
  %9261 = vmatpush.msra.mxu0 0.0
  %9262 = vmatpush.msra.mxu0 0.0
  %9263 = vmatpush.msra.mxu0 0.0
  %9264 = vmatpush.msra.mxu0 %v8167
  %9265 = vmatmul.f32.gmra.mxu0 %v8187
  %v9266 = vpop.f32.mrf.mxu0
  %v9267 = vadd.f32 %v8183, %v9266
  %9268 = vdwg.mxu0
  %9269 = vmatpush.msra.mxu0 0.0
  %9270 = vmatpush.msra.mxu0 0.0
  %9271 = vmatpush.msra.mxu0 0.0
  %9272 = vmatpush.msra.mxu0 0.0
  %9273 = vmatpush.msra.mxu0 0.0
  %9274 = vmatpush.msra.mxu0 0.0
  %9275 = vmatpush.msra.mxu0 0.0
  %9276 = vmatpush.msra.mxu0 0.0
  %9277 = vmatpush.msra.mxu0 0.0
  %9278 = vmatpush.msra.mxu0 0.0
  %9279 = vmatpush.msra.mxu0 0.0
  %9280 = vmatpush.msra.mxu0 0.0
  %9281 = vmatpush.msra.mxu0 0.0
  %9282 = vmatpush.msra.mxu0 0.0
  %9283 = vmatpush.msra.mxu0 0.0
  %9284 = vmatpush.msra.mxu0 %v8168
  %9285 = vmatmul.f32.gmra.mxu0 %v8187
  %v9286 = vpop.f32.mrf.mxu0
  %v9287 = vadd.f32 %v8183, %v9286
  %9288 = vdwg.mxu0
  %9289 = vmatpush.msra.mxu0 0.0
  %9290 = vmatpush.msra.mxu0 0.0
  %9291 = vmatpush.msra.mxu0 0.0
  %9292 = vmatpush.msra.mxu0 0.0
  %9293 = vmatpush.msra.mxu0 0.0
  %9294 = vmatpush.msra.mxu0 0.0
  %9295 = vmatpush.msra.mxu0 0.0
  %9296 = vmatpush.msra.mxu0 0.0
  %9297 = vmatpush.msra.mxu0 0.0
  %9298 = vmatpush.msra.mxu0 0.0
  %9299 = vmatpush.msra.mxu0 0.0
  %9300 = vmatpush.msra.mxu0 0.0
  %9301 = vmatpush.msra.mxu0 0.0
  %9302 = vmatpush.msra.mxu0 0.0
  %9303 = vmatpush.msra.mxu0 0.0
  %9304 = vmatpush.msra.mxu0 %v8169
  %9305 = vmatmul.f32.gmra.mxu0 %v8187
  %v9306 = vpop.f32.mrf.mxu0
  %v9307 = vadd.f32 %v8183, %v9306
  %9308 = vdwg.mxu0
  %9309 = vmatpush.msra.mxu0 0.0
  %9310 = vmatpush.msra.mxu0 0.0
  %9311 = vmatpush.msra.mxu0 0.0
  %9312 = vmatpush.msra.mxu0 0.0
  %9313 = vmatpush.msra.mxu0 0.0
  %9314 = vmatpush.msra.mxu0 0.0
  %9315 = vmatpush.msra.mxu0 0.0
  %9316 = vmatpush.msra.mxu0 0.0
  %9317 = vmatpush.msra.mxu0 0.0
  %9318 = vmatpush.msra.mxu0 0.0
  %9319 = vmatpush.msra.mxu0 0.0
  %9320 = vmatpush.msra.mxu0 0.0
  %9321 = vmatpush.msra.mxu0 0.0
  %9322 = vmatpush.msra.mxu0 0.0
  %9323 = vmatpush.msra.mxu0 0.0
  %9324 = vmatpush.msra.mxu0 %v8170
  %9325 = vmatmul.f32.gmra.mxu0 %v8187
  %v9326 = vpop.f32.mrf.mxu0
  %v9327 = vadd.f32 %v8183, %v9326
  %9328 = vdwg.mxu0
  %9329 = vmatpush.msra.mxu0 0.0
  %9330 = vmatpush.msra.mxu0 0.0
  %9331 = vmatpush.msra.mxu0 0.0
  %9332 = vmatpush.msra.mxu0 0.0
  %9333 = vmatpush.msra.mxu0 0.0
  %9334 = vmatpush.msra.mxu0 0.0
  %9335 = vmatpush.msra.mxu0 0.0
  %9336 = vmatpush.msra.mxu0 0.0
  %9337 = vmatpush.msra.mxu0 0.0
  %9338 = vmatpush.msra.mxu0 0.0
  %9339 = vmatpush.msra.mxu0 0.0
  %9340 = vmatpush.msra.mxu0 0.0
  %9341 = vmatpush.msra.mxu0 0.0
  %9342 = vmatpush.msra.mxu0 0.0
  %9343 = vmatpush.msra.mxu0 0.0
  %9344 = vmatpush.msra.mxu0 %v8171
  %9345 = vmatmul.f32.gmra.mxu0 %v8187
  %v9346 = vpop.f32.mrf.mxu0
  %v9347 = vadd.f32 %v8183, %v9346
  %9348 = vdwg.mxu0
  %9349 = vmatpush.msra.mxu0 0.0
  %9350 = vmatpush.msra.mxu0 0.0
  %9351 = vmatpush.msra.mxu0 0.0
  %9352 = vmatpush.msra.mxu0 0.0
  %9353 = vmatpush.msra.mxu0 0.0
  %9354 = vmatpush.msra.mxu0 0.0
  %9355 = vmatpush.msra.mxu0 0.0
  %9356 = vmatpush.msra.mxu0 0.0
  %9357 = vmatpush.msra.mxu0 0.0
  %9358 = vmatpush.msra.mxu0 0.0
  %9359 = vmatpush.msra.mxu0 0.0
  %9360 = vmatpush.msra.mxu0 0.0
  %9361 = vmatpush.msra.mxu0 0.0
  %9362 = vmatpush.msra.mxu0 0.0
  %9363 = vmatpush.msra.mxu0 0.0
  %9364 = vmatpush.msra.mxu0 %v8172
  %9365 = vmatmul.f32.gmra.mxu0 %v8187
  %v9366 = vpop.f32.mrf.mxu0
  %v9367 = vadd.f32 %v8183, %v9366
  %9368 = vdwg.mxu0
  %9369 = vmatpush.msra.mxu0 0.0
  %9370 = vmatpush.msra.mxu0 0.0
  %9371 = vmatpush.msra.mxu0 0.0
  %9372 = vmatpush.msra.mxu0 0.0
  %9373 = vmatpush.msra.mxu0 0.0
  %9374 = vmatpush.msra.mxu0 0.0
  %9375 = vmatpush.msra.mxu0 0.0
  %9376 = vmatpush.msra.mxu0 0.0
  %9377 = vmatpush.msra.mxu0 0.0
  %9378 = vmatpush.msra.mxu0 0.0
  %9379 = vmatpush.msra.mxu0 0.0
  %9380 = vmatpush.msra.mxu0 0.0
  %9381 = vmatpush.msra.mxu0 0.0
  %9382 = vmatpush.msra.mxu0 0.0
  %9383 = vmatpush.msra.mxu0 0.0
  %9384 = vmatpush.msra.mxu0 %v8173
  %9385 = vmatmul.f32.gmra.mxu0 %v8187
  %v9386 = vpop.f32.mrf.mxu0
  %v9387 = vadd.f32 %v8183, %v9386
  %9388 = vdwg.mxu0
  %9389 = vmatpush.msra.mxu0 0.0
  %9390 = vmatpush.msra.mxu0 0.0
  %9391 = vmatpush.msra.mxu0 0.0
  %9392 = vmatpush.msra.mxu0 0.0
  %9393 = vmatpush.msra.mxu0 0.0
  %9394 = vmatpush.msra.mxu0 0.0
  %9395 = vmatpush.msra.mxu0 0.0
  %9396 = vmatpush.msra.mxu0 0.0
  %9397 = vmatpush.msra.mxu0 0.0
  %9398 = vmatpush.msra.mxu0 0.0
  %9399 = vmatpush.msra.mxu0 0.0
  %9400 = vmatpush.msra.mxu0 0.0
  %9401 = vmatpush.msra.mxu0 0.0
  %9402 = vmatpush.msra.mxu0 0.0
  %9403 = vmatpush.msra.mxu0 0.0
  %9404 = vmatpush.msra.mxu0 %v8174
  %9405 = vmatmul.f32.gmra.mxu0 %v8187
  %v9406 = vpop.f32.mrf.mxu0
  %v9407 = vadd.f32 %v8183, %v9406
  %9408 = vdwg.mxu0
  %9409 = vmatpush.msra.mxu0 0.0
  %9410 = vmatpush.msra.mxu0 0.0
  %9411 = vmatpush.msra.mxu0 0.0
  %9412 = vmatpush.msra.mxu0 0.0
  %9413 = vmatpush.msra.mxu0 0.0
  %9414 = vmatpush.msra.mxu0 0.0
  %9415 = vmatpush.msra.mxu0 0.0
  %9416 = vmatpush.msra.mxu0 0.0
  %9417 = vmatpush.msra.mxu0 0.0
  %9418 = vmatpush.msra.mxu0 0.0
  %9419 = vmatpush.msra.mxu0 0.0
  %9420 = vmatpush.msra.mxu0 0.0
  %9421 = vmatpush.msra.mxu0 0.0
  %9422 = vmatpush.msra.mxu0 0.0
  %9423 = vmatpush.msra.mxu0 0.0
  %9424 = vmatpush.msra.mxu0 %v8175
  %9425 = vmatmul.f32.gmra.mxu0 %v8187
  %v9426 = vpop.f32.mrf.mxu0
  %v9427 = vadd.f32 %v8183, %v9426
  %9428 = vdwg.mxu0
  %9429 = vmatpush.msra.mxu0 0.0
  %9430 = vmatpush.msra.mxu0 0.0
  %9431 = vmatpush.msra.mxu0 0.0
  %9432 = vmatpush.msra.mxu0 0.0
  %9433 = vmatpush.msra.mxu0 0.0
  %9434 = vmatpush.msra.mxu0 0.0
  %9435 = vmatpush.msra.mxu0 0.0
  %9436 = vmatpush.msra.mxu0 0.0
  %9437 = vmatpush.msra.mxu0 0.0
  %9438 = vmatpush.msra.mxu0 0.0
  %9439 = vmatpush.msra.mxu0 0.0
  %9440 = vmatpush.msra.mxu0 0.0
  %9441 = vmatpush.msra.mxu0 0.0
  %9442 = vmatpush.msra.mxu0 0.0
  %9443 = vmatpush.msra.mxu0 0.0
  %9444 = vmatpush.msra.mxu0 %v8176
  %9445 = vmatmul.f32.gmra.mxu0 %v8187
  %v9446 = vpop.f32.mrf.mxu0
  %v9447 = vadd.f32 %v8183, %v9446
  %9448 = vdwg.mxu0
  %9449 = vmatpush.msra.mxu0 0.0
  %9450 = vmatpush.msra.mxu0 0.0
  %9451 = vmatpush.msra.mxu0 0.0
  %9452 = vmatpush.msra.mxu0 0.0
  %9453 = vmatpush.msra.mxu0 0.0
  %9454 = vmatpush.msra.mxu0 0.0
  %9455 = vmatpush.msra.mxu0 0.0
  %9456 = vmatpush.msra.mxu0 0.0
  %9457 = vmatpush.msra.mxu0 0.0
  %9458 = vmatpush.msra.mxu0 0.0
  %9459 = vmatpush.msra.mxu0 0.0
  %9460 = vmatpush.msra.mxu0 0.0
  %9461 = vmatpush.msra.mxu0 0.0
  %9462 = vmatpush.msra.mxu0 0.0
  %9463 = vmatpush.msra.mxu0 0.0
  %9464 = vmatpush.msra.mxu0 %v8177
  %9465 = vmatmul.f32.gmra.mxu0 %v8187
  %v9466 = vpop.f32.mrf.mxu0
  %v9467 = vadd.f32 %v8183, %v9466
  %9468 = vdwg.mxu0
  %v9533 = vrot.slane %v8227, 4
  %v9534 = vrot.slane %v8267, 4
  %v9535 = vrot.slane %v8307, 4
  %v9536 = vrot.slane %v8347, 4
  %v9537 = vrot.slane %v8387, 4
  %v9538 = vrot.slane %v8427, 4
  %v9539 = vrot.slane %v8467, 4
  %v9540 = vrot.slane %v8507, 4
  %v9541 = vrot.slane %v8547, 4
  %v9542 = vrot.slane %v8587, 4
  %v9543 = vrot.slane %v8627, 4
  %v9544 = vrot.slane %v8667, 4
  %v9545 = vrot.slane %v8707, 4
  %v9546 = vrot.slane %v8747, 4
  %v9547 = vrot.slane %v8787, 4
  %v9548 = vrot.slane %v8827, 4
  %v9549 = vrot.slane %v8867, 4
  %v9550 = vrot.slane %v8907, 4
  %v9551 = vrot.slane %v8947, 4
  %v9552 = vrot.slane %v8987, 4
  %v9553 = vrot.slane %v9027, 4
  %v9554 = vrot.slane %v9067, 4
  %v9555 = vrot.slane %v9107, 4
  %v9556 = vrot.slane %v9147, 4
  %v9557 = vrot.slane %v9187, 4
  %v9558 = vrot.slane %v9227, 4
  %v9559 = vrot.slane %v9267, 4
  %v9560 = vrot.slane %v9307, 4
  %v9561 = vrot.slane %v9347, 4
  %v9562 = vrot.slane %v9387, 4
  %v9563 = vrot.slane %v9427, 4
  %v9564 = vrot.slane %v9467, 4
  %vm9565 = vcmask 1043456
  %v9566 = vsel %vm9565, %v8207, %v9533
  %v9567 = vsel %vm9565, %v8247, %v9534
  %v9568 = vsel %vm9565, %v8287, %v9535
  %v9569 = vsel %vm9565, %v8327, %v9536
  %v9570 = vsel %vm9565, %v8367, %v9537
  %v9571 = vsel %vm9565, %v8407, %v9538
  %v9572 = vsel %vm9565, %v8447, %v9539
  %v9573 = vsel %vm9565, %v8487, %v9540
  %v9574 = vsel %vm9565, %v8527, %v9541
  %v9575 = vsel %vm9565, %v8567, %v9542
  %v9576 = vsel %vm9565, %v8607, %v9543
  %v9577 = vsel %vm9565, %v8647, %v9544
  %v9578 = vsel %vm9565, %v8687, %v9545
  %v9579 = vsel %vm9565, %v8727, %v9546
  %v9580 = vsel %vm9565, %v8767, %v9547
  %v9581 = vsel %vm9565, %v8807, %v9548
  %v9582 = vsel %vm9565, %v8847, %v9549
  %v9583 = vsel %vm9565, %v8887, %v9550
  %v9584 = vsel %vm9565, %v8927, %v9551
  %v9585 = vsel %vm9565, %v8967, %v9552
  %v9586 = vsel %vm9565, %v9007, %v9553
  %v9587 = vsel %vm9565, %v9047, %v9554
  %v9588 = vsel %vm9565, %v9087, %v9555
  %v9589 = vsel %vm9565, %v9127, %v9556
  %v9590 = vsel %vm9565, %v9167, %v9557
  %v9591 = vsel %vm9565, %v9207, %v9558
  %v9592 = vsel %vm9565, %v9247, %v9559
  %v9593 = vsel %vm9565, %v9287, %v9560
  %v9594 = vsel %vm9565, %v9327, %v9561
  %v9595 = vsel %vm9565, %v9367, %v9562
  %v9596 = vsel %vm9565, %v9407, %v9563
  %v9597 = vsel %vm9565, %v9447, %v9564
  %9630 = vst [vmem:[%s7] sm:$0xff] %v9566
  %9631 = vst [vmem:[%s7 + $0x8] sm:$0xff] %v9567
  %9632 = vst [vmem:[%s7 + $0x10] sm:$0xff] %v9568
  %9633 = vst [vmem:[%s7 + $0x18] sm:$0xff] %v9569
  %9634 = vst [vmem:[%s7 + $0x20] sm:$0xff] %v9570
  %9635 = vst [vmem:[%s7 + $0x28] sm:$0xff] %v9571
  %9636 = vst [vmem:[%s7 + $0x30] sm:$0xff] %v9572
  %9637 = vst [vmem:[%s7 + $0x38] sm:$0xff] %v9573
  %9638 = vst [vmem:[%s7 + $0x40] sm:$0xff] %v9574
  %9639 = vst [vmem:[%s7 + $0x48] sm:$0xff] %v9575
  %9640 = vst [vmem:[%s7 + $0x50] sm:$0xff] %v9576
  %9641 = vst [vmem:[%s7 + $0x58] sm:$0xff] %v9577
  %9642 = vst [vmem:[%s7 + $0x60] sm:$0xff] %v9578
  %9643 = vst [vmem:[%s7 + $0x68] sm:$0xff] %v9579
  %9644 = vst [vmem:[%s7 + $0x70] sm:$0xff] %v9580
  %9645 = vst [vmem:[%s7 + $0x78] sm:$0xff] %v9581
  %9646 = vst [vmem:[%s7 + $0x80] sm:$0xff] %v9582
  %9647 = vst [vmem:[%s7 + $0x88] sm:$0xff] %v9583
  %9648 = vst [vmem:[%s7 + $0x90] sm:$0xff] %v9584
  %9649 = vst [vmem:[%s7 + $0x98] sm:$0xff] %v9585
  %9650 = vst [vmem:[%s7 + $0xa0] sm:$0xff] %v9586
  %9651 = vst [vmem:[%s7 + $0xa8] sm:$0xff] %v9587
  %9652 = vst [vmem:[%s7 + $0xb0] sm:$0xff] %v9588
  %9653 = vst [vmem:[%s7 + $0xb8] sm:$0xff] %v9589
  %9654 = vst [vmem:[%s7 + $0xc0] sm:$0xff] %v9590
  %9655 = vst [vmem:[%s7 + $0xc8] sm:$0xff] %v9591
  %9656 = vst [vmem:[%s7 + $0xd0] sm:$0xff] %v9592
  %9657 = vst [vmem:[%s7 + $0xd8] sm:$0xff] %v9593
  %9658 = vst [vmem:[%s7 + $0xe0] sm:$0xff] %v9594
  %9659 = vst [vmem:[%s7 + $0xe8] sm:$0xff] %v9595
  %9660 = vst [vmem:[%s7 + $0xf0] sm:$0xff] %v9596
  %9661 = vst [vmem:[%s7 + $0xf8] sm:$0xff] %v9597
  %v9662 = vld [vmem:[#allocation2] sm:$0xf]
  %v9663 = vsel %vm9565, %v8207, 0.0
  %v9664 = vsel %vm9565, %v8227, 0.0
  %v9665 = vadd.f32 %v9663, %v9664
  %v9666 = vsel %vm9565, %v8247, 0.0
  %v9667 = vadd.f32 %v9665, %v9666
  %v9668 = vsel %vm9565, %v8267, 0.0
  %v9669 = vadd.f32 %v9667, %v9668
  %v9670 = vsel %vm9565, %v8287, 0.0
  %v9671 = vadd.f32 %v9669, %v9670
  %v9672 = vsel %vm9565, %v8307, 0.0
  %v9673 = vadd.f32 %v9671, %v9672
  %v9674 = vsel %vm9565, %v8327, 0.0
  %v9675 = vadd.f32 %v9673, %v9674
  %v9676 = vsel %vm9565, %v8347, 0.0
  %v9677 = vadd.f32 %v9675, %v9676
  %v9678 = vsel %vm9565, %v8367, 0.0
  %v9679 = vadd.f32 %v9677, %v9678
  %v9680 = vsel %vm9565, %v8387, 0.0
  %v9681 = vadd.f32 %v9679, %v9680
  %v9682 = vsel %vm9565, %v8407, 0.0
  %v9683 = vadd.f32 %v9681, %v9682
  %v9684 = vsel %vm9565, %v8427, 0.0
  %v9685 = vadd.f32 %v9683, %v9684
  %v9686 = vsel %vm9565, %v8447, 0.0
  %v9687 = vadd.f32 %v9685, %v9686
  %v9688 = vsel %vm9565, %v8467, 0.0
  %v9689 = vadd.f32 %v9687, %v9688
  %v9690 = vsel %vm9565, %v8487, 0.0
  %v9691 = vadd.f32 %v9689, %v9690
  %v9692 = vsel %vm9565, %v8507, 0.0
  %v9693 = vadd.f32 %v9691, %v9692
  %v9694 = vsel %vm9565, %v8527, 0.0
  %v9695 = vadd.f32 %v9693, %v9694
  %v9696 = vsel %vm9565, %v8547, 0.0
  %v9697 = vadd.f32 %v9695, %v9696
  %v9698 = vsel %vm9565, %v8567, 0.0
  %v9699 = vadd.f32 %v9697, %v9698
  %v9700 = vsel %vm9565, %v8587, 0.0
  %v9701 = vadd.f32 %v9699, %v9700
  %v9702 = vsel %vm9565, %v8607, 0.0
  %v9703 = vadd.f32 %v9701, %v9702
  %v9704 = vsel %vm9565, %v8627, 0.0
  %v9705 = vadd.f32 %v9703, %v9704
  %v9706 = vsel %vm9565, %v8647, 0.0
  %v9707 = vadd.f32 %v9705, %v9706
  %v9708 = vsel %vm9565, %v8667, 0.0
  %v9709 = vadd.f32 %v9707, %v9708
  %v9710 = vsel %vm9565, %v8687, 0.0
  %v9711 = vadd.f32 %v9709, %v9710
  %v9712 = vsel %vm9565, %v8707, 0.0
  %v9713 = vadd.f32 %v9711, %v9712
  %v9714 = vsel %vm9565, %v8727, 0.0
  %v9715 = vadd.f32 %v9713, %v9714
  %v9716 = vsel %vm9565, %v8747, 0.0
  %v9717 = vadd.f32 %v9715, %v9716
  %v9718 = vsel %vm9565, %v8767, 0.0
  %v9719 = vadd.f32 %v9717, %v9718
  %v9720 = vsel %vm9565, %v8787, 0.0
  %v9721 = vadd.f32 %v9719, %v9720
  %v9722 = vsel %vm9565, %v8807, 0.0
  %v9723 = vadd.f32 %v9721, %v9722
  %v9724 = vsel %vm9565, %v8827, 0.0
  %v9725 = vadd.f32 %v9723, %v9724
  %v9726 = vsel %vm9565, %v8847, 0.0
  %v9727 = vadd.f32 %v9725, %v9726
  %v9728 = vsel %vm9565, %v8867, 0.0
  %v9729 = vadd.f32 %v9727, %v9728
  %v9730 = vsel %vm9565, %v8887, 0.0
  %v9731 = vadd.f32 %v9729, %v9730
  %v9732 = vsel %vm9565, %v8907, 0.0
  %v9733 = vadd.f32 %v9731, %v9732
  %v9734 = vsel %vm9565, %v8927, 0.0
  %v9735 = vadd.f32 %v9733, %v9734
  %v9736 = vsel %vm9565, %v8947, 0.0
  %v9737 = vadd.f32 %v9735, %v9736
  %v9738 = vsel %vm9565, %v8967, 0.0
  %v9739 = vadd.f32 %v9737, %v9738
  %v9740 = vsel %vm9565, %v8987, 0.0
  %v9741 = vadd.f32 %v9739, %v9740
  %v9742 = vsel %vm9565, %v9007, 0.0
  %v9743 = vadd.f32 %v9741, %v9742
  %v9744 = vsel %vm9565, %v9027, 0.0
  %v9745 = vadd.f32 %v9743, %v9744
  %v9746 = vsel %vm9565, %v9047, 0.0
  %v9747 = vadd.f32 %v9745, %v9746
  %v9748 = vsel %vm9565, %v9067, 0.0
  %v9749 = vadd.f32 %v9747, %v9748
  %v9750 = vsel %vm9565, %v9087, 0.0
  %v9751 = vadd.f32 %v9749, %v9750
  %v9752 = vsel %vm9565, %v9107, 0.0
  %v9753 = vadd.f32 %v9751, %v9752
  %v9754 = vsel %vm9565, %v9127, 0.0
  %v9755 = vadd.f32 %v9753, %v9754
  %v9756 = vsel %vm9565, %v9147, 0.0
  %v9757 = vadd.f32 %v9755, %v9756
  %v9758 = vsel %vm9565, %v9167, 0.0
  %v9759 = vadd.f32 %v9757, %v9758
  %v9760 = vsel %vm9565, %v9187, 0.0
  %v9761 = vadd.f32 %v9759, %v9760
  %v9762 = vsel %vm9565, %v9207, 0.0
  %v9763 = vadd.f32 %v9761, %v9762
  %v9764 = vsel %vm9565, %v9227, 0.0
  %v9765 = vadd.f32 %v9763, %v9764
  %v9766 = vsel %vm9565, %v9247, 0.0
  %v9767 = vadd.f32 %v9765, %v9766
  %v9768 = vsel %vm9565, %v9267, 0.0
  %v9769 = vadd.f32 %v9767, %v9768
  %v9770 = vsel %vm9565, %v9287, 0.0
  %v9771 = vadd.f32 %v9769, %v9770
  %v9772 = vsel %vm9565, %v9307, 0.0
  %v9773 = vadd.f32 %v9771, %v9772
  %v9774 = vsel %vm9565, %v9327, 0.0
  %v9775 = vadd.f32 %v9773, %v9774
  %v9776 = vsel %vm9565, %v9347, 0.0
  %v9777 = vadd.f32 %v9775, %v9776
  %v9778 = vsel %vm9565, %v9367, 0.0
  %v9779 = vadd.f32 %v9777, %v9778
  %v9780 = vsel %vm9565, %v9387, 0.0
  %v9781 = vadd.f32 %v9779, %v9780
  %v9782 = vsel %vm9565, %v9407, 0.0
  %v9783 = vadd.f32 %v9781, %v9782
  %v9784 = vsel %vm9565, %v9427, 0.0
  %v9785 = vadd.f32 %v9783, %v9784
  %v9786 = vsel %vm9565, %v9447, 0.0
  %v9787 = vadd.f32 %v9785, %v9786
  %v9788 = vsel %vm9565, %v9467, 0.0
  %v9789 = vadd.f32 %v9787, %v9788
  %9790 = vadd.xlane.f32.xlu0 %v9789
  %v9791 = vpop.xlane.xlu0 %9790
  %v9792 = vadd.f32 %v9662, %v9791
  %vm9793 = vcmask 3072
  %9794 = vst.msk [vmem:[#allocation2] sm:$0xf] %vm9793, %v9792
  %v9795 = vld [vmem:[#allocation3] sm:$0xf]
  %v9796 = vmul.f32 %v8207, %v8207
  %v9797 = vmul.f32 %v8227, %v8227
  %v9798 = vmul.f32 %v8247, %v8247
  %v9799 = vmul.f32 %v8267, %v8267
  %v9800 = vmul.f32 %v8287, %v8287
  %v9801 = vmul.f32 %v8307, %v8307
  %v9802 = vmul.f32 %v8327, %v8327
  %v9803 = vmul.f32 %v8347, %v8347
  %v9804 = vmul.f32 %v8367, %v8367
  %v9805 = vmul.f32 %v8387, %v8387
  %v9806 = vmul.f32 %v8407, %v8407
  %v9807 = vmul.f32 %v8427, %v8427
  %v9808 = vmul.f32 %v8447, %v8447
  %v9809 = vmul.f32 %v8467, %v8467
  %v9810 = vmul.f32 %v8487, %v8487
  %v9811 = vmul.f32 %v8507, %v8507
  %v9812 = vmul.f32 %v8527, %v8527
  %v9813 = vmul.f32 %v8547, %v8547
  %v9814 = vmul.f32 %v8567, %v8567
  %v9815 = vmul.f32 %v8587, %v8587
  %v9816 = vmul.f32 %v8607, %v8607
  %v9817 = vmul.f32 %v8627, %v8627
  %v9818 = vmul.f32 %v8647, %v8647
  %v9819 = vmul.f32 %v8667, %v8667
  %v9820 = vmul.f32 %v8687, %v8687
  %v9821 = vmul.f32 %v8707, %v8707
  %v9822 = vmul.f32 %v8727, %v8727
  %v9823 = vmul.f32 %v8747, %v8747
  %v9824 = vmul.f32 %v8767, %v8767
  %v9825 = vmul.f32 %v8787, %v8787
  %v9826 = vmul.f32 %v8807, %v8807
  %v9827 = vmul.f32 %v8827, %v8827
  %v9828 = vmul.f32 %v8847, %v8847
  %v9829 = vmul.f32 %v8867, %v8867
  %v9830 = vmul.f32 %v8887, %v8887
  %v9831 = vmul.f32 %v8907, %v8907
  %v9832 = vmul.f32 %v8927, %v8927
  %v9833 = vmul.f32 %v8947, %v8947
  %v9834 = vmul.f32 %v8967, %v8967
  %v9835 = vmul.f32 %v8987, %v8987
  %v9836 = vmul.f32 %v9007, %v9007
  %v9837 = vmul.f32 %v9027, %v9027
  %v9838 = vmul.f32 %v9047, %v9047
  %v9839 = vmul.f32 %v9067, %v9067
  %v9840 = vmul.f32 %v9087, %v9087
  %v9841 = vmul.f32 %v9107, %v9107
  %v9842 = vmul.f32 %v9127, %v9127
  %v9843 = vmul.f32 %v9147, %v9147
  %v9844 = vmul.f32 %v9167, %v9167
  %v9845 = vmul.f32 %v9187, %v9187
  %v9846 = vmul.f32 %v9207, %v9207
  %v9847 = vmul.f32 %v9227, %v9227
  %v9848 = vmul.f32 %v9247, %v9247
  %v9849 = vmul.f32 %v9267, %v9267
  %v9850 = vmul.f32 %v9287, %v9287
  %v9851 = vmul.f32 %v9307, %v9307
  %v9852 = vmul.f32 %v9327, %v9327
  %v9853 = vmul.f32 %v9347, %v9347
  %v9854 = vmul.f32 %v9367, %v9367
  %v9855 = vmul.f32 %v9387, %v9387
  %v9856 = vmul.f32 %v9407, %v9407
  %v9857 = vmul.f32 %v9427, %v9427
  %v9858 = vmul.f32 %v9447, %v9447
  %v9859 = vmul.f32 %v9467, %v9467
  %v9860 = vsel %vm9565, %v9796, 0.0
  %v9861 = vsel %vm9565, %v9797, 0.0
  %v9862 = vadd.f32 %v9860, %v9861
  %v9863 = vsel %vm9565, %v9798, 0.0
  %v9864 = vadd.f32 %v9862, %v9863
  %v9865 = vsel %vm9565, %v9799, 0.0
  %v9866 = vadd.f32 %v9864, %v9865
  %v9867 = vsel %vm9565, %v9800, 0.0
  %v9868 = vadd.f32 %v9866, %v9867
  %v9869 = vsel %vm9565, %v9801, 0.0
  %v9870 = vadd.f32 %v9868, %v9869
  %v9871 = vsel %vm9565, %v9802, 0.0
  %v9872 = vadd.f32 %v9870, %v9871
  %v9873 = vsel %vm9565, %v9803, 0.0
  %v9874 = vadd.f32 %v9872, %v9873
  %v9875 = vsel %vm9565, %v9804, 0.0
  %v9876 = vadd.f32 %v9874, %v9875
  %v9877 = vsel %vm9565, %v9805, 0.0
  %v9878 = vadd.f32 %v9876, %v9877
  %v9879 = vsel %vm9565, %v9806, 0.0
  %v9880 = vadd.f32 %v9878, %v9879
  %v9881 = vsel %vm9565, %v9807, 0.0
  %v9882 = vadd.f32 %v9880, %v9881
  %v9883 = vsel %vm9565, %v9808, 0.0
  %v9884 = vadd.f32 %v9882, %v9883
  %v9885 = vsel %vm9565, %v9809, 0.0
  %v9886 = vadd.f32 %v9884, %v9885
  %v9887 = vsel %vm9565, %v9810, 0.0
  %v9888 = vadd.f32 %v9886, %v9887
  %v9889 = vsel %vm9565, %v9811, 0.0
  %v9890 = vadd.f32 %v9888, %v9889
  %v9891 = vsel %vm9565, %v9812, 0.0
  %v9892 = vadd.f32 %v9890, %v9891
  %v9893 = vsel %vm9565, %v9813, 0.0
  %v9894 = vadd.f32 %v9892, %v9893
  %v9895 = vsel %vm9565, %v9814, 0.0
  %v9896 = vadd.f32 %v9894, %v9895
  %v9897 = vsel %vm9565, %v9815, 0.0
  %v9898 = vadd.f32 %v9896, %v9897
  %v9899 = vsel %vm9565, %v9816, 0.0
  %v9900 = vadd.f32 %v9898, %v9899
  %v9901 = vsel %vm9565, %v9817, 0.0
  %v9902 = vadd.f32 %v9900, %v9901
  %v9903 = vsel %vm9565, %v9818, 0.0
  %v9904 = vadd.f32 %v9902, %v9903
  %v9905 = vsel %vm9565, %v9819, 0.0
  %v9906 = vadd.f32 %v9904, %v9905
  %v9907 = vsel %vm9565, %v9820, 0.0
  %v9908 = vadd.f32 %v9906, %v9907
  %v9909 = vsel %vm9565, %v9821, 0.0
  %v9910 = vadd.f32 %v9908, %v9909
  %v9911 = vsel %vm9565, %v9822, 0.0
  %v9912 = vadd.f32 %v9910, %v9911
  %v9913 = vsel %vm9565, %v9823, 0.0
  %v9914 = vadd.f32 %v9912, %v9913
  %v9915 = vsel %vm9565, %v9824, 0.0
  %v9916 = vadd.f32 %v9914, %v9915
  %v9917 = vsel %vm9565, %v9825, 0.0
  %v9918 = vadd.f32 %v9916, %v9917
  %v9919 = vsel %vm9565, %v9826, 0.0
  %v9920 = vadd.f32 %v9918, %v9919
  %v9921 = vsel %vm9565, %v9827, 0.0
  %v9922 = vadd.f32 %v9920, %v9921
  %v9923 = vsel %vm9565, %v9828, 0.0
  %v9924 = vadd.f32 %v9922, %v9923
  %v9925 = vsel %vm9565, %v9829, 0.0
  %v9926 = vadd.f32 %v9924, %v9925
  %v9927 = vsel %vm9565, %v9830, 0.0
  %v9928 = vadd.f32 %v9926, %v9927
  %v9929 = vsel %vm9565, %v9831, 0.0
  %v9930 = vadd.f32 %v9928, %v9929
  %v9931 = vsel %vm9565, %v9832, 0.0
  %v9932 = vadd.f32 %v9930, %v9931
  %v9933 = vsel %vm9565, %v9833, 0.0
  %v9934 = vadd.f32 %v9932, %v9933
  %v9935 = vsel %vm9565, %v9834, 0.0
  %v9936 = vadd.f32 %v9934, %v9935
  %v9937 = vsel %vm9565, %v9835, 0.0
  %v9938 = vadd.f32 %v9936, %v9937
  %v9939 = vsel %vm9565, %v9836, 0.0
  %v9940 = vadd.f32 %v9938, %v9939
  %v9941 = vsel %vm9565, %v9837, 0.0
  %v9942 = vadd.f32 %v9940, %v9941
  %v9943 = vsel %vm9565, %v9838, 0.0
  %v9944 = vadd.f32 %v9942, %v9943
  %v9945 = vsel %vm9565, %v9839, 0.0
  %v9946 = vadd.f32 %v9944, %v9945
  %v9947 = vsel %vm9565, %v9840, 0.0
  %v9948 = vadd.f32 %v9946, %v9947
  %v9949 = vsel %vm9565, %v9841, 0.0
  %v9950 = vadd.f32 %v9948, %v9949
  %v9951 = vsel %vm9565, %v9842, 0.0
  %v9952 = vadd.f32 %v9950, %v9951
  %v9953 = vsel %vm9565, %v9843, 0.0
  %v9954 = vadd.f32 %v9952, %v9953
  %v9955 = vsel %vm9565, %v9844, 0.0
  %v9956 = vadd.f32 %v9954, %v9955
  %v9957 = vsel %vm9565, %v9845, 0.0
  %v9958 = vadd.f32 %v9956, %v9957
  %v9959 = vsel %vm9565, %v9846, 0.0
  %v9960 = vadd.f32 %v9958, %v9959
  %v9961 = vsel %vm9565, %v9847, 0.0
  %v9962 = vadd.f32 %v9960, %v9961
  %v9963 = vsel %vm9565, %v9848, 0.0
  %v9964 = vadd.f32 %v9962, %v9963
  %v9965 = vsel %vm9565, %v9849, 0.0
  %v9966 = vadd.f32 %v9964, %v9965
  %v9967 = vsel %vm9565, %v9850, 0.0
  %v9968 = vadd.f32 %v9966, %v9967
  %v9969 = vsel %vm9565, %v9851, 0.0
  %v9970 = vadd.f32 %v9968, %v9969
  %v9971 = vsel %vm9565, %v9852, 0.0
  %v9972 = vadd.f32 %v9970, %v9971
  %v9973 = vsel %vm9565, %v9853, 0.0
  %v9974 = vadd.f32 %v9972, %v9973
  %v9975 = vsel %vm9565, %v9854, 0.0
  %v9976 = vadd.f32 %v9974, %v9975
  %v9977 = vsel %vm9565, %v9855, 0.0
  %v9978 = vadd.f32 %v9976, %v9977
  %v9979 = vsel %vm9565, %v9856, 0.0
  %v9980 = vadd.f32 %v9978, %v9979
  %v9981 = vsel %vm9565, %v9857, 0.0
  %v9982 = vadd.f32 %v9980, %v9981
  %v9983 = vsel %vm9565, %v9858, 0.0
  %v9984 = vadd.f32 %v9982, %v9983
  %v9985 = vsel %vm9565, %v9859, 0.0
  %v9986 = vadd.f32 %v9984, %v9985
  %9987 = vadd.xlane.f32.xlu0 %v9986
  %v9988 = vpop.xlane.xlu0 %9987
  %v9989 = vadd.f32 %v9795, %v9988
  %9990 = vst.msk [vmem:[#allocation3] sm:$0xf] %vm9793, %v9989
  // Predicated region
  $region34: #{atr_res_13_forward.2} parent=0 // pred_check
    %p9991 = pneg %p29
  $region35: #{atr_res_13_forward.2} parent=0 // pred_check_branch
    %9993 = sbr.rel (%p9991) target = $region37
  $region36: #{atr_res_13_forward.2} parent=0 // pred_region
    %v9994 = vld [vmem:[#allocation2] sm:$0xf]
    %v9995 = vmul.f32 %v9994, 0.00012207031
    %v9996 = vld [vmem:[#allocation3] sm:$0xf]
    %v9997 = vmul.f32 %v9996, 0.00012207031
    %v9998 = vmul.f32 %v9995, %v9995
    %v9999 = vsub.f32 %v9997, %v9998
    %v10000 = vadd.f32 %v9999, 1e-05
    %v10001 = vrsqrt.pop %v10000
    %v10002 = vmul.f32 %v10001, %v10000
    %v10003 = vmul.f32 %v10002, %v10001
    %v10004 = vmul.f32 0.5, %v10003
    %v10005 = vsub.f32 1.5, %v10004
    %v10006 = vmul.f32 %v10001, %v10005
    %vm10007 = vweird.f32 %v10000
    %vm10008 = vweird.f32 %v10001
    %vm10009 = vmor %vm10007, %vm10008
    %v10010 = vsel %vm10009, %v10001, %v10006
    %v10011 = vld [vmem:[%s5] sm:$0xf]
    %v10012 = vmul.f32 %v10010, %v10011
    %10013 = vst.msk [vmem:[%s8] sm:$0xf] %vm9793, %v10012
    %v10014 = vld [vmem:[%s6] sm:$0xf]
    %v10015 = vmul.f32 %v9995, %v10012
    %v10016 = vsub.f32 %v10014, %v10015
    %10017 = vst.msk [vmem:[%s9] sm:$0xf] %vm9793, %v10016
  $region37: #{atr_res_13_forward.2} parent=0 // pred_fallthru
    _
  // Predicated region
  $region38: #{atr_res_13_forward.2} parent=0 // pred_check
    _
  $region39: #{atr_res_13_forward.2} parent=0 // pred_check_branch
    %10019 = sbr.rel (0) target = $region41
  $region40: #{atr_res_13_forward.2} parent=0 // pred_region
    _
  $region41: #{atr_res_13_forward.2} parent=0 // pred_fallthru
    _
  // Predicated region
  $region42: #{atr_res_13_forward.2} parent=0 // pred_check
    _
  $region43: #{atr_res_13_forward.2} parent=0 // pred_check_branch
    %10021 = sbr.rel (0) target = $region45
  $region44: #{atr_res_13_forward.2} parent=0 // pred_region
    _
  $region45: #{atr_res_13_forward.2} parent=0 // pred_fallthru
    _
  // Predicated region
  $region46: #{atr_res_13_forward.2} parent=0 // pred_check
    _
  $region47: #{atr_res_13_forward.2} parent=0 // pred_check_branch
    %10023 = sbr.rel (0) target = $region49
  $region48: #{atr_res_13_forward.2} parent=0 // pred_region
    _
  $region49: #{atr_res_13_forward.2} parent=0 // pred_fallthru
    _
  // Predicated region
  $region50: #{atr_res_13_forward.2} parent=0 // pred_check
    _
  $region51: #{atr_res_13_forward.2} parent=0 // pred_check_branch
    %10025 = sbr.rel (0) target = $region53
  $region52: #{atr_res_13_forward.2} parent=0 // pred_region
    _
  $region53: #{atr_res_13_forward.2} parent=0 // pred_fallthru
    _
  // Predicated region
  $region54: #{atr_res_13_forward.2} parent=0 // pred_check
    _
  $region55: #{atr_res_13_forward.2} parent=0 // pred_check_branch
    %10027 = sbr.rel (0) target = $region57
  $region56: #{atr_res_13_forward.2} parent=0 // pred_region
    _
  $region57: #{atr_res_13_forward.2} parent=0 // pred_fallthru
    _
  // Predicated region
  $region58: #{atr_res_13_forward.2} parent=0 // pred_check
    _
  $region59: #{atr_res_13_forward.2} parent=0 // pred_check_branch
    %10029 = sbr.rel (0) target = $region61
  $region60: #{atr_res_13_forward.2} parent=0 // pred_region
    _
  $region61: #{atr_res_13_forward.2} parent=0 // pred_fallthru
    _

// kernel: atr_res_13_forward.3
$region0: #{atr_res_13_forward.3}
  #allocation0 [shape = 'u32[]', space=smem, size = 0x4, offset = 0x4, fixed_abs, tag = 'smem constant byte address 0x4 - core index']
  #allocation1 [shape = 'u32[72,128]{1,0:T(1,128)}', space=vmem, size = 0x9000, scoped, tag = 'internal scratch']
  %s0 = inlined_call_operand.vmem [shape: f32[4,1], index: 0, kind: input, shape index: {}]
  %s1 = inlined_call_operand.vmem [shape: f32[4,1], index: 1, kind: input, shape index: {}]
  %s2 = inlined_call_operand.vmem [shape: f32[4,8192], index: 2, kind: input, shape index: {}]
  %s3 = inlined_call_operand.vmem [shape: f32[2,4,4096], index: 3, kind: input, shape index: {}]
  %s4 = inlined_call_operand.vmem [shape: f32[2,4,4096], index: 4, kind: output, shape index: {}]
  %s5 = sld [smem:[#allocation0]]
  $region49: #{atr_res_13_forward.3} parent=0
    _
  %s7 = ssub.s32 1, %s5
  %s8 = scalar_select 0, %s7, %s5
  loop: start=0, step=1, limit=4
  $region2: #{atr_res_13_forward.3} parent=0 // loop_pre_header
    _
  $region3: #{atr_res_13_forward.3} parent=0 // loop_header
    %s10 = sphi 0, %s14
    %p11 = scmp.ge.s32.totalorder %s10, 4
    %s17 = sphi 0, %s29
    %s18 = sphi 0, %s25
    %s19 = sphi 0, %s17
    %s20 = sphi 0, %s18
    %s21 = sphi 0, %s19
    %s22 = sphi 0, %s20
    %s30 = sphi 0, %s30
    %s32 = sphi 0, %s30
    %s33 = sphi 0, %s32
    %s47 = sphi 0, %s33
    %s51 = sphi 0, %s51
    %s53 = sphi 0, %s51
    %s54 = sphi 0, %s53
    %s68 = sphi 0, %s54
    %s76 = sphi 0, %s78
    %s79 = sphi 0, %s76
    %s80 = sphi 0, %s79
    %s96 = sphi 0, %s80
    %s104 = sphi 0, %s106
    %s107 = sphi 0, %s104
    %s108 = sphi 0, %s107
    %s124 = sphi 0, %s108
    %s132 = sphi 0, %s134
    %s135 = sphi 0, %s132
    %s136 = sphi 0, %s135
    %s152 = sphi 0, %s136
  $region4: #{atr_res_13_forward.3} parent=0 // loop_header_branch
    %13 = sbr.rel (%p11) target = $region8
  $region5: #{atr_res_13_forward.3} parent=0 // loop_body
    %s15 = ssub.s32 %s10, 1
    %s16 = ssub.s32 %s10, 2
    %s23 = sadd.s32 1, %s18
    %p24 = scmp.ge.s32.totalorder %s23, 1
    %s25 = scalar_select %p24, 0, %s23
    %s26 = sadd.s32 1, %s17
    %s27 = scalar_select %p24, %s26, %s17
    %p28 = scmp.ge.s32.totalorder %s27, 2
    %s29 = scalar_select %p28, 0, %s27
    %s31 = sadd.s32 %s30, 1
    %p34 = scmp.eq.s32.totalorder %s10, 1
    %p35 = scmp.ne.s32.totalorder %s30, %s32
    %p36 = scmp.eq.s32.totalorder %s10, 0
    %p37 = por %p35, %p36
    %p38 = scmp.ne.s32.totalorder %s30, %s32
    %p39 = scmp.eq.s32.totalorder %s15, 1
    %p40 = por %p38, %p39
    %p41 = scmp.ne.s32.totalorder %s32, %s33
    %p42 = scmp.eq.s32.totalorder %s15, 0
    %p43 = por %p41, %p42
    %p44 = scmp.ne.s32.totalorder %s32, %s33
    %p45 = scmp.eq.s32.totalorder %s16, 1
    %p46 = por %p44, %p45
    %p48 = scmp.ne.s32.totalorder %s33, %s47
    %p49 = scmp.eq.s32.totalorder %s16, 0
    %p50 = por %p48, %p49
    %s52 = sadd.s32 %s51, 1
    %p55 = scmp.eq.s32.totalorder %s10, 1
    %p56 = scmp.ne.s32.totalorder %s51, %s53
    %p57 = scmp.eq.s32.totalorder %s10, 0
    %p58 = por %p56, %p57
    %p59 = scmp.ne.s32.totalorder %s51, %s53
    %p60 = scmp.eq.s32.totalorder %s15, 1
    %p61 = por %p59, %p60
    %p62 = scmp.ne.s32.totalorder %s53, %s54
    %p63 = scmp.eq.s32.totalorder %s15, 0
    %p64 = por %p62, %p63
    %p65 = scmp.ne.s32.totalorder %s53, %s54
    %p66 = scmp.eq.s32.totalorder %s16, 1
    %p67 = por %p65, %p66
    %p69 = scmp.ne.s32.totalorder %s54, %s68
    %p70 = scmp.eq.s32.totalorder %s16, 0
    %p71 = por %p69, %p70
    %s72 = sadd.s32 %s17, %s18
    %s73 = sadd.s32 %s29, %s25
    %s74 = ssub.s32 %s72, %s73
    %p75 = scmp.eq.s32.totalorder %s74, 0
    %s77 = sadd.s32 %s76, 1
    %s78 = scalar_select %p75, %s76, %s77
    %p81 = pneg %p75
    %p82 = scmp.eq.s32.totalorder %s10, 1
    %p83 = por %p81, %p82
    %p84 = scmp.ne.s32.totalorder %s76, %s79
    %p85 = scmp.eq.s32.totalorder %s10, 0
    %p86 = por %p84, %p85
    %p87 = scmp.ne.s32.totalorder %s76, %s79
    %p88 = scmp.eq.s32.totalorder %s15, 1
    %p89 = por %p87, %p88
    %p90 = scmp.ne.s32.totalorder %s79, %s80
    %p91 = scmp.eq.s32.totalorder %s15, 0
    %p92 = por %p90, %p91
    %p93 = scmp.ne.s32.totalorder %s79, %s80
    %p94 = scmp.eq.s32.totalorder %s16, 1
    %p95 = por %p93, %p94
    %p97 = scmp.ne.s32.totalorder %s80, %s96
    %p98 = scmp.eq.s32.totalorder %s16, 0
    %p99 = por %p97, %p98
    %s100 = ssub.s32 %s17, %s29
    %s101 = ssub.s32 %s18, %s25
    %s102 = sor.u32 %s100, %s101
    %p103 = scmp.eq.s32.totalorder %s102, 0
    %s105 = sadd.s32 %s104, 1
    %s106 = scalar_select %p103, %s104, %s105
    %p109 = pneg %p103
    %p110 = scmp.eq.s32.totalorder %s10, 1
    %p111 = por %p109, %p110
    %p112 = scmp.ne.s32.totalorder %s104, %s107
    %p113 = scmp.eq.s32.totalorder %s10, 0
    %p114 = por %p112, %p113
    %p115 = scmp.ne.s32.totalorder %s104, %s107
    %p116 = scmp.eq.s32.totalorder %s15, 1
    %p117 = por %p115, %p116
    %p118 = scmp.ne.s32.totalorder %s107, %s108
    %p119 = scmp.eq.s32.totalorder %s15, 0
    %p120 = por %p118, %p119
    %p121 = scmp.ne.s32.totalorder %s107, %s108
    %p122 = scmp.eq.s32.totalorder %s16, 1
    %p123 = por %p121, %p122
    %p125 = scmp.ne.s32.totalorder %s108, %s124
    %p126 = scmp.eq.s32.totalorder %s16, 0
    %p127 = por %p125, %p126
    %s128 = ssub.s32 %s17, %s29
    %s129 = ssub.s32 %s18, %s25
    %s130 = sor.u32 %s128, %s129
    %p131 = scmp.eq.s32.totalorder %s130, 0
    %s133 = sadd.s32 %s132, 1
    %s134 = scalar_select %p131, %s132, %s133
    %p137 = pneg %p131
    %p138 = scmp.eq.s32.totalorder %s10, 1
    %p139 = por %p137, %p138
    %p140 = scmp.ne.s32.totalorder %s132, %s135
    %p141 = scmp.eq.s32.totalorder %s10, 0
    %p142 = por %p140, %p141
    %p143 = scmp.ne.s32.totalorder %s132, %s135
    %p144 = scmp.eq.s32.totalorder %s15, 1
    %p145 = por %p143, %p144
    %p146 = scmp.ne.s32.totalorder %s135, %s136
    %p147 = scmp.eq.s32.totalorder %s15, 0
    %p148 = por %p146, %p147
    %p149 = scmp.ne.s32.totalorder %s135, %s136
    %p150 = scmp.eq.s32.totalorder %s16, 1
    %p151 = por %p149, %p150
    %p153 = scmp.ne.s32.totalorder %s136, %s152
    %p154 = scmp.eq.s32.totalorder %s16, 0
    %p155 = por %p153, %p154
    %p156 = scmp.le.s32.totalorder 1, %s10
    %p157 = scmp.lt.s32.totalorder %s10, 3
    %p158 = pnand %p156, %p157
    %p159 = pneg %p158
    // Predicated region
    $region9: #{atr_res_13_forward.3} parent=5 // pred_check
      _
    $region10: #{atr_res_13_forward.3} parent=5 // pred_check_branch
      %161 = sbr.rel (%p158) target = $region12
    $region11: #{atr_res_13_forward.3} parent=5 // pred_region
      %s162 = ssub.s32 %s10, 1
      // Predicated region
      $region13: #{atr_res_13_forward.3} parent=11 // pred_check
        %p163 = pneg %p43
      $region14: #{atr_res_13_forward.3} parent=11 // pred_check_branch
        %165 = sbr.rel (%p163) target = $region16
      $region15: #{atr_res_13_forward.3} parent=11 // pred_region
        _
      $region16: #{atr_res_13_forward.3} parent=11 // pred_fallthru
        _
      // Predicated region
      $region17: #{atr_res_13_forward.3} parent=11 // pred_check
        %p166 = pneg %p64
      $region18: #{atr_res_13_forward.3} parent=11 // pred_check_branch
        %168 = sbr.rel (%p166) target = $region20
      $region19: #{atr_res_13_forward.3} parent=11 // pred_region
        _
      $region20: #{atr_res_13_forward.3} parent=11 // pred_fallthru
        _
    $region12: #{atr_res_13_forward.3} parent=5 // pred_fallthru
      _
    %p169 = scmp.lt.s32.totalorder %s10, 2
    // Predicated region
    $region21: #{atr_res_13_forward.3} parent=5 // pred_check
      %p170 = pneg %p169
    $region22: #{atr_res_13_forward.3} parent=5 // pred_check_branch
      %172 = sbr.rel (%p170) target = $region24
    $region23: #{atr_res_13_forward.3} parent=5 // pred_region
      // Predicated region
      $region25: #{atr_res_13_forward.3} parent=23 // pred_check
        %p173 = pneg %p86
      $region26: #{atr_res_13_forward.3} parent=23 // pred_check_branch
        %175 = sbr.rel (%p173) target = $region28
      $region27: #{atr_res_13_forward.3} parent=23 // pred_region
        %s176 = sadd.s32 %s17, %s18
        %s177 = smul.u32 32, %s176
        %p178 = scmp.lt.s32.totalorder %s177, 63
        %s179 = scalar_select %p178, %s177, 63
        %s180 = smul.addr %s179, 4
        %s181 = scalar_lea.vmem %s2, %s180
        %s182 = sadd.s32 %s17, %s18
        %s183 = smul.u32 32, %s182
      $region28: #{atr_res_13_forward.3} parent=23 // pred_fallthru
        _
      // Predicated region
      $region29: #{atr_res_13_forward.3} parent=23 // pred_check
        %p184 = pneg %p114
      $region30: #{atr_res_13_forward.3} parent=23 // pred_check_branch
        %186 = sbr.rel (%p184) target = $region32
      $region31: #{atr_res_13_forward.3} parent=23 // pred_region
        %s187 = smul.u32 32, %s18
        %p188 = scmp.lt.s32.totalorder %s17, 1
        %s189 = scalar_select %p188, %s17, 1
        %p190 = scmp.lt.s32.totalorder %s187, 31
        %s191 = scalar_select %p190, %s187, 31
        %s192 = smul.addr %s189, 32
        %s193 = sadd.s32 %s191, %s192
        %s194 = smul.addr %s193, 4
        %s195 = scalar_lea.vmem %s3, %s194
        %s196 = smul.u32 32, %s18
      $region32: #{atr_res_13_forward.3} parent=23 // pred_fallthru
        _
    $region24: #{atr_res_13_forward.3} parent=5 // pred_fallthru
      _
    %p197 = scmp.le.s32.totalorder 1, %s10
    %p198 = scmp.lt.s32.totalorder %s10, 3
    %p199 = pnand %p197, %p198
    %p200 = pneg %p199
    // Predicated region
    $region33: #{atr_res_13_forward.3} parent=5 // pred_check
      _
    $region34: #{atr_res_13_forward.3} parent=5 // pred_check_branch
      %202 = sbr.rel (%p199) target = $region36
    $region35: #{atr_res_13_forward.3} parent=5 // pred_region
      %s203 = ssub.s32 %s10, 1
      %p204 = pneg %p43
      %p205 = pneg %p40
      %p206 = pneg %p64
      %p207 = pneg %p61
      %s208 = sadd.s32 %s19, %s20
      %s209 = smul.u32 32, %s208
      %p210 = scmp.lt.s32.totalorder %s209, 63
      %s211 = scalar_select %p210, %s209, 63
      %s212 = smul.addr %s211, 4
      %s213 = scalar_lea.vmem %s2, %s212
      %p214 = pneg %p92
      %p215 = pneg %p89
      %s216 = smul.u32 32, %s20
      %p217 = scmp.lt.s32.totalorder %s19, 1
      %s218 = scalar_select %p217, %s19, 1
      %p219 = scmp.lt.s32.totalorder %s216, 31
      %s220 = scalar_select %p219, %s216, 31
      %s221 = smul.addr %s218, 32
      %s222 = sadd.s32 %s220, %s221
      %s223 = smul.addr %s222, 4
      %s224 = scalar_lea.vmem %s3, %s223
      %p225 = pneg %p120
      %p226 = pneg %p117
      %p227 = pneg %p148
      %p228 = pneg %p145
      %s229 = smul.u32 32, %s20
      %p230 = scmp.lt.s32.totalorder %s19, 1
      %s231 = scalar_select %p230, %s19, 1
      %p232 = scmp.lt.s32.totalorder %s229, 31
      %s233 = scalar_select %p232, %s229, 31
      %s234 = smul.addr %s231, 32
      %s235 = sadd.s32 %s233, %s234
      %s236 = smul.addr %s235, 4
      %s237 = scalar_lea.vmem %s4, %s236
      %s238 = sadd.s32 %s19, %s20
      %s239 = smul.u32 32, %s238
      %p240 = scmp.lt.s32.totalorder %s239, 63
      %s241 = scalar_select %p240, %s239, 63
      %s242 = smul.addr %s241, 4
      %s243 = scalar_lea.vmem %s2, %s242
      %s244 = sadd.s32 %s19, %s20
      %s245 = smul.u32 32, %s244
      %s246 = smul.u32 32, %s20
      %p247 = scmp.lt.s32.totalorder %s19, 1
      %s248 = scalar_select %p247, %s19, 1
      %p249 = scmp.lt.s32.totalorder %s246, 31
      %s250 = scalar_select %p249, %s246, 31
      %s251 = smul.addr %s248, 32
      %s252 = sadd.s32 %s250, %s251
      %s253 = smul.addr %s252, 4
      %s254 = scalar_lea.vmem %s3, %s253
      %s255 = smul.u32 32, %s20
      %s256 = smul.u32 32, %s20
      %p257 = scmp.lt.s32.totalorder %s19, 1
      %s258 = scalar_select %p257, %s19, 1
      %p259 = scmp.lt.s32.totalorder %s256, 31
      %s260 = scalar_select %p259, %s256, 31
      %s261 = smul.addr %s258, 32
      %s262 = sadd.s32 %s260, %s261
      %s263 = smul.addr %s262, 4
      %s264 = scalar_lea.vmem %s4, %s263
      %s265 = smul.u32 32, %s20
      %v266 = vld [vmem:[%s243] sm:$0xff]
      %v267 = vld [vmem:[%s243 + $0x8] sm:$0xff]
      %v268 = vld [vmem:[%s243 + $0x10] sm:$0xff]
      %v269 = vld [vmem:[%s243 + $0x18] sm:$0xff]
      %v270 = vld [vmem:[%s243 + $0x20] sm:$0xff]
      %v271 = vld [vmem:[%s243 + $0x28] sm:$0xff]
      %v272 = vld [vmem:[%s243 + $0x30] sm:$0xff]
      %v273 = vld [vmem:[%s243 + $0x38] sm:$0xff]
      %v274 = vld [vmem:[%s243 + $0x40] sm:$0xff]
      %v275 = vld [vmem:[%s243 + $0x48] sm:$0xff]
      %v276 = vld [vmem:[%s243 + $0x50] sm:$0xff]
      %v277 = vld [vmem:[%s243 + $0x58] sm:$0xff]
      %v278 = vld [vmem:[%s243 + $0x60] sm:$0xff]
      %v279 = vld [vmem:[%s243 + $0x68] sm:$0xff]
      %v280 = vld [vmem:[%s243 + $0x70] sm:$0xff]
      %v281 = vld [vmem:[%s243 + $0x78] sm:$0xff]
      %v282 = vld [vmem:[%s0] sm:$0xf]
      %284 = vset.pattern.permute.xlu0 0
      %285 = vperm.xlu0 %284, %v282
      %v286 = vpop.permute.xlu0 %285
      %v288 = vunpack.c.l.s4 839922192
      %v289 = vunpack.c.0.s8 %v288
      %v290 = vperm.slane %v286, %v289
      %v292 = vmul.f32 %v266, %v290
      %v293 = vmul.f32 %v267, %v290
      %v294 = vmul.f32 %v268, %v290
      %v295 = vmul.f32 %v269, %v290
      %v296 = vmul.f32 %v270, %v290
      %v297 = vmul.f32 %v271, %v290
      %v298 = vmul.f32 %v272, %v290
      %v299 = vmul.f32 %v273, %v290
      %v300 = vmul.f32 %v274, %v290
      %v301 = vmul.f32 %v275, %v290
      %v302 = vmul.f32 %v276, %v290
      %v303 = vmul.f32 %v277, %v290
      %v304 = vmul.f32 %v278, %v290
      %v305 = vmul.f32 %v279, %v290
      %v306 = vmul.f32 %v280, %v290
      %v307 = vmul.f32 %v281, %v290
      %v308 = vld [vmem:[%s1] sm:$0xf]
      %310 = vset.pattern.permute.xlu0 0
      %311 = vperm.xlu0 %310, %v308
      %v312 = vpop.permute.xlu0 %311
      %v314 = vunpack.c.l.s4 839922192
      %v315 = vunpack.c.0.s8 %v314
      %v316 = vperm.slane %v312, %v315
      %v318 = vadd.f32 %v292, %v316
      %v319 = vadd.f32 %v293, %v316
      %v320 = vadd.f32 %v294, %v316
      %v321 = vadd.f32 %v295, %v316
      %v322 = vadd.f32 %v296, %v316
      %v323 = vadd.f32 %v297, %v316
      %v324 = vadd.f32 %v298, %v316
      %v325 = vadd.f32 %v299, %v316
      %v326 = vadd.f32 %v300, %v316
      %v327 = vadd.f32 %v301, %v316
      %v328 = vadd.f32 %v302, %v316
      %v329 = vadd.f32 %v303, %v316
      %v330 = vadd.f32 %v304, %v316
      %v331 = vadd.f32 %v305, %v316
      %v332 = vadd.f32 %v306, %v316
      %v333 = vadd.f32 %v307, %v316
      %v334 = vld [vmem:[%s254] sm:$0xff]
      %v335 = vld [vmem:[%s254 + $0x8] sm:$0xff]
      %v336 = vld [vmem:[%s254 + $0x10] sm:$0xff]
      %v337 = vld [vmem:[%s254 + $0x18] sm:$0xff]
      %v338 = vld [vmem:[%s254 + $0x20] sm:$0xff]
      %v339 = vld [vmem:[%s254 + $0x28] sm:$0xff]
      %v340 = vld [vmem:[%s254 + $0x30] sm:$0xff]
      %v341 = vld [vmem:[%s254 + $0x38] sm:$0xff]
      %v342 = vld [vmem:[%s254 + $0x40] sm:$0xff]
      %v343 = vld [vmem:[%s254 + $0x48] sm:$0xff]
      %v344 = vld [vmem:[%s254 + $0x50] sm:$0xff]
      %v345 = vld [vmem:[%s254 + $0x58] sm:$0xff]
      %v346 = vld [vmem:[%s254 + $0x60] sm:$0xff]
      %v347 = vld [vmem:[%s254 + $0x68] sm:$0xff]
      %v348 = vld [vmem:[%s254 + $0x70] sm:$0xff]
      %v349 = vld [vmem:[%s254 + $0x78] sm:$0xff]
      %v350 = vadd.f32 %v334, %v318
      %v351 = vadd.f32 %v335, %v319
      %v352 = vadd.f32 %v336, %v320
      %v353 = vadd.f32 %v337, %v321
      %v354 = vadd.f32 %v338, %v322
      %v355 = vadd.f32 %v339, %v323
      %v356 = vadd.f32 %v340, %v324
      %v357 = vadd.f32 %v341, %v325
      %v358 = vadd.f32 %v342, %v326
      %v359 = vadd.f32 %v343, %v327
      %v360 = vadd.f32 %v344, %v328
      %v361 = vadd.f32 %v345, %v329
      %v362 = vadd.f32 %v346, %v330
      %v363 = vadd.f32 %v347, %v331
      %v364 = vadd.f32 %v348, %v332
      %v365 = vadd.f32 %v349, %v333
      %vm366 = vcmp.gt.f32.partialorder %v350, 0.0
      %vm367 = vcmp.gt.f32.partialorder %v351, 0.0
      %vm368 = vcmp.gt.f32.partialorder %v352, 0.0
      %vm369 = vcmp.gt.f32.partialorder %v353, 0.0
      %vm370 = vcmp.gt.f32.partialorder %v354, 0.0
      %vm371 = vcmp.gt.f32.partialorder %v355, 0.0
      %vm372 = vcmp.gt.f32.partialorder %v356, 0.0
      %vm373 = vcmp.gt.f32.partialorder %v357, 0.0
      %vm374 = vcmp.gt.f32.partialorder %v358, 0.0
      %vm375 = vcmp.gt.f32.partialorder %v359, 0.0
      %vm376 = vcmp.gt.f32.partialorder %v360, 0.0
      %vm377 = vcmp.gt.f32.partialorder %v361, 0.0
      %vm378 = vcmp.gt.f32.partialorder %v362, 0.0
      %vm379 = vcmp.gt.f32.partialorder %v363, 0.0
      %vm380 = vcmp.gt.f32.partialorder %v364, 0.0
      %vm381 = vcmp.gt.f32.partialorder %v365, 0.0
      %v382 = vmul.f32 %v350, 1.442695
      %v383 = vpow.pop %v382
      %v384 = vmul.f32 %v351, 1.442695
      %v385 = vpow.pop %v384
      %v386 = vmul.f32 %v352, 1.442695
      %v387 = vpow.pop %v386
      %v388 = vmul.f32 %v353, 1.442695
      %v389 = vpow.pop %v388
      %v390 = vmul.f32 %v354, 1.442695
      %v391 = vpow.pop %v390
      %v392 = vmul.f32 %v355, 1.442695
      %v393 = vpow.pop %v392
      %v394 = vmul.f32 %v356, 1.442695
      %v395 = vpow.pop %v394
      %v396 = vmul.f32 %v357, 1.442695
      %v397 = vpow.pop %v396
      %v398 = vmul.f32 %v358, 1.442695
      %v399 = vpow.pop %v398
      %v400 = vmul.f32 %v359, 1.442695
      %v401 = vpow.pop %v400
      %v402 = vmul.f32 %v360, 1.442695
      %v403 = vpow.pop %v402
      %v404 = vmul.f32 %v361, 1.442695
      %v405 = vpow.pop %v404
      %v406 = vmul.f32 %v362, 1.442695
      %v407 = vpow.pop %v406
      %v408 = vmul.f32 %v363, 1.442695
      %v409 = vpow.pop %v408
      %v410 = vmul.f32 %v364, 1.442695
      %v411 = vpow.pop %v410
      %v412 = vmul.f32 %v365, 1.442695
      %v413 = vpow.pop %v412
      %v414 = vsub.f32 %v383, 1.0
      %v415 = vsub.f32 %v385, 1.0
      %v416 = vsub.f32 %v387, 1.0
      %v417 = vsub.f32 %v389, 1.0
      %v418 = vsub.f32 %v391, 1.0
      %v419 = vsub.f32 %v393, 1.0
      %v420 = vsub.f32 %v395, 1.0
      %v421 = vsub.f32 %v397, 1.0
      %v422 = vsub.f32 %v399, 1.0
      %v423 = vsub.f32 %v401, 1.0
      %v424 = vsub.f32 %v403, 1.0
      %v425 = vsub.f32 %v405, 1.0
      %v426 = vsub.f32 %v407, 1.0
      %v427 = vsub.f32 %v409, 1.0
      %v428 = vsub.f32 %v411, 1.0
      %v429 = vsub.f32 %v413, 1.0
      %v430 = vsel %vm366, %v350, %v414
      %v431 = vsel %vm367, %v351, %v415
      %v432 = vsel %vm368, %v352, %v416
      %v433 = vsel %vm369, %v353, %v417
      %v434 = vsel %vm370, %v354, %v418
      %v435 = vsel %vm371, %v355, %v419
      %v436 = vsel %vm372, %v356, %v420
      %v437 = vsel %vm373, %v357, %v421
      %v438 = vsel %vm374, %v358, %v422
      %v439 = vsel %vm375, %v359, %v423
      %v440 = vsel %vm376, %v360, %v424
      %v441 = vsel %vm377, %v361, %v425
      %v442 = vsel %vm378, %v362, %v426
      %v443 = vsel %vm379, %v363, %v427
      %v444 = vsel %vm380, %v364, %v428
      %v445 = vsel %vm381, %v365, %v429
      %446 = vst [vmem:[%s264] sm:$0xff] %v430
      %447 = vst [vmem:[%s264 + $0x8] sm:$0xff] %v431
      %448 = vst [vmem:[%s264 + $0x10] sm:$0xff] %v432
      %449 = vst [vmem:[%s264 + $0x18] sm:$0xff] %v433
      %450 = vst [vmem:[%s264 + $0x20] sm:$0xff] %v434
      %451 = vst [vmem:[%s264 + $0x28] sm:$0xff] %v435
      %452 = vst [vmem:[%s264 + $0x30] sm:$0xff] %v436
      %453 = vst [vmem:[%s264 + $0x38] sm:$0xff] %v437
      %454 = vst [vmem:[%s264 + $0x40] sm:$0xff] %v438
      %455 = vst [vmem:[%s264 + $0x48] sm:$0xff] %v439
      %456 = vst [vmem:[%s264 + $0x50] sm:$0xff] %v440
      %457 = vst [vmem:[%s264 + $0x58] sm:$0xff] %v441
      %458 = vst [vmem:[%s264 + $0x60] sm:$0xff] %v442
      %459 = vst [vmem:[%s264 + $0x68] sm:$0xff] %v443
      %460 = vst [vmem:[%s264 + $0x70] sm:$0xff] %v444
      %461 = vst [vmem:[%s264 + $0x78] sm:$0xff] %v445
      %s462 = smul.u32 32, %s20
      %p463 = scmp.lt.s32.totalorder %s19, 1
      %s464 = scalar_select %p463, %s19, 1
      %p465 = scmp.lt.s32.totalorder %s462, 31
      %s466 = scalar_select %p465, %s462, 31
      %s467 = smul.addr %s464, 32
      %s468 = sadd.s32 %s466, %s467
      %s469 = smul.addr %s468, 4
      %s470 = scalar_lea.vmem %s4, %s469
      // Predicated region
      $region37: #{atr_res_13_forward.3} parent=35 // pred_check
        %p471 = pneg %p145
      $region38: #{atr_res_13_forward.3} parent=35 // pred_check_branch
        %473 = sbr.rel (%p471) target = $region40
      $region39: #{atr_res_13_forward.3} parent=35 // pred_region
        %s474 = smul.u32 32, %s20
      $region40: #{atr_res_13_forward.3} parent=35 // pred_fallthru
        _
    $region36: #{atr_res_13_forward.3} parent=5 // pred_fallthru
      _
    %p475 = scmp.le.s32.totalorder 2, %s10
    // Predicated region
    $region41: #{atr_res_13_forward.3} parent=5 // pred_check
      %p476 = pneg %p475
    $region42: #{atr_res_13_forward.3} parent=5 // pred_check_branch
      %478 = sbr.rel (%p476) target = $region44
    $region43: #{atr_res_13_forward.3} parent=5 // pred_region
      %s479 = ssub.s32 %s10, 2
      // Predicated region
      $region45: #{atr_res_13_forward.3} parent=43 // pred_check
        %p480 = pneg %p151
      $region46: #{atr_res_13_forward.3} parent=43 // pred_check_branch
        %482 = sbr.rel (%p480) target = $region48
      $region47: #{atr_res_13_forward.3} parent=43 // pred_region
        %s483 = smul.u32 32, %s22
        %p484 = scmp.lt.s32.totalorder %s21, 1
        %s485 = scalar_select %p484, %s21, 1
        %p486 = scmp.lt.s32.totalorder %s483, 31
        %s487 = scalar_select %p486, %s483, 31
        %s488 = smul.addr %s485, 32
        %s489 = sadd.s32 %s487, %s488
        %s490 = smul.addr %s489, 4
        %s491 = scalar_lea.vmem %s4, %s490
      $region48: #{atr_res_13_forward.3} parent=43 // pred_fallthru
        _
    $region44: #{atr_res_13_forward.3} parent=5 // pred_fallthru
      _
  $region6: #{atr_res_13_forward.3} parent=0 // loop_footer
    %s14 = sadd.s32 1, %s10
  $region7: #{atr_res_13_forward.3} parent=0 // loop_footer_branch
    %9 = sbr.rel target = $region3
  $region8: #{atr_res_13_forward.3} parent=0 // loop_exit
    _

</llo_original>
